<compile_context>
chip_gen: v5e
topology: v5e:2x2
jax: 0.10.0
libtpu: 0.0.40
codegen_flags: <defaults>
</compile_context>

<pallas_src>
from functools import partial

import numpy as np
import jax
import jax.numpy as jnp
from jax import lax
from jax.experimental import pallas as pl
from jax.experimental.pallas import tpu as pltpu


# ----------------------- generation-aware VMEM budget -----------------------

def _query_vmem_limit():
    try:
        cap = int(pltpu.get_tpu_info().vmem_capacity_bytes)
    except Exception:
        cap = 64 * 1024 * 1024          # conservative (v7x-sized) fallback
    return max(32 * 1024 * 1024, min(96 * 1024 * 1024, (cap * 3) // 4))


_VMEM_LIMIT = _query_vmem_limit()
_TILE_BUDGET = max(24 * 1024 * 1024, (_VMEM_LIMIT * 3) // 4)

_PALLAS_MIN_N = 16                       # Cout below this -> XLA conv path
_WEIGHT_RESIDENT_BYTES = 4 * 1024 * 1024
_WEIGHT_RESIDENT_MAX_K = 2048


# ----------------------------- Pallas kernel -----------------------------

def _mm_kernel(*refs, n_res, relu_pos, a_relu, multi_k):
    a_ref, b_ref, s_ref, t_ref = refs[:4]
    res_refs = refs[4:4 + n_res]
    o_ref = refs[4 + n_res]

    a = a_ref[...]
    if a_relu:                 # fused ReLU on the input tile (pre-activation)
        a = jnp.maximum(a, 0)
    part = jnp.dot(a, b_ref[...], preferred_element_type=jnp.float32)

    def _epilogue(acc):
        y = acc * s_ref[...] + t_ref[...]          # BN / bias epilogue
        if relu_pos == 'pre':
            y = jnp.maximum(y, 0.0)
        for r in res_refs:                         # fused residual adds
            y = y + r[...].astype(jnp.float32)
        if relu_pos == 'post':
            y = jnp.maximum(y, 0.0)
        o_ref[...] = y.astype(o_ref.dtype)

    if multi_k:
        acc_ref = refs[5 + n_res]
        k = pl.program_id(2)

        @pl.when(k == 0)
        def _zero():
            acc_ref[...] = jnp.zeros_like(acc_ref)

        acc_ref[...] += part

        @pl.when(k == pl.num_programs(2) - 1)
        def _store():
            _epilogue(acc_ref[...])
    else:
        _epilogue(part)


def _pick_tiles(M, K, N, n_res):
    # N tile: lane-dense; 256 matches the 256-wide MXU on v6e/v7x.
    if N <= 256:
        TN = N
    elif N % 256 == 0:
        TN = 256
    elif N % 128 == 0:
        TN = 128
    else:
        TN = N
    # K tile: keep the whole weight slab VMEM-resident when small so it is not
    # re-streamed once per M tile; otherwise pick a divisor that pipelines.
    if K * N * 2 <= _WEIGHT_RESIDENT_BYTES and K <= _WEIGHT_RESIDENT_MAX_K:
        TK, TN = K, N
    else:
        TK = K
        for cand in (512, 384, 256, 128):
            if K % cand == 0:
                TK = cand
                break
    multi_k = K > TK
    # M tile: as big as the VMEM budget allows (full M when M < 1024).
    TM = 1024 if M >= 1024 else M

    def _need(tm):
        b = 2 * tm * TK * 2            # A (double-buffered, bf16)
        b += 2 * TK * TN * 2           # B
        b += 2 * tm * TN * 2           # out
        b += 2 * n_res * tm * TN * 2   # residual inputs
        if multi_k:
            b += tm * TN * 4           # f32 accumulator scratch
        return b

    while _need(TM) > _TILE_BUDGET and TM > 256:
        TM = max(256, ((TM // 2) + 7) // 8 * 8)
        if TM >= M:
            TM = M
            break
    return TM, TK, TN, multi_k


def _matmul_fused(a, b, scale, shift, residuals=(), relu_pos='none',
                  a_relu=False, out_dtype=jnp.bfloat16):
    """out = epilogue(a @ b) with a:(M,K), b:(K,N), scale/shift:(1,N)."""
    M, K = a.shape
    K2, N = b.shape
    assert K == K2
    n_res = len(residuals)
    TM, TK, TN, multi_k = _pick_tiles(M, K, N, n_res)
    grid = (pl.cdiv(M, TM), pl.cdiv(N, TN), pl.cdiv(K, TK))

    in_specs = [
        pl.BlockSpec((TM, TK), lambda i, j, k: (i, k)),
        pl.BlockSpec((TK, TN), lambda i, j, k: (k, j)),
        pl.BlockSpec((1, TN), lambda i, j, k: (0, j)),
        pl.BlockSpec((1, TN), lambda i, j, k: (0, j)),
    ]
    in_specs += [pl.BlockSpec((TM, TN), lambda i, j, k: (i, j))
                 for _ in range(n_res)]
    scratch = [pltpu.VMEM((TM, TN), jnp.float32)] if multi_k else []

    kernel = partial(_mm_kernel, n_res=n_res, relu_pos=relu_pos,
                     a_relu=a_relu, multi_k=multi_k)
    return pl.pallas_call(
        kernel,
        out_shape=jax.ShapeDtypeStruct((M, N), out_dtype),
        grid_spec=pltpu.PrefetchScalarGridSpec(
            num_scalar_prefetch=0,
            grid=grid,
            in_specs=in_specs,
            out_specs=pl.BlockSpec((TM, TN), lambda i, j, k: (i, j)),
            scratch_shapes=scratch),
        compiler_params=pltpu.CompilerParams(
            dimension_semantics=("parallel", "parallel", "arbitrary"),
            vmem_limit_bytes=_VMEM_LIMIT),
    )(a.astype(jnp.bfloat16), b.astype(jnp.bfloat16),
      scale.astype(jnp.float32).reshape(1, N),
      shift.astype(jnp.float32).reshape(1, N),
      *[r.reshape(M, N).astype(jnp.bfloat16) for r in residuals])


# ------------------------------- op wrappers -------------------------------

def _affine(bn=None, bias=None, cout=None):
    """Fold (optional) inference-BN and (optional) bias into scale/shift."""
    if bn is not None:
        scale = bn[0].astype(jnp.float32)
        shift = bn[1].astype(jnp.float32)
    else:
        n = cout if cout is not None else bias.shape[0]
        scale = jnp.ones((n,), jnp.float32)
        shift = jnp.zeros((n,), jnp.float32)
    if bias is not None:
        shift = shift + scale * bias.astype(jnp.float32)
    return scale.reshape(1, -1), shift.reshape(1, -1)


def conv3d_fused(x, w, scale, shift, *, stride=(1, 1, 1), padding=(0, 0, 0),
                 dilation=(1, 1, 1), residuals=(), relu_pos='none',
                 a_relu=False, out_dtype=jnp.bfloat16):
    """x: (B,D,H,W,Cin); w: (kd,kh,kw,Cin,Cout)."""
    B, D, H, W, Cin = x.shape
    kd, kh, kw, _, Cout = w.shape

    if Cout < _PALLAS_MIN_N:
        # Tiny-Cout conv (heads, oper conv1): a Pallas matmul would emit
        # masked non-lane-dense stores, so run it through XLA instead while
        # keeping the identical fused epilogue semantics.
        xin = x.astype(jnp.bfloat16)
        if a_relu:
            xin = jnp.maximum(xin, 0)
        y = lax.conv_general_dilated(
            xin, w.astype(jnp.bfloat16),
            window_strides=tuple(stride),
            padding=[(p, p) for p in padding],
            rhs_dilation=tuple(dilation),
            dimension_numbers=('NDHWC', 'DHWIO', 'NDHWC'),
            preferred_element_type=jnp.float32)
        y = y * scale.reshape(1, 1, 1, 1, -1) + shift.reshape(1, 1, 1, 1, -1)
        if relu_pos == 'pre':
            y = jnp.maximum(y, 0.0)
        for r in residuals:
            y = y + r.astype(jnp.float32)
        if relu_pos == 'post':
            y = jnp.maximum(y, 0.0)
        return y.astype(out_dtype)

    sd, sh, sw = stride
    pd, ph, pw = padding
    dd, dh, dw = dilation
    od = (D + 2 * pd - dd * (kd - 1) - 1) // sd + 1
    oh = (H + 2 * ph - dh * (kh - 1) - 1) // sh + 1
    ow = (W + 2 * pw - dw * (kw - 1) - 1) // sw + 1
    if (kd, kh, kw) == (1, 1, 1) and stride == (1, 1, 1) and padding == (0, 0, 0):
        a = x.reshape(B * D * H * W, Cin)
    else:
        # TODO(synk): tap-streaming (taps on the K grid axis / manual DMA from
        # the padded input) to avoid materializing this im2col in HBM.
        xp = jnp.pad(x, ((0, 0), (pd, pd), (ph, ph), (pw, pw), (0, 0)))
        patches = []
        for i in range(kd):
            for j in range(kh):
                for k in range(kw):
                    patches.append(
                        xp[:, i * dd:i * dd + (od - 1) * sd + 1:sd,
                           j * dh:j * dh + (oh - 1) * sh + 1:sh,
                           k * dw:k * dw + (ow - 1) * sw + 1:sw, :])
        a = jnp.concatenate(patches, axis=-1).reshape(
            B * od * oh * ow, kd * kh * kw * Cin)
    bmat = w.reshape(kd * kh * kw * Cin, Cout)
    out = _matmul_fused(a, bmat, scale, shift, residuals=residuals,
                        relu_pos=relu_pos, a_relu=a_relu, out_dtype=out_dtype)
    return out.reshape(B, od, oh, ow, Cout)


def conv2d_fused(x, w, scale, shift, *, stride=(1, 1), padding=(0, 0),
                 relu_pos='none'):
    y = conv3d_fused(x[:, None], w[None], scale, shift,
                     stride=(1,) + tuple(stride), padding=(0,) + tuple(padding),
                     relu_pos=relu_pos)
    return y[:, 0]


def avg_pool3d(x, kernel, stride, padding):
    # PyTorch AvgPool3d default count_include_pad=True
    window = (1,) + tuple(kernel) + (1,)
    strides = (1,) + tuple(stride) + (1,)
    pads = ((0, 0),) + tuple((p, p) for p in padding) + ((0, 0),)
    s = lax.reduce_window(x.astype(jnp.float32), 0.0, lax.add,
                          window, strides, pads)
    return (s / float(np.prod(kernel))).astype(x.dtype)


def upsample_bilinear_x16(x):
    # F.interpolate(scale_factor=16, mode='bilinear', align_corners=True)
    B, H, W, C = x.shape
    OH, OW = 16 * H, 16 * W

    def src(out_n, in_n):
        if in_n == 1:
            return jnp.zeros((out_n,), jnp.float32)
        return jnp.arange(out_n, dtype=jnp.float32) * (in_n - 1) / (out_n - 1)

    ys, xs = src(OH, H), src(OW, W)
    y0 = jnp.floor(ys).astype(jnp.int32)
    y1 = jnp.minimum(y0 + 1, H - 1)
    wy = (ys - y0)[None, :, None, None]
    x0 = jnp.floor(xs).astype(jnp.int32)
    x1 = jnp.minimum(x0 + 1, W - 1)
    wx = (xs - x0)[None, None, :, None]
    xf = x.astype(jnp.float32)
    rows = xf[:, y0] * (1 - wy) + xf[:, y1] * wy
    out = rows[:, :, x0] * (1 - wx) + rows[:, :, x1] * wx
    return out.astype(jnp.bfloat16)


# ---------------------------- fused ConvTranspose3d ----------------------------
# Output parity p along an axis: output o = 2*i_base + p receives contributions
# from (input offset, kernel tap) pairs below (PyTorch ConvTranspose3d with the
# weight re-laid-out as (kd,kh,kw,Cin,Cout) = torch_w.permute(2,3,4,0,1); no
# spatial flip is needed).
_DECONV_TAPS = {0: ((0, 1),), 1: ((0, 2), (1, 0))}


def _build_deconv_weight8(w):
    """Fuse the 8 sub-pixel phases of a k=3,s=2,p=1,op=1 ConvTranspose3d into a
    single (8*Cin, 8*Cout) matrix over the 2x2x2 input-offset neighbourhood."""
    Cin, Cout = w.shape[3], w.shape[4]
    zero = jnp.zeros((Cin, Cout), w.dtype)
    cols = []
    for pd in (0, 1):
        for ph in (0, 1):
            for pw in (0, 1):
                taps = {}
                for od_, kd_ in _DECONV_TAPS[pd]:
                    for oh_, kh_ in _DECONV_TAPS[ph]:
                        for ow_, kw_ in _DECONV_TAPS[pw]:
                            taps[(od_, oh_, ow_)] = w[kd_, kh_, kw_]
                rows = [taps.get((qd, qh, qw), zero)
                        for qd in (0, 1) for qh in (0, 1) for qw in (0, 1)]
                cols.append(jnp.concatenate(rows, axis=0))
    return jnp.concatenate(cols, axis=1)        # (8*Cin, 8*Cout)


def deconv_block_forward(p, x):
    """ConvTranspose3d(k=3, s=2, p=1, output_padding=1) + bias + BN + ReLU.
    All 8 sub-pixel output phases are computed by ONE fused Pallas matmul
    (lane-dense N = 8*Cout, single launch), then interleaved in XLA."""
    B, D, H, W, Cin = x.shape
    w8 = p['w8']                                   # prebuilt (8*Cin, 8*Cout)
    Cout = w8.shape[1] // 8
    scale, shift = _affine(bn=p['bn'], bias=p['b'])
    scale8 = jnp.tile(scale, (1, 8))
    shift8 = jnp.tile(shift, (1, 8))
    xpad = jnp.pad(x, ((0, 0), (0, 1), (0, 1), (0, 1), (0, 0)))
    slices = [xpad[:, qd:qd + D, qh:qh + H, qw:qw + W, :]
              for qd in (0, 1) for qh in (0, 1) for qw in (0, 1)]
    a = jnp.concatenate(slices, axis=-1).reshape(B * D * H * W, 8 * Cin)
    y = _matmul_fused(a, w8, scale8, shift8, relu_pos='post')
    y = y.reshape(B, D, H, W, 2, 2, 2, Cout)
    y = jnp.transpose(y, (0, 1, 4, 2, 5, 3, 6, 7))
    return y.reshape(B, 2 * D, 2 * H, 2 * W, Cout)


def head_forward(p, x):
    # TODO(synk): Dropout3d(0.1) preceding this 1x1x1 conv is identity at inference.
    return conv3d_fused(x, p['w'], *_affine(bias=p['b']))


def oper_forward(p, x, final_residual=None):
    (w0, bn0), (w1, bn1), (w2, bn2) = p
    x = conv3d_fused(x, w0, *_affine(bn=bn0), padding=(1, 1, 1), relu_pos='post')
    x = conv3d_fused(x, w1, *_affine(bn=bn1), padding=(1, 1, 1), relu_pos='post')
    if final_residual is None:
        return conv3d_fused(x, w2, *_affine(bn=bn2), padding=(1, 1, 1),
                            relu_pos='post')
    # PyTorch: relu(bn(conv(x))) THEN + residual  -> relu before residual add
    return conv3d_fused(x, w2, *_affine(bn=bn2), padding=(1, 1, 1),
                        relu_pos='pre', residuals=(final_residual,))


def bottleneck_forward(p, x, *, stride, dilation, has_downsample):
    d0, d1, d2 = dilation
    out1 = conv3d_fused(x, p['conv1'], *_affine(bn=p['bn1']), relu_pos='post')
    # out2 kept pre-ReLU: the reference feeds pre-ReLU out2 to downsample2 and
    # relu(out2) to conv3 (here via the in-kernel a_relu, single K step).
    out2 = conv3d_fused(out1, p['conv2'], *_affine(bn=p['bn2']),
                        stride=(1, 1, stride), padding=(0, 0, d0),
                        dilation=(1, 1, d0))
    if stride != 1:
        r2 = conv3d_fused(avg_pool3d(out2, (1, stride, 1), (1, stride, 1),
                                     (0, 0, 0)),
                          p['ds2_conv'], *_affine(bn=p['ds2_bn']))
    else:
        r2 = out2
    out3 = conv3d_fused(out2, p['conv3'], *_affine(bn=p['bn3']),
                        stride=(1, stride, 1), padding=(0, d1, 0),
                        dilation=(1, d1, 1), residuals=(r2,), a_relu=True)
    if stride != 1:
        r2b = conv3d_fused(avg_pool3d(r2, (stride, 1, 1), (stride, 1, 1),
                                      (0, 0, 0)),
                           p['ds3_conv'], *_affine(bn=p['ds3_bn']))
        r3 = conv3d_fused(avg_pool3d(out3, (stride, 1, 1), (stride, 1, 1),
                                     (0, 0, 0)),
                          p['ds4_conv'], *_affine(bn=p['ds4_bn']))
    else:
        r2b, r3 = r2, out3
    out4 = conv3d_fused(out3, p['conv4'], *_affine(bn=p['bn4']),
                        stride=(stride, 1, 1), padding=(d2, 0, 0),
                        dilation=(d2, 1, 1), residuals=(r2b, r3),
                        a_relu=True, relu_pos='post')
    if has_downsample:
        res = conv3d_fused(avg_pool3d(x, (2, 2, 2), (2, 2, 2), (0, 0, 0)),
                           p['ds_conv'], *_affine(bn=p['ds_bn']))
    else:
        res = x
    return conv3d_fused(out4, p['conv5'], *_affine(bn=p['bn5']),
                        residuals=(res,), relu_pos='post')


def res_layer_forward(blocks, x):
    x = bottleneck_forward(blocks[0], x, stride=2, dilation=(1, 1, 1),
                           has_downsample=True)
    for d, blk in zip((1, 2, 3), blocks[1:]):
        x = bottleneck_forward(blk, x, stride=1, dilation=(d, d, d),
                               has_downsample=False)
    return x


def projection_forward(P, feature2d, depth_mapping_3d, grid3d):
    f = conv2d_fused(feature2d, P['proj_conv'], *_affine(bn=P['proj_bn']),
                     relu_pos='post')
    f = upsample_bilinear_x16(f)                        # (B, h, w, feature)
    B, h, w, c = f.shape
    seg_vec = jnp.concatenate(
        [f.reshape(B, h * w, c), jnp.zeros((B, 1, c), f.dtype)], axis=1)
    gathered = jnp.take_along_axis(seg_vec, depth_mapping_3d[:, :, None], axis=1)
    segres = gathered.reshape(B, grid3d[0], grid3d[1], grid3d[2], c)
    # ThreeDinit: fill exactly-zero entries with 3x3x3 average-pooled values.
    # (mask evaluated at bf16 precision; same per-element (segres == 0) rule
    # as the reference code)
    pool = avg_pool3d(segres, (3, 3, 3), (1, 1, 1), (1, 1, 1))
    return segres + pool * (segres == 0).astype(segres.dtype)


# --------------------------- parameter construction ---------------------------

class KeyGen:
    def __init__(self, key):
        self._key = key

    def __call__(self):
        self._key, k = jax.random.split(self._key)
        return k


def init_conv3d(key, kd, kh, kw, cin, cout):
    fan_in = kd * kh * kw * cin
    w = jax.random.normal(key, (kd, kh, kw, cin, cout), jnp.float32) / np.sqrt(fan_in)
    return w.astype(jnp.bfloat16)       # pre-cast once (no per-forward cast traffic)


def init_conv2d(key, kh, kw, cin, cout):
    fan_in = kh * kw * cin
    w = jax.random.normal(key, (kh, kw, cin, cout), jnp.float32) / np.sqrt(fan_in)
    return w.astype(jnp.bfloat16)


def init_bn(key, c):
    k1, k2 = jax.random.split(key)
    gamma = 1.0 + 0.1 * jax.random.normal(k1, (c,), jnp.float32)
    beta = 0.1 * jax.random.normal(k2, (c,), jnp.float32)
    # inference-mode BN pre-folded (running_mean=0, running_var=1)
    return (gamma / jnp.sqrt(1.0 + 1e-5), beta)


def init_bottleneck(kg, inplanes, planes, expansion, stride, has_downsample):
    p = {
        'conv1': init_conv3d(kg(), 1, 1, 1, inplanes, planes), 'bn1': init_bn(kg(), planes),
        'conv2': init_conv3d(kg(), 1, 1, 3, planes, planes),   'bn2': init_bn(kg(), planes),
        'conv3': init_conv3d(kg(), 1, 3, 1, planes, planes),   'bn3': init_bn(kg(), planes),
        'conv4': init_conv3d(kg(), 3, 1, 1, planes, planes),   'bn4': init_bn(kg(), planes),
        'conv5': init_conv3d(kg(), 1, 1, 1, planes, planes * expansion),
        'bn5': init_bn(kg(), planes * expansion),
    }
    if stride != 1:
        for name in ('ds2', 'ds3', 'ds4'):
            p[name + '_conv'] = init_conv3d(kg(), 1, 1, 1, planes, planes)
            p[name + '_bn'] = init_bn(kg(), planes)
    if has_downsample:
        p['ds_conv'] = init_conv3d(kg(), 1, 1, 1, inplanes, planes * expansion)
        p['ds_bn'] = init_bn(kg(), planes * expansion)
    return p


def init_res_layer(kg, feature, first_expansion):
    planes1 = feature // 4
    blocks = [init_bottleneck(kg, feature, planes1, first_expansion, 2, True)]
    out_ch = planes1 * first_expansion
    for _ in range(3):
        blocks.append(init_bottleneck(kg, out_ch, out_ch // 4, 4, 1, False))
    return blocks


def init_oper(kg, cin, feature):
    chans = [cin, 3, 64, feature]
    return [(init_conv3d(kg(), 3, 3, 3, chans[i], chans[i + 1]),
             init_bn(kg(), chans[i + 1])) for i in range(3)]


def init_deconv(kg, cin, cout):
    w = init_conv3d(kg(), 3, 3, 3, cin, cout)
    return {'w8': _build_deconv_weight8(w),      # prebuilt fused phase weight
            'b': 0.1 * jax.random.normal(kg(), (cout,), jnp.float32),
            'bn': init_bn(kg(), cout)}


def init_head(kg, cin, cout):
    return {'w': init_conv3d(kg(), 1, 1, 1, cin, cout),
            'b': 0.1 * jax.random.normal(kg(), (cout,), jnp.float32)}


def init_network(key, *, feature, resnet_out, class_num):
    kg = KeyGen(key)
    P = {}
    # TODO(synk): the real model uses an external dilated ResNet-50 backbone
    # (get_resnet50 + config, not provided); replaced by a small deterministic
    # stride-16 conv stack producing `resnet_out` channels.
    chans = [3, 8, 16, 32, resnet_out]
    P['backbone'] = [(init_conv2d(kg(), 3, 3, chans[i], chans[i + 1]),
                      init_bn(kg(), chans[i + 1])) for i in range(4)]
    P['proj_conv'] = init_conv2d(kg(), 1, 1, resnet_out, feature)
    P['proj_bn'] = init_bn(kg(), feature)
    # STAGE1
    P['oper1'] = init_oper(kg, 1, feature)
    P['comp1'] = init_res_layer(kg, feature, 4)
    P['comp2'] = init_res_layer(kg, feature, 8)
    P['comp3'] = init_res_layer(kg, feature, 4)
    P['comp4'] = init_res_layer(kg, feature, 8)
    P['cs0'] = init_deconv(kg, feature * 2, feature)
    P['cs1'] = init_deconv(kg, feature, feature)
    P['cs3'] = init_deconv(kg, feature * 2, feature)
    P['cs4'] = init_deconv(kg, feature, feature)
    P['cs5'] = init_head(kg, feature, 2)
    # STAGE2
    P['oper_sketch_rgb'] = init_oper(kg, 2, feature)
    P['sem1'] = init_res_layer(kg, feature, 4)
    P['sem2'] = init_res_layer(kg, feature, 8)
    P['csem0'] = init_deconv(kg, feature * 2, feature)
    P['csem1'] = init_deconv(kg, feature, feature)
    P['csem2'] = init_head(kg, feature, class_num)
    return P


# ------------------------------- forward pass -------------------------------

@partial(jax.jit, static_argnames=('grid3d',))
def network_forward(P, rgb, depth_mapping_3d, tsdf, *, grid3d):
    # backbone (stride-16 conv stub standing in for ResNet-50)
    x = jnp.transpose(rgb, (0, 2, 3, 1)).astype(jnp.bfloat16)
    for w, bn in P['backbone']:
        x = conv2d_fused(x, w, *_affine(bn=bn), stride=(2, 2), padding=(1, 1),
                         relu_pos='post')
    feature3d = projection_forward(P, x, depth_mapping_3d, grid3d)

    # ---- STAGE1 ----
    t = jnp.transpose(tsdf, (0, 2, 3, 4, 1)).astype(jnp.bfloat16)
    t = oper_forward(P['oper1'], t, final_residual=feature3d)
    c1 = res_layer_forward(P['comp1'], t)
    c2 = res_layer_forward(P['comp2'], c1)
    u1 = deconv_block_forward(P['cs0'], c2) + c1
    u2 = deconv_block_forward(P['cs1'], u1)            # pred_sketch_raw features
    c3 = res_layer_forward(P['comp3'], u2)
    c4 = res_layer_forward(P['comp4'], c3)
    u3 = deconv_block_forward(P['cs3'], c4) + c3
    u4 = deconv_block_forward(P['cs4'], u3)
    pred_sketch_refine = head_forward(P['cs5'], u4)

    # ---- STAGE2 ----
    seg_fea = oper_forward(P['oper_sketch_rgb'], pred_sketch_refine,
                           final_residual=feature3d)
    s1 = res_layer_forward(P['sem1'], seg_fea)
    s2 = res_layer_forward(P['sem2'], s1)
    v1 = deconv_block_forward(P['csem0'], s2) + s1
    v2 = deconv_block_forward(P['csem1'], v1)
    pred_semantic = head_forward(P['csem2'], v2)

    ncdhw = lambda a: jnp.transpose(a, (0, 4, 1, 2, 3)).astype(jnp.float32)
    return ncdhw(pred_semantic), ncdhw(pred_sketch_refine)


# ----------------------------------- main -----------------------------------

if __name__ == "__main__":
    # Small configuration (feature 512 -> 16, 60x36x60 SSC grid -> 8x4x8,
    # resnet_out 2048 -> 32, class_num -> 4).
    feature, resnet_out, class_num = 16, 32, 4
    B, H, W = 1, 32, 32
    grid3d = (8, 4, 8)

    key = jax.random.PRNGKey(0)
    kp, kr, kt, kd = jax.random.split(key, 4)
    params = init_network(kp, feature=feature, resnet_out=resnet_out,
                          class_num=class_num)

    rgb = jax.random.normal(kr, (B, 3, H, W), jnp.float32)
    tsdf = jax.random.normal(kt, (B, 1) + grid3d, jnp.float32)
    n_vox = grid3d[0] * grid3d[1] * grid3d[2]
    # values in [0, H*W]; index H*W selects the appended zero vector
    depth_mapping_3d = jax.random.randint(kd, (B, n_vox), 0, H * W + 1,
                                          dtype=jnp.int32)

    pred_semantic, pred_sketch_refine = network_forward(
        params, rgb, depth_mapping_3d, tsdf, grid3d=grid3d)
    jax.block_until_ready((pred_semantic, pred_sketch_refine))
    pred_sketch_raw = None                             # STAGE1 returns (None, refine)

    assert pred_semantic.shape == (B, class_num) + grid3d
    assert pred_sketch_raw is None
    assert pred_sketch_refine.shape == (B, 2) + grid3d
    assert np.all(np.isfinite(np.asarray(pred_semantic)))
    assert np.all(np.isfinite(np.asarray(pred_sketch_refine)))
    print("KERNEL_OK")
</pallas_src>

<mosaic_0001>
module attributes {stable_mosaic.version = 11 : i64} {
  func.func @_mm_kernel(%arg0: i32, %arg1: i32, %arg2: i32, %arg3: memref<64x72xbf16, #tpu.memory_space<vmem>>, %arg4: memref<72x16xbf16, #tpu.memory_space<vmem>>, %arg5: memref<1x16xf32, #tpu.memory_space<vmem>>, %arg6: memref<1x16xf32, #tpu.memory_space<vmem>>, %arg7: memref<64x16xbf16, #tpu.memory_space<vmem>>) attributes {dimension_semantics = [#tpu.dimension_semantics<parallel>, #tpu.dimension_semantics<parallel>, #tpu.dimension_semantics<arbitrary>], iteration_bounds = array<i64: 1, 1, 1>, scalar_prefetch = 0 : i64, scratch_operands = 0 : i64, tpu.core_type = #tpu.core_type<tc>, window_params = [{transform_indices = @transform_0, window_bounds = array<i64: 64, 72>}, {transform_indices = @transform_1, window_bounds = array<i64: 72, 16>}, {transform_indices = @transform_2, window_bounds = array<i64: 1, 16>}, {transform_indices = @transform_3, window_bounds = array<i64: 1, 16>}, {transform_indices = @transform_4, window_bounds = array<i64: 64, 16>}]} {
    %c0 = arith.constant 0 : index
    %c0_0 = arith.constant 0 : index
    %0 = vector.load %arg3[%c0, %c0_0] : memref<64x72xbf16, #tpu.memory_space<vmem>>, vector<64x72xbf16>
    %c0_1 = arith.constant 0 : index
    %c0_2 = arith.constant 0 : index
    %1 = vector.load %arg4[%c0_1, %c0_2] : memref<72x16xbf16, #tpu.memory_space<vmem>>, vector<72x16xbf16>
    %cst = arith.constant dense<0.000000e+00> : vector<64x16xf32>
    %2 = tpu.matmul %0, %1, %cst {dimension_numbers = #tpu.dot_dimension_numbers<[1], [0], [0], [1], [0, 0, 1, 1], [], []>} : vector<64x72xbf16>, vector<72x16xbf16>, vector<64x16xf32> -> vector<64x16xf32>
    %c0_3 = arith.constant 0 : index
    %c0_4 = arith.constant 0 : index
    %3 = vector.load %arg5[%c0_3, %c0_4] : memref<1x16xf32, #tpu.memory_space<vmem>>, vector<1x16xf32>
    %4 = vector.broadcast %3 : vector<1x16xf32> to vector<64x16xf32>
    %5 = arith.mulf %2, %4 : vector<64x16xf32>
    %c0_5 = arith.constant 0 : index
    %c0_6 = arith.constant 0 : index
    %6 = vector.load %arg6[%c0_5, %c0_6] : memref<1x16xf32, #tpu.memory_space<vmem>>, vector<1x16xf32>
    %7 = vector.broadcast %6 : vector<1x16xf32> to vector<64x16xf32>
    %8 = arith.addf %5, %7 : vector<64x16xf32>
    %cst_7 = arith.constant 0.000000e+00 : f32
    %9 = vector.broadcast %cst_7 : f32 to vector<64x16xf32>
    %10 = arith.maximumf %8, %9 : vector<64x16xf32>
    %11 = arith.truncf %10 : vector<64x16xf32> to vector<64x16xbf16>
    %c0_8 = arith.constant 0 : index
    %c0_9 = arith.constant 0 : index
    %12 = vector.load %arg7[%c0_8, %c0_9] : memref<64x16xbf16, #tpu.memory_space<vmem>>, vector<64x16xbf16>
    tpu.vector_store %arg7[%c0_8, %c0_9], %11 {strides = array<i32>} : memref<64x16xbf16, #tpu.memory_space<vmem>>, vector<64x16xbf16>,
    return
  }
  func.func @transform_0(%arg0: i32, %arg1: i32, %arg2: i32) -> (i32, i32) {
    %c0_i32 = arith.constant 0 : i32
    return %arg0, %arg2 : i32, i32
  }
  func.func @transform_1(%arg0: i32, %arg1: i32, %arg2: i32) -> (i32, i32) {
    %c0_i32 = arith.constant 0 : i32
    return %arg2, %arg1 : i32, i32
  }
  func.func @transform_2(%arg0: i32, %arg1: i32, %arg2: i32) -> (i32, i32) {
    %c0_i32 = arith.constant 0 : i32
    %c0_i32_0 = arith.constant 0 : i32
    return %c0_i32, %arg1 : i32, i32
  }
  func.func @transform_3(%arg0: i32, %arg1: i32, %arg2: i32) -> (i32, i32) {
    %c0_i32 = arith.constant 0 : i32
    %c0_i32_0 = arith.constant 0 : i32
    return %c0_i32, %arg1 : i32, i32
  }
  func.func @transform_4(%arg0: i32, %arg1: i32, %arg2: i32) -> (i32, i32) {
    %c0_i32 = arith.constant 0 : i32
    return %arg0, %arg1 : i32, i32
  }
}

module attributes {stable_mosaic.version = 11 : i64} {
  func.func @_mm_kernel(%arg0: i32, %arg1: i32, %arg2: i32, %arg3: memref<16x144xbf16, #tpu.memory_space<vmem>>, %arg4: memref<144x32xbf16, #tpu.memory_space<vmem>>, %arg5: memref<1x32xf32, #tpu.memory_space<vmem>>, %arg6: memref<1x32xf32, #tpu.memory_space<vmem>>, %arg7: memref<16x32xbf16, #tpu.memory_space<vmem>>) attributes {dimension_semantics = [#tpu.dimension_semantics<parallel>, #tpu.dimension_semantics<parallel>, #tpu.dimension_semantics<arbitrary>], iteration_bounds = array<i64: 1, 1, 1>, scalar_prefetch = 0 : i64, scratch_operands = 0 : i64, tpu.core_type = #tpu.core_type<tc>, window_params = [{transform_indices = @transform_0, window_bounds = array<i64: 16, 144>}, {transform_indices = @transform_1, window_bounds = array<i64: 144, 32>}, {transform_indices = @transform_2, window_bounds = array<i64: 1, 32>}, {transform_indices = @transform_3, window_bounds = array<i64: 1, 32>}, {transform_indices = @transform_4, window_bounds = array<i64: 16, 32>}]} {
    %c0 = arith.constant 0 : index
    %c0_0 = arith.constant 0 : index
    %0 = vector.load %arg3[%c0, %c0_0] : memref<16x144xbf16, #tpu.memory_space<vmem>>, vector<16x144xbf16>
    %c0_1 = arith.constant 0 : index
    %c0_2 = arith.constant 0 : index
    %1 = vector.load %arg4[%c0_1, %c0_2] : memref<144x32xbf16, #tpu.memory_space<vmem>>, vector<144x32xbf16>
    %cst = arith.constant dense<0.000000e+00> : vector<16x32xf32>
    %2 = tpu.matmul %0, %1, %cst {dimension_numbers = #tpu.dot_dimension_numbers<[1], [0], [0], [1], [0, 0, 1, 1], [], []>} : vector<16x144xbf16>, vector<144x32xbf16>, vector<16x32xf32> -> vector<16x32xf32>
    %c0_3 = arith.constant 0 : index
    %c0_4 = arith.constant 0 : index
    %3 = vector.load %arg5[%c0_3, %c0_4] : memref<1x32xf32, #tpu.memory_space<vmem>>, vector<1x32xf32>
    %4 = vector.broadcast %3 : vector<1x32xf32> to vector<16x32xf32>
    %5 = arith.mulf %2, %4 : vector<16x32xf32>
    %c0_5 = arith.constant 0 : index
    %c0_6 = arith.constant 0 : index
    %6 = vector.load %arg6[%c0_5, %c0_6] : memref<1x32xf32, #tpu.memory_space<vmem>>, vector<1x32xf32>
    %7 = vector.broadcast %6 : vector<1x32xf32> to vector<16x32xf32>
    %8 = arith.addf %5, %7 : vector<16x32xf32>
    %cst_7 = arith.constant 0.000000e+00 : f32
    %9 = vector.broadcast %cst_7 : f32 to vector<16x32xf32>
    %10 = arith.maximumf %8, %9 : vector<16x32xf32>
    %11 = arith.truncf %10 : vector<16x32xf32> to vector<16x32xbf16>
    %c0_8 = arith.constant 0 : index
    %c0_9 = arith.constant 0 : index
    %12 = vector.load %arg7[%c0_8, %c0_9] : memref<16x32xbf16, #tpu.memory_space<vmem>>, vector<16x32xbf16>
    tpu.vector_store %arg7[%c0_8, %c0_9], %11 {strides = array<i32>} : memref<16x32xbf16, #tpu.memory_space<vmem>>, vector<16x32xbf16>,
    return
  }
  func.func @transform_0(%arg0: i32, %arg1: i32, %arg2: i32) -> (i32, i32) {
    %c0_i32 = arith.constant 0 : i32
    return %arg0, %arg2 : i32, i32
  }
  func.func @transform_1(%arg0: i32, %arg1: i32, %arg2: i32) -> (i32, i32) {
    %c0_i32 = arith.constant 0 : i32
    return %arg2, %arg1 : i32, i32
  }
  func.func @transform_2(%arg0: i32, %arg1: i32, %arg2: i32) -> (i32, i32) {
    %c0_i32 = arith.constant 0 : i32
    %c0_i32_0 = arith.constant 0 : i32
    return %c0_i32, %arg1 : i32, i32
  }
  func.func @transform_3(%arg0: i32, %arg1: i32, %arg2: i32) -> (i32, i32) {
    %c0_i32 = arith.constant 0 : i32
    %c0_i32_0 = arith.constant 0 : i32
    return %c0_i32, %arg1 : i32, i32
  }
  func.func @transform_4(%arg0: i32, %arg1: i32, %arg2: i32) -> (i32, i32) {
    %c0_i32 = arith.constant 0 : i32
    return %arg0, %arg1 : i32, i32
  }
}

module attributes {stable_mosaic.version = 11 : i64} {
  func.func @_mm_kernel(%arg0: i32, %arg1: i32, %arg2: i32, %arg3: memref<4x288xbf16, #tpu.memory_space<vmem>>, %arg4: memref<288x32xbf16, #tpu.memory_space<vmem>>, %arg5: memref<1x32xf32, #tpu.memory_space<vmem>>, %arg6: memref<1x32xf32, #tpu.memory_space<vmem>>, %arg7: memref<4x32xbf16, #tpu.memory_space<vmem>>) attributes {dimension_semantics = [#tpu.dimension_semantics<parallel>, #tpu.dimension_semantics<parallel>, #tpu.dimension_semantics<arbitrary>], iteration_bounds = array<i64: 1, 1, 1>, scalar_prefetch = 0 : i64, scratch_operands = 0 : i64, tpu.core_type = #tpu.core_type<tc>, window_params = [{transform_indices = @transform_0, window_bounds = array<i64: 4, 288>}, {transform_indices = @transform_1, window_bounds = array<i64: 288, 32>}, {transform_indices = @transform_2, window_bounds = array<i64: 1, 32>}, {transform_indices = @transform_3, window_bounds = array<i64: 1, 32>}, {transform_indices = @transform_4, window_bounds = array<i64: 4, 32>}]} {
    %c0 = arith.constant 0 : index
    %c0_0 = arith.constant 0 : index
    %0 = vector.load %arg3[%c0, %c0_0] : memref<4x288xbf16, #tpu.memory_space<vmem>>, vector<4x288xbf16>
    %c0_1 = arith.constant 0 : index
    %c0_2 = arith.constant 0 : index
    %1 = vector.load %arg4[%c0_1, %c0_2] : memref<288x32xbf16, #tpu.memory_space<vmem>>, vector<288x32xbf16>
    %cst = arith.constant dense<0.000000e+00> : vector<4x32xf32>
    %2 = tpu.matmul %0, %1, %cst {dimension_numbers = #tpu.dot_dimension_numbers<[1], [0], [0], [1], [0, 0, 1, 1], [], []>} : vector<4x288xbf16>, vector<288x32xbf16>, vector<4x32xf32> -> vector<4x32xf32>
    %c0_3 = arith.constant 0 : index
    %c0_4 = arith.constant 0 : index
    %3 = vector.load %arg5[%c0_3, %c0_4] : memref<1x32xf32, #tpu.memory_space<vmem>>, vector<1x32xf32>
    %4 = vector.broadcast %3 : vector<1x32xf32> to vector<4x32xf32>
    %5 = arith.mulf %2, %4 : vector<4x32xf32>
    %c0_5 = arith.constant 0 : index
    %c0_6 = arith.constant 0 : index
    %6 = vector.load %arg6[%c0_5, %c0_6] : memref<1x32xf32, #tpu.memory_space<vmem>>, vector<1x32xf32>
    %7 = vector.broadcast %6 : vector<1x32xf32> to vector<4x32xf32>
    %8 = arith.addf %5, %7 : vector<4x32xf32>
    %cst_7 = arith.constant 0.000000e+00 : f32
    %9 = vector.broadcast %cst_7 : f32 to vector<4x32xf32>
    %10 = arith.maximumf %8, %9 : vector<4x32xf32>
    %11 = arith.truncf %10 : vector<4x32xf32> to vector<4x32xbf16>
    %c0_8 = arith.constant 0 : index
    %c0_9 = arith.constant 0 : index
    %12 = vector.load %arg7[%c0_8, %c0_9] : memref<4x32xbf16, #tpu.memory_space<vmem>>, vector<4x32xbf16>
    tpu.vector_store %arg7[%c0_8, %c0_9], %11 {strides = array<i32>} : memref<4x32xbf16, #tpu.memory_space<vmem>>, vector<4x32xbf16>,
    return
  }
  func.func @transform_0(%arg0: i32, %arg1: i32, %arg2: i32) -> (i32, i32) {
    %c0_i32 = arith.constant 0 : i32
    return %arg0, %arg2 : i32, i32
  }
  func.func @transform_1(%arg0: i32, %arg1: i32, %arg2: i32) -> (i32, i32) {
    %c0_i32 = arith.constant 0 : i32
    return %arg2, %arg1 : i32, i32
  }
  func.func @transform_2(%arg0: i32, %arg1: i32, %arg2: i32) -> (i32, i32) {
    %c0_i32 = arith.constant 0 : i32
    %c0_i32_0 = arith.constant 0 : i32
    return %c0_i32, %arg1 : i32, i32
  }
  func.func @transform_3(%arg0: i32, %arg1: i32, %arg2: i32) -> (i32, i32) {
    %c0_i32 = arith.constant 0 : i32
    %c0_i32_0 = arith.constant 0 : i32
    return %c0_i32, %arg1 : i32, i32
  }
  func.func @transform_4(%arg0: i32, %arg1: i32, %arg2: i32) -> (i32, i32) {
    %c0_i32 = arith.constant 0 : i32
    return %arg0, %arg1 : i32, i32
  }
}

module attributes {stable_mosaic.version = 11 : i64} {
  func.func @_mm_kernel(%arg0: i32, %arg1: i32, %arg2: i32, %arg3: memref<4x32xbf16, #tpu.memory_space<vmem>>, %arg4: memref<32x16xbf16, #tpu.memory_space<vmem>>, %arg5: memref<1x16xf32, #tpu.memory_space<vmem>>, %arg6: memref<1x16xf32, #tpu.memory_space<vmem>>, %arg7: memref<4x16xbf16, #tpu.memory_space<vmem>>) attributes {dimension_semantics = [#tpu.dimension_semantics<parallel>, #tpu.dimension_semantics<parallel>, #tpu.dimension_semantics<arbitrary>], iteration_bounds = array<i64: 1, 1, 1>, scalar_prefetch = 0 : i64, scratch_operands = 0 : i64, tpu.core_type = #tpu.core_type<tc>, window_params = [{transform_indices = @transform_0, window_bounds = array<i64: 4, 32>}, {transform_indices = @transform_1, window_bounds = array<i64: 32, 16>}, {transform_indices = @transform_2, window_bounds = array<i64: 1, 16>}, {transform_indices = @transform_3, window_bounds = array<i64: 1, 16>}, {transform_indices = @transform_4, window_bounds = array<i64: 4, 16>}]} {
    %c0 = arith.constant 0 : index
    %c0_0 = arith.constant 0 : index
    %0 = vector.load %arg3[%c0, %c0_0] : memref<4x32xbf16, #tpu.memory_space<vmem>>, vector<4x32xbf16>
    %c0_1 = arith.constant 0 : index
    %c0_2 = arith.constant 0 : index
    %1 = vector.load %arg4[%c0_1, %c0_2] : memref<32x16xbf16, #tpu.memory_space<vmem>>, vector<32x16xbf16>
    %cst = arith.constant dense<0.000000e+00> : vector<4x16xf32>
    %2 = tpu.matmul %0, %1, %cst {dimension_numbers = #tpu.dot_dimension_numbers<[1], [0], [0], [1], [0, 0, 1, 1], [], []>} : vector<4x32xbf16>, vector<32x16xbf16>, vector<4x16xf32> -> vector<4x16xf32>
    %c0_3 = arith.constant 0 : index
    %c0_4 = arith.constant 0 : index
    %3 = vector.load %arg5[%c0_3, %c0_4] : memref<1x16xf32, #tpu.memory_space<vmem>>, vector<1x16xf32>
    %4 = vector.broadcast %3 : vector<1x16xf32> to vector<4x16xf32>
    %5 = arith.mulf %2, %4 : vector<4x16xf32>
    %c0_5 = arith.constant 0 : index
    %c0_6 = arith.constant 0 : index
    %6 = vector.load %arg6[%c0_5, %c0_6] : memref<1x16xf32, #tpu.memory_space<vmem>>, vector<1x16xf32>
    %7 = vector.broadcast %6 : vector<1x16xf32> to vector<4x16xf32>
    %8 = arith.addf %5, %7 : vector<4x16xf32>
    %cst_7 = arith.constant 0.000000e+00 : f32
    %9 = vector.broadcast %cst_7 : f32 to vector<4x16xf32>
    %10 = arith.maximumf %8, %9 : vector<4x16xf32>
    %11 = arith.truncf %10 : vector<4x16xf32> to vector<4x16xbf16>
    %c0_8 = arith.constant 0 : index
    %c0_9 = arith.constant 0 : index
    %12 = vector.load %arg7[%c0_8, %c0_9] : memref<4x16xbf16, #tpu.memory_space<vmem>>, vector<4x16xbf16>
    tpu.vector_store %arg7[%c0_8, %c0_9], %11 {strides = array<i32>} : memref<4x16xbf16, #tpu.memory_space<vmem>>, vector<4x16xbf16>,
    return
  }
  func.func @transform_0(%arg0: i32, %arg1: i32, %arg2: i32) -> (i32, i32) {
    %c0_i32 = arith.constant 0 : i32
    return %arg0, %arg2 : i32, i32
  }
  func.func @transform_1(%arg0: i32, %arg1: i32, %arg2: i32) -> (i32, i32) {
    %c0_i32 = arith.constant 0 : i32
    return %arg2, %arg1 : i32, i32
  }
  func.func @transform_2(%arg0: i32, %arg1: i32, %arg2: i32) -> (i32, i32) {
    %c0_i32 = arith.constant 0 : i32
    %c0_i32_0 = arith.constant 0 : i32
    return %c0_i32, %arg1 : i32, i32
  }
  func.func @transform_3(%arg0: i32, %arg1: i32, %arg2: i32) -> (i32, i32) {
    %c0_i32 = arith.constant 0 : i32
    %c0_i32_0 = arith.constant 0 : i32
    return %c0_i32, %arg1 : i32, i32
  }
  func.func @transform_4(%arg0: i32, %arg1: i32, %arg2: i32) -> (i32, i32) {
    %c0_i32 = arith.constant 0 : i32
    return %arg0, %arg1 : i32, i32
  }
}

module attributes {stable_mosaic.version = 11 : i64} {
  func.func @_mm_kernel(%arg0: i32, %arg1: i32, %arg2: i32, %arg3: memref<256x81xbf16, #tpu.memory_space<vmem>>, %arg4: memref<81x64xbf16, #tpu.memory_space<vmem>>, %arg5: memref<1x64xf32, #tpu.memory_space<vmem>>, %arg6: memref<1x64xf32, #tpu.memory_space<vmem>>, %arg7: memref<256x64xbf16, #tpu.memory_space<vmem>>) attributes {dimension_semantics = [#tpu.dimension_semantics<parallel>, #tpu.dimension_semantics<parallel>, #tpu.dimension_semantics<arbitrary>], iteration_bounds = array<i64: 1, 1, 1>, scalar_prefetch = 0 : i64, scratch_operands = 0 : i64, tpu.core_type = #tpu.core_type<tc>, window_params = [{transform_indices = @transform_0, window_bounds = array<i64: 256, 81>}, {transform_indices = @transform_1, window_bounds = array<i64: 81, 64>}, {transform_indices = @transform_2, window_bounds = array<i64: 1, 64>}, {transform_indices = @transform_3, window_bounds = array<i64: 1, 64>}, {transform_indices = @transform_4, window_bounds = array<i64: 256, 64>}]} {
    %c0 = arith.constant 0 : index
    %c0_0 = arith.constant 0 : index
    %0 = vector.load %arg3[%c0, %c0_0] : memref<256x81xbf16, #tpu.memory_space<vmem>>, vector<256x81xbf16>
    %c0_1 = arith.constant 0 : index
    %c0_2 = arith.constant 0 : index
    %1 = vector.load %arg4[%c0_1, %c0_2] : memref<81x64xbf16, #tpu.memory_space<vmem>>, vector<81x64xbf16>
    %cst = arith.constant dense<0.000000e+00> : vector<256x64xf32>
    %2 = tpu.matmul %0, %1, %cst {dimension_numbers = #tpu.dot_dimension_numbers<[1], [0], [0], [1], [0, 0, 1, 1], [], []>} : vector<256x81xbf16>, vector<81x64xbf16>, vector<256x64xf32> -> vector<256x64xf32>
    %c0_3 = arith.constant 0 : index
    %c0_4 = arith.constant 0 : index
    %3 = vector.load %arg5[%c0_3, %c0_4] : memref<1x64xf32, #tpu.memory_space<vmem>>, vector<1x64xf32>
    %4 = vector.broadcast %3 : vector<1x64xf32> to vector<256x64xf32>
    %5 = arith.mulf %2, %4 : vector<256x64xf32>
    %c0_5 = arith.constant 0 : index
    %c0_6 = arith.constant 0 : index
    %6 = vector.load %arg6[%c0_5, %c0_6] : memref<1x64xf32, #tpu.memory_space<vmem>>, vector<1x64xf32>
    %7 = vector.broadcast %6 : vector<1x64xf32> to vector<256x64xf32>
    %8 = arith.addf %5, %7 : vector<256x64xf32>
    %cst_7 = arith.constant 0.000000e+00 : f32
    %9 = vector.broadcast %cst_7 : f32 to vector<256x64xf32>
    %10 = arith.maximumf %8, %9 : vector<256x64xf32>
    %11 = arith.truncf %10 : vector<256x64xf32> to vector<256x64xbf16>
    %c0_8 = arith.constant 0 : index
    %c0_9 = arith.constant 0 : index
    %12 = vector.load %arg7[%c0_8, %c0_9] : memref<256x64xbf16, #tpu.memory_space<vmem>>, vector<256x64xbf16>
    tpu.vector_store %arg7[%c0_8, %c0_9], %11 {strides = array<i32>} : memref<256x64xbf16, #tpu.memory_space<vmem>>, vector<256x64xbf16>,
    return
  }
  func.func @transform_0(%arg0: i32, %arg1: i32, %arg2: i32) -> (i32, i32) {
    %c0_i32 = arith.constant 0 : i32
    return %arg0, %arg2 : i32, i32
  }
  func.func @transform_1(%arg0: i32, %arg1: i32, %arg2: i32) -> (i32, i32) {
    %c0_i32 = arith.constant 0 : i32
    return %arg2, %arg1 : i32, i32
  }
  func.func @transform_2(%arg0: i32, %arg1: i32, %arg2: i32) -> (i32, i32) {
    %c0_i32 = arith.constant 0 : i32
    %c0_i32_0 = arith.constant 0 : i32
    return %c0_i32, %arg1 : i32, i32
  }
  func.func @transform_3(%arg0: i32, %arg1: i32, %arg2: i32) -> (i32, i32) {
    %c0_i32 = arith.constant 0 : i32
    %c0_i32_0 = arith.constant 0 : i32
    return %c0_i32, %arg1 : i32, i32
  }
  func.func @transform_4(%arg0: i32, %arg1: i32, %arg2: i32) -> (i32, i32) {
    %c0_i32 = arith.constant 0 : i32
    return %arg0, %arg1 : i32, i32
  }
}

module attributes {stable_mosaic.version = 11 : i64} {
  func.func @_mm_kernel(%arg0: i32, %arg1: i32, %arg2: i32, %arg3: memref<256x1728xbf16, #tpu.memory_space<vmem>>, %arg4: memref<1728x16xbf16, #tpu.memory_space<vmem>>, %arg5: memref<1x16xf32, #tpu.memory_space<vmem>>, %arg6: memref<1x16xf32, #tpu.memory_space<vmem>>, %arg7: memref<256x16xbf16, #tpu.memory_space<vmem>>, %arg8: memref<256x16xbf16, #tpu.memory_space<vmem>>) attributes {dimension_semantics = [#tpu.dimension_semantics<parallel>, #tpu.dimension_semantics<parallel>, #tpu.dimension_semantics<arbitrary>], iteration_bounds = array<i64: 1, 1, 1>, scalar_prefetch = 0 : i64, scratch_operands = 0 : i64, tpu.core_type = #tpu.core_type<tc>, window_params = [{transform_indices = @transform_0, window_bounds = array<i64: 256, 1728>}, {transform_indices = @transform_1, window_bounds = array<i64: 1728, 16>}, {transform_indices = @transform_2, window_bounds = array<i64: 1, 16>}, {transform_indices = @transform_3, window_bounds = array<i64: 1, 16>}, {transform_indices = @transform_4, window_bounds = array<i64: 256, 16>}, {transform_indices = @transform_5, window_bounds = array<i64: 256, 16>}]} {
    %c0 = arith.constant 0 : index
    %c0_0 = arith.constant 0 : index
    %0 = vector.load %arg3[%c0, %c0_0] : memref<256x1728xbf16, #tpu.memory_space<vmem>>, vector<256x1728xbf16>
    %c0_1 = arith.constant 0 : index
    %c0_2 = arith.constant 0 : index
    %1 = vector.load %arg4[%c0_1, %c0_2] : memref<1728x16xbf16, #tpu.memory_space<vmem>>, vector<1728x16xbf16>
    %cst = arith.constant dense<0.000000e+00> : vector<256x16xf32>
    %2 = tpu.matmul %0, %1, %cst {dimension_numbers = #tpu.dot_dimension_numbers<[1], [0], [0], [1], [0, 0, 1, 1], [], []>} : vector<256x1728xbf16>, vector<1728x16xbf16>, vector<256x16xf32> -> vector<256x16xf32>
    %c0_3 = arith.constant 0 : index
    %c0_4 = arith.constant 0 : index
    %3 = vector.load %arg5[%c0_3, %c0_4] : memref<1x16xf32, #tpu.memory_space<vmem>>, vector<1x16xf32>
    %4 = vector.broadcast %3 : vector<1x16xf32> to vector<256x16xf32>
    %5 = arith.mulf %2, %4 : vector<256x16xf32>
    %c0_5 = arith.constant 0 : index
    %c0_6 = arith.constant 0 : index
    %6 = vector.load %arg6[%c0_5, %c0_6] : memref<1x16xf32, #tpu.memory_space<vmem>>, vector<1x16xf32>
    %7 = vector.broadcast %6 : vector<1x16xf32> to vector<256x16xf32>
    %8 = arith.addf %5, %7 : vector<256x16xf32>
    %cst_7 = arith.constant 0.000000e+00 : f32
    %9 = vector.broadcast %cst_7 : f32 to vector<256x16xf32>
    %10 = arith.maximumf %8, %9 : vector<256x16xf32>
    %c0_8 = arith.constant 0 : index
    %c0_9 = arith.constant 0 : index
    %11 = vector.load %arg7[%c0_8, %c0_9] : memref<256x16xbf16, #tpu.memory_space<vmem>>, vector<256x16xbf16>
    %12 = arith.extf %11 : vector<256x16xbf16> to vector<256x16xf32>
    %13 = arith.addf %10, %12 : vector<256x16xf32>
    %14 = arith.truncf %13 : vector<256x16xf32> to vector<256x16xbf16>
    %c0_10 = arith.constant 0 : index
    %c0_11 = arith.constant 0 : index
    %15 = vector.load %arg8[%c0_10, %c0_11] : memref<256x16xbf16, #tpu.memory_space<vmem>>, vector<256x16xbf16>
    tpu.vector_store %arg8[%c0_10, %c0_11], %14 {strides = array<i32>} : memref<256x16xbf16, #tpu.memory_space<vmem>>, vector<256x16xbf16>,
    return
  }
  func.func @transform_0(%arg0: i32, %arg1: i32, %arg2: i32) -> (i32, i32) {
    %c0_i32 = arith.constant 0 : i32
    return %arg0, %arg2 : i32, i32
  }
  func.func @transform_1(%arg0: i32, %arg1: i32, %arg2: i32) -> (i32, i32) {
    %c0_i32 = arith.constant 0 : i32
    return %arg2, %arg1 : i32, i32
  }
  func.func @transform_2(%arg0: i32, %arg1: i32, %arg2: i32) -> (i32, i32) {
    %c0_i32 = arith.constant 0 : i32
    %c0_i32_0 = arith.constant 0 : i32
    return %c0_i32, %arg1 : i32, i32
  }
  func.func @transform_3(%arg0: i32, %arg1: i32, %arg2: i32) -> (i32, i32) {
    %c0_i32 = arith.constant 0 : i32
    %c0_i32_0 = arith.constant 0 : i32
    return %c0_i32, %arg1 : i32, i32
  }
  func.func @transform_4(%arg0: i32, %arg1: i32, %arg2: i32) -> (i32, i32) {
    %c0_i32 = arith.constant 0 : i32
    return %arg0, %arg1 : i32, i32
  }
  func.func @transform_5(%arg0: i32, %arg1: i32, %arg2: i32) -> (i32, i32) {
    %c0_i32 = arith.constant 0 : i32
    return %arg0, %arg1 : i32, i32
  }
}

module attributes {stable_mosaic.version = 11 : i64} {
  func.func @_mm_kernel(%arg0: i32, %arg1: i32, %arg2: i32, %arg3: memref<32x16xbf16, #tpu.memory_space<vmem>>, %arg4: memref<16x16xbf16, #tpu.memory_space<vmem>>, %arg5: memref<1x16xf32, #tpu.memory_space<vmem>>, %arg6: memref<1x16xf32, #tpu.memory_space<vmem>>, %arg7: memref<32x16xbf16, #tpu.memory_space<vmem>>) attributes {dimension_semantics = [#tpu.dimension_semantics<parallel>, #tpu.dimension_semantics<parallel>, #tpu.dimension_semantics<arbitrary>], iteration_bounds = array<i64: 1, 1, 1>, scalar_prefetch = 0 : i64, scratch_operands = 0 : i64, tpu.core_type = #tpu.core_type<tc>, window_params = [{transform_indices = @transform_0, window_bounds = array<i64: 32, 16>}, {transform_indices = @transform_1, window_bounds = array<i64: 16, 16>}, {transform_indices = @transform_2, window_bounds = array<i64: 1, 16>}, {transform_indices = @transform_3, window_bounds = array<i64: 1, 16>}, {transform_indices = @transform_4, window_bounds = array<i64: 32, 16>}]} {
    %c0 = arith.constant 0 : index
    %c0_0 = arith.constant 0 : index
    %0 = vector.load %arg3[%c0, %c0_0] : memref<32x16xbf16, #tpu.memory_space<vmem>>, vector<32x16xbf16>
    %c0_1 = arith.constant 0 : index
    %c0_2 = arith.constant 0 : index
    %1 = vector.load %arg4[%c0_1, %c0_2] : memref<16x16xbf16, #tpu.memory_space<vmem>>, vector<16x16xbf16>
    %cst = arith.constant dense<0.000000e+00> : vector<32x16xf32>
    %2 = tpu.matmul %0, %1, %cst {dimension_numbers = #tpu.dot_dimension_numbers<[1], [0], [0], [1], [0, 0, 1, 1], [], []>} : vector<32x16xbf16>, vector<16x16xbf16>, vector<32x16xf32> -> vector<32x16xf32>
    %c0_3 = arith.constant 0 : index
    %c0_4 = arith.constant 0 : index
    %3 = vector.load %arg5[%c0_3, %c0_4] : memref<1x16xf32, #tpu.memory_space<vmem>>, vector<1x16xf32>
    %4 = vector.broadcast %3 : vector<1x16xf32> to vector<32x16xf32>
    %5 = arith.mulf %2, %4 : vector<32x16xf32>
    %c0_5 = arith.constant 0 : index
    %c0_6 = arith.constant 0 : index
    %6 = vector.load %arg6[%c0_5, %c0_6] : memref<1x16xf32, #tpu.memory_space<vmem>>, vector<1x16xf32>
    %7 = vector.broadcast %6 : vector<1x16xf32> to vector<32x16xf32>
    %8 = arith.addf %5, %7 : vector<32x16xf32>
    %9 = arith.truncf %8 : vector<32x16xf32> to vector<32x16xbf16>
    %c0_7 = arith.constant 0 : index
    %c0_8 = arith.constant 0 : index
    %10 = vector.load %arg7[%c0_7, %c0_8] : memref<32x16xbf16, #tpu.memory_space<vmem>>, vector<32x16xbf16>
    tpu.vector_store %arg7[%c0_7, %c0_8], %9 {strides = array<i32>} : memref<32x16xbf16, #tpu.memory_space<vmem>>, vector<32x16xbf16>,
    return
  }
  func.func @transform_0(%arg0: i32, %arg1: i32, %arg2: i32) -> (i32, i32) {
    %c0_i32 = arith.constant 0 : i32
    return %arg0, %arg2 : i32, i32
  }
  func.func @transform_1(%arg0: i32, %arg1: i32, %arg2: i32) -> (i32, i32) {
    %c0_i32 = arith.constant 0 : i32
    return %arg2, %arg1 : i32, i32
  }
  func.func @transform_2(%arg0: i32, %arg1: i32, %arg2: i32) -> (i32, i32) {
    %c0_i32 = arith.constant 0 : i32
    %c0_i32_0 = arith.constant 0 : i32
    return %c0_i32, %arg1 : i32, i32
  }
  func.func @transform_3(%arg0: i32, %arg1: i32, %arg2: i32) -> (i32, i32) {
    %c0_i32 = arith.constant 0 : i32
    %c0_i32_0 = arith.constant 0 : i32
    return %c0_i32, %arg1 : i32, i32
  }
  func.func @transform_4(%arg0: i32, %arg1: i32, %arg2: i32) -> (i32, i32) {
    %c0_i32 = arith.constant 0 : i32
    return %arg0, %arg1 : i32, i32
  }
}

module attributes {stable_mosaic.version = 11 : i64} {
  func.func @_mm_kernel(%arg0: i32, %arg1: i32, %arg2: i32, %arg3: memref<32x4xbf16, #tpu.memory_space<vmem>>, %arg4: memref<4x16xbf16, #tpu.memory_space<vmem>>, %arg5: memref<1x16xf32, #tpu.memory_space<vmem>>, %arg6: memref<1x16xf32, #tpu.memory_space<vmem>>, %arg7: memref<32x16xbf16, #tpu.memory_space<vmem>>, %arg8: memref<32x16xbf16, #tpu.memory_space<vmem>>) attributes {dimension_semantics = [#tpu.dimension_semantics<parallel>, #tpu.dimension_semantics<parallel>, #tpu.dimension_semantics<arbitrary>], iteration_bounds = array<i64: 1, 1, 1>, scalar_prefetch = 0 : i64, scratch_operands = 0 : i64, tpu.core_type = #tpu.core_type<tc>, window_params = [{transform_indices = @transform_0, window_bounds = array<i64: 32, 4>}, {transform_indices = @transform_1, window_bounds = array<i64: 4, 16>}, {transform_indices = @transform_2, window_bounds = array<i64: 1, 16>}, {transform_indices = @transform_3, window_bounds = array<i64: 1, 16>}, {transform_indices = @transform_4, window_bounds = array<i64: 32, 16>}, {transform_indices = @transform_5, window_bounds = array<i64: 32, 16>}]} {
    %c0 = arith.constant 0 : index
    %c0_0 = arith.constant 0 : index
    %0 = vector.load %arg3[%c0, %c0_0] : memref<32x4xbf16, #tpu.memory_space<vmem>>, vector<32x4xbf16>
    %c0_1 = arith.constant 0 : index
    %c0_2 = arith.constant 0 : index
    %1 = vector.load %arg4[%c0_1, %c0_2] : memref<4x16xbf16, #tpu.memory_space<vmem>>, vector<4x16xbf16>
    %cst = arith.constant dense<0.000000e+00> : vector<32x16xf32>
    %2 = tpu.matmul %0, %1, %cst {dimension_numbers = #tpu.dot_dimension_numbers<[1], [0], [0], [1], [0, 0, 1, 1], [], []>} : vector<32x4xbf16>, vector<4x16xbf16>, vector<32x16xf32> -> vector<32x16xf32>
    %c0_3 = arith.constant 0 : index
    %c0_4 = arith.constant 0 : index
    %3 = vector.load %arg5[%c0_3, %c0_4] : memref<1x16xf32, #tpu.memory_space<vmem>>, vector<1x16xf32>
    %4 = vector.broadcast %3 : vector<1x16xf32> to vector<32x16xf32>
    %5 = arith.mulf %2, %4 : vector<32x16xf32>
    %c0_5 = arith.constant 0 : index
    %c0_6 = arith.constant 0 : index
    %6 = vector.load %arg6[%c0_5, %c0_6] : memref<1x16xf32, #tpu.memory_space<vmem>>, vector<1x16xf32>
    %7 = vector.broadcast %6 : vector<1x16xf32> to vector<32x16xf32>
    %8 = arith.addf %5, %7 : vector<32x16xf32>
    %c0_7 = arith.constant 0 : index
    %c0_8 = arith.constant 0 : index
    %9 = vector.load %arg7[%c0_7, %c0_8] : memref<32x16xbf16, #tpu.memory_space<vmem>>, vector<32x16xbf16>
    %10 = arith.extf %9 : vector<32x16xbf16> to vector<32x16xf32>
    %11 = arith.addf %8, %10 : vector<32x16xf32>
    %cst_9 = arith.constant 0.000000e+00 : f32
    %12 = vector.broadcast %cst_9 : f32 to vector<32x16xf32>
    %13 = arith.maximumf %11, %12 : vector<32x16xf32>
    %14 = arith.truncf %13 : vector<32x16xf32> to vector<32x16xbf16>
    %c0_10 = arith.constant 0 : index
    %c0_11 = arith.constant 0 : index
    %15 = vector.load %arg8[%c0_10, %c0_11] : memref<32x16xbf16, #tpu.memory_space<vmem>>, vector<32x16xbf16>
    tpu.vector_store %arg8[%c0_10, %c0_11], %14 {strides = array<i32>} : memref<32x16xbf16, #tpu.memory_space<vmem>>, vector<32x16xbf16>,
    return
  }
  func.func @transform_0(%arg0: i32, %arg1: i32, %arg2: i32) -> (i32, i32) {
    %c0_i32 = arith.constant 0 : i32
    return %arg0, %arg2 : i32, i32
  }
  func.func @transform_1(%arg0: i32, %arg1: i32, %arg2: i32) -> (i32, i32) {
    %c0_i32 = arith.constant 0 : i32
    return %arg2, %arg1 : i32, i32
  }
  func.func @transform_2(%arg0: i32, %arg1: i32, %arg2: i32) -> (i32, i32) {
    %c0_i32 = arith.constant 0 : i32
    %c0_i32_0 = arith.constant 0 : i32
    return %c0_i32, %arg1 : i32, i32
  }
  func.func @transform_3(%arg0: i32, %arg1: i32, %arg2: i32) -> (i32, i32) {
    %c0_i32 = arith.constant 0 : i32
    %c0_i32_0 = arith.constant 0 : i32
    return %c0_i32, %arg1 : i32, i32
  }
  func.func @transform_4(%arg0: i32, %arg1: i32, %arg2: i32) -> (i32, i32) {
    %c0_i32 = arith.constant 0 : i32
    return %arg0, %arg1 : i32, i32
  }
  func.func @transform_5(%arg0: i32, %arg1: i32, %arg2: i32) -> (i32, i32) {
    %c0_i32 = arith.constant 0 : i32
    return %arg0, %arg1 : i32, i32
  }
}

module attributes {stable_mosaic.version = 11 : i64} {
  func.func @_mm_kernel(%arg0: i32, %arg1: i32, %arg2: i32, %arg3: memref<4x16xbf16, #tpu.memory_space<vmem>>, %arg4: memref<16x32xbf16, #tpu.memory_space<vmem>>, %arg5: memref<1x32xf32, #tpu.memory_space<vmem>>, %arg6: memref<1x32xf32, #tpu.memory_space<vmem>>, %arg7: memref<4x32xbf16, #tpu.memory_space<vmem>>) attributes {dimension_semantics = [#tpu.dimension_semantics<parallel>, #tpu.dimension_semantics<parallel>, #tpu.dimension_semantics<arbitrary>], iteration_bounds = array<i64: 1, 1, 1>, scalar_prefetch = 0 : i64, scratch_operands = 0 : i64, tpu.core_type = #tpu.core_type<tc>, window_params = [{transform_indices = @transform_0, window_bounds = array<i64: 4, 16>}, {transform_indices = @transform_1, window_bounds = array<i64: 16, 32>}, {transform_indices = @transform_2, window_bounds = array<i64: 1, 32>}, {transform_indices = @transform_3, window_bounds = array<i64: 1, 32>}, {transform_indices = @transform_4, window_bounds = array<i64: 4, 32>}]} {
    %c0 = arith.constant 0 : index
    %c0_0 = arith.constant 0 : index
    %0 = vector.load %arg3[%c0, %c0_0] : memref<4x16xbf16, #tpu.memory_space<vmem>>, vector<4x16xbf16>
    %c0_1 = arith.constant 0 : index
    %c0_2 = arith.constant 0 : index
    %1 = vector.load %arg4[%c0_1, %c0_2] : memref<16x32xbf16, #tpu.memory_space<vmem>>, vector<16x32xbf16>
    %cst = arith.constant dense<0.000000e+00> : vector<4x32xf32>
    %2 = tpu.matmul %0, %1, %cst {dimension_numbers = #tpu.dot_dimension_numbers<[1], [0], [0], [1], [0, 0, 1, 1], [], []>} : vector<4x16xbf16>, vector<16x32xbf16>, vector<4x32xf32> -> vector<4x32xf32>
    %c0_3 = arith.constant 0 : index
    %c0_4 = arith.constant 0 : index
    %3 = vector.load %arg5[%c0_3, %c0_4] : memref<1x32xf32, #tpu.memory_space<vmem>>, vector<1x32xf32>
    %4 = vector.broadcast %3 : vector<1x32xf32> to vector<4x32xf32>
    %5 = arith.mulf %2, %4 : vector<4x32xf32>
    %c0_5 = arith.constant 0 : index
    %c0_6 = arith.constant 0 : index
    %6 = vector.load %arg6[%c0_5, %c0_6] : memref<1x32xf32, #tpu.memory_space<vmem>>, vector<1x32xf32>
    %7 = vector.broadcast %6 : vector<1x32xf32> to vector<4x32xf32>
    %8 = arith.addf %5, %7 : vector<4x32xf32>
    %9 = arith.truncf %8 : vector<4x32xf32> to vector<4x32xbf16>
    %c0_7 = arith.constant 0 : index
    %c0_8 = arith.constant 0 : index
    %10 = vector.load %arg7[%c0_7, %c0_8] : memref<4x32xbf16, #tpu.memory_space<vmem>>, vector<4x32xbf16>
    tpu.vector_store %arg7[%c0_7, %c0_8], %9 {strides = array<i32>} : memref<4x32xbf16, #tpu.memory_space<vmem>>, vector<4x32xbf16>,
    return
  }
  func.func @transform_0(%arg0: i32, %arg1: i32, %arg2: i32) -> (i32, i32) {
    %c0_i32 = arith.constant 0 : i32
    return %arg0, %arg2 : i32, i32
  }
  func.func @transform_1(%arg0: i32, %arg1: i32, %arg2: i32) -> (i32, i32) {
    %c0_i32 = arith.constant 0 : i32
    return %arg2, %arg1 : i32, i32
  }
  func.func @transform_2(%arg0: i32, %arg1: i32, %arg2: i32) -> (i32, i32) {
    %c0_i32 = arith.constant 0 : i32
    %c0_i32_0 = arith.constant 0 : i32
    return %c0_i32, %arg1 : i32, i32
  }
  func.func @transform_3(%arg0: i32, %arg1: i32, %arg2: i32) -> (i32, i32) {
    %c0_i32 = arith.constant 0 : i32
    %c0_i32_0 = arith.constant 0 : i32
    return %c0_i32, %arg1 : i32, i32
  }
  func.func @transform_4(%arg0: i32, %arg1: i32, %arg2: i32) -> (i32, i32) {
    %c0_i32 = arith.constant 0 : i32
    return %arg0, %arg1 : i32, i32
  }
}

module attributes {stable_mosaic.version = 11 : i64} {
  func.func @_mm_kernel(%arg0: i32, %arg1: i32, %arg2: i32, %arg3: memref<4x4xbf16, #tpu.memory_space<vmem>>, %arg4: memref<4x32xbf16, #tpu.memory_space<vmem>>, %arg5: memref<1x32xf32, #tpu.memory_space<vmem>>, %arg6: memref<1x32xf32, #tpu.memory_space<vmem>>, %arg7: memref<4x32xbf16, #tpu.memory_space<vmem>>, %arg8: memref<4x32xbf16, #tpu.memory_space<vmem>>) attributes {dimension_semantics = [#tpu.dimension_semantics<parallel>, #tpu.dimension_semantics<parallel>, #tpu.dimension_semantics<arbitrary>], iteration_bounds = array<i64: 1, 1, 1>, scalar_prefetch = 0 : i64, scratch_operands = 0 : i64, tpu.core_type = #tpu.core_type<tc>, window_params = [{transform_indices = @transform_0, window_bounds = array<i64: 4, 4>}, {transform_indices = @transform_1, window_bounds = array<i64: 4, 32>}, {transform_indices = @transform_2, window_bounds = array<i64: 1, 32>}, {transform_indices = @transform_3, window_bounds = array<i64: 1, 32>}, {transform_indices = @transform_4, window_bounds = array<i64: 4, 32>}, {transform_indices = @transform_5, window_bounds = array<i64: 4, 32>}]} {
    %c0 = arith.constant 0 : index
    %c0_0 = arith.constant 0 : index
    %0 = vector.load %arg3[%c0, %c0_0] : memref<4x4xbf16, #tpu.memory_space<vmem>>, vector<4x4xbf16>
    %c0_1 = arith.constant 0 : index
    %c0_2 = arith.constant 0 : index
    %1 = vector.load %arg4[%c0_1, %c0_2] : memref<4x32xbf16, #tpu.memory_space<vmem>>, vector<4x32xbf16>
    %cst = arith.constant dense<0.000000e+00> : vector<4x32xf32>
    %2 = tpu.matmul %0, %1, %cst {dimension_numbers = #tpu.dot_dimension_numbers<[1], [0], [0], [1], [0, 0, 1, 1], [], []>} : vector<4x4xbf16>, vector<4x32xbf16>, vector<4x32xf32> -> vector<4x32xf32>
    %c0_3 = arith.constant 0 : index
    %c0_4 = arith.constant 0 : index
    %3 = vector.load %arg5[%c0_3, %c0_4] : memref<1x32xf32, #tpu.memory_space<vmem>>, vector<1x32xf32>
    %4 = vector.broadcast %3 : vector<1x32xf32> to vector<4x32xf32>
    %5 = arith.mulf %2, %4 : vector<4x32xf32>
    %c0_5 = arith.constant 0 : index
    %c0_6 = arith.constant 0 : index
    %6 = vector.load %arg6[%c0_5, %c0_6] : memref<1x32xf32, #tpu.memory_space<vmem>>, vector<1x32xf32>
    %7 = vector.broadcast %6 : vector<1x32xf32> to vector<4x32xf32>
    %8 = arith.addf %5, %7 : vector<4x32xf32>
    %c0_7 = arith.constant 0 : index
    %c0_8 = arith.constant 0 : index
    %9 = vector.load %arg7[%c0_7, %c0_8] : memref<4x32xbf16, #tpu.memory_space<vmem>>, vector<4x32xbf16>
    %10 = arith.extf %9 : vector<4x32xbf16> to vector<4x32xf32>
    %11 = arith.addf %8, %10 : vector<4x32xf32>
    %cst_9 = arith.constant 0.000000e+00 : f32
    %12 = vector.broadcast %cst_9 : f32 to vector<4x32xf32>
    %13 = arith.maximumf %11, %12 : vector<4x32xf32>
    %14 = arith.truncf %13 : vector<4x32xf32> to vector<4x32xbf16>
    %c0_10 = arith.constant 0 : index
    %c0_11 = arith.constant 0 : index
    %15 = vector.load %arg8[%c0_10, %c0_11] : memref<4x32xbf16, #tpu.memory_space<vmem>>, vector<4x32xbf16>
    tpu.vector_store %arg8[%c0_10, %c0_11], %14 {strides = array<i32>} : memref<4x32xbf16, #tpu.memory_space<vmem>>, vector<4x32xbf16>,
    return
  }
  func.func @transform_0(%arg0: i32, %arg1: i32, %arg2: i32) -> (i32, i32) {
    %c0_i32 = arith.constant 0 : i32
    return %arg0, %arg2 : i32, i32
  }
  func.func @transform_1(%arg0: i32, %arg1: i32, %arg2: i32) -> (i32, i32) {
    %c0_i32 = arith.constant 0 : i32
    return %arg2, %arg1 : i32, i32
  }
  func.func @transform_2(%arg0: i32, %arg1: i32, %arg2: i32) -> (i32, i32) {
    %c0_i32 = arith.constant 0 : i32
    %c0_i32_0 = arith.constant 0 : i32
    return %c0_i32, %arg1 : i32, i32
  }
  func.func @transform_3(%arg0: i32, %arg1: i32, %arg2: i32) -> (i32, i32) {
    %c0_i32 = arith.constant 0 : i32
    %c0_i32_0 = arith.constant 0 : i32
    return %c0_i32, %arg1 : i32, i32
  }
  func.func @transform_4(%arg0: i32, %arg1: i32, %arg2: i32) -> (i32, i32) {
    %c0_i32 = arith.constant 0 : i32
    return %arg0, %arg1 : i32, i32
  }
  func.func @transform_5(%arg0: i32, %arg1: i32, %arg2: i32) -> (i32, i32) {
    %c0_i32 = arith.constant 0 : i32
    return %arg0, %arg1 : i32, i32
  }
}

module attributes {stable_mosaic.version = 11 : i64} {
  func.func @_mm_kernel(%arg0: i32, %arg1: i32, %arg2: i32, %arg3: memref<4x8xbf16, #tpu.memory_space<vmem>>, %arg4: memref<8x32xbf16, #tpu.memory_space<vmem>>, %arg5: memref<1x32xf32, #tpu.memory_space<vmem>>, %arg6: memref<1x32xf32, #tpu.memory_space<vmem>>, %arg7: memref<4x32xbf16, #tpu.memory_space<vmem>>, %arg8: memref<4x32xbf16, #tpu.memory_space<vmem>>) attributes {dimension_semantics = [#tpu.dimension_semantics<parallel>, #tpu.dimension_semantics<parallel>, #tpu.dimension_semantics<arbitrary>], iteration_bounds = array<i64: 1, 1, 1>, scalar_prefetch = 0 : i64, scratch_operands = 0 : i64, tpu.core_type = #tpu.core_type<tc>, window_params = [{transform_indices = @transform_0, window_bounds = array<i64: 4, 8>}, {transform_indices = @transform_1, window_bounds = array<i64: 8, 32>}, {transform_indices = @transform_2, window_bounds = array<i64: 1, 32>}, {transform_indices = @transform_3, window_bounds = array<i64: 1, 32>}, {transform_indices = @transform_4, window_bounds = array<i64: 4, 32>}, {transform_indices = @transform_5, window_bounds = array<i64: 4, 32>}]} {
    %c0 = arith.constant 0 : index
    %c0_0 = arith.constant 0 : index
    %0 = vector.load %arg3[%c0, %c0_0] : memref<4x8xbf16, #tpu.memory_space<vmem>>, vector<4x8xbf16>
    %c0_1 = arith.constant 0 : index
    %c0_2 = arith.constant 0 : index
    %1 = vector.load %arg4[%c0_1, %c0_2] : memref<8x32xbf16, #tpu.memory_space<vmem>>, vector<8x32xbf16>
    %cst = arith.constant dense<0.000000e+00> : vector<4x32xf32>
    %2 = tpu.matmul %0, %1, %cst {dimension_numbers = #tpu.dot_dimension_numbers<[1], [0], [0], [1], [0, 0, 1, 1], [], []>} : vector<4x8xbf16>, vector<8x32xbf16>, vector<4x32xf32> -> vector<4x32xf32>
    %c0_3 = arith.constant 0 : index
    %c0_4 = arith.constant 0 : index
    %3 = vector.load %arg5[%c0_3, %c0_4] : memref<1x32xf32, #tpu.memory_space<vmem>>, vector<1x32xf32>
    %4 = vector.broadcast %3 : vector<1x32xf32> to vector<4x32xf32>
    %5 = arith.mulf %2, %4 : vector<4x32xf32>
    %c0_5 = arith.constant 0 : index
    %c0_6 = arith.constant 0 : index
    %6 = vector.load %arg6[%c0_5, %c0_6] : memref<1x32xf32, #tpu.memory_space<vmem>>, vector<1x32xf32>
    %7 = vector.broadcast %6 : vector<1x32xf32> to vector<4x32xf32>
    %8 = arith.addf %5, %7 : vector<4x32xf32>
    %c0_7 = arith.constant 0 : index
    %c0_8 = arith.constant 0 : index
    %9 = vector.load %arg7[%c0_7, %c0_8] : memref<4x32xbf16, #tpu.memory_space<vmem>>, vector<4x32xbf16>
    %10 = arith.extf %9 : vector<4x32xbf16> to vector<4x32xf32>
    %11 = arith.addf %8, %10 : vector<4x32xf32>
    %cst_9 = arith.constant 0.000000e+00 : f32
    %12 = vector.broadcast %cst_9 : f32 to vector<4x32xf32>
    %13 = arith.maximumf %11, %12 : vector<4x32xf32>
    %14 = arith.truncf %13 : vector<4x32xf32> to vector<4x32xbf16>
    %c0_10 = arith.constant 0 : index
    %c0_11 = arith.constant 0 : index
    %15 = vector.load %arg8[%c0_10, %c0_11] : memref<4x32xbf16, #tpu.memory_space<vmem>>, vector<4x32xbf16>
    tpu.vector_store %arg8[%c0_10, %c0_11], %14 {strides = array<i32>} : memref<4x32xbf16, #tpu.memory_space<vmem>>, vector<4x32xbf16>,
    return
  }
  func.func @transform_0(%arg0: i32, %arg1: i32, %arg2: i32) -> (i32, i32) {
    %c0_i32 = arith.constant 0 : i32
    return %arg0, %arg2 : i32, i32
  }
  func.func @transform_1(%arg0: i32, %arg1: i32, %arg2: i32) -> (i32, i32) {
    %c0_i32 = arith.constant 0 : i32
    return %arg2, %arg1 : i32, i32
  }
  func.func @transform_2(%arg0: i32, %arg1: i32, %arg2: i32) -> (i32, i32) {
    %c0_i32 = arith.constant 0 : i32
    %c0_i32_0 = arith.constant 0 : i32
    return %c0_i32, %arg1 : i32, i32
  }
  func.func @transform_3(%arg0: i32, %arg1: i32, %arg2: i32) -> (i32, i32) {
    %c0_i32 = arith.constant 0 : i32
    %c0_i32_0 = arith.constant 0 : i32
    return %c0_i32, %arg1 : i32, i32
  }
  func.func @transform_4(%arg0: i32, %arg1: i32, %arg2: i32) -> (i32, i32) {
    %c0_i32 = arith.constant 0 : i32
    return %arg0, %arg1 : i32, i32
  }
  func.func @transform_5(%arg0: i32, %arg1: i32, %arg2: i32) -> (i32, i32) {
    %c0_i32 = arith.constant 0 : i32
    return %arg0, %arg1 : i32, i32
  }
}

module attributes {stable_mosaic.version = 11 : i64} {
  func.func @_mm_kernel(%arg0: i32, %arg1: i32, %arg2: i32, %arg3: memref<4x8xbf16, #tpu.memory_space<vmem>>, %arg4: memref<8x32xbf16, #tpu.memory_space<vmem>>, %arg5: memref<1x32xf32, #tpu.memory_space<vmem>>, %arg6: memref<1x32xf32, #tpu.memory_space<vmem>>, %arg7: memref<4x32xbf16, #tpu.memory_space<vmem>>, %arg8: memref<4x32xbf16, #tpu.memory_space<vmem>>) attributes {dimension_semantics = [#tpu.dimension_semantics<parallel>, #tpu.dimension_semantics<parallel>, #tpu.dimension_semantics<arbitrary>], iteration_bounds = array<i64: 1, 1, 1>, scalar_prefetch = 0 : i64, scratch_operands = 0 : i64, tpu.core_type = #tpu.core_type<tc>, window_params = [{transform_indices = @transform_0, window_bounds = array<i64: 4, 8>}, {transform_indices = @transform_1, window_bounds = array<i64: 8, 32>}, {transform_indices = @transform_2, window_bounds = array<i64: 1, 32>}, {transform_indices = @transform_3, window_bounds = array<i64: 1, 32>}, {transform_indices = @transform_4, window_bounds = array<i64: 4, 32>}, {transform_indices = @transform_5, window_bounds = array<i64: 4, 32>}]} {
    %c0 = arith.constant 0 : index
    %c0_0 = arith.constant 0 : index
    %0 = vector.load %arg3[%c0, %c0_0] : memref<4x8xbf16, #tpu.memory_space<vmem>>, vector<4x8xbf16>
    %c0_1 = arith.constant 0 : index
    %c0_2 = arith.constant 0 : index
    %1 = vector.load %arg4[%c0_1, %c0_2] : memref<8x32xbf16, #tpu.memory_space<vmem>>, vector<8x32xbf16>
    %cst = arith.constant dense<0.000000e+00> : vector<4x32xf32>
    %2 = tpu.matmul %0, %1, %cst {dimension_numbers = #tpu.dot_dimension_numbers<[1], [0], [0], [1], [0, 0, 1, 1], [], []>} : vector<4x8xbf16>, vector<8x32xbf16>, vector<4x32xf32> -> vector<4x32xf32>
    %c0_3 = arith.constant 0 : index
    %c0_4 = arith.constant 0 : index
    %3 = vector.load %arg5[%c0_3, %c0_4] : memref<1x32xf32, #tpu.memory_space<vmem>>, vector<1x32xf32>
    %4 = vector.broadcast %3 : vector<1x32xf32> to vector<4x32xf32>
    %5 = arith.mulf %2, %4 : vector<4x32xf32>
    %c0_5 = arith.constant 0 : index
    %c0_6 = arith.constant 0 : index
    %6 = vector.load %arg6[%c0_5, %c0_6] : memref<1x32xf32, #tpu.memory_space<vmem>>, vector<1x32xf32>
    %7 = vector.broadcast %6 : vector<1x32xf32> to vector<4x32xf32>
    %8 = arith.addf %5, %7 : vector<4x32xf32>
    %c0_7 = arith.constant 0 : index
    %c0_8 = arith.constant 0 : index
    %9 = vector.load %arg7[%c0_7, %c0_8] : memref<4x32xbf16, #tpu.memory_space<vmem>>, vector<4x32xbf16>
    %10 = arith.extf %9 : vector<4x32xbf16> to vector<4x32xf32>
    %11 = arith.addf %8, %10 : vector<4x32xf32>
    %cst_9 = arith.constant 0.000000e+00 : f32
    %12 = vector.broadcast %cst_9 : f32 to vector<4x32xf32>
    %13 = arith.maximumf %11, %12 : vector<4x32xf32>
    %14 = arith.truncf %13 : vector<4x32xf32> to vector<4x32xbf16>
    %c0_10 = arith.constant 0 : index
    %c0_11 = arith.constant 0 : index
    %15 = vector.load %arg8[%c0_10, %c0_11] : memref<4x32xbf16, #tpu.memory_space<vmem>>, vector<4x32xbf16>
    tpu.vector_store %arg8[%c0_10, %c0_11], %14 {strides = array<i32>} : memref<4x32xbf16, #tpu.memory_space<vmem>>, vector<4x32xbf16>,
    return
  }
  func.func @transform_0(%arg0: i32, %arg1: i32, %arg2: i32) -> (i32, i32) {
    %c0_i32 = arith.constant 0 : i32
    return %arg0, %arg2 : i32, i32
  }
  func.func @transform_1(%arg0: i32, %arg1: i32, %arg2: i32) -> (i32, i32) {
    %c0_i32 = arith.constant 0 : i32
    return %arg2, %arg1 : i32, i32
  }
  func.func @transform_2(%arg0: i32, %arg1: i32, %arg2: i32) -> (i32, i32) {
    %c0_i32 = arith.constant 0 : i32
    %c0_i32_0 = arith.constant 0 : i32
    return %c0_i32, %arg1 : i32, i32
  }
  func.func @transform_3(%arg0: i32, %arg1: i32, %arg2: i32) -> (i32, i32) {
    %c0_i32 = arith.constant 0 : i32
    %c0_i32_0 = arith.constant 0 : i32
    return %c0_i32, %arg1 : i32, i32
  }
  func.func @transform_4(%arg0: i32, %arg1: i32, %arg2: i32) -> (i32, i32) {
    %c0_i32 = arith.constant 0 : i32
    return %arg0, %arg1 : i32, i32
  }
  func.func @transform_5(%arg0: i32, %arg1: i32, %arg2: i32) -> (i32, i32) {
    %c0_i32 = arith.constant 0 : i32
    return %arg0, %arg1 : i32, i32
  }
}

module attributes {stable_mosaic.version = 11 : i64} {
  func.func @_mm_kernel(%arg0: i32, %arg1: i32, %arg2: i32, %arg3: memref<4x256xbf16, #tpu.memory_space<vmem>>, %arg4: memref<256x128xbf16, #tpu.memory_space<vmem>>, %arg5: memref<1x128xf32, #tpu.memory_space<vmem>>, %arg6: memref<1x128xf32, #tpu.memory_space<vmem>>, %arg7: memref<4x128xbf16, #tpu.memory_space<vmem>>) attributes {dimension_semantics = [#tpu.dimension_semantics<parallel>, #tpu.dimension_semantics<parallel>, #tpu.dimension_semantics<arbitrary>], iteration_bounds = array<i64: 1, 1, 1>, scalar_prefetch = 0 : i64, scratch_operands = 0 : i64, tpu.core_type = #tpu.core_type<tc>, window_params = [{transform_indices = @transform_0, window_bounds = array<i64: 4, 256>}, {transform_indices = @transform_1, window_bounds = array<i64: 256, 128>}, {transform_indices = @transform_2, window_bounds = array<i64: 1, 128>}, {transform_indices = @transform_3, window_bounds = array<i64: 1, 128>}, {transform_indices = @transform_4, window_bounds = array<i64: 4, 128>}]} {
    %c0 = arith.constant 0 : index
    %c0_0 = arith.constant 0 : index
    %0 = vector.load %arg3[%c0, %c0_0] : memref<4x256xbf16, #tpu.memory_space<vmem>>, vector<4x256xbf16>
    %c0_1 = arith.constant 0 : index
    %c0_2 = arith.constant 0 : index
    %1 = vector.load %arg4[%c0_1, %c0_2] : memref<256x128xbf16, #tpu.memory_space<vmem>>, vector<256x128xbf16>
    %cst = arith.constant dense<0.000000e+00> : vector<4x128xf32>
    %2 = tpu.matmul %0, %1, %cst {dimension_numbers = #tpu.dot_dimension_numbers<[1], [0], [0], [1], [0, 0, 1, 1], [], []>} : vector<4x256xbf16>, vector<256x128xbf16>, vector<4x128xf32> -> vector<4x128xf32>
    %c0_3 = arith.constant 0 : index
    %c0_4 = arith.constant 0 : index
    %3 = vector.load %arg5[%c0_3, %c0_4] : memref<1x128xf32, #tpu.memory_space<vmem>>, vector<1x128xf32>
    %4 = vector.broadcast %3 : vector<1x128xf32> to vector<4x128xf32>
    %5 = arith.mulf %2, %4 : vector<4x128xf32>
    %c0_5 = arith.constant 0 : index
    %c0_6 = arith.constant 0 : index
    %6 = vector.load %arg6[%c0_5, %c0_6] : memref<1x128xf32, #tpu.memory_space<vmem>>, vector<1x128xf32>
    %7 = vector.broadcast %6 : vector<1x128xf32> to vector<4x128xf32>
    %8 = arith.addf %5, %7 : vector<4x128xf32>
    %cst_7 = arith.constant 0.000000e+00 : f32
    %9 = vector.broadcast %cst_7 : f32 to vector<4x128xf32>
    %10 = arith.maximumf %8, %9 : vector<4x128xf32>
    %11 = arith.truncf %10 : vector<4x128xf32> to vector<4x128xbf16>
    %c0_8 = arith.constant 0 : index
    %c0_9 = arith.constant 0 : index
    %12 = vector.load %arg7[%c0_8, %c0_9] : memref<4x128xbf16, #tpu.memory_space<vmem>>, vector<4x128xbf16>
    tpu.vector_store %arg7[%c0_8, %c0_9], %11 {strides = array<i32>} : memref<4x128xbf16, #tpu.memory_space<vmem>>, vector<4x128xbf16>,
    return
  }
  func.func @transform_0(%arg0: i32, %arg1: i32, %arg2: i32) -> (i32, i32) {
    %c0_i32 = arith.constant 0 : i32
    return %arg0, %arg2 : i32, i32
  }
  func.func @transform_1(%arg0: i32, %arg1: i32, %arg2: i32) -> (i32, i32) {
    %c0_i32 = arith.constant 0 : i32
    return %arg2, %arg1 : i32, i32
  }
  func.func @transform_2(%arg0: i32, %arg1: i32, %arg2: i32) -> (i32, i32) {
    %c0_i32 = arith.constant 0 : i32
    %c0_i32_0 = arith.constant 0 : i32
    return %c0_i32, %arg1 : i32, i32
  }
  func.func @transform_3(%arg0: i32, %arg1: i32, %arg2: i32) -> (i32, i32) {
    %c0_i32 = arith.constant 0 : i32
    %c0_i32_0 = arith.constant 0 : i32
    return %c0_i32, %arg1 : i32, i32
  }
  func.func @transform_4(%arg0: i32, %arg1: i32, %arg2: i32) -> (i32, i32) {
    %c0_i32 = arith.constant 0 : i32
    return %arg0, %arg1 : i32, i32
  }
}

module attributes {stable_mosaic.version = 11 : i64} {
  func.func @_mm_kernel(%arg0: i32, %arg1: i32, %arg2: i32, %arg3: memref<32x128xbf16, #tpu.memory_space<vmem>>, %arg4: memref<128x128xbf16, #tpu.memory_space<vmem>>, %arg5: memref<1x128xf32, #tpu.memory_space<vmem>>, %arg6: memref<1x128xf32, #tpu.memory_space<vmem>>, %arg7: memref<32x128xbf16, #tpu.memory_space<vmem>>) attributes {dimension_semantics = [#tpu.dimension_semantics<parallel>, #tpu.dimension_semantics<parallel>, #tpu.dimension_semantics<arbitrary>], iteration_bounds = array<i64: 1, 1, 1>, scalar_prefetch = 0 : i64, scratch_operands = 0 : i64, tpu.core_type = #tpu.core_type<tc>, window_params = [{transform_indices = @transform_0, window_bounds = array<i64: 32, 128>}, {transform_indices = @transform_1, window_bounds = array<i64: 128, 128>}, {transform_indices = @transform_2, window_bounds = array<i64: 1, 128>}, {transform_indices = @transform_3, window_bounds = array<i64: 1, 128>}, {transform_indices = @transform_4, window_bounds = array<i64: 32, 128>}]} {
    %c0 = arith.constant 0 : index
    %c0_0 = arith.constant 0 : index
    %0 = vector.load %arg3[%c0, %c0_0] : memref<32x128xbf16, #tpu.memory_space<vmem>>, vector<32x128xbf16>
    %c0_1 = arith.constant 0 : index
    %c0_2 = arith.constant 0 : index
    %1 = vector.load %arg4[%c0_1, %c0_2] : memref<128x128xbf16, #tpu.memory_space<vmem>>, vector<128x128xbf16>
    %cst = arith.constant dense<0.000000e+00> : vector<32x128xf32>
    %2 = tpu.matmul %0, %1, %cst {dimension_numbers = #tpu.dot_dimension_numbers<[1], [0], [0], [1], [0, 0, 1, 1], [], []>} : vector<32x128xbf16>, vector<128x128xbf16>, vector<32x128xf32> -> vector<32x128xf32>
    %c0_3 = arith.constant 0 : index
    %c0_4 = arith.constant 0 : index
    %3 = vector.load %arg5[%c0_3, %c0_4] : memref<1x128xf32, #tpu.memory_space<vmem>>, vector<1x128xf32>
    %4 = vector.broadcast %3 : vector<1x128xf32> to vector<32x128xf32>
    %5 = arith.mulf %2, %4 : vector<32x128xf32>
    %c0_5 = arith.constant 0 : index
    %c0_6 = arith.constant 0 : index
    %6 = vector.load %arg6[%c0_5, %c0_6] : memref<1x128xf32, #tpu.memory_space<vmem>>, vector<1x128xf32>
    %7 = vector.broadcast %6 : vector<1x128xf32> to vector<32x128xf32>
    %8 = arith.addf %5, %7 : vector<32x128xf32>
    %cst_7 = arith.constant 0.000000e+00 : f32
    %9 = vector.broadcast %cst_7 : f32 to vector<32x128xf32>
    %10 = arith.maximumf %8, %9 : vector<32x128xf32>
    %11 = arith.truncf %10 : vector<32x128xf32> to vector<32x128xbf16>
    %c0_8 = arith.constant 0 : index
    %c0_9 = arith.constant 0 : index
    %12 = vector.load %arg7[%c0_8, %c0_9] : memref<32x128xbf16, #tpu.memory_space<vmem>>, vector<32x128xbf16>
    tpu.vector_store %arg7[%c0_8, %c0_9], %11 {strides = array<i32>} : memref<32x128xbf16, #tpu.memory_space<vmem>>, vector<32x128xbf16>,
    return
  }
  func.func @transform_0(%arg0: i32, %arg1: i32, %arg2: i32) -> (i32, i32) {
    %c0_i32 = arith.constant 0 : i32
    return %arg0, %arg2 : i32, i32
  }
  func.func @transform_1(%arg0: i32, %arg1: i32, %arg2: i32) -> (i32, i32) {
    %c0_i32 = arith.constant 0 : i32
    return %arg2, %arg1 : i32, i32
  }
  func.func @transform_2(%arg0: i32, %arg1: i32, %arg2: i32) -> (i32, i32) {
    %c0_i32 = arith.constant 0 : i32
    %c0_i32_0 = arith.constant 0 : i32
    return %c0_i32, %arg1 : i32, i32
  }
  func.func @transform_3(%arg0: i32, %arg1: i32, %arg2: i32) -> (i32, i32) {
    %c0_i32 = arith.constant 0 : i32
    %c0_i32_0 = arith.constant 0 : i32
    return %c0_i32, %arg1 : i32, i32
  }
  func.func @transform_4(%arg0: i32, %arg1: i32, %arg2: i32) -> (i32, i32) {
    %c0_i32 = arith.constant 0 : i32
    return %arg0, %arg1 : i32, i32
  }
}

module attributes {stable_mosaic.version = 11 : i64} {
  func.func @_mm_kernel(%arg0: i32, %arg1: i32, %arg2: i32, %arg3: memref<4x4xbf16, #tpu.memory_space<vmem>>, %arg4: memref<4x32xbf16, #tpu.memory_space<vmem>>, %arg5: memref<1x32xf32, #tpu.memory_space<vmem>>, %arg6: memref<1x32xf32, #tpu.memory_space<vmem>>, %arg7: memref<4x32xbf16, #tpu.memory_space<vmem>>, %arg8: memref<4x32xbf16, #tpu.memory_space<vmem>>) attributes {dimension_semantics = [#tpu.dimension_semantics<parallel>, #tpu.dimension_semantics<parallel>, #tpu.dimension_semantics<arbitrary>], iteration_bounds = array<i64: 1, 1, 1>, scalar_prefetch = 0 : i64, scratch_operands = 0 : i64, tpu.core_type = #tpu.core_type<tc>, window_params = [{transform_indices = @transform_0, window_bounds = array<i64: 4, 4>}, {transform_indices = @transform_1, window_bounds = array<i64: 4, 32>}, {transform_indices = @transform_2, window_bounds = array<i64: 1, 32>}, {transform_indices = @transform_3, window_bounds = array<i64: 1, 32>}, {transform_indices = @transform_4, window_bounds = array<i64: 4, 32>}, {transform_indices = @transform_5, window_bounds = array<i64: 4, 32>}]} {
    %c0 = arith.constant 0 : index
    %c0_0 = arith.constant 0 : index
    %0 = vector.load %arg3[%c0, %c0_0] : memref<4x4xbf16, #tpu.memory_space<vmem>>, vector<4x4xbf16>
    %c0_1 = arith.constant 0 : index
    %c0_2 = arith.constant 0 : index
    %1 = vector.load %arg4[%c0_1, %c0_2] : memref<4x32xbf16, #tpu.memory_space<vmem>>, vector<4x32xbf16>
    %cst = arith.constant dense<0.000000e+00> : vector<4x32xf32>
    %2 = tpu.matmul %0, %1, %cst {dimension_numbers = #tpu.dot_dimension_numbers<[1], [0], [0], [1], [0, 0, 1, 1], [], []>} : vector<4x4xbf16>, vector<4x32xbf16>, vector<4x32xf32> -> vector<4x32xf32>
    %c0_3 = arith.constant 0 : index
    %c0_4 = arith.constant 0 : index
    %3 = vector.load %arg5[%c0_3, %c0_4] : memref<1x32xf32, #tpu.memory_space<vmem>>, vector<1x32xf32>
    %4 = vector.broadcast %3 : vector<1x32xf32> to vector<4x32xf32>
    %5 = arith.mulf %2, %4 : vector<4x32xf32>
    %c0_5 = arith.constant 0 : index
    %c0_6 = arith.constant 0 : index
    %6 = vector.load %arg6[%c0_5, %c0_6] : memref<1x32xf32, #tpu.memory_space<vmem>>, vector<1x32xf32>
    %7 = vector.broadcast %6 : vector<1x32xf32> to vector<4x32xf32>
    %8 = arith.addf %5, %7 : vector<4x32xf32>
    %c0_7 = arith.constant 0 : index
    %c0_8 = arith.constant 0 : index
    %9 = vector.load %arg7[%c0_7, %c0_8] : memref<4x32xbf16, #tpu.memory_space<vmem>>, vector<4x32xbf16>
    %10 = arith.extf %9 : vector<4x32xbf16> to vector<4x32xf32>
    %11 = arith.addf %8, %10 : vector<4x32xf32>
    %cst_9 = arith.constant 0.000000e+00 : f32
    %12 = vector.broadcast %cst_9 : f32 to vector<4x32xf32>
    %13 = arith.maximumf %11, %12 : vector<4x32xf32>
    %14 = arith.truncf %13 : vector<4x32xf32> to vector<4x32xbf16>
    %c0_10 = arith.constant 0 : index
    %c0_11 = arith.constant 0 : index
    %15 = vector.load %arg8[%c0_10, %c0_11] : memref<4x32xbf16, #tpu.memory_space<vmem>>, vector<4x32xbf16>
    tpu.vector_store %arg8[%c0_10, %c0_11], %14 {strides = array<i32>} : memref<4x32xbf16, #tpu.memory_space<vmem>>, vector<4x32xbf16>,
    return
  }
  func.func @transform_0(%arg0: i32, %arg1: i32, %arg2: i32) -> (i32, i32) {
    %c0_i32 = arith.constant 0 : i32
    return %arg0, %arg2 : i32, i32
  }
  func.func @transform_1(%arg0: i32, %arg1: i32, %arg2: i32) -> (i32, i32) {
    %c0_i32 = arith.constant 0 : i32
    return %arg2, %arg1 : i32, i32
  }
  func.func @transform_2(%arg0: i32, %arg1: i32, %arg2: i32) -> (i32, i32) {
    %c0_i32 = arith.constant 0 : i32
    %c0_i32_0 = arith.constant 0 : i32
    return %c0_i32, %arg1 : i32, i32
  }
  func.func @transform_3(%arg0: i32, %arg1: i32, %arg2: i32) -> (i32, i32) {
    %c0_i32 = arith.constant 0 : i32
    %c0_i32_0 = arith.constant 0 : i32
    return %c0_i32, %arg1 : i32, i32
  }
  func.func @transform_4(%arg0: i32, %arg1: i32, %arg2: i32) -> (i32, i32) {
    %c0_i32 = arith.constant 0 : i32
    return %arg0, %arg1 : i32, i32
  }
  func.func @transform_5(%arg0: i32, %arg1: i32, %arg2: i32) -> (i32, i32) {
    %c0_i32 = arith.constant 0 : i32
    return %arg0, %arg1 : i32, i32
  }
}

module attributes {stable_mosaic.version = 11 : i64} {
  func.func @_mm_kernel(%arg0: i32, %arg1: i32, %arg2: i32, %arg3: memref<4x16xbf16, #tpu.memory_space<vmem>>, %arg4: memref<16x32xbf16, #tpu.memory_space<vmem>>, %arg5: memref<1x32xf32, #tpu.memory_space<vmem>>, %arg6: memref<1x32xf32, #tpu.memory_space<vmem>>, %arg7: memref<4x32xbf16, #tpu.memory_space<vmem>>) attributes {dimension_semantics = [#tpu.dimension_semantics<parallel>, #tpu.dimension_semantics<parallel>, #tpu.dimension_semantics<arbitrary>], iteration_bounds = array<i64: 1, 1, 1>, scalar_prefetch = 0 : i64, scratch_operands = 0 : i64, tpu.core_type = #tpu.core_type<tc>, window_params = [{transform_indices = @transform_0, window_bounds = array<i64: 4, 16>}, {transform_indices = @transform_1, window_bounds = array<i64: 16, 32>}, {transform_indices = @transform_2, window_bounds = array<i64: 1, 32>}, {transform_indices = @transform_3, window_bounds = array<i64: 1, 32>}, {transform_indices = @transform_4, window_bounds = array<i64: 4, 32>}]} {
    %c0 = arith.constant 0 : index
    %c0_0 = arith.constant 0 : index
    %0 = vector.load %arg3[%c0, %c0_0] : memref<4x16xbf16, #tpu.memory_space<vmem>>, vector<4x16xbf16>
    %c0_1 = arith.constant 0 : index
    %c0_2 = arith.constant 0 : index
    %1 = vector.load %arg4[%c0_1, %c0_2] : memref<16x32xbf16, #tpu.memory_space<vmem>>, vector<16x32xbf16>
    %cst = arith.constant dense<0.000000e+00> : vector<4x32xf32>
    %2 = tpu.matmul %0, %1, %cst {dimension_numbers = #tpu.dot_dimension_numbers<[1], [0], [0], [1], [0, 0, 1, 1], [], []>} : vector<4x16xbf16>, vector<16x32xbf16>, vector<4x32xf32> -> vector<4x32xf32>
    %c0_3 = arith.constant 0 : index
    %c0_4 = arith.constant 0 : index
    %3 = vector.load %arg5[%c0_3, %c0_4] : memref<1x32xf32, #tpu.memory_space<vmem>>, vector<1x32xf32>
    %4 = vector.broadcast %3 : vector<1x32xf32> to vector<4x32xf32>
    %5 = arith.mulf %2, %4 : vector<4x32xf32>
    %c0_5 = arith.constant 0 : index
    %c0_6 = arith.constant 0 : index
    %6 = vector.load %arg6[%c0_5, %c0_6] : memref<1x32xf32, #tpu.memory_space<vmem>>, vector<1x32xf32>
    %7 = vector.broadcast %6 : vector<1x32xf32> to vector<4x32xf32>
    %8 = arith.addf %5, %7 : vector<4x32xf32>
    %9 = arith.truncf %8 : vector<4x32xf32> to vector<4x32xbf16>
    %c0_7 = arith.constant 0 : index
    %c0_8 = arith.constant 0 : index
    %10 = vector.load %arg7[%c0_7, %c0_8] : memref<4x32xbf16, #tpu.memory_space<vmem>>, vector<4x32xbf16>
    tpu.vector_store %arg7[%c0_7, %c0_8], %9 {strides = array<i32>} : memref<4x32xbf16, #tpu.memory_space<vmem>>, vector<4x32xbf16>,
    return
  }
  func.func @transform_0(%arg0: i32, %arg1: i32, %arg2: i32) -> (i32, i32) {
    %c0_i32 = arith.constant 0 : i32
    return %arg0, %arg2 : i32, i32
  }
  func.func @transform_1(%arg0: i32, %arg1: i32, %arg2: i32) -> (i32, i32) {
    %c0_i32 = arith.constant 0 : i32
    return %arg2, %arg1 : i32, i32
  }
  func.func @transform_2(%arg0: i32, %arg1: i32, %arg2: i32) -> (i32, i32) {
    %c0_i32 = arith.constant 0 : i32
    %c0_i32_0 = arith.constant 0 : i32
    return %c0_i32, %arg1 : i32, i32
  }
  func.func @transform_3(%arg0: i32, %arg1: i32, %arg2: i32) -> (i32, i32) {
    %c0_i32 = arith.constant 0 : i32
    %c0_i32_0 = arith.constant 0 : i32
    return %c0_i32, %arg1 : i32, i32
  }
  func.func @transform_4(%arg0: i32, %arg1: i32, %arg2: i32) -> (i32, i32) {
    %c0_i32 = arith.constant 0 : i32
    return %arg0, %arg1 : i32, i32
  }
}

</mosaic_0001>

<llo_original>
// kernel: network_forward.44
$region0: #{network_forward.44}
  #allocation0 [shape = 'u32[]', space=smem, size = 0x4, offset = 0x4, fixed_abs, tag = 'smem constant byte address 0x4 - core index']
  #allocation1 [shape = 'u32[72,128]{1,0:T(1,128)}', space=vmem, size = 0x9000, scoped, tag = 'internal scratch']
  %s0 = inlined_call_operand.vmem [shape: bf16[64,72], index: 0, kind: input, shape index: {}]
  %s1 = inlined_call_operand.vmem [shape: bf16[72,16], index: 1, kind: input, shape index: {}]
  %s2 = inlined_call_operand.vmem [shape: f32[1,16], index: 2, kind: input, shape index: {}]
  %s3 = inlined_call_operand.vmem [shape: f32[1,16], index: 3, kind: input, shape index: {}]
  %s4 = inlined_call_operand.vmem [shape: bf16[64,16], index: 4, kind: output, shape index: {}]
  %s5 = sld [smem:[#allocation0]]
  $region26: #{network_forward.44} parent=0
    _
  %s7 = ssub.s32 1, %s5
  %s8 = scalar_select 0, %s7, %s5
  // Predicated region
  $region2: #{network_forward.44} parent=0 // pred_check
    _
  $region3: #{network_forward.44} parent=0 // pred_check_branch
    %10 = sbr.rel (0) target = $region5
  $region4: #{network_forward.44} parent=0 // pred_region
    _
  $region5: #{network_forward.44} parent=0 // pred_fallthru
    _
  // Predicated region
  $region6: #{network_forward.44} parent=0 // pred_check
    _
  $region7: #{network_forward.44} parent=0 // pred_check_branch
    %12 = sbr.rel (0) target = $region9
  $region8: #{network_forward.44} parent=0 // pred_region
    _
  $region9: #{network_forward.44} parent=0 // pred_fallthru
    _
  // Predicated region
  $region10: #{network_forward.44} parent=0 // pred_check
    _
  $region11: #{network_forward.44} parent=0 // pred_check_branch
    %14 = sbr.rel (0) target = $region13
  $region12: #{network_forward.44} parent=0 // pred_region
    _
  $region13: #{network_forward.44} parent=0 // pred_fallthru
    _
  // Predicated region
  $region14: #{network_forward.44} parent=0 // pred_check
    _
  $region15: #{network_forward.44} parent=0 // pred_check_branch
    %16 = sbr.rel (0) target = $region17
  $region16: #{network_forward.44} parent=0 // pred_region
    _
  $region17: #{network_forward.44} parent=0 // pred_fallthru
    _
  %v18 = vld [vmem:[%s0] sm:$0xf]
  %v19 = vld [vmem:[%s0 + $0x4] sm:$0xf]
  %v20 = vld [vmem:[%s0 + $0x8] sm:$0xf]
  %v21 = vld [vmem:[%s0 + $0xc] sm:$0xf]
  %v22 = vld [vmem:[%s0 + $0x10] sm:$0xf]
  %v23 = vld [vmem:[%s0 + $0x14] sm:$0xf]
  %v24 = vld [vmem:[%s0 + $0x18] sm:$0xf]
  %v25 = vld [vmem:[%s0 + $0x1c] sm:$0xf]
  %v26 = vld [vmem:[%s1] sm:$0xf]
  %v27 = vld [vmem:[%s1 + $0x4] sm:$0xf]
  %v28 = vld [vmem:[%s1 + $0x8] sm:$0xf]
  %v29 = vld [vmem:[%s1 + $0xc] sm:$0xf]
  %v30 = vld [vmem:[%s1 + $0x10] sm:$0xf]
  %v31 = vld [vmem:[%s1 + $0x14] sm:$0xf]
  %v32 = vld [vmem:[%s1 + $0x18] sm:$0xf]
  %v33 = vld [vmem:[%s1 + $0x1c] sm:$0xf]
  %v34 = vld [vmem:[%s1 + $0x20] sm:$0xf]
  %v43 = vunpack.c.l.b16 %v18
  %v44 = vunpack.c.l.b16 %v19
  %v45 = vunpack.c.l.b16 %v20
  %v46 = vunpack.c.l.b16 %v21
  %v47 = vunpack.c.l.b16 %v22
  %v48 = vunpack.c.l.b16 %v23
  %v49 = vunpack.c.l.b16 %v24
  %v50 = vunpack.c.l.b16 %v25
  %v51 = vpack.c.b16 %v44, %v43
  %v52 = vpack.c.b16 %v46, %v45
  %v53 = vpack.c.b16 %v48, %v47
  %v54 = vpack.c.b16 %v50, %v49
  %v64 = vunpack.c.l.b16 %v26
  %v65 = vunpack.c.l.b16 %v27
  %v66 = vunpack.c.l.b16 %v28
  %v67 = vunpack.c.l.b16 %v29
  %v68 = vunpack.c.l.b16 %v30
  %v69 = vunpack.c.l.b16 %v31
  %v70 = vunpack.c.l.b16 %v32
  %v71 = vunpack.c.l.b16 %v33
  %v72 = vunpack.c.l.b16 %v34
  %v73 = vpack.c.b16 %v65, %v64
  %v74 = vpack.c.b16 %v67, %v66
  %v75 = vpack.c.b16 %v69, %v68
  %v76 = vpack.c.b16 %v71, %v70
  %v77 = vpack.c.b16 %v72, %v72
  %vm82 = vcmask 588800
  %v84 = vsel %vm82, %v51, 0
  %v87 = vsel %vm82, %v52, 0
  %v90 = vsel %vm82, %v53, 0
  %v93 = vsel %vm82, %v54, 0
  %vm95 = vcmask 1043456
  %v97 = vsel %vm95, %v77, 0
  %99 = vmatpush.bf16.msra.mxu0 0
  %100 = vmatpush.bf16.msra.mxu0 0
  %101 = vmatpush.bf16.msra.mxu0 0
  %102 = vmatpush.bf16.msra.mxu0 %v97
  %103 = vmatpush.bf16.msra.mxu0 %v76
  %104 = vmatpush.bf16.msra.mxu0 %v75
  %105 = vmatpush.bf16.msra.mxu0 %v74
  %106 = vmatpush.bf16.msra.mxu0 %v73
  %107 = vmatmul.bf16.gmra.mxu0 %v84
  %v108 = vpop.f32.mrf.mxu0
  %v109 = vadd.f32 0.0, %v108
  %v110 = vpop.f32.mrf.mxu0
  %v111 = vadd.f32 0.0, %v110
  %112 = vmatmul.bf16.gmra.mxu0 %v87
  %v113 = vpop.f32.mrf.mxu0
  %v114 = vadd.f32 0.0, %v113
  %v115 = vpop.f32.mrf.mxu0
  %v116 = vadd.f32 0.0, %v115
  %117 = vmatmul.bf16.gmra.mxu0 %v90
  %v118 = vpop.f32.mrf.mxu0
  %v119 = vadd.f32 0.0, %v118
  %v120 = vpop.f32.mrf.mxu0
  %v121 = vadd.f32 0.0, %v120
  %122 = vmatmul.bf16.gmra.mxu0 %v93
  %v123 = vpop.f32.mrf.mxu0
  %v124 = vadd.f32 0.0, %v123
  %v125 = vpop.f32.mrf.mxu0
  %v126 = vadd.f32 0.0, %v125
  %127 = vdwg.mxu0
  %v128 = vld [vmem:[%s2] sm:$0x1]
  %v130 = vperm.slane %v128, 0
  %v132 = vmul.f32 %v109, %v130
  %v133 = vmul.f32 %v111, %v130
  %v134 = vmul.f32 %v114, %v130
  %v135 = vmul.f32 %v116, %v130
  %v136 = vmul.f32 %v119, %v130
  %v137 = vmul.f32 %v121, %v130
  %v138 = vmul.f32 %v124, %v130
  %v139 = vmul.f32 %v126, %v130
  %v140 = vld [vmem:[%s3] sm:$0x1]
  %v142 = vperm.slane %v140, 0
  %v144 = vadd.f32 %v132, %v142
  %v145 = vadd.f32 %v133, %v142
  %v146 = vadd.f32 %v134, %v142
  %v147 = vadd.f32 %v135, %v142
  %v148 = vadd.f32 %v136, %v142
  %v149 = vadd.f32 %v137, %v142
  %v150 = vadd.f32 %v138, %v142
  %v151 = vadd.f32 %v139, %v142
  %v152 = vmax.f32 %v144, 0.0
  %v153 = vmax.f32 %v145, 0.0
  %v154 = vmax.f32 %v146, 0.0
  %v155 = vmax.f32 %v147, 0.0
  %v156 = vmax.f32 %v148, 0.0
  %v157 = vmax.f32 %v149, 0.0
  %v158 = vmax.f32 %v150, 0.0
  %v159 = vmax.f32 %v151, 0.0
  %v160 = vpack.c.bf16 %v152, %v152
  %v161 = vpack.c.bf16 %v153, %v153
  %v162 = vpack.c.bf16 %v154, %v154
  %v163 = vpack.c.bf16 %v155, %v155
  %v164 = vpack.c.bf16 %v156, %v156
  %v165 = vpack.c.bf16 %v157, %v157
  %v166 = vpack.c.bf16 %v158, %v158
  %v167 = vpack.c.bf16 %v159, %v159
  %vm168 = vcmask 125952
  %169 = vst.msk [vmem:[%s4] sm:$0xf] %vm168, %v160
  %170 = vst.msk [vmem:[%s4 + $0x4] sm:$0xf] %vm168, %v161
  %171 = vst.msk [vmem:[%s4 + $0x8] sm:$0xf] %vm168, %v162
  %172 = vst.msk [vmem:[%s4 + $0xc] sm:$0xf] %vm168, %v163
  %173 = vst.msk [vmem:[%s4 + $0x10] sm:$0xf] %vm168, %v164
  %174 = vst.msk [vmem:[%s4 + $0x14] sm:$0xf] %vm168, %v165
  %175 = vst.msk [vmem:[%s4 + $0x18] sm:$0xf] %vm168, %v166
  %176 = vst.msk [vmem:[%s4 + $0x1c] sm:$0xf] %vm168, %v167
  // Predicated region
  $region18: #{network_forward.44} parent=0 // pred_check
    _
  $region19: #{network_forward.44} parent=0 // pred_check_branch
    %178 = sbr.rel (0) target = $region21
  $region20: #{network_forward.44} parent=0 // pred_region
    _
  $region21: #{network_forward.44} parent=0 // pred_fallthru
    _
  // Predicated region
  $region22: #{network_forward.44} parent=0 // pred_check
    _
  $region23: #{network_forward.44} parent=0 // pred_check_branch
    %180 = sbr.rel (0) target = $region25
  $region24: #{network_forward.44} parent=0 // pred_region
    _
  $region25: #{network_forward.44} parent=0 // pred_fallthru
    _

// kernel: network_forward.45
$region0: #{network_forward.45}
  #allocation0 [shape = 'u32[]', space=smem, size = 0x4, offset = 0x4, fixed_abs, tag = 'smem constant byte address 0x4 - core index']
  #allocation1 [shape = 'u32[72,128]{1,0:T(1,128)}', space=vmem, size = 0x9000, scoped, tag = 'internal scratch']
  %s0 = inlined_call_operand.vmem [shape: bf16[16,144], index: 0, kind: input, shape index: {}]
  %s1 = inlined_call_operand.vmem [shape: bf16[144,32], index: 1, kind: input, shape index: {}]
  %s2 = inlined_call_operand.vmem [shape: f32[1,32], index: 2, kind: input, shape index: {}]
  %s3 = inlined_call_operand.vmem [shape: f32[1,32], index: 3, kind: input, shape index: {}]
  %s4 = inlined_call_operand.vmem [shape: bf16[16,32], index: 4, kind: output, shape index: {}]
  %s5 = sld [smem:[#allocation0]]
  $region26: #{network_forward.45} parent=0
    _
  %s7 = ssub.s32 1, %s5
  %s8 = scalar_select 0, %s7, %s5
  // Predicated region
  $region2: #{network_forward.45} parent=0 // pred_check
    _
  $region3: #{network_forward.45} parent=0 // pred_check_branch
    %10 = sbr.rel (0) target = $region5
  $region4: #{network_forward.45} parent=0 // pred_region
    _
  $region5: #{network_forward.45} parent=0 // pred_fallthru
    _
  // Predicated region
  $region6: #{network_forward.45} parent=0 // pred_check
    _
  $region7: #{network_forward.45} parent=0 // pred_check_branch
    %12 = sbr.rel (0) target = $region9
  $region8: #{network_forward.45} parent=0 // pred_region
    _
  $region9: #{network_forward.45} parent=0 // pred_fallthru
    _
  // Predicated region
  $region10: #{network_forward.45} parent=0 // pred_check
    _
  $region11: #{network_forward.45} parent=0 // pred_check_branch
    %14 = sbr.rel (0) target = $region13
  $region12: #{network_forward.45} parent=0 // pred_region
    _
  $region13: #{network_forward.45} parent=0 // pred_fallthru
    _
  // Predicated region
  $region14: #{network_forward.45} parent=0 // pred_check
    _
  $region15: #{network_forward.45} parent=0 // pred_check_branch
    %16 = sbr.rel (0) target = $region17
  $region16: #{network_forward.45} parent=0 // pred_region
    _
  $region17: #{network_forward.45} parent=0 // pred_fallthru
    _
  %v18 = vld [vmem:[%s0] sm:$0xff]
  %v19 = vld [vmem:[%s0 + $0x8] sm:$0xff]
  %v20 = vld [vmem:[%s1] sm:$0xf]
  %v21 = vld [vmem:[%s1 + $0x4] sm:$0xf]
  %v22 = vld [vmem:[%s1 + $0x8] sm:$0xf]
  %v23 = vld [vmem:[%s1 + $0xc] sm:$0xf]
  %v24 = vld [vmem:[%s1 + $0x10] sm:$0xf]
  %v25 = vld [vmem:[%s1 + $0x14] sm:$0xf]
  %v26 = vld [vmem:[%s1 + $0x18] sm:$0xf]
  %v27 = vld [vmem:[%s1 + $0x1c] sm:$0xf]
  %v28 = vld [vmem:[%s1 + $0x20] sm:$0xf]
  %v29 = vld [vmem:[%s1 + $0x24] sm:$0xf]
  %v30 = vld [vmem:[%s1 + $0x28] sm:$0xf]
  %v31 = vld [vmem:[%s1 + $0x2c] sm:$0xf]
  %v32 = vld [vmem:[%s1 + $0x30] sm:$0xf]
  %v33 = vld [vmem:[%s1 + $0x34] sm:$0xf]
  %v34 = vld [vmem:[%s1 + $0x38] sm:$0xf]
  %v35 = vld [vmem:[%s1 + $0x3c] sm:$0xf]
  %v36 = vld [vmem:[%s1 + $0x40] sm:$0xf]
  %v37 = vld [vmem:[%s1 + $0x44] sm:$0xf]
  %v40 = vunpack.c.l.b16 %v18
  %v41 = vunpack.c.h.b16 %v18
  %v42 = vunpack.c.l.b16 %v19
  %v43 = vunpack.c.h.b16 %v19
  %v44 = vpack.c.b16 %v42, %v40
  %v45 = vpack.c.b16 %v43, %v41
  %v65 = vunpack.c.l.b16 %v20
  %v66 = vunpack.c.l.b16 %v21
  %v67 = vunpack.c.l.b16 %v22
  %v68 = vunpack.c.l.b16 %v23
  %v69 = vunpack.c.l.b16 %v24
  %v70 = vunpack.c.l.b16 %v25
  %v71 = vunpack.c.l.b16 %v26
  %v72 = vunpack.c.l.b16 %v27
  %v73 = vunpack.c.l.b16 %v28
  %v74 = vunpack.c.l.b16 %v29
  %v75 = vunpack.c.l.b16 %v30
  %v76 = vunpack.c.l.b16 %v31
  %v77 = vunpack.c.l.b16 %v32
  %v78 = vunpack.c.l.b16 %v33
  %v79 = vunpack.c.l.b16 %v34
  %v80 = vunpack.c.l.b16 %v35
  %v81 = vunpack.c.l.b16 %v36
  %v82 = vunpack.c.l.b16 %v37
  %v83 = vpack.c.b16 %v66, %v65
  %v84 = vpack.c.b16 %v68, %v67
  %v85 = vpack.c.b16 %v70, %v69
  %v86 = vpack.c.b16 %v72, %v71
  %v87 = vpack.c.b16 %v74, %v73
  %v88 = vpack.c.b16 %v76, %v75
  %v89 = vpack.c.b16 %v78, %v77
  %v90 = vpack.c.b16 %v80, %v79
  %v91 = vpack.c.b16 %v82, %v81
  %vm101 = vcmask 130048
  %v103 = vsel %vm101, %v45, 0
  %105 = vmatpush.bf16.msra.mxu0 %v90
  %106 = vmatpush.bf16.msra.mxu0 %v89
  %107 = vmatpush.bf16.msra.mxu0 %v88
  %108 = vmatpush.bf16.msra.mxu0 %v87
  %109 = vmatpush.bf16.msra.mxu0 %v86
  %110 = vmatpush.bf16.msra.mxu0 %v85
  %111 = vmatpush.bf16.msra.mxu0 %v84
  %112 = vmatpush.bf16.msra.mxu0 %v83
  %113 = vmatmul.bf16.gmra.mxu0 %v44
  %v114 = vpop.f32.mrf.mxu0
  %v115 = vadd.f32 0.0, %v114
  %v116 = vpop.f32.mrf.mxu0
  %v117 = vadd.f32 0.0, %v116
  %118 = vdwg.mxu0
  %119 = vmatpush.bf16.msra.mxu0 0
  %120 = vmatpush.bf16.msra.mxu0 0
  %121 = vmatpush.bf16.msra.mxu0 0
  %122 = vmatpush.bf16.msra.mxu0 0
  %123 = vmatpush.bf16.msra.mxu0 0
  %124 = vmatpush.bf16.msra.mxu0 0
  %125 = vmatpush.bf16.msra.mxu0 0
  %126 = vmatpush.bf16.msra.mxu0 %v91
  %127 = vmatmul.bf16.gmra.mxu0 %v103
  %v128 = vpop.f32.mrf.mxu0
  %v129 = vadd.f32 %v115, %v128
  %v130 = vpop.f32.mrf.mxu0
  %v131 = vadd.f32 %v117, %v130
  %132 = vdwg.mxu0
  %v133 = vld [vmem:[%s2] sm:$0x1]
  %v135 = vperm.slane %v133, 0
  %v137 = vmul.f32 %v129, %v135
  %v138 = vmul.f32 %v131, %v135
  %v139 = vld [vmem:[%s3] sm:$0x1]
  %v141 = vperm.slane %v139, 0
  %v143 = vadd.f32 %v137, %v141
  %v144 = vadd.f32 %v138, %v141
  %v145 = vmax.f32 %v143, 0.0
  %v146 = vmax.f32 %v144, 0.0
  %v147 = vpack.c.bf16 %v145, %v145
  %v148 = vpack.c.bf16 %v146, %v146
  %vm149 = vcmask 257024
  %150 = vst.msk [vmem:[%s4] sm:$0xf] %vm149, %v147
  %151 = vst.msk [vmem:[%s4 + $0x4] sm:$0xf] %vm149, %v148
  // Predicated region
  $region18: #{network_forward.45} parent=0 // pred_check
    _
  $region19: #{network_forward.45} parent=0 // pred_check_branch
    %153 = sbr.rel (0) target = $region21
  $region20: #{network_forward.45} parent=0 // pred_region
    _
  $region21: #{network_forward.45} parent=0 // pred_fallthru
    _
  // Predicated region
  $region22: #{network_forward.45} parent=0 // pred_check
    _
  $region23: #{network_forward.45} parent=0 // pred_check_branch
    %155 = sbr.rel (0) target = $region25
  $region24: #{network_forward.45} parent=0 // pred_region
    _
  $region25: #{network_forward.45} parent=0 // pred_fallthru
    _

// kernel: network_forward.47
$region0: #{network_forward.47}
  #allocation0 [shape = 'u32[]', space=smem, size = 0x4, offset = 0x4, fixed_abs, tag = 'smem constant byte address 0x4 - core index']
  #allocation1 [shape = 'u32[72,128]{1,0:T(1,128)}', space=vmem, size = 0x9000, scoped, tag = 'internal scratch']
  %s0 = inlined_call_operand.vmem [shape: bf16[4,32], index: 0, kind: input, shape index: {}]
  %s1 = inlined_call_operand.vmem [shape: bf16[32,16], index: 1, kind: input, shape index: {}]
  %s2 = inlined_call_operand.vmem [shape: f32[1,16], index: 2, kind: input, shape index: {}]
  %s3 = inlined_call_operand.vmem [shape: f32[1,16], index: 3, kind: input, shape index: {}]
  %s4 = inlined_call_operand.vmem [shape: bf16[4,16], index: 4, kind: output, shape index: {}]
  %s5 = sld [smem:[#allocation0]]
  $region26: #{network_forward.47} parent=0
    _
  %s7 = ssub.s32 1, %s5
  %s8 = scalar_select 0, %s7, %s5
  // Predicated region
  $region2: #{network_forward.47} parent=0 // pred_check
    _
  $region3: #{network_forward.47} parent=0 // pred_check_branch
    %10 = sbr.rel (0) target = $region5
  $region4: #{network_forward.47} parent=0 // pred_region
    _
  $region5: #{network_forward.47} parent=0 // pred_fallthru
    _
  // Predicated region
  $region6: #{network_forward.47} parent=0 // pred_check
    _
  $region7: #{network_forward.47} parent=0 // pred_check_branch
    %12 = sbr.rel (0) target = $region9
  $region8: #{network_forward.47} parent=0 // pred_region
    _
  $region9: #{network_forward.47} parent=0 // pred_fallthru
    _
  // Predicated region
  $region10: #{network_forward.47} parent=0 // pred_check
    _
  $region11: #{network_forward.47} parent=0 // pred_check_branch
    %14 = sbr.rel (0) target = $region13
  $region12: #{network_forward.47} parent=0 // pred_region
    _
  $region13: #{network_forward.47} parent=0 // pred_fallthru
    _
  // Predicated region
  $region14: #{network_forward.47} parent=0 // pred_check
    _
  $region15: #{network_forward.47} parent=0 // pred_check_branch
    %16 = sbr.rel (0) target = $region17
  $region16: #{network_forward.47} parent=0 // pred_region
    _
  $region17: #{network_forward.47} parent=0 // pred_fallthru
    _
  %v18 = vld [vmem:[%s0] sm:$0x3]
  %v19 = vld [vmem:[%s1] sm:$0xf]
  %v20 = vld [vmem:[%s1 + $0x4] sm:$0xf]
  %v21 = vld [vmem:[%s1 + $0x8] sm:$0xf]
  %v22 = vld [vmem:[%s1 + $0xc] sm:$0xf]
  %v27 = vunpack.c.l.b16 %v19
  %v28 = vunpack.c.l.b16 %v20
  %v29 = vunpack.c.l.b16 %v21
  %v30 = vunpack.c.l.b16 %v22
  %v31 = vpack.c.b16 %v28, %v27
  %v32 = vpack.c.b16 %v30, %v29
  %vm35 = vcmask 261120
  %v37 = vsel %vm35, %v18, 0
  %39 = vmatpush.bf16.msra.mxu0 0
  %40 = vmatpush.bf16.msra.mxu0 0
  %41 = vmatpush.bf16.msra.mxu0 0
  %42 = vmatpush.bf16.msra.mxu0 0
  %43 = vmatpush.bf16.msra.mxu0 0
  %44 = vmatpush.bf16.msra.mxu0 0
  %45 = vmatpush.bf16.msra.mxu0 %v32
  %46 = vmatpush.bf16.msra.mxu0 %v31
  %47 = vmatmul.bf16.gmra.mxu0 %v37
  %v48 = vpop.f32.mrf.mxu0
  %v49 = vadd.f32 0.0, %v48
  %v50 = vpop.f32.mrf.mxu0
  %51 = vdwg.mxu0
  %v52 = vld [vmem:[%s2] sm:$0x1]
  %v54 = vperm.slane %v52, 0
  %v56 = vmul.f32 %v49, %v54
  %v57 = vld [vmem:[%s3] sm:$0x1]
  %v59 = vperm.slane %v57, 0
  %v61 = vadd.f32 %v56, %v59
  %v62 = vmax.f32 %v61, 0.0
  %v63 = vpack.c.bf16 %v62, %v62
  %vm64 = vcmask 123904
  %65 = vst.msk [vmem:[%s4] sm:$0x3] %vm64, %v63
  // Predicated region
  $region18: #{network_forward.47} parent=0 // pred_check
    _
  $region19: #{network_forward.47} parent=0 // pred_check_branch
    %67 = sbr.rel (0) target = $region21
  $region20: #{network_forward.47} parent=0 // pred_region
    _
  $region21: #{network_forward.47} parent=0 // pred_fallthru
    _
  // Predicated region
  $region22: #{network_forward.47} parent=0 // pred_check
    _
  $region23: #{network_forward.47} parent=0 // pred_check_branch
    %69 = sbr.rel (0) target = $region25
  $region24: #{network_forward.47} parent=0 // pred_region
    _
  $region25: #{network_forward.47} parent=0 // pred_fallthru
    _

// kernel: network_forward.46
$region0: #{network_forward.46}
  #allocation0 [shape = 'u32[]', space=smem, size = 0x4, offset = 0x4, fixed_abs, tag = 'smem constant byte address 0x4 - core index']
  #allocation1 [shape = 'u32[72,128]{1,0:T(1,128)}', space=vmem, size = 0x9000, scoped, tag = 'internal scratch']
  %s0 = inlined_call_operand.vmem [shape: bf16[4,288], index: 0, kind: input, shape index: {}]
  %s1 = inlined_call_operand.vmem [shape: bf16[288,32], index: 1, kind: input, shape index: {}]
  %s2 = inlined_call_operand.vmem [shape: f32[1,32], index: 2, kind: input, shape index: {}]
  %s3 = inlined_call_operand.vmem [shape: f32[1,32], index: 3, kind: input, shape index: {}]
  %s4 = inlined_call_operand.vmem [shape: bf16[4,32], index: 4, kind: output, shape index: {}]
  %s5 = sld [smem:[#allocation0]]
  $region26: #{network_forward.46} parent=0
    _
  %s7 = ssub.s32 1, %s5
  %s8 = scalar_select 0, %s7, %s5
  // Predicated region
  $region2: #{network_forward.46} parent=0 // pred_check
    _
  $region3: #{network_forward.46} parent=0 // pred_check_branch
    %10 = sbr.rel (0) target = $region5
  $region4: #{network_forward.46} parent=0 // pred_region
    _
  $region5: #{network_forward.46} parent=0 // pred_fallthru
    _
  // Predicated region
  $region6: #{network_forward.46} parent=0 // pred_check
    _
  $region7: #{network_forward.46} parent=0 // pred_check_branch
    %12 = sbr.rel (0) target = $region9
  $region8: #{network_forward.46} parent=0 // pred_region
    _
  $region9: #{network_forward.46} parent=0 // pred_fallthru
    _
  // Predicated region
  $region10: #{network_forward.46} parent=0 // pred_check
    _
  $region11: #{network_forward.46} parent=0 // pred_check_branch
    %14 = sbr.rel (0) target = $region13
  $region12: #{network_forward.46} parent=0 // pred_region
    _
  $region13: #{network_forward.46} parent=0 // pred_fallthru
    _
  // Predicated region
  $region14: #{network_forward.46} parent=0 // pred_check
    _
  $region15: #{network_forward.46} parent=0 // pred_check_branch
    %16 = sbr.rel (0) target = $region17
  $region16: #{network_forward.46} parent=0 // pred_region
    _
  $region17: #{network_forward.46} parent=0 // pred_fallthru
    _
  %v18 = vld [vmem:[%s0] sm:$0x3f]
  %v19 = vld [vmem:[%s1] sm:$0xf]
  %v20 = vld [vmem:[%s1 + $0x4] sm:$0xf]
  %v21 = vld [vmem:[%s1 + $0x8] sm:$0xf]
  %v22 = vld [vmem:[%s1 + $0xc] sm:$0xf]
  %v23 = vld [vmem:[%s1 + $0x10] sm:$0xf]
  %v24 = vld [vmem:[%s1 + $0x14] sm:$0xf]
  %v25 = vld [vmem:[%s1 + $0x18] sm:$0xf]
  %v26 = vld [vmem:[%s1 + $0x1c] sm:$0xf]
  %v27 = vld [vmem:[%s1 + $0x20] sm:$0xf]
  %v28 = vld [vmem:[%s1 + $0x24] sm:$0xf]
  %v29 = vld [vmem:[%s1 + $0x28] sm:$0xf]
  %v30 = vld [vmem:[%s1 + $0x2c] sm:$0xf]
  %v31 = vld [vmem:[%s1 + $0x30] sm:$0xf]
  %v32 = vld [vmem:[%s1 + $0x34] sm:$0xf]
  %v33 = vld [vmem:[%s1 + $0x38] sm:$0xf]
  %v34 = vld [vmem:[%s1 + $0x3c] sm:$0xf]
  %v35 = vld [vmem:[%s1 + $0x40] sm:$0xf]
  %v36 = vld [vmem:[%s1 + $0x44] sm:$0xf]
  %v37 = vld [vmem:[%s1 + $0x48] sm:$0xf]
  %v38 = vld [vmem:[%s1 + $0x4c] sm:$0xf]
  %v39 = vld [vmem:[%s1 + $0x50] sm:$0xf]
  %v40 = vld [vmem:[%s1 + $0x54] sm:$0xf]
  %v41 = vld [vmem:[%s1 + $0x58] sm:$0xf]
  %v42 = vld [vmem:[%s1 + $0x5c] sm:$0xf]
  %v43 = vld [vmem:[%s1 + $0x60] sm:$0xf]
  %v44 = vld [vmem:[%s1 + $0x64] sm:$0xf]
  %v45 = vld [vmem:[%s1 + $0x68] sm:$0xf]
  %v46 = vld [vmem:[%s1 + $0x6c] sm:$0xf]
  %v47 = vld [vmem:[%s1 + $0x70] sm:$0xf]
  %v48 = vld [vmem:[%s1 + $0x74] sm:$0xf]
  %v49 = vld [vmem:[%s1 + $0x78] sm:$0xf]
  %v50 = vld [vmem:[%s1 + $0x7c] sm:$0xf]
  %v51 = vld [vmem:[%s1 + $0x80] sm:$0xf]
  %v52 = vld [vmem:[%s1 + $0x84] sm:$0xf]
  %v53 = vld [vmem:[%s1 + $0x88] sm:$0xf]
  %v54 = vld [vmem:[%s1 + $0x8c] sm:$0xf]
  %56 = vst [vmem:[#allocation1] ss:$4 sm:$0xff] %v18
  %v57 = vld.sshfl [vmem:[#allocation1] sm:$0xff pattern:$0x73625140]
  %v58 = vld.sshfl [vmem:[#allocation1 + $0x8] sm:$0xff pattern:$0x73625140]
  %v59 = vld.sshfl [vmem:[#allocation1 + $0x10] sm:$0xff pattern:$0x73625140]
  %v98 = vunpack.c.l.b16 %v19
  %v99 = vunpack.c.l.b16 %v20
  %v100 = vunpack.c.l.b16 %v21
  %v101 = vunpack.c.l.b16 %v22
  %v102 = vunpack.c.l.b16 %v23
  %v103 = vunpack.c.l.b16 %v24
  %v104 = vunpack.c.l.b16 %v25
  %v105 = vunpack.c.l.b16 %v26
  %v106 = vunpack.c.l.b16 %v27
  %v107 = vunpack.c.l.b16 %v28
  %v108 = vunpack.c.l.b16 %v29
  %v109 = vunpack.c.l.b16 %v30
  %v110 = vunpack.c.l.b16 %v31
  %v111 = vunpack.c.l.b16 %v32
  %v112 = vunpack.c.l.b16 %v33
  %v113 = vunpack.c.l.b16 %v34
  %v114 = vunpack.c.l.b16 %v35
  %v115 = vunpack.c.l.b16 %v36
  %v116 = vunpack.c.l.b16 %v37
  %v117 = vunpack.c.l.b16 %v38
  %v118 = vunpack.c.l.b16 %v39
  %v119 = vunpack.c.l.b16 %v40
  %v120 = vunpack.c.l.b16 %v41
  %v121 = vunpack.c.l.b16 %v42
  %v122 = vunpack.c.l.b16 %v43
  %v123 = vunpack.c.l.b16 %v44
  %v124 = vunpack.c.l.b16 %v45
  %v125 = vunpack.c.l.b16 %v46
  %v126 = vunpack.c.l.b16 %v47
  %v127 = vunpack.c.l.b16 %v48
  %v128 = vunpack.c.l.b16 %v49
  %v129 = vunpack.c.l.b16 %v50
  %v130 = vunpack.c.l.b16 %v51
  %v131 = vunpack.c.l.b16 %v52
  %v132 = vunpack.c.l.b16 %v53
  %v133 = vunpack.c.l.b16 %v54
  %v134 = vpack.c.b16 %v99, %v98
  %v135 = vpack.c.b16 %v101, %v100
  %v136 = vpack.c.b16 %v103, %v102
  %v137 = vpack.c.b16 %v105, %v104
  %v138 = vpack.c.b16 %v107, %v106
  %v139 = vpack.c.b16 %v109, %v108
  %v140 = vpack.c.b16 %v111, %v110
  %v141 = vpack.c.b16 %v113, %v112
  %v142 = vpack.c.b16 %v115, %v114
  %v143 = vpack.c.b16 %v117, %v116
  %v144 = vpack.c.b16 %v119, %v118
  %v145 = vpack.c.b16 %v121, %v120
  %v146 = vpack.c.b16 %v123, %v122
  %v147 = vpack.c.b16 %v125, %v124
  %v148 = vpack.c.b16 %v127, %v126
  %v149 = vpack.c.b16 %v129, %v128
  %v150 = vpack.c.b16 %v131, %v130
  %v151 = vpack.c.b16 %v133, %v132
  %vm170 = vcmask 261120
  %v171 = vsel %vm170, %v59, 0
  %173 = vmatpush.bf16.msra.mxu0 %v141
  %174 = vmatpush.bf16.msra.mxu0 %v140
  %175 = vmatpush.bf16.msra.mxu0 %v139
  %176 = vmatpush.bf16.msra.mxu0 %v138
  %177 = vmatpush.bf16.msra.mxu0 %v137
  %178 = vmatpush.bf16.msra.mxu0 %v136
  %179 = vmatpush.bf16.msra.mxu0 %v135
  %180 = vmatpush.bf16.msra.mxu0 %v134
  %181 = vmatmul.bf16.gmra.mxu0 %v57
  %v182 = vpop.f32.mrf.mxu0
  %v183 = vadd.f32 0.0, %v182
  %v184 = vpop.f32.mrf.mxu0
  %185 = vdwg.mxu0
  %186 = vmatpush.bf16.msra.mxu0 %v149
  %187 = vmatpush.bf16.msra.mxu0 %v148
  %188 = vmatpush.bf16.msra.mxu0 %v147
  %189 = vmatpush.bf16.msra.mxu0 %v146
  %190 = vmatpush.bf16.msra.mxu0 %v145
  %191 = vmatpush.bf16.msra.mxu0 %v144
  %192 = vmatpush.bf16.msra.mxu0 %v143
  %193 = vmatpush.bf16.msra.mxu0 %v142
  %194 = vmatmul.bf16.gmra.mxu0 %v58
  %v195 = vpop.f32.mrf.mxu0
  %v196 = vadd.f32 %v183, %v195
  %v197 = vpop.f32.mrf.mxu0
  %198 = vdwg.mxu0
  %199 = vmatpush.bf16.msra.mxu0 0
  %200 = vmatpush.bf16.msra.mxu0 0
  %201 = vmatpush.bf16.msra.mxu0 0
  %202 = vmatpush.bf16.msra.mxu0 0
  %203 = vmatpush.bf16.msra.mxu0 0
  %204 = vmatpush.bf16.msra.mxu0 0
  %205 = vmatpush.bf16.msra.mxu0 %v151
  %206 = vmatpush.bf16.msra.mxu0 %v150
  %207 = vmatmul.bf16.gmra.mxu0 %v171
  %v208 = vpop.f32.mrf.mxu0
  %v209 = vadd.f32 %v196, %v208
  %v210 = vpop.f32.mrf.mxu0
  %211 = vdwg.mxu0
  %v212 = vld [vmem:[%s2] sm:$0x1]
  %v214 = vperm.slane %v212, 0
  %v216 = vmul.f32 %v209, %v214
  %v217 = vld [vmem:[%s3] sm:$0x1]
  %v219 = vperm.slane %v217, 0
  %v221 = vadd.f32 %v216, %v219
  %v222 = vmax.f32 %v221, 0.0
  %v223 = vpack.c.bf16 %v222, %v222
  %vm224 = vcmask 254976
  %225 = vst.msk [vmem:[%s4] sm:$0x3] %vm224, %v223
  // Predicated region
  $region18: #{network_forward.46} parent=0 // pred_check
    _
  $region19: #{network_forward.46} parent=0 // pred_check_branch
    %227 = sbr.rel (0) target = $region21
  $region20: #{network_forward.46} parent=0 // pred_region
    _
  $region21: #{network_forward.46} parent=0 // pred_fallthru
    _
  // Predicated region
  $region22: #{network_forward.46} parent=0 // pred_check
    _
  $region23: #{network_forward.46} parent=0 // pred_check_branch
    %229 = sbr.rel (0) target = $region25
  $region24: #{network_forward.46} parent=0 // pred_region
    _
  $region25: #{network_forward.46} parent=0 // pred_fallthru
    _

// kernel: network_forward.48
$region0: #{network_forward.48}
  #allocation0 [shape = 'u32[]', space=smem, size = 0x4, offset = 0x4, fixed_abs, tag = 'smem constant byte address 0x4 - core index']
  #allocation1 [shape = 'u32[72,128]{1,0:T(1,128)}', space=vmem, size = 0x9000, scoped, tag = 'internal scratch']
  %s0 = inlined_call_operand.vmem [shape: bf16[256,81], index: 0, kind: input, shape index: {}]
  %s1 = inlined_call_operand.vmem [shape: bf16[81,64], index: 1, kind: input, shape index: {}]
  %s2 = inlined_call_operand.vmem [shape: f32[1,64], index: 2, kind: input, shape index: {}]
  %s3 = inlined_call_operand.vmem [shape: f32[1,64], index: 3, kind: input, shape index: {}]
  %s4 = inlined_call_operand.vmem [shape: bf16[256,64], index: 4, kind: output, shape index: {}]
  %s5 = sld [smem:[#allocation0]]
  $region26: #{network_forward.48} parent=0
    _
  %s7 = ssub.s32 1, %s5
  %s8 = scalar_select 0, %s7, %s5
  // Predicated region
  $region2: #{network_forward.48} parent=0 // pred_check
    _
  $region3: #{network_forward.48} parent=0 // pred_check_branch
    %10 = sbr.rel (0) target = $region5
  $region4: #{network_forward.48} parent=0 // pred_region
    _
  $region5: #{network_forward.48} parent=0 // pred_fallthru
    _
  // Predicated region
  $region6: #{network_forward.48} parent=0 // pred_check
    _
  $region7: #{network_forward.48} parent=0 // pred_check_branch
    %12 = sbr.rel (0) target = $region9
  $region8: #{network_forward.48} parent=0 // pred_region
    _
  $region9: #{network_forward.48} parent=0 // pred_fallthru
    _
  // Predicated region
  $region10: #{network_forward.48} parent=0 // pred_check
    _
  $region11: #{network_forward.48} parent=0 // pred_check_branch
    %14 = sbr.rel (0) target = $region13
  $region12: #{network_forward.48} parent=0 // pred_region
    _
  $region13: #{network_forward.48} parent=0 // pred_fallthru
    _
  // Predicated region
  $region14: #{network_forward.48} parent=0 // pred_check
    _
  $region15: #{network_forward.48} parent=0 // pred_check_branch
    %16 = sbr.rel (0) target = $region17
  $region16: #{network_forward.48} parent=0 // pred_region
    _
  $region17: #{network_forward.48} parent=0 // pred_fallthru
    _
  %v18 = vld [vmem:[%s0] sm:$0xf]
  %v19 = vld [vmem:[%s0 + $0x4] sm:$0xf]
  %v20 = vld [vmem:[%s0 + $0x8] sm:$0xf]
  %v21 = vld [vmem:[%s0 + $0xc] sm:$0xf]
  %v22 = vld [vmem:[%s0 + $0x10] sm:$0xf]
  %v23 = vld [vmem:[%s0 + $0x14] sm:$0xf]
  %v24 = vld [vmem:[%s0 + $0x18] sm:$0xf]
  %v25 = vld [vmem:[%s0 + $0x1c] sm:$0xf]
  %v26 = vld [vmem:[%s0 + $0x20] sm:$0xf]
  %v27 = vld [vmem:[%s0 + $0x24] sm:$0xf]
  %v28 = vld [vmem:[%s0 + $0x28] sm:$0xf]
  %v29 = vld [vmem:[%s0 + $0x2c] sm:$0xf]
  %v30 = vld [vmem:[%s0 + $0x30] sm:$0xf]
  %v31 = vld [vmem:[%s0 + $0x34] sm:$0xf]
  %v32 = vld [vmem:[%s0 + $0x38] sm:$0xf]
  %v33 = vld [vmem:[%s0 + $0x3c] sm:$0xf]
  %v34 = vld [vmem:[%s0 + $0x40] sm:$0xf]
  %v35 = vld [vmem:[%s0 + $0x44] sm:$0xf]
  %v36 = vld [vmem:[%s0 + $0x48] sm:$0xf]
  %v37 = vld [vmem:[%s0 + $0x4c] sm:$0xf]
  %v38 = vld [vmem:[%s0 + $0x50] sm:$0xf]
  %v39 = vld [vmem:[%s0 + $0x54] sm:$0xf]
  %v40 = vld [vmem:[%s0 + $0x58] sm:$0xf]
  %v41 = vld [vmem:[%s0 + $0x5c] sm:$0xf]
  %v42 = vld [vmem:[%s0 + $0x60] sm:$0xf]
  %v43 = vld [vmem:[%s0 + $0x64] sm:$0xf]
  %v44 = vld [vmem:[%s0 + $0x68] sm:$0xf]
  %v45 = vld [vmem:[%s0 + $0x6c] sm:$0xf]
  %v46 = vld [vmem:[%s0 + $0x70] sm:$0xf]
  %v47 = vld [vmem:[%s0 + $0x74] sm:$0xf]
  %v48 = vld [vmem:[%s0 + $0x78] sm:$0xf]
  %v49 = vld [vmem:[%s0 + $0x7c] sm:$0xf]
  %v50 = vld [vmem:[%s1] sm:$0xf]
  %v51 = vld [vmem:[%s1 + $0x4] sm:$0xf]
  %v52 = vld [vmem:[%s1 + $0x8] sm:$0xf]
  %v53 = vld [vmem:[%s1 + $0xc] sm:$0xf]
  %v54 = vld [vmem:[%s1 + $0x10] sm:$0xf]
  %v55 = vld [vmem:[%s1 + $0x14] sm:$0xf]
  %v56 = vld [vmem:[%s1 + $0x18] sm:$0xf]
  %v57 = vld [vmem:[%s1 + $0x1c] sm:$0xf]
  %v58 = vld [vmem:[%s1 + $0x20] sm:$0xf]
  %v59 = vld [vmem:[%s1 + $0x24] sm:$0xf]
  %v60 = vld [vmem:[%s1 + $0x28] sm:$0x1]
  %v93 = vunpack.c.l.b16 %v18
  %v94 = vunpack.c.l.b16 %v19
  %v95 = vunpack.c.l.b16 %v20
  %v96 = vunpack.c.l.b16 %v21
  %v97 = vunpack.c.l.b16 %v22
  %v98 = vunpack.c.l.b16 %v23
  %v99 = vunpack.c.l.b16 %v24
  %v100 = vunpack.c.l.b16 %v25
  %v101 = vunpack.c.l.b16 %v26
  %v102 = vunpack.c.l.b16 %v27
  %v103 = vunpack.c.l.b16 %v28
  %v104 = vunpack.c.l.b16 %v29
  %v105 = vunpack.c.l.b16 %v30
  %v106 = vunpack.c.l.b16 %v31
  %v107 = vunpack.c.l.b16 %v32
  %v108 = vunpack.c.l.b16 %v33
  %v109 = vunpack.c.l.b16 %v34
  %v110 = vunpack.c.l.b16 %v35
  %v111 = vunpack.c.l.b16 %v36
  %v112 = vunpack.c.l.b16 %v37
  %v113 = vunpack.c.l.b16 %v38
  %v114 = vunpack.c.l.b16 %v39
  %v115 = vunpack.c.l.b16 %v40
  %v116 = vunpack.c.l.b16 %v41
  %v117 = vunpack.c.l.b16 %v42
  %v118 = vunpack.c.l.b16 %v43
  %v119 = vunpack.c.l.b16 %v44
  %v120 = vunpack.c.l.b16 %v45
  %v121 = vunpack.c.l.b16 %v46
  %v122 = vunpack.c.l.b16 %v47
  %v123 = vunpack.c.l.b16 %v48
  %v124 = vunpack.c.l.b16 %v49
  %v125 = vpack.c.b16 %v94, %v93
  %v126 = vpack.c.b16 %v96, %v95
  %v127 = vpack.c.b16 %v98, %v97
  %v128 = vpack.c.b16 %v100, %v99
  %v129 = vpack.c.b16 %v102, %v101
  %v130 = vpack.c.b16 %v104, %v103
  %v131 = vpack.c.b16 %v106, %v105
  %v132 = vpack.c.b16 %v108, %v107
  %v133 = vpack.c.b16 %v110, %v109
  %v134 = vpack.c.b16 %v112, %v111
  %v135 = vpack.c.b16 %v114, %v113
  %v136 = vpack.c.b16 %v116, %v115
  %v137 = vpack.c.b16 %v118, %v117
  %v138 = vpack.c.b16 %v120, %v119
  %v139 = vpack.c.b16 %v122, %v121
  %v140 = vpack.c.b16 %v124, %v123
  %v152 = vunpack.c.l.b16 %v50
  %v153 = vunpack.c.l.b16 %v51
  %v154 = vunpack.c.l.b16 %v52
  %v155 = vunpack.c.l.b16 %v53
  %v156 = vunpack.c.l.b16 %v54
  %v157 = vunpack.c.l.b16 %v55
  %v158 = vunpack.c.l.b16 %v56
  %v159 = vunpack.c.l.b16 %v57
  %v160 = vunpack.c.l.b16 %v58
  %v161 = vunpack.c.l.b16 %v59
  %v162 = vunpack.c.l.b16 %v60
  %v163 = vpack.c.b16 %v153, %v152
  %v164 = vpack.c.b16 %v155, %v154
  %v165 = vpack.c.b16 %v157, %v156
  %v166 = vpack.c.b16 %v159, %v158
  %v167 = vpack.c.b16 %v161, %v160
  %v168 = vpack.c.b16 %v162, %v162
  %vm174 = vcmask 662528
  %v176 = vsel %vm174, %v125, 0
  %v179 = vsel %vm174, %v126, 0
  %v182 = vsel %vm174, %v127, 0
  %v185 = vsel %vm174, %v128, 0
  %v188 = vsel %vm174, %v129, 0
  %v191 = vsel %vm174, %v130, 0
  %v194 = vsel %vm174, %v131, 0
  %v197 = vsel %vm174, %v132, 0
  %v200 = vsel %vm174, %v133, 0
  %v203 = vsel %vm174, %v134, 0
  %v206 = vsel %vm174, %v135, 0
  %v209 = vsel %vm174, %v136, 0
  %v212 = vsel %vm174, %v137, 0
  %v215 = vsel %vm174, %v138, 0
  %v218 = vsel %vm174, %v139, 0
  %v221 = vsel %vm174, %v140, 0
  %vm223 = vcmask 1040384
  %v224 = vsel 0, 4294967295, 65535
  %v225 = vsel %vm223, %v224, 0
  %v227 = vand.u32 %v168, %v225
  %229 = vmatpush.bf16.msra.mxu0 0
  %230 = vmatpush.bf16.msra.mxu0 0
  %231 = vmatpush.bf16.msra.mxu0 %v227
  %232 = vmatpush.bf16.msra.mxu0 %v167
  %233 = vmatpush.bf16.msra.mxu0 %v166
  %234 = vmatpush.bf16.msra.mxu0 %v165
  %235 = vmatpush.bf16.msra.mxu0 %v164
  %236 = vmatpush.bf16.msra.mxu0 %v163
  %237 = vmatmul.bf16.gmra.mxu0 %v176
  %v238 = vpop.f32.mrf.mxu0
  %v239 = vadd.f32 0.0, %v238
  %v240 = vpop.f32.mrf.mxu0
  %v241 = vadd.f32 0.0, %v240
  %242 = vmatmul.bf16.gmra.mxu0 %v179
  %v243 = vpop.f32.mrf.mxu0
  %v244 = vadd.f32 0.0, %v243
  %v245 = vpop.f32.mrf.mxu0
  %v246 = vadd.f32 0.0, %v245
  %247 = vmatmul.bf16.gmra.mxu0 %v182
  %v248 = vpop.f32.mrf.mxu0
  %v249 = vadd.f32 0.0, %v248
  %v250 = vpop.f32.mrf.mxu0
  %v251 = vadd.f32 0.0, %v250
  %252 = vmatmul.bf16.gmra.mxu0 %v185
  %v253 = vpop.f32.mrf.mxu0
  %v254 = vadd.f32 0.0, %v253
  %v255 = vpop.f32.mrf.mxu0
  %v256 = vadd.f32 0.0, %v255
  %257 = vmatmul.bf16.gmra.mxu0 %v188
  %v258 = vpop.f32.mrf.mxu0
  %v259 = vadd.f32 0.0, %v258
  %v260 = vpop.f32.mrf.mxu0
  %v261 = vadd.f32 0.0, %v260
  %262 = vmatmul.bf16.gmra.mxu0 %v191
  %v263 = vpop.f32.mrf.mxu0
  %v264 = vadd.f32 0.0, %v263
  %v265 = vpop.f32.mrf.mxu0
  %v266 = vadd.f32 0.0, %v265
  %267 = vmatmul.bf16.gmra.mxu0 %v194
  %v268 = vpop.f32.mrf.mxu0
  %v269 = vadd.f32 0.0, %v268
  %v270 = vpop.f32.mrf.mxu0
  %v271 = vadd.f32 0.0, %v270
  %272 = vmatmul.bf16.gmra.mxu0 %v197
  %v273 = vpop.f32.mrf.mxu0
  %v274 = vadd.f32 0.0, %v273
  %v275 = vpop.f32.mrf.mxu0
  %v276 = vadd.f32 0.0, %v275
  %277 = vmatmul.bf16.gmra.mxu0 %v200
  %v278 = vpop.f32.mrf.mxu0
  %v279 = vadd.f32 0.0, %v278
  %v280 = vpop.f32.mrf.mxu0
  %v281 = vadd.f32 0.0, %v280
  %282 = vmatmul.bf16.gmra.mxu0 %v203
  %v283 = vpop.f32.mrf.mxu0
  %v284 = vadd.f32 0.0, %v283
  %v285 = vpop.f32.mrf.mxu0
  %v286 = vadd.f32 0.0, %v285
  %287 = vmatmul.bf16.gmra.mxu0 %v206
  %v288 = vpop.f32.mrf.mxu0
  %v289 = vadd.f32 0.0, %v288
  %v290 = vpop.f32.mrf.mxu0
  %v291 = vadd.f32 0.0, %v290
  %292 = vmatmul.bf16.gmra.mxu0 %v209
  %v293 = vpop.f32.mrf.mxu0
  %v294 = vadd.f32 0.0, %v293
  %v295 = vpop.f32.mrf.mxu0
  %v296 = vadd.f32 0.0, %v295
  %297 = vmatmul.bf16.gmra.mxu0 %v212
  %v298 = vpop.f32.mrf.mxu0
  %v299 = vadd.f32 0.0, %v298
  %v300 = vpop.f32.mrf.mxu0
  %v301 = vadd.f32 0.0, %v300
  %302 = vmatmul.bf16.gmra.mxu0 %v215
  %v303 = vpop.f32.mrf.mxu0
  %v304 = vadd.f32 0.0, %v303
  %v305 = vpop.f32.mrf.mxu0
  %v306 = vadd.f32 0.0, %v305
  %307 = vmatmul.bf16.gmra.mxu0 %v218
  %v308 = vpop.f32.mrf.mxu0
  %v309 = vadd.f32 0.0, %v308
  %v310 = vpop.f32.mrf.mxu0
  %v311 = vadd.f32 0.0, %v310
  %312 = vmatmul.bf16.gmra.mxu0 %v221
  %v313 = vpop.f32.mrf.mxu0
  %v314 = vadd.f32 0.0, %v313
  %v315 = vpop.f32.mrf.mxu0
  %v316 = vadd.f32 0.0, %v315
  %317 = vdwg.mxu0
  %v318 = vld [vmem:[%s2] sm:$0x1]
  %v320 = vperm.slane %v318, 0
  %v322 = vmul.f32 %v239, %v320
  %v323 = vmul.f32 %v241, %v320
  %v324 = vmul.f32 %v244, %v320
  %v325 = vmul.f32 %v246, %v320
  %v326 = vmul.f32 %v249, %v320
  %v327 = vmul.f32 %v251, %v320
  %v328 = vmul.f32 %v254, %v320
  %v329 = vmul.f32 %v256, %v320
  %v330 = vmul.f32 %v259, %v320
  %v331 = vmul.f32 %v261, %v320
  %v332 = vmul.f32 %v264, %v320
  %v333 = vmul.f32 %v266, %v320
  %v334 = vmul.f32 %v269, %v320
  %v335 = vmul.f32 %v271, %v320
  %v336 = vmul.f32 %v274, %v320
  %v337 = vmul.f32 %v276, %v320
  %v338 = vmul.f32 %v279, %v320
  %v339 = vmul.f32 %v281, %v320
  %v340 = vmul.f32 %v284, %v320
  %v341 = vmul.f32 %v286, %v320
  %v342 = vmul.f32 %v289, %v320
  %v343 = vmul.f32 %v291, %v320
  %v344 = vmul.f32 %v294, %v320
  %v345 = vmul.f32 %v296, %v320
  %v346 = vmul.f32 %v299, %v320
  %v347 = vmul.f32 %v301, %v320
  %v348 = vmul.f32 %v304, %v320
  %v349 = vmul.f32 %v306, %v320
  %v350 = vmul.f32 %v309, %v320
  %v351 = vmul.f32 %v311, %v320
  %v352 = vmul.f32 %v314, %v320
  %v353 = vmul.f32 %v316, %v320
  %v354 = vld [vmem:[%s3] sm:$0x1]
  %v356 = vperm.slane %v354, 0
  %v358 = vadd.f32 %v322, %v356
  %v359 = vadd.f32 %v323, %v356
  %v360 = vadd.f32 %v324, %v356
  %v361 = vadd.f32 %v325, %v356
  %v362 = vadd.f32 %v326, %v356
  %v363 = vadd.f32 %v327, %v356
  %v364 = vadd.f32 %v328, %v356
  %v365 = vadd.f32 %v329, %v356
  %v366 = vadd.f32 %v330, %v356
  %v367 = vadd.f32 %v331, %v356
  %v368 = vadd.f32 %v332, %v356
  %v369 = vadd.f32 %v333, %v356
  %v370 = vadd.f32 %v334, %v356
  %v371 = vadd.f32 %v335, %v356
  %v372 = vadd.f32 %v336, %v356
  %v373 = vadd.f32 %v337, %v356
  %v374 = vadd.f32 %v338, %v356
  %v375 = vadd.f32 %v339, %v356
  %v376 = vadd.f32 %v340, %v356
  %v377 = vadd.f32 %v341, %v356
  %v378 = vadd.f32 %v342, %v356
  %v379 = vadd.f32 %v343, %v356
  %v380 = vadd.f32 %v344, %v356
  %v381 = vadd.f32 %v345, %v356
  %v382 = vadd.f32 %v346, %v356
  %v383 = vadd.f32 %v347, %v356
  %v384 = vadd.f32 %v348, %v356
  %v385 = vadd.f32 %v349, %v356
  %v386 = vadd.f32 %v350, %v356
  %v387 = vadd.f32 %v351, %v356
  %v388 = vadd.f32 %v352, %v356
  %v389 = vadd.f32 %v353, %v356
  %v390 = vmax.f32 %v358, 0.0
  %v391 = vmax.f32 %v359, 0.0
  %v392 = vmax.f32 %v360, 0.0
  %v393 = vmax.f32 %v361, 0.0
  %v394 = vmax.f32 %v362, 0.0
  %v395 = vmax.f32 %v363, 0.0
  %v396 = vmax.f32 %v364, 0.0
  %v397 = vmax.f32 %v365, 0.0
  %v398 = vmax.f32 %v366, 0.0
  %v399 = vmax.f32 %v367, 0.0
  %v400 = vmax.f32 %v368, 0.0
  %v401 = vmax.f32 %v369, 0.0
  %v402 = vmax.f32 %v370, 0.0
  %v403 = vmax.f32 %v371, 0.0
  %v404 = vmax.f32 %v372, 0.0
  %v405 = vmax.f32 %v373, 0.0
  %v406 = vmax.f32 %v374, 0.0
  %v407 = vmax.f32 %v375, 0.0
  %v408 = vmax.f32 %v376, 0.0
  %v409 = vmax.f32 %v377, 0.0
  %v410 = vmax.f32 %v378, 0.0
  %v411 = vmax.f32 %v379, 0.0
  %v412 = vmax.f32 %v380, 0.0
  %v413 = vmax.f32 %v381, 0.0
  %v414 = vmax.f32 %v382, 0.0
  %v415 = vmax.f32 %v383, 0.0
  %v416 = vmax.f32 %v384, 0.0
  %v417 = vmax.f32 %v385, 0.0
  %v418 = vmax.f32 %v386, 0.0
  %v419 = vmax.f32 %v387, 0.0
  %v420 = vmax.f32 %v388, 0.0
  %v421 = vmax.f32 %v389, 0.0
  %v422 = vpack.c.bf16 %v390, %v390
  %v423 = vpack.c.bf16 %v391, %v391
  %v424 = vpack.c.bf16 %v392, %v392
  %v425 = vpack.c.bf16 %v393, %v393
  %v426 = vpack.c.bf16 %v394, %v394
  %v427 = vpack.c.bf16 %v395, %v395
  %v428 = vpack.c.bf16 %v396, %v396
  %v429 = vpack.c.bf16 %v397, %v397
  %v430 = vpack.c.bf16 %v398, %v398
  %v431 = vpack.c.bf16 %v399, %v399
  %v432 = vpack.c.bf16 %v400, %v400
  %v433 = vpack.c.bf16 %v401, %v401
  %v434 = vpack.c.bf16 %v402, %v402
  %v435 = vpack.c.bf16 %v403, %v403
  %v436 = vpack.c.bf16 %v404, %v404
  %v437 = vpack.c.bf16 %v405, %v405
  %v438 = vpack.c.bf16 %v406, %v406
  %v439 = vpack.c.bf16 %v407, %v407
  %v440 = vpack.c.bf16 %v408, %v408
  %v441 = vpack.c.bf16 %v409, %v409
  %v442 = vpack.c.bf16 %v410, %v410
  %v443 = vpack.c.bf16 %v411, %v411
  %v444 = vpack.c.bf16 %v412, %v412
  %v445 = vpack.c.bf16 %v413, %v413
  %v446 = vpack.c.bf16 %v414, %v414
  %v447 = vpack.c.bf16 %v415, %v415
  %v448 = vpack.c.bf16 %v416, %v416
  %v449 = vpack.c.bf16 %v417, %v417
  %v450 = vpack.c.bf16 %v418, %v418
  %v451 = vpack.c.bf16 %v419, %v419
  %v452 = vpack.c.bf16 %v420, %v420
  %v453 = vpack.c.bf16 %v421, %v421
  %vm454 = vcmask 519168
  %455 = vst.msk [vmem:[%s4] sm:$0xf] %vm454, %v422
  %456 = vst.msk [vmem:[%s4 + $0x4] sm:$0xf] %vm454, %v423
  %457 = vst.msk [vmem:[%s4 + $0x8] sm:$0xf] %vm454, %v424
  %458 = vst.msk [vmem:[%s4 + $0xc] sm:$0xf] %vm454, %v425
  %459 = vst.msk [vmem:[%s4 + $0x10] sm:$0xf] %vm454, %v426
  %460 = vst.msk [vmem:[%s4 + $0x14] sm:$0xf] %vm454, %v427
  %461 = vst.msk [vmem:[%s4 + $0x18] sm:$0xf] %vm454, %v428
  %462 = vst.msk [vmem:[%s4 + $0x1c] sm:$0xf] %vm454, %v429
  %463 = vst.msk [vmem:[%s4 + $0x20] sm:$0xf] %vm454, %v430
  %464 = vst.msk [vmem:[%s4 + $0x24] sm:$0xf] %vm454, %v431
  %465 = vst.msk [vmem:[%s4 + $0x28] sm:$0xf] %vm454, %v432
  %466 = vst.msk [vmem:[%s4 + $0x2c] sm:$0xf] %vm454, %v433
  %467 = vst.msk [vmem:[%s4 + $0x30] sm:$0xf] %vm454, %v434
  %468 = vst.msk [vmem:[%s4 + $0x34] sm:$0xf] %vm454, %v435
  %469 = vst.msk [vmem:[%s4 + $0x38] sm:$0xf] %vm454, %v436
  %470 = vst.msk [vmem:[%s4 + $0x3c] sm:$0xf] %vm454, %v437
  %471 = vst.msk [vmem:[%s4 + $0x40] sm:$0xf] %vm454, %v438
  %472 = vst.msk [vmem:[%s4 + $0x44] sm:$0xf] %vm454, %v439
  %473 = vst.msk [vmem:[%s4 + $0x48] sm:$0xf] %vm454, %v440
  %474 = vst.msk [vmem:[%s4 + $0x4c] sm:$0xf] %vm454, %v441
  %475 = vst.msk [vmem:[%s4 + $0x50] sm:$0xf] %vm454, %v442
  %476 = vst.msk [vmem:[%s4 + $0x54] sm:$0xf] %vm454, %v443
  %477 = vst.msk [vmem:[%s4 + $0x58] sm:$0xf] %vm454, %v444
  %478 = vst.msk [vmem:[%s4 + $0x5c] sm:$0xf] %vm454, %v445
  %479 = vst.msk [vmem:[%s4 + $0x60] sm:$0xf] %vm454, %v446
  %480 = vst.msk [vmem:[%s4 + $0x64] sm:$0xf] %vm454, %v447
  %481 = vst.msk [vmem:[%s4 + $0x68] sm:$0xf] %vm454, %v448
  %482 = vst.msk [vmem:[%s4 + $0x6c] sm:$0xf] %vm454, %v449
  %483 = vst.msk [vmem:[%s4 + $0x70] sm:$0xf] %vm454, %v450
  %484 = vst.msk [vmem:[%s4 + $0x74] sm:$0xf] %vm454, %v451
  %485 = vst.msk [vmem:[%s4 + $0x78] sm:$0xf] %vm454, %v452
  %486 = vst.msk [vmem:[%s4 + $0x7c] sm:$0xf] %vm454, %v453
  // Predicated region
  $region18: #{network_forward.48} parent=0 // pred_check
    _
  $region19: #{network_forward.48} parent=0 // pred_check_branch
    %488 = sbr.rel (0) target = $region21
  $region20: #{network_forward.48} parent=0 // pred_region
    _
  $region21: #{network_forward.48} parent=0 // pred_fallthru
    _
  // Predicated region
  $region22: #{network_forward.48} parent=0 // pred_check
    _
  $region23: #{network_forward.48} parent=0 // pred_check_branch
    %490 = sbr.rel (0) target = $region25
  $region24: #{network_forward.48} parent=0 // pred_region
    _
  $region25: #{network_forward.48} parent=0 // pred_fallthru
    _

// kernel: network_forward.49
$region0: #{network_forward.49}
  #allocation0 [shape = 'u32[]', space=smem, size = 0x4, offset = 0x4, fixed_abs, tag = 'smem constant byte address 0x4 - core index']
  #allocation1 [shape = 'u32[72,128]{1,0:T(1,128)}', space=vmem, size = 0x9000, scoped, tag = 'internal scratch']
  %s0 = inlined_call_operand.vmem [shape: bf16[256,1728], index: 0, kind: input, shape index: {}]
  %s1 = inlined_call_operand.vmem [shape: bf16[1728,16], index: 1, kind: input, shape index: {}]
  %s2 = inlined_call_operand.vmem [shape: f32[1,16], index: 2, kind: input, shape index: {}]
  %s3 = inlined_call_operand.vmem [shape: f32[1,16], index: 3, kind: input, shape index: {}]
  %s4 = inlined_call_operand.vmem [shape: bf16[256,16], index: 4, kind: input, shape index: {}]
  %s5 = inlined_call_operand.vmem [shape: bf16[256,16], index: 5, kind: output, shape index: {}]
  %s6 = sld [smem:[#allocation0]]
  $region30: #{network_forward.49} parent=0
    _
  %s8 = ssub.s32 1, %s6
  %s9 = scalar_select 0, %s8, %s6
  // Predicated region
  $region2: #{network_forward.49} parent=0 // pred_check
    _
  $region3: #{network_forward.49} parent=0 // pred_check_branch
    %11 = sbr.rel (0) target = $region5
  $region4: #{network_forward.49} parent=0 // pred_region
    _
  $region5: #{network_forward.49} parent=0 // pred_fallthru
    _
  // Predicated region
  $region6: #{network_forward.49} parent=0 // pred_check
    _
  $region7: #{network_forward.49} parent=0 // pred_check_branch
    %13 = sbr.rel (0) target = $region9
  $region8: #{network_forward.49} parent=0 // pred_region
    _
  $region9: #{network_forward.49} parent=0 // pred_fallthru
    _
  // Predicated region
  $region10: #{network_forward.49} parent=0 // pred_check
    _
  $region11: #{network_forward.49} parent=0 // pred_check_branch
    %15 = sbr.rel (0) target = $region13
  $region12: #{network_forward.49} parent=0 // pred_region
    _
  $region13: #{network_forward.49} parent=0 // pred_fallthru
    _
  // Predicated region
  $region14: #{network_forward.49} parent=0 // pred_check
    _
  $region15: #{network_forward.49} parent=0 // pred_check_branch
    %17 = sbr.rel (0) target = $region17
  $region16: #{network_forward.49} parent=0 // pred_region
    _
  $region17: #{network_forward.49} parent=0 // pred_fallthru
    _
  // Predicated region
  $region18: #{network_forward.49} parent=0 // pred_check
    _
  $region19: #{network_forward.49} parent=0 // pred_check_branch
    %19 = sbr.rel (0) target = $region21
  $region20: #{network_forward.49} parent=0 // pred_region
    _
  $region21: #{network_forward.49} parent=0 // pred_fallthru
    _
  %v21 = vld [vmem:[%s0] sm:$0xff]
  %v22 = vld [vmem:[%s0 + $0x8] sm:$0xff]
  %v23 = vld [vmem:[%s0 + $0x10] sm:$0xff]
  %v24 = vld [vmem:[%s0 + $0x18] sm:$0xff]
  %v25 = vld [vmem:[%s0 + $0x20] sm:$0xff]
  %v26 = vld [vmem:[%s0 + $0x28] sm:$0xff]
  %v27 = vld [vmem:[%s0 + $0x30] sm:$0xff]
  %v28 = vld [vmem:[%s0 + $0x38] sm:$0xff]
  %v29 = vld [vmem:[%s0 + $0x40] sm:$0xff]
  %v30 = vld [vmem:[%s0 + $0x48] sm:$0xff]
  %v31 = vld [vmem:[%s0 + $0x50] sm:$0xff]
  %v32 = vld [vmem:[%s0 + $0x58] sm:$0xff]
  %v33 = vld [vmem:[%s0 + $0x60] sm:$0xff]
  %v34 = vld [vmem:[%s0 + $0x68] sm:$0xff]
  %v35 = vld [vmem:[%s0 + $0x70] sm:$0xff]
  %v36 = vld [vmem:[%s0 + $0x78] sm:$0xff]
  %v37 = vld [vmem:[%s0 + $0x80] sm:$0xff]
  %v38 = vld [vmem:[%s0 + $0x88] sm:$0xff]
  %v39 = vld [vmem:[%s0 + $0x90] sm:$0xff]
  %v40 = vld [vmem:[%s0 + $0x98] sm:$0xff]
  %v41 = vld [vmem:[%s0 + $0xa0] sm:$0xff]
  %v42 = vld [vmem:[%s0 + $0xa8] sm:$0xff]
  %v43 = vld [vmem:[%s0 + $0xb0] sm:$0xff]
  %v44 = vld [vmem:[%s0 + $0xb8] sm:$0xff]
  %v45 = vld [vmem:[%s0 + $0xc0] sm:$0xff]
  %v46 = vld [vmem:[%s0 + $0xc8] sm:$0xff]
  %v47 = vld [vmem:[%s0 + $0xd0] sm:$0xff]
  %v48 = vld [vmem:[%s0 + $0xd8] sm:$0xff]
  %v49 = vld [vmem:[%s0 + $0xe0] sm:$0xff]
  %v50 = vld [vmem:[%s0 + $0xe8] sm:$0xff]
  %v51 = vld [vmem:[%s0 + $0xf0] sm:$0xff]
  %v52 = vld [vmem:[%s0 + $0xf8] sm:$0xff]
  %v53 = vld [vmem:[%s0 + $0x100] sm:$0xff]
  %v54 = vld [vmem:[%s0 + $0x108] sm:$0xff]
  %v55 = vld [vmem:[%s0 + $0x110] sm:$0xff]
  %v56 = vld [vmem:[%s0 + $0x118] sm:$0xff]
  %v57 = vld [vmem:[%s0 + $0x120] sm:$0xff]
  %v58 = vld [vmem:[%s0 + $0x128] sm:$0xff]
  %v59 = vld [vmem:[%s0 + $0x130] sm:$0xff]
  %v60 = vld [vmem:[%s0 + $0x138] sm:$0xff]
  %v61 = vld [vmem:[%s0 + $0x140] sm:$0xff]
  %v62 = vld [vmem:[%s0 + $0x148] sm:$0xff]
  %v63 = vld [vmem:[%s0 + $0x150] sm:$0xff]
  %v64 = vld [vmem:[%s0 + $0x158] sm:$0xff]
  %v65 = vld [vmem:[%s0 + $0x160] sm:$0xff]
  %v66 = vld [vmem:[%s0 + $0x168] sm:$0xff]
  %v67 = vld [vmem:[%s0 + $0x170] sm:$0xff]
  %v68 = vld [vmem:[%s0 + $0x178] sm:$0xff]
  %v69 = vld [vmem:[%s0 + $0x180] sm:$0xff]
  %v70 = vld [vmem:[%s0 + $0x188] sm:$0xff]
  %v71 = vld [vmem:[%s0 + $0x190] sm:$0xff]
  %v72 = vld [vmem:[%s0 + $0x198] sm:$0xff]
  %v73 = vld [vmem:[%s0 + $0x1a0] sm:$0xff]
  %v74 = vld [vmem:[%s0 + $0x1a8] sm:$0xff]
  %v75 = vld [vmem:[%s0 + $0x1b0] sm:$0xff]
  %v76 = vld [vmem:[%s0 + $0x1b8] sm:$0xff]
  %v77 = vld [vmem:[%s0 + $0x1c0] sm:$0xff]
  %v78 = vld [vmem:[%s0 + $0x1c8] sm:$0xff]
  %v79 = vld [vmem:[%s0 + $0x1d0] sm:$0xff]
  %v80 = vld [vmem:[%s0 + $0x1d8] sm:$0xff]
  %v81 = vld [vmem:[%s0 + $0x1e0] sm:$0xff]
  %v82 = vld [vmem:[%s0 + $0x1e8] sm:$0xff]
  %v83 = vld [vmem:[%s0 + $0x1f0] sm:$0xff]
  %v84 = vld [vmem:[%s0 + $0x1f8] sm:$0xff]
  %v85 = vld [vmem:[%s0 + $0x200] sm:$0xff]
  %v86 = vld [vmem:[%s0 + $0x208] sm:$0xff]
  %v87 = vld [vmem:[%s0 + $0x210] sm:$0xff]
  %v88 = vld [vmem:[%s0 + $0x218] sm:$0xff]
  %v89 = vld [vmem:[%s0 + $0x220] sm:$0xff]
  %v90 = vld [vmem:[%s0 + $0x228] sm:$0xff]
  %v91 = vld [vmem:[%s0 + $0x230] sm:$0xff]
  %v92 = vld [vmem:[%s0 + $0x238] sm:$0xff]
  %v93 = vld [vmem:[%s0 + $0x240] sm:$0xff]
  %v94 = vld [vmem:[%s0 + $0x248] sm:$0xff]
  %v95 = vld [vmem:[%s0 + $0x250] sm:$0xff]
  %v96 = vld [vmem:[%s0 + $0x258] sm:$0xff]
  %v97 = vld [vmem:[%s0 + $0x260] sm:$0xff]
  %v98 = vld [vmem:[%s0 + $0x268] sm:$0xff]
  %v99 = vld [vmem:[%s0 + $0x270] sm:$0xff]
  %v100 = vld [vmem:[%s0 + $0x278] sm:$0xff]
  %v101 = vld [vmem:[%s0 + $0x280] sm:$0xff]
  %v102 = vld [vmem:[%s0 + $0x288] sm:$0xff]
  %v103 = vld [vmem:[%s0 + $0x290] sm:$0xff]
  %v104 = vld [vmem:[%s0 + $0x298] sm:$0xff]
  %v105 = vld [vmem:[%s0 + $0x2a0] sm:$0xff]
  %v106 = vld [vmem:[%s0 + $0x2a8] sm:$0xff]
  %v107 = vld [vmem:[%s0 + $0x2b0] sm:$0xff]
  %v108 = vld [vmem:[%s0 + $0x2b8] sm:$0xff]
  %v109 = vld [vmem:[%s0 + $0x2c0] sm:$0xff]
  %v110 = vld [vmem:[%s0 + $0x2c8] sm:$0xff]
  %v111 = vld [vmem:[%s0 + $0x2d0] sm:$0xff]
  %v112 = vld [vmem:[%s0 + $0x2d8] sm:$0xff]
  %v113 = vld [vmem:[%s0 + $0x2e0] sm:$0xff]
  %v114 = vld [vmem:[%s0 + $0x2e8] sm:$0xff]
  %v115 = vld [vmem:[%s0 + $0x2f0] sm:$0xff]
  %v116 = vld [vmem:[%s0 + $0x2f8] sm:$0xff]
  %v117 = vld [vmem:[%s0 + $0x300] sm:$0xff]
  %v118 = vld [vmem:[%s0 + $0x308] sm:$0xff]
  %v119 = vld [vmem:[%s0 + $0x310] sm:$0xff]
  %v120 = vld [vmem:[%s0 + $0x318] sm:$0xff]
  %v121 = vld [vmem:[%s0 + $0x320] sm:$0xff]
  %v122 = vld [vmem:[%s0 + $0x328] sm:$0xff]
  %v123 = vld [vmem:[%s0 + $0x330] sm:$0xff]
  %v124 = vld [vmem:[%s0 + $0x338] sm:$0xff]
  %v125 = vld [vmem:[%s0 + $0x340] sm:$0xff]
  %v126 = vld [vmem:[%s0 + $0x348] sm:$0xff]
  %v127 = vld [vmem:[%s0 + $0x350] sm:$0xff]
  %v128 = vld [vmem:[%s0 + $0x358] sm:$0xff]
  %v129 = vld [vmem:[%s0 + $0x360] sm:$0xff]
  %v130 = vld [vmem:[%s0 + $0x368] sm:$0xff]
  %v131 = vld [vmem:[%s0 + $0x370] sm:$0xff]
  %v132 = vld [vmem:[%s0 + $0x378] sm:$0xff]
  %v133 = vld [vmem:[%s0 + $0x380] sm:$0xff]
  %v134 = vld [vmem:[%s0 + $0x388] sm:$0xff]
  %v135 = vld [vmem:[%s0 + $0x390] sm:$0xff]
  %v136 = vld [vmem:[%s0 + $0x398] sm:$0xff]
  %v137 = vld [vmem:[%s0 + $0x3a0] sm:$0xff]
  %v138 = vld [vmem:[%s0 + $0x3a8] sm:$0xff]
  %v139 = vld [vmem:[%s0 + $0x3b0] sm:$0xff]
  %v140 = vld [vmem:[%s0 + $0x3b8] sm:$0xff]
  %v141 = vld [vmem:[%s0 + $0x3c0] sm:$0xff]
  %v142 = vld [vmem:[%s0 + $0x3c8] sm:$0xff]
  %v143 = vld [vmem:[%s0 + $0x3d0] sm:$0xff]
  %v144 = vld [vmem:[%s0 + $0x3d8] sm:$0xff]
  %v145 = vld [vmem:[%s0 + $0x3e0] sm:$0xff]
  %v146 = vld [vmem:[%s0 + $0x3e8] sm:$0xff]
  %v147 = vld [vmem:[%s0 + $0x3f0] sm:$0xff]
  %v148 = vld [vmem:[%s0 + $0x3f8] sm:$0xff]
  %v149 = vld [vmem:[%s0 + $0x400] sm:$0xff]
  %v150 = vld [vmem:[%s0 + $0x408] sm:$0xff]
  %v151 = vld [vmem:[%s0 + $0x410] sm:$0xff]
  %v152 = vld [vmem:[%s0 + $0x418] sm:$0xff]
  %v153 = vld [vmem:[%s0 + $0x420] sm:$0xff]
  %v154 = vld [vmem:[%s0 + $0x428] sm:$0xff]
  %v155 = vld [vmem:[%s0 + $0x430] sm:$0xff]
  %v156 = vld [vmem:[%s0 + $0x438] sm:$0xff]
  %v157 = vld [vmem:[%s0 + $0x440] sm:$0xff]
  %v158 = vld [vmem:[%s0 + $0x448] sm:$0xff]
  %v159 = vld [vmem:[%s0 + $0x450] sm:$0xff]
  %v160 = vld [vmem:[%s0 + $0x458] sm:$0xff]
  %v161 = vld [vmem:[%s0 + $0x460] sm:$0xff]
  %v162 = vld [vmem:[%s0 + $0x468] sm:$0xff]
  %v163 = vld [vmem:[%s0 + $0x470] sm:$0xff]
  %v164 = vld [vmem:[%s0 + $0x478] sm:$0xff]
  %v165 = vld [vmem:[%s0 + $0x480] sm:$0xff]
  %v166 = vld [vmem:[%s0 + $0x488] sm:$0xff]
  %v167 = vld [vmem:[%s0 + $0x490] sm:$0xff]
  %v168 = vld [vmem:[%s0 + $0x498] sm:$0xff]
  %v169 = vld [vmem:[%s0 + $0x4a0] sm:$0xff]
  %v170 = vld [vmem:[%s0 + $0x4a8] sm:$0xff]
  %v171 = vld [vmem:[%s0 + $0x4b0] sm:$0xff]
  %v172 = vld [vmem:[%s0 + $0x4b8] sm:$0xff]
  %v173 = vld [vmem:[%s0 + $0x4c0] sm:$0xff]
  %v174 = vld [vmem:[%s0 + $0x4c8] sm:$0xff]
  %v175 = vld [vmem:[%s0 + $0x4d0] sm:$0xff]
  %v176 = vld [vmem:[%s0 + $0x4d8] sm:$0xff]
  %v177 = vld [vmem:[%s0 + $0x4e0] sm:$0xff]
  %v178 = vld [vmem:[%s0 + $0x4e8] sm:$0xff]
  %v179 = vld [vmem:[%s0 + $0x4f0] sm:$0xff]
  %v180 = vld [vmem:[%s0 + $0x4f8] sm:$0xff]
  %v181 = vld [vmem:[%s0 + $0x500] sm:$0xff]
  %v182 = vld [vmem:[%s0 + $0x508] sm:$0xff]
  %v183 = vld [vmem:[%s0 + $0x510] sm:$0xff]
  %v184 = vld [vmem:[%s0 + $0x518] sm:$0xff]
  %v185 = vld [vmem:[%s0 + $0x520] sm:$0xff]
  %v186 = vld [vmem:[%s0 + $0x528] sm:$0xff]
  %v187 = vld [vmem:[%s0 + $0x530] sm:$0xff]
  %v188 = vld [vmem:[%s0 + $0x538] sm:$0xff]
  %v189 = vld [vmem:[%s0 + $0x540] sm:$0xff]
  %v190 = vld [vmem:[%s0 + $0x548] sm:$0xff]
  %v191 = vld [vmem:[%s0 + $0x550] sm:$0xff]
  %v192 = vld [vmem:[%s0 + $0x558] sm:$0xff]
  %v193 = vld [vmem:[%s0 + $0x560] sm:$0xff]
  %v194 = vld [vmem:[%s0 + $0x568] sm:$0xff]
  %v195 = vld [vmem:[%s0 + $0x570] sm:$0xff]
  %v196 = vld [vmem:[%s0 + $0x578] sm:$0xff]
  %v197 = vld [vmem:[%s0 + $0x580] sm:$0xff]
  %v198 = vld [vmem:[%s0 + $0x588] sm:$0xff]
  %v199 = vld [vmem:[%s0 + $0x590] sm:$0xff]
  %v200 = vld [vmem:[%s0 + $0x598] sm:$0xff]
  %v201 = vld [vmem:[%s0 + $0x5a0] sm:$0xff]
  %v202 = vld [vmem:[%s0 + $0x5a8] sm:$0xff]
  %v203 = vld [vmem:[%s0 + $0x5b0] sm:$0xff]
  %v204 = vld [vmem:[%s0 + $0x5b8] sm:$0xff]
  %v205 = vld [vmem:[%s0 + $0x5c0] sm:$0xff]
  %v206 = vld [vmem:[%s0 + $0x5c8] sm:$0xff]
  %v207 = vld [vmem:[%s0 + $0x5d0] sm:$0xff]
  %v208 = vld [vmem:[%s0 + $0x5d8] sm:$0xff]
  %v209 = vld [vmem:[%s0 + $0x5e0] sm:$0xff]
  %v210 = vld [vmem:[%s0 + $0x5e8] sm:$0xff]
  %v211 = vld [vmem:[%s0 + $0x5f0] sm:$0xff]
  %v212 = vld [vmem:[%s0 + $0x5f8] sm:$0xff]
  %v213 = vld [vmem:[%s0 + $0x600] sm:$0xff]
  %v214 = vld [vmem:[%s0 + $0x608] sm:$0xff]
  %v215 = vld [vmem:[%s0 + $0x610] sm:$0xff]
  %v216 = vld [vmem:[%s0 + $0x618] sm:$0xff]
  %v217 = vld [vmem:[%s0 + $0x620] sm:$0xff]
  %v218 = vld [vmem:[%s0 + $0x628] sm:$0xff]
  %v219 = vld [vmem:[%s0 + $0x630] sm:$0xff]
  %v220 = vld [vmem:[%s0 + $0x638] sm:$0xff]
  %v221 = vld [vmem:[%s0 + $0x640] sm:$0xff]
  %v222 = vld [vmem:[%s0 + $0x648] sm:$0xff]
  %v223 = vld [vmem:[%s0 + $0x650] sm:$0xff]
  %v224 = vld [vmem:[%s0 + $0x658] sm:$0xff]
  %v225 = vld [vmem:[%s0 + $0x660] sm:$0xff]
  %v226 = vld [vmem:[%s0 + $0x668] sm:$0xff]
  %v227 = vld [vmem:[%s0 + $0x670] sm:$0xff]
  %v228 = vld [vmem:[%s0 + $0x678] sm:$0xff]
  %v229 = vld [vmem:[%s0 + $0x680] sm:$0xff]
  %v230 = vld [vmem:[%s0 + $0x688] sm:$0xff]
  %v231 = vld [vmem:[%s0 + $0x690] sm:$0xff]
  %v232 = vld [vmem:[%s0 + $0x698] sm:$0xff]
  %v233 = vld [vmem:[%s0 + $0x6a0] sm:$0xff]
  %v234 = vld [vmem:[%s0 + $0x6a8] sm:$0xff]
  %v235 = vld [vmem:[%s0 + $0x6b0] sm:$0xff]
  %v236 = vld [vmem:[%s0 + $0x6b8] sm:$0xff]
  %v237 = vld [vmem:[%s0 + $0x6c0] sm:$0xff]
  %v238 = vld [vmem:[%s0 + $0x6c8] sm:$0xff]
  %v239 = vld [vmem:[%s0 + $0x6d0] sm:$0xff]
  %v240 = vld [vmem:[%s0 + $0x6d8] sm:$0xff]
  %v241 = vld [vmem:[%s0 + $0x6e0] sm:$0xff]
  %v242 = vld [vmem:[%s0 + $0x6e8] sm:$0xff]
  %v243 = vld [vmem:[%s0 + $0x6f0] sm:$0xff]
  %v244 = vld [vmem:[%s0 + $0x6f8] sm:$0xff]
  %v245 = vld [vmem:[%s1] sm:$0xf]
  %v246 = vld [vmem:[%s1 + $0x4] sm:$0xf]
  %v247 = vld [vmem:[%s1 + $0x8] sm:$0xf]
  %v248 = vld [vmem:[%s1 + $0xc] sm:$0xf]
  %v249 = vld [vmem:[%s1 + $0x10] sm:$0xf]
  %v250 = vld [vmem:[%s1 + $0x14] sm:$0xf]
  %v251 = vld [vmem:[%s1 + $0x18] sm:$0xf]
  %v252 = vld [vmem:[%s1 + $0x1c] sm:$0xf]
  %v253 = vld [vmem:[%s1 + $0x20] sm:$0xf]
  %v254 = vld [vmem:[%s1 + $0x24] sm:$0xf]
  %v255 = vld [vmem:[%s1 + $0x28] sm:$0xf]
  %v256 = vld [vmem:[%s1 + $0x2c] sm:$0xf]
  %v257 = vld [vmem:[%s1 + $0x30] sm:$0xf]
  %v258 = vld [vmem:[%s1 + $0x34] sm:$0xf]
  %v259 = vld [vmem:[%s1 + $0x38] sm:$0xf]
  %v260 = vld [vmem:[%s1 + $0x3c] sm:$0xf]
  %v261 = vld [vmem:[%s1 + $0x40] sm:$0xf]
  %v262 = vld [vmem:[%s1 + $0x44] sm:$0xf]
  %v263 = vld [vmem:[%s1 + $0x48] sm:$0xf]
  %v264 = vld [vmem:[%s1 + $0x4c] sm:$0xf]
  %v265 = vld [vmem:[%s1 + $0x50] sm:$0xf]
  %v266 = vld [vmem:[%s1 + $0x54] sm:$0xf]
  %v267 = vld [vmem:[%s1 + $0x58] sm:$0xf]
  %v268 = vld [vmem:[%s1 + $0x5c] sm:$0xf]
  %v269 = vld [vmem:[%s1 + $0x60] sm:$0xf]
  %v270 = vld [vmem:[%s1 + $0x64] sm:$0xf]
  %v271 = vld [vmem:[%s1 + $0x68] sm:$0xf]
  %v272 = vld [vmem:[%s1 + $0x6c] sm:$0xf]
  %v273 = vld [vmem:[%s1 + $0x70] sm:$0xf]
  %v274 = vld [vmem:[%s1 + $0x74] sm:$0xf]
  %v275 = vld [vmem:[%s1 + $0x78] sm:$0xf]
  %v276 = vld [vmem:[%s1 + $0x7c] sm:$0xf]
  %v277 = vld [vmem:[%s1 + $0x80] sm:$0xf]
  %v278 = vld [vmem:[%s1 + $0x84] sm:$0xf]
  %v279 = vld [vmem:[%s1 + $0x88] sm:$0xf]
  %v280 = vld [vmem:[%s1 + $0x8c] sm:$0xf]
  %v281 = vld [vmem:[%s1 + $0x90] sm:$0xf]
  %v282 = vld [vmem:[%s1 + $0x94] sm:$0xf]
  %v283 = vld [vmem:[%s1 + $0x98] sm:$0xf]
  %v284 = vld [vmem:[%s1 + $0x9c] sm:$0xf]
  %v285 = vld [vmem:[%s1 + $0xa0] sm:$0xf]
  %v286 = vld [vmem:[%s1 + $0xa4] sm:$0xf]
  %v287 = vld [vmem:[%s1 + $0xa8] sm:$0xf]
  %v288 = vld [vmem:[%s1 + $0xac] sm:$0xf]
  %v289 = vld [vmem:[%s1 + $0xb0] sm:$0xf]
  %v290 = vld [vmem:[%s1 + $0xb4] sm:$0xf]
  %v291 = vld [vmem:[%s1 + $0xb8] sm:$0xf]
  %v292 = vld [vmem:[%s1 + $0xbc] sm:$0xf]
  %v293 = vld [vmem:[%s1 + $0xc0] sm:$0xf]
  %v294 = vld [vmem:[%s1 + $0xc4] sm:$0xf]
  %v295 = vld [vmem:[%s1 + $0xc8] sm:$0xf]
  %v296 = vld [vmem:[%s1 + $0xcc] sm:$0xf]
  %v297 = vld [vmem:[%s1 + $0xd0] sm:$0xf]
  %v298 = vld [vmem:[%s1 + $0xd4] sm:$0xf]
  %v299 = vld [vmem:[%s1 + $0xd8] sm:$0xf]
  %v300 = vld [vmem:[%s1 + $0xdc] sm:$0xf]
  %v301 = vld [vmem:[%s1 + $0xe0] sm:$0xf]
  %v302 = vld [vmem:[%s1 + $0xe4] sm:$0xf]
  %v303 = vld [vmem:[%s1 + $0xe8] sm:$0xf]
  %v304 = vld [vmem:[%s1 + $0xec] sm:$0xf]
  %v305 = vld [vmem:[%s1 + $0xf0] sm:$0xf]
  %v306 = vld [vmem:[%s1 + $0xf4] sm:$0xf]
  %v307 = vld [vmem:[%s1 + $0xf8] sm:$0xf]
  %v308 = vld [vmem:[%s1 + $0xfc] sm:$0xf]
  %v309 = vld [vmem:[%s1 + $0x100] sm:$0xf]
  %v310 = vld [vmem:[%s1 + $0x104] sm:$0xf]
  %v311 = vld [vmem:[%s1 + $0x108] sm:$0xf]
  %v312 = vld [vmem:[%s1 + $0x10c] sm:$0xf]
  %v313 = vld [vmem:[%s1 + $0x110] sm:$0xf]
  %v314 = vld [vmem:[%s1 + $0x114] sm:$0xf]
  %v315 = vld [vmem:[%s1 + $0x118] sm:$0xf]
  %v316 = vld [vmem:[%s1 + $0x11c] sm:$0xf]
  %v317 = vld [vmem:[%s1 + $0x120] sm:$0xf]
  %v318 = vld [vmem:[%s1 + $0x124] sm:$0xf]
  %v319 = vld [vmem:[%s1 + $0x128] sm:$0xf]
  %v320 = vld [vmem:[%s1 + $0x12c] sm:$0xf]
  %v321 = vld [vmem:[%s1 + $0x130] sm:$0xf]
  %v322 = vld [vmem:[%s1 + $0x134] sm:$0xf]
  %v323 = vld [vmem:[%s1 + $0x138] sm:$0xf]
  %v324 = vld [vmem:[%s1 + $0x13c] sm:$0xf]
  %v325 = vld [vmem:[%s1 + $0x140] sm:$0xf]
  %v326 = vld [vmem:[%s1 + $0x144] sm:$0xf]
  %v327 = vld [vmem:[%s1 + $0x148] sm:$0xf]
  %v328 = vld [vmem:[%s1 + $0x14c] sm:$0xf]
  %v329 = vld [vmem:[%s1 + $0x150] sm:$0xf]
  %v330 = vld [vmem:[%s1 + $0x154] sm:$0xf]
  %v331 = vld [vmem:[%s1 + $0x158] sm:$0xf]
  %v332 = vld [vmem:[%s1 + $0x15c] sm:$0xf]
  %v333 = vld [vmem:[%s1 + $0x160] sm:$0xf]
  %v334 = vld [vmem:[%s1 + $0x164] sm:$0xf]
  %v335 = vld [vmem:[%s1 + $0x168] sm:$0xf]
  %v336 = vld [vmem:[%s1 + $0x16c] sm:$0xf]
  %v337 = vld [vmem:[%s1 + $0x170] sm:$0xf]
  %v338 = vld [vmem:[%s1 + $0x174] sm:$0xf]
  %v339 = vld [vmem:[%s1 + $0x178] sm:$0xf]
  %v340 = vld [vmem:[%s1 + $0x17c] sm:$0xf]
  %v341 = vld [vmem:[%s1 + $0x180] sm:$0xf]
  %v342 = vld [vmem:[%s1 + $0x184] sm:$0xf]
  %v343 = vld [vmem:[%s1 + $0x188] sm:$0xf]
  %v344 = vld [vmem:[%s1 + $0x18c] sm:$0xf]
  %v345 = vld [vmem:[%s1 + $0x190] sm:$0xf]
  %v346 = vld [vmem:[%s1 + $0x194] sm:$0xf]
  %v347 = vld [vmem:[%s1 + $0x198] sm:$0xf]
  %v348 = vld [vmem:[%s1 + $0x19c] sm:$0xf]
  %v349 = vld [vmem:[%s1 + $0x1a0] sm:$0xf]
  %v350 = vld [vmem:[%s1 + $0x1a4] sm:$0xf]
  %v351 = vld [vmem:[%s1 + $0x1a8] sm:$0xf]
  %v352 = vld [vmem:[%s1 + $0x1ac] sm:$0xf]
  %v353 = vld [vmem:[%s1 + $0x1b0] sm:$0xf]
  %v354 = vld [vmem:[%s1 + $0x1b4] sm:$0xf]
  %v355 = vld [vmem:[%s1 + $0x1b8] sm:$0xf]
  %v356 = vld [vmem:[%s1 + $0x1bc] sm:$0xf]
  %v357 = vld [vmem:[%s1 + $0x1c0] sm:$0xf]
  %v358 = vld [vmem:[%s1 + $0x1c4] sm:$0xf]
  %v359 = vld [vmem:[%s1 + $0x1c8] sm:$0xf]
  %v360 = vld [vmem:[%s1 + $0x1cc] sm:$0xf]
  %v361 = vld [vmem:[%s1 + $0x1d0] sm:$0xf]
  %v362 = vld [vmem:[%s1 + $0x1d4] sm:$0xf]
  %v363 = vld [vmem:[%s1 + $0x1d8] sm:$0xf]
  %v364 = vld [vmem:[%s1 + $0x1dc] sm:$0xf]
  %v365 = vld [vmem:[%s1 + $0x1e0] sm:$0xf]
  %v366 = vld [vmem:[%s1 + $0x1e4] sm:$0xf]
  %v367 = vld [vmem:[%s1 + $0x1e8] sm:$0xf]
  %v368 = vld [vmem:[%s1 + $0x1ec] sm:$0xf]
  %v369 = vld [vmem:[%s1 + $0x1f0] sm:$0xf]
  %v370 = vld [vmem:[%s1 + $0x1f4] sm:$0xf]
  %v371 = vld [vmem:[%s1 + $0x1f8] sm:$0xf]
  %v372 = vld [vmem:[%s1 + $0x1fc] sm:$0xf]
  %v373 = vld [vmem:[%s1 + $0x200] sm:$0xf]
  %v374 = vld [vmem:[%s1 + $0x204] sm:$0xf]
  %v375 = vld [vmem:[%s1 + $0x208] sm:$0xf]
  %v376 = vld [vmem:[%s1 + $0x20c] sm:$0xf]
  %v377 = vld [vmem:[%s1 + $0x210] sm:$0xf]
  %v378 = vld [vmem:[%s1 + $0x214] sm:$0xf]
  %v379 = vld [vmem:[%s1 + $0x218] sm:$0xf]
  %v380 = vld [vmem:[%s1 + $0x21c] sm:$0xf]
  %v381 = vld [vmem:[%s1 + $0x220] sm:$0xf]
  %v382 = vld [vmem:[%s1 + $0x224] sm:$0xf]
  %v383 = vld [vmem:[%s1 + $0x228] sm:$0xf]
  %v384 = vld [vmem:[%s1 + $0x22c] sm:$0xf]
  %v385 = vld [vmem:[%s1 + $0x230] sm:$0xf]
  %v386 = vld [vmem:[%s1 + $0x234] sm:$0xf]
  %v387 = vld [vmem:[%s1 + $0x238] sm:$0xf]
  %v388 = vld [vmem:[%s1 + $0x23c] sm:$0xf]
  %v389 = vld [vmem:[%s1 + $0x240] sm:$0xf]
  %v390 = vld [vmem:[%s1 + $0x244] sm:$0xf]
  %v391 = vld [vmem:[%s1 + $0x248] sm:$0xf]
  %v392 = vld [vmem:[%s1 + $0x24c] sm:$0xf]
  %v393 = vld [vmem:[%s1 + $0x250] sm:$0xf]
  %v394 = vld [vmem:[%s1 + $0x254] sm:$0xf]
  %v395 = vld [vmem:[%s1 + $0x258] sm:$0xf]
  %v396 = vld [vmem:[%s1 + $0x25c] sm:$0xf]
  %v397 = vld [vmem:[%s1 + $0x260] sm:$0xf]
  %v398 = vld [vmem:[%s1 + $0x264] sm:$0xf]
  %v399 = vld [vmem:[%s1 + $0x268] sm:$0xf]
  %v400 = vld [vmem:[%s1 + $0x26c] sm:$0xf]
  %v401 = vld [vmem:[%s1 + $0x270] sm:$0xf]
  %v402 = vld [vmem:[%s1 + $0x274] sm:$0xf]
  %v403 = vld [vmem:[%s1 + $0x278] sm:$0xf]
  %v404 = vld [vmem:[%s1 + $0x27c] sm:$0xf]
  %v405 = vld [vmem:[%s1 + $0x280] sm:$0xf]
  %v406 = vld [vmem:[%s1 + $0x284] sm:$0xf]
  %v407 = vld [vmem:[%s1 + $0x288] sm:$0xf]
  %v408 = vld [vmem:[%s1 + $0x28c] sm:$0xf]
  %v409 = vld [vmem:[%s1 + $0x290] sm:$0xf]
  %v410 = vld [vmem:[%s1 + $0x294] sm:$0xf]
  %v411 = vld [vmem:[%s1 + $0x298] sm:$0xf]
  %v412 = vld [vmem:[%s1 + $0x29c] sm:$0xf]
  %v413 = vld [vmem:[%s1 + $0x2a0] sm:$0xf]
  %v414 = vld [vmem:[%s1 + $0x2a4] sm:$0xf]
  %v415 = vld [vmem:[%s1 + $0x2a8] sm:$0xf]
  %v416 = vld [vmem:[%s1 + $0x2ac] sm:$0xf]
  %v417 = vld [vmem:[%s1 + $0x2b0] sm:$0xf]
  %v418 = vld [vmem:[%s1 + $0x2b4] sm:$0xf]
  %v419 = vld [vmem:[%s1 + $0x2b8] sm:$0xf]
  %v420 = vld [vmem:[%s1 + $0x2bc] sm:$0xf]
  %v421 = vld [vmem:[%s1 + $0x2c0] sm:$0xf]
  %v422 = vld [vmem:[%s1 + $0x2c4] sm:$0xf]
  %v423 = vld [vmem:[%s1 + $0x2c8] sm:$0xf]
  %v424 = vld [vmem:[%s1 + $0x2cc] sm:$0xf]
  %v425 = vld [vmem:[%s1 + $0x2d0] sm:$0xf]
  %v426 = vld [vmem:[%s1 + $0x2d4] sm:$0xf]
  %v427 = vld [vmem:[%s1 + $0x2d8] sm:$0xf]
  %v428 = vld [vmem:[%s1 + $0x2dc] sm:$0xf]
  %v429 = vld [vmem:[%s1 + $0x2e0] sm:$0xf]
  %v430 = vld [vmem:[%s1 + $0x2e4] sm:$0xf]
  %v431 = vld [vmem:[%s1 + $0x2e8] sm:$0xf]
  %v432 = vld [vmem:[%s1 + $0x2ec] sm:$0xf]
  %v433 = vld [vmem:[%s1 + $0x2f0] sm:$0xf]
  %v434 = vld [vmem:[%s1 + $0x2f4] sm:$0xf]
  %v435 = vld [vmem:[%s1 + $0x2f8] sm:$0xf]
  %v436 = vld [vmem:[%s1 + $0x2fc] sm:$0xf]
  %v437 = vld [vmem:[%s1 + $0x300] sm:$0xf]
  %v438 = vld [vmem:[%s1 + $0x304] sm:$0xf]
  %v439 = vld [vmem:[%s1 + $0x308] sm:$0xf]
  %v440 = vld [vmem:[%s1 + $0x30c] sm:$0xf]
  %v441 = vld [vmem:[%s1 + $0x310] sm:$0xf]
  %v442 = vld [vmem:[%s1 + $0x314] sm:$0xf]
  %v443 = vld [vmem:[%s1 + $0x318] sm:$0xf]
  %v444 = vld [vmem:[%s1 + $0x31c] sm:$0xf]
  %v445 = vld [vmem:[%s1 + $0x320] sm:$0xf]
  %v446 = vld [vmem:[%s1 + $0x324] sm:$0xf]
  %v447 = vld [vmem:[%s1 + $0x328] sm:$0xf]
  %v448 = vld [vmem:[%s1 + $0x32c] sm:$0xf]
  %v449 = vld [vmem:[%s1 + $0x330] sm:$0xf]
  %v450 = vld [vmem:[%s1 + $0x334] sm:$0xf]
  %v451 = vld [vmem:[%s1 + $0x338] sm:$0xf]
  %v452 = vld [vmem:[%s1 + $0x33c] sm:$0xf]
  %v453 = vld [vmem:[%s1 + $0x340] sm:$0xf]
  %v454 = vld [vmem:[%s1 + $0x344] sm:$0xf]
  %v455 = vld [vmem:[%s1 + $0x348] sm:$0xf]
  %v456 = vld [vmem:[%s1 + $0x34c] sm:$0xf]
  %v457 = vld [vmem:[%s1 + $0x350] sm:$0xf]
  %v458 = vld [vmem:[%s1 + $0x354] sm:$0xf]
  %v459 = vld [vmem:[%s1 + $0x358] sm:$0xf]
  %v460 = vld [vmem:[%s1 + $0x35c] sm:$0xf]
  %v685 = vunpack.c.l.b16 %v21
  %v686 = vunpack.c.h.b16 %v21
  %v687 = vunpack.c.l.b16 %v22
  %v688 = vunpack.c.h.b16 %v22
  %v689 = vunpack.c.l.b16 %v23
  %v690 = vunpack.c.h.b16 %v23
  %v691 = vunpack.c.l.b16 %v24
  %v692 = vunpack.c.h.b16 %v24
  %v693 = vunpack.c.l.b16 %v25
  %v694 = vunpack.c.h.b16 %v25
  %v695 = vunpack.c.l.b16 %v26
  %v696 = vunpack.c.h.b16 %v26
  %v697 = vunpack.c.l.b16 %v27
  %v698 = vunpack.c.h.b16 %v27
  %v699 = vunpack.c.l.b16 %v28
  %v700 = vunpack.c.h.b16 %v28
  %v701 = vunpack.c.l.b16 %v29
  %v702 = vunpack.c.h.b16 %v29
  %v703 = vunpack.c.l.b16 %v30
  %v704 = vunpack.c.h.b16 %v30
  %v705 = vunpack.c.l.b16 %v31
  %v706 = vunpack.c.h.b16 %v31
  %v707 = vunpack.c.l.b16 %v32
  %v708 = vunpack.c.h.b16 %v32
  %v709 = vunpack.c.l.b16 %v33
  %v710 = vunpack.c.h.b16 %v33
  %v711 = vunpack.c.l.b16 %v34
  %v712 = vunpack.c.h.b16 %v34
  %v713 = vunpack.c.l.b16 %v35
  %v714 = vunpack.c.h.b16 %v35
  %v715 = vunpack.c.l.b16 %v36
  %v716 = vunpack.c.h.b16 %v36
  %v717 = vunpack.c.l.b16 %v37
  %v718 = vunpack.c.h.b16 %v37
  %v719 = vunpack.c.l.b16 %v38
  %v720 = vunpack.c.h.b16 %v38
  %v721 = vunpack.c.l.b16 %v39
  %v722 = vunpack.c.h.b16 %v39
  %v723 = vunpack.c.l.b16 %v40
  %v724 = vunpack.c.h.b16 %v40
  %v725 = vunpack.c.l.b16 %v41
  %v726 = vunpack.c.h.b16 %v41
  %v727 = vunpack.c.l.b16 %v42
  %v728 = vunpack.c.h.b16 %v42
  %v729 = vunpack.c.l.b16 %v43
  %v730 = vunpack.c.h.b16 %v43
  %v731 = vunpack.c.l.b16 %v44
  %v732 = vunpack.c.h.b16 %v44
  %v733 = vunpack.c.l.b16 %v45
  %v734 = vunpack.c.h.b16 %v45
  %v735 = vunpack.c.l.b16 %v46
  %v736 = vunpack.c.h.b16 %v46
  %v737 = vunpack.c.l.b16 %v47
  %v738 = vunpack.c.h.b16 %v47
  %v739 = vunpack.c.l.b16 %v48
  %v740 = vunpack.c.h.b16 %v48
  %v741 = vunpack.c.l.b16 %v49
  %v742 = vunpack.c.h.b16 %v49
  %v743 = vunpack.c.l.b16 %v50
  %v744 = vunpack.c.h.b16 %v50
  %v745 = vunpack.c.l.b16 %v51
  %v746 = vunpack.c.h.b16 %v51
  %v747 = vunpack.c.l.b16 %v52
  %v748 = vunpack.c.h.b16 %v52
  %v749 = vunpack.c.l.b16 %v53
  %v750 = vunpack.c.h.b16 %v53
  %v751 = vunpack.c.l.b16 %v54
  %v752 = vunpack.c.h.b16 %v54
  %v753 = vunpack.c.l.b16 %v55
  %v754 = vunpack.c.h.b16 %v55
  %v755 = vunpack.c.l.b16 %v56
  %v756 = vunpack.c.h.b16 %v56
  %v757 = vunpack.c.l.b16 %v57
  %v758 = vunpack.c.h.b16 %v57
  %v759 = vunpack.c.l.b16 %v58
  %v760 = vunpack.c.h.b16 %v58
  %v761 = vunpack.c.l.b16 %v59
  %v762 = vunpack.c.h.b16 %v59
  %v763 = vunpack.c.l.b16 %v60
  %v764 = vunpack.c.h.b16 %v60
  %v765 = vunpack.c.l.b16 %v61
  %v766 = vunpack.c.h.b16 %v61
  %v767 = vunpack.c.l.b16 %v62
  %v768 = vunpack.c.h.b16 %v62
  %v769 = vunpack.c.l.b16 %v63
  %v770 = vunpack.c.h.b16 %v63
  %v771 = vunpack.c.l.b16 %v64
  %v772 = vunpack.c.h.b16 %v64
  %v773 = vunpack.c.l.b16 %v65
  %v774 = vunpack.c.h.b16 %v65
  %v775 = vunpack.c.l.b16 %v66
  %v776 = vunpack.c.h.b16 %v66
  %v777 = vunpack.c.l.b16 %v67
  %v778 = vunpack.c.h.b16 %v67
  %v779 = vunpack.c.l.b16 %v68
  %v780 = vunpack.c.h.b16 %v68
  %v781 = vunpack.c.l.b16 %v69
  %v782 = vunpack.c.h.b16 %v69
  %v783 = vunpack.c.l.b16 %v70
  %v784 = vunpack.c.h.b16 %v70
  %v785 = vunpack.c.l.b16 %v71
  %v786 = vunpack.c.h.b16 %v71
  %v787 = vunpack.c.l.b16 %v72
  %v788 = vunpack.c.h.b16 %v72
  %v789 = vunpack.c.l.b16 %v73
  %v790 = vunpack.c.h.b16 %v73
  %v791 = vunpack.c.l.b16 %v74
  %v792 = vunpack.c.h.b16 %v74
  %v793 = vunpack.c.l.b16 %v75
  %v794 = vunpack.c.h.b16 %v75
  %v795 = vunpack.c.l.b16 %v76
  %v796 = vunpack.c.h.b16 %v76
  %v797 = vunpack.c.l.b16 %v77
  %v798 = vunpack.c.h.b16 %v77
  %v799 = vunpack.c.l.b16 %v78
  %v800 = vunpack.c.h.b16 %v78
  %v801 = vunpack.c.l.b16 %v79
  %v802 = vunpack.c.h.b16 %v79
  %v803 = vunpack.c.l.b16 %v80
  %v804 = vunpack.c.h.b16 %v80
  %v805 = vunpack.c.l.b16 %v81
  %v806 = vunpack.c.h.b16 %v81
  %v807 = vunpack.c.l.b16 %v82
  %v808 = vunpack.c.h.b16 %v82
  %v809 = vunpack.c.l.b16 %v83
  %v810 = vunpack.c.h.b16 %v83
  %v811 = vunpack.c.l.b16 %v84
  %v812 = vunpack.c.h.b16 %v84
  %v813 = vunpack.c.l.b16 %v85
  %v814 = vunpack.c.h.b16 %v85
  %v815 = vunpack.c.l.b16 %v86
  %v816 = vunpack.c.h.b16 %v86
  %v817 = vunpack.c.l.b16 %v87
  %v818 = vunpack.c.h.b16 %v87
  %v819 = vunpack.c.l.b16 %v88
  %v820 = vunpack.c.h.b16 %v88
  %v821 = vunpack.c.l.b16 %v89
  %v822 = vunpack.c.h.b16 %v89
  %v823 = vunpack.c.l.b16 %v90
  %v824 = vunpack.c.h.b16 %v90
  %v825 = vunpack.c.l.b16 %v91
  %v826 = vunpack.c.h.b16 %v91
  %v827 = vunpack.c.l.b16 %v92
  %v828 = vunpack.c.h.b16 %v92
  %v829 = vunpack.c.l.b16 %v93
  %v830 = vunpack.c.h.b16 %v93
  %v831 = vunpack.c.l.b16 %v94
  %v832 = vunpack.c.h.b16 %v94
  %v833 = vunpack.c.l.b16 %v95
  %v834 = vunpack.c.h.b16 %v95
  %v835 = vunpack.c.l.b16 %v96
  %v836 = vunpack.c.h.b16 %v96
  %v837 = vunpack.c.l.b16 %v97
  %v838 = vunpack.c.h.b16 %v97
  %v839 = vunpack.c.l.b16 %v98
  %v840 = vunpack.c.h.b16 %v98
  %v841 = vunpack.c.l.b16 %v99
  %v842 = vunpack.c.h.b16 %v99
  %v843 = vunpack.c.l.b16 %v100
  %v844 = vunpack.c.h.b16 %v100
  %v845 = vunpack.c.l.b16 %v101
  %v846 = vunpack.c.h.b16 %v101
  %v847 = vunpack.c.l.b16 %v102
  %v848 = vunpack.c.h.b16 %v102
  %v849 = vunpack.c.l.b16 %v103
  %v850 = vunpack.c.h.b16 %v103
  %v851 = vunpack.c.l.b16 %v104
  %v852 = vunpack.c.h.b16 %v104
  %v853 = vunpack.c.l.b16 %v105
  %v854 = vunpack.c.h.b16 %v105
  %v855 = vunpack.c.l.b16 %v106
  %v856 = vunpack.c.h.b16 %v106
  %v857 = vunpack.c.l.b16 %v107
  %v858 = vunpack.c.h.b16 %v107
  %v859 = vunpack.c.l.b16 %v108
  %v860 = vunpack.c.h.b16 %v108
  %v861 = vunpack.c.l.b16 %v109
  %v862 = vunpack.c.h.b16 %v109
  %v863 = vunpack.c.l.b16 %v110
  %v864 = vunpack.c.h.b16 %v110
  %v865 = vunpack.c.l.b16 %v111
  %v866 = vunpack.c.h.b16 %v111
  %v867 = vunpack.c.l.b16 %v112
  %v868 = vunpack.c.h.b16 %v112
  %v869 = vunpack.c.l.b16 %v113
  %v870 = vunpack.c.h.b16 %v113
  %v871 = vunpack.c.l.b16 %v114
  %v872 = vunpack.c.h.b16 %v114
  %v873 = vunpack.c.l.b16 %v115
  %v874 = vunpack.c.h.b16 %v115
  %v875 = vunpack.c.l.b16 %v116
  %v876 = vunpack.c.h.b16 %v116
  %v877 = vunpack.c.l.b16 %v117
  %v878 = vunpack.c.h.b16 %v117
  %v879 = vunpack.c.l.b16 %v118
  %v880 = vunpack.c.h.b16 %v118
  %v881 = vunpack.c.l.b16 %v119
  %v882 = vunpack.c.h.b16 %v119
  %v883 = vunpack.c.l.b16 %v120
  %v884 = vunpack.c.h.b16 %v120
  %v885 = vunpack.c.l.b16 %v121
  %v886 = vunpack.c.h.b16 %v121
  %v887 = vunpack.c.l.b16 %v122
  %v888 = vunpack.c.h.b16 %v122
  %v889 = vunpack.c.l.b16 %v123
  %v890 = vunpack.c.h.b16 %v123
  %v891 = vunpack.c.l.b16 %v124
  %v892 = vunpack.c.h.b16 %v124
  %v893 = vunpack.c.l.b16 %v125
  %v894 = vunpack.c.h.b16 %v125
  %v895 = vunpack.c.l.b16 %v126
  %v896 = vunpack.c.h.b16 %v126
  %v897 = vunpack.c.l.b16 %v127
  %v898 = vunpack.c.h.b16 %v127
  %v899 = vunpack.c.l.b16 %v128
  %v900 = vunpack.c.h.b16 %v128
  %v901 = vunpack.c.l.b16 %v129
  %v902 = vunpack.c.h.b16 %v129
  %v903 = vunpack.c.l.b16 %v130
  %v904 = vunpack.c.h.b16 %v130
  %v905 = vunpack.c.l.b16 %v131
  %v906 = vunpack.c.h.b16 %v131
  %v907 = vunpack.c.l.b16 %v132
  %v908 = vunpack.c.h.b16 %v132
  %v909 = vunpack.c.l.b16 %v133
  %v910 = vunpack.c.h.b16 %v133
  %v911 = vunpack.c.l.b16 %v134
  %v912 = vunpack.c.h.b16 %v134
  %v913 = vunpack.c.l.b16 %v135
  %v914 = vunpack.c.h.b16 %v135
  %v915 = vunpack.c.l.b16 %v136
  %v916 = vunpack.c.h.b16 %v136
  %v917 = vunpack.c.l.b16 %v137
  %v918 = vunpack.c.h.b16 %v137
  %v919 = vunpack.c.l.b16 %v138
  %v920 = vunpack.c.h.b16 %v138
  %v921 = vunpack.c.l.b16 %v139
  %v922 = vunpack.c.h.b16 %v139
  %v923 = vunpack.c.l.b16 %v140
  %v924 = vunpack.c.h.b16 %v140
  %v925 = vunpack.c.l.b16 %v141
  %v926 = vunpack.c.h.b16 %v141
  %v927 = vunpack.c.l.b16 %v142
  %v928 = vunpack.c.h.b16 %v142
  %v929 = vunpack.c.l.b16 %v143
  %v930 = vunpack.c.h.b16 %v143
  %v931 = vunpack.c.l.b16 %v144
  %v932 = vunpack.c.h.b16 %v144
  %v933 = vunpack.c.l.b16 %v145
  %v934 = vunpack.c.h.b16 %v145
  %v935 = vunpack.c.l.b16 %v146
  %v936 = vunpack.c.h.b16 %v146
  %v937 = vunpack.c.l.b16 %v147
  %v938 = vunpack.c.h.b16 %v147
  %v939 = vunpack.c.l.b16 %v148
  %v940 = vunpack.c.h.b16 %v148
  %v941 = vunpack.c.l.b16 %v149
  %v942 = vunpack.c.h.b16 %v149
  %v943 = vunpack.c.l.b16 %v150
  %v944 = vunpack.c.h.b16 %v150
  %v945 = vunpack.c.l.b16 %v151
  %v946 = vunpack.c.h.b16 %v151
  %v947 = vunpack.c.l.b16 %v152
  %v948 = vunpack.c.h.b16 %v152
  %v949 = vunpack.c.l.b16 %v153
  %v950 = vunpack.c.h.b16 %v153
  %v951 = vunpack.c.l.b16 %v154
  %v952 = vunpack.c.h.b16 %v154
  %v953 = vunpack.c.l.b16 %v155
  %v954 = vunpack.c.h.b16 %v155
  %v955 = vunpack.c.l.b16 %v156
  %v956 = vunpack.c.h.b16 %v156
  %v957 = vunpack.c.l.b16 %v157
  %v958 = vunpack.c.h.b16 %v157
  %v959 = vunpack.c.l.b16 %v158
  %v960 = vunpack.c.h.b16 %v158
  %v961 = vunpack.c.l.b16 %v159
  %v962 = vunpack.c.h.b16 %v159
  %v963 = vunpack.c.l.b16 %v160
  %v964 = vunpack.c.h.b16 %v160
  %v965 = vunpack.c.l.b16 %v161
  %v966 = vunpack.c.h.b16 %v161
  %v967 = vunpack.c.l.b16 %v162
  %v968 = vunpack.c.h.b16 %v162
  %v969 = vunpack.c.l.b16 %v163
  %v970 = vunpack.c.h.b16 %v163
  %v971 = vunpack.c.l.b16 %v164
  %v972 = vunpack.c.h.b16 %v164
  %v973 = vunpack.c.l.b16 %v165
  %v974 = vunpack.c.h.b16 %v165
  %v975 = vunpack.c.l.b16 %v166
  %v976 = vunpack.c.h.b16 %v166
  %v977 = vunpack.c.l.b16 %v167
  %v978 = vunpack.c.h.b16 %v167
  %v979 = vunpack.c.l.b16 %v168
  %v980 = vunpack.c.h.b16 %v168
  %v981 = vunpack.c.l.b16 %v169
  %v982 = vunpack.c.h.b16 %v169
  %v983 = vunpack.c.l.b16 %v170
  %v984 = vunpack.c.h.b16 %v170
  %v985 = vunpack.c.l.b16 %v171
  %v986 = vunpack.c.h.b16 %v171
  %v987 = vunpack.c.l.b16 %v172
  %v988 = vunpack.c.h.b16 %v172
  %v989 = vunpack.c.l.b16 %v173
  %v990 = vunpack.c.h.b16 %v173
  %v991 = vunpack.c.l.b16 %v174
  %v992 = vunpack.c.h.b16 %v174
  %v993 = vunpack.c.l.b16 %v175
  %v994 = vunpack.c.h.b16 %v175
  %v995 = vunpack.c.l.b16 %v176
  %v996 = vunpack.c.h.b16 %v176
  %v997 = vunpack.c.l.b16 %v177
  %v998 = vunpack.c.h.b16 %v177
  %v999 = vunpack.c.l.b16 %v178
  %v1000 = vunpack.c.h.b16 %v178
  %v1001 = vunpack.c.l.b16 %v179
  %v1002 = vunpack.c.h.b16 %v179
  %v1003 = vunpack.c.l.b16 %v180
  %v1004 = vunpack.c.h.b16 %v180
  %v1005 = vunpack.c.l.b16 %v181
  %v1006 = vunpack.c.h.b16 %v181
  %v1007 = vunpack.c.l.b16 %v182
  %v1008 = vunpack.c.h.b16 %v182
  %v1009 = vunpack.c.l.b16 %v183
  %v1010 = vunpack.c.h.b16 %v183
  %v1011 = vunpack.c.l.b16 %v184
  %v1012 = vunpack.c.h.b16 %v184
  %v1013 = vunpack.c.l.b16 %v185
  %v1014 = vunpack.c.h.b16 %v185
  %v1015 = vunpack.c.l.b16 %v186
  %v1016 = vunpack.c.h.b16 %v186
  %v1017 = vunpack.c.l.b16 %v187
  %v1018 = vunpack.c.h.b16 %v187
  %v1019 = vunpack.c.l.b16 %v188
  %v1020 = vunpack.c.h.b16 %v188
  %v1021 = vunpack.c.l.b16 %v189
  %v1022 = vunpack.c.h.b16 %v189
  %v1023 = vunpack.c.l.b16 %v190
  %v1024 = vunpack.c.h.b16 %v190
  %v1025 = vunpack.c.l.b16 %v191
  %v1026 = vunpack.c.h.b16 %v191
  %v1027 = vunpack.c.l.b16 %v192
  %v1028 = vunpack.c.h.b16 %v192
  %v1029 = vunpack.c.l.b16 %v193
  %v1030 = vunpack.c.h.b16 %v193
  %v1031 = vunpack.c.l.b16 %v194
  %v1032 = vunpack.c.h.b16 %v194
  %v1033 = vunpack.c.l.b16 %v195
  %v1034 = vunpack.c.h.b16 %v195
  %v1035 = vunpack.c.l.b16 %v196
  %v1036 = vunpack.c.h.b16 %v196
  %v1037 = vunpack.c.l.b16 %v197
  %v1038 = vunpack.c.h.b16 %v197
  %v1039 = vunpack.c.l.b16 %v198
  %v1040 = vunpack.c.h.b16 %v198
  %v1041 = vunpack.c.l.b16 %v199
  %v1042 = vunpack.c.h.b16 %v199
  %v1043 = vunpack.c.l.b16 %v200
  %v1044 = vunpack.c.h.b16 %v200
  %v1045 = vunpack.c.l.b16 %v201
  %v1046 = vunpack.c.h.b16 %v201
  %v1047 = vunpack.c.l.b16 %v202
  %v1048 = vunpack.c.h.b16 %v202
  %v1049 = vunpack.c.l.b16 %v203
  %v1050 = vunpack.c.h.b16 %v203
  %v1051 = vunpack.c.l.b16 %v204
  %v1052 = vunpack.c.h.b16 %v204
  %v1053 = vunpack.c.l.b16 %v205
  %v1054 = vunpack.c.h.b16 %v205
  %v1055 = vunpack.c.l.b16 %v206
  %v1056 = vunpack.c.h.b16 %v206
  %v1057 = vunpack.c.l.b16 %v207
  %v1058 = vunpack.c.h.b16 %v207
  %v1059 = vunpack.c.l.b16 %v208
  %v1060 = vunpack.c.h.b16 %v208
  %v1061 = vunpack.c.l.b16 %v209
  %v1062 = vunpack.c.h.b16 %v209
  %v1063 = vunpack.c.l.b16 %v210
  %v1064 = vunpack.c.h.b16 %v210
  %v1065 = vunpack.c.l.b16 %v211
  %v1066 = vunpack.c.h.b16 %v211
  %v1067 = vunpack.c.l.b16 %v212
  %v1068 = vunpack.c.h.b16 %v212
  %v1069 = vunpack.c.l.b16 %v213
  %v1070 = vunpack.c.h.b16 %v213
  %v1071 = vunpack.c.l.b16 %v214
  %v1072 = vunpack.c.h.b16 %v214
  %v1073 = vunpack.c.l.b16 %v215
  %v1074 = vunpack.c.h.b16 %v215
  %v1075 = vunpack.c.l.b16 %v216
  %v1076 = vunpack.c.h.b16 %v216
  %v1077 = vunpack.c.l.b16 %v217
  %v1078 = vunpack.c.h.b16 %v217
  %v1079 = vunpack.c.l.b16 %v218
  %v1080 = vunpack.c.h.b16 %v218
  %v1081 = vunpack.c.l.b16 %v219
  %v1082 = vunpack.c.h.b16 %v219
  %v1083 = vunpack.c.l.b16 %v220
  %v1084 = vunpack.c.h.b16 %v220
  %v1085 = vunpack.c.l.b16 %v221
  %v1086 = vunpack.c.h.b16 %v221
  %v1087 = vunpack.c.l.b16 %v222
  %v1088 = vunpack.c.h.b16 %v222
  %v1089 = vunpack.c.l.b16 %v223
  %v1090 = vunpack.c.h.b16 %v223
  %v1091 = vunpack.c.l.b16 %v224
  %v1092 = vunpack.c.h.b16 %v224
  %v1093 = vunpack.c.l.b16 %v225
  %v1094 = vunpack.c.h.b16 %v225
  %v1095 = vunpack.c.l.b16 %v226
  %v1096 = vunpack.c.h.b16 %v226
  %v1097 = vunpack.c.l.b16 %v227
  %v1098 = vunpack.c.h.b16 %v227
  %v1099 = vunpack.c.l.b16 %v228
  %v1100 = vunpack.c.h.b16 %v228
  %v1101 = vunpack.c.l.b16 %v229
  %v1102 = vunpack.c.h.b16 %v229
  %v1103 = vunpack.c.l.b16 %v230
  %v1104 = vunpack.c.h.b16 %v230
  %v1105 = vunpack.c.l.b16 %v231
  %v1106 = vunpack.c.h.b16 %v231
  %v1107 = vunpack.c.l.b16 %v232
  %v1108 = vunpack.c.h.b16 %v232
  %v1109 = vunpack.c.l.b16 %v233
  %v1110 = vunpack.c.h.b16 %v233
  %v1111 = vunpack.c.l.b16 %v234
  %v1112 = vunpack.c.h.b16 %v234
  %v1113 = vunpack.c.l.b16 %v235
  %v1114 = vunpack.c.h.b16 %v235
  %v1115 = vunpack.c.l.b16 %v236
  %v1116 = vunpack.c.h.b16 %v236
  %v1117 = vunpack.c.l.b16 %v237
  %v1118 = vunpack.c.h.b16 %v237
  %v1119 = vunpack.c.l.b16 %v238
  %v1120 = vunpack.c.h.b16 %v238
  %v1121 = vunpack.c.l.b16 %v239
  %v1122 = vunpack.c.h.b16 %v239
  %v1123 = vunpack.c.l.b16 %v240
  %v1124 = vunpack.c.h.b16 %v240
  %v1125 = vunpack.c.l.b16 %v241
  %v1126 = vunpack.c.h.b16 %v241
  %v1127 = vunpack.c.l.b16 %v242
  %v1128 = vunpack.c.h.b16 %v242
  %v1129 = vunpack.c.l.b16 %v243
  %v1130 = vunpack.c.h.b16 %v243
  %v1131 = vunpack.c.l.b16 %v244
  %v1132 = vunpack.c.h.b16 %v244
  %v1133 = vpack.c.b16 %v699, %v685
  %v1134 = vpack.c.b16 %v700, %v686
  %v1135 = vpack.c.b16 %v701, %v687
  %v1136 = vpack.c.b16 %v702, %v688
  %v1137 = vpack.c.b16 %v703, %v689
  %v1138 = vpack.c.b16 %v704, %v690
  %v1139 = vpack.c.b16 %v705, %v691
  %v1140 = vpack.c.b16 %v706, %v692
  %v1141 = vpack.c.b16 %v707, %v693
  %v1142 = vpack.c.b16 %v708, %v694
  %v1143 = vpack.c.b16 %v709, %v695
  %v1144 = vpack.c.b16 %v710, %v696
  %v1145 = vpack.c.b16 %v711, %v697
  %v1146 = vpack.c.b16 %v712, %v698
  %v1147 = vpack.c.b16 %v727, %v713
  %v1148 = vpack.c.b16 %v728, %v714
  %v1149 = vpack.c.b16 %v729, %v715
  %v1150 = vpack.c.b16 %v730, %v716
  %v1151 = vpack.c.b16 %v731, %v717
  %v1152 = vpack.c.b16 %v732, %v718
  %v1153 = vpack.c.b16 %v733, %v719
  %v1154 = vpack.c.b16 %v734, %v720
  %v1155 = vpack.c.b16 %v735, %v721
  %v1156 = vpack.c.b16 %v736, %v722
  %v1157 = vpack.c.b16 %v737, %v723
  %v1158 = vpack.c.b16 %v738, %v724
  %v1159 = vpack.c.b16 %v739, %v725
  %v1160 = vpack.c.b16 %v740, %v726
  %v1161 = vpack.c.b16 %v755, %v741
  %v1162 = vpack.c.b16 %v756, %v742
  %v1163 = vpack.c.b16 %v757, %v743
  %v1164 = vpack.c.b16 %v758, %v744
  %v1165 = vpack.c.b16 %v759, %v745
  %v1166 = vpack.c.b16 %v760, %v746
  %v1167 = vpack.c.b16 %v761, %v747
  %v1168 = vpack.c.b16 %v762, %v748
  %v1169 = vpack.c.b16 %v763, %v749
  %v1170 = vpack.c.b16 %v764, %v750
  %v1171 = vpack.c.b16 %v765, %v751
  %v1172 = vpack.c.b16 %v766, %v752
  %v1173 = vpack.c.b16 %v767, %v753
  %v1174 = vpack.c.b16 %v768, %v754
  %v1175 = vpack.c.b16 %v783, %v769
  %v1176 = vpack.c.b16 %v784, %v770
  %v1177 = vpack.c.b16 %v785, %v771
  %v1178 = vpack.c.b16 %v786, %v772
  %v1179 = vpack.c.b16 %v787, %v773
  %v1180 = vpack.c.b16 %v788, %v774
  %v1181 = vpack.c.b16 %v789, %v775
  %v1182 = vpack.c.b16 %v790, %v776
  %v1183 = vpack.c.b16 %v791, %v777
  %v1184 = vpack.c.b16 %v792, %v778
  %v1185 = vpack.c.b16 %v793, %v779
  %v1186 = vpack.c.b16 %v794, %v780
  %v1187 = vpack.c.b16 %v795, %v781
  %v1188 = vpack.c.b16 %v796, %v782
  %v1189 = vpack.c.b16 %v811, %v797
  %v1190 = vpack.c.b16 %v812, %v798
  %v1191 = vpack.c.b16 %v813, %v799
  %v1192 = vpack.c.b16 %v814, %v800
  %v1193 = vpack.c.b16 %v815, %v801
  %v1194 = vpack.c.b16 %v816, %v802
  %v1195 = vpack.c.b16 %v817, %v803
  %v1196 = vpack.c.b16 %v818, %v804
  %v1197 = vpack.c.b16 %v819, %v805
  %v1198 = vpack.c.b16 %v820, %v806
  %v1199 = vpack.c.b16 %v821, %v807
  %v1200 = vpack.c.b16 %v822, %v808
  %v1201 = vpack.c.b16 %v823, %v809
  %v1202 = vpack.c.b16 %v824, %v810
  %v1203 = vpack.c.b16 %v839, %v825
  %v1204 = vpack.c.b16 %v840, %v826
  %v1205 = vpack.c.b16 %v841, %v827
  %v1206 = vpack.c.b16 %v842, %v828
  %v1207 = vpack.c.b16 %v843, %v829
  %v1208 = vpack.c.b16 %v844, %v830
  %v1209 = vpack.c.b16 %v845, %v831
  %v1210 = vpack.c.b16 %v846, %v832
  %v1211 = vpack.c.b16 %v847, %v833
  %v1212 = vpack.c.b16 %v848, %v834
  %v1213 = vpack.c.b16 %v849, %v835
  %v1214 = vpack.c.b16 %v850, %v836
  %v1215 = vpack.c.b16 %v851, %v837
  %v1216 = vpack.c.b16 %v852, %v838
  %v1217 = vpack.c.b16 %v867, %v853
  %v1218 = vpack.c.b16 %v868, %v854
  %v1219 = vpack.c.b16 %v869, %v855
  %v1220 = vpack.c.b16 %v870, %v856
  %v1221 = vpack.c.b16 %v871, %v857
  %v1222 = vpack.c.b16 %v872, %v858
  %v1223 = vpack.c.b16 %v873, %v859
  %v1224 = vpack.c.b16 %v874, %v860
  %v1225 = vpack.c.b16 %v875, %v861
  %v1226 = vpack.c.b16 %v876, %v862
  %v1227 = vpack.c.b16 %v877, %v863
  %v1228 = vpack.c.b16 %v878, %v864
  %v1229 = vpack.c.b16 %v879, %v865
  %v1230 = vpack.c.b16 %v880, %v866
  %v1231 = vpack.c.b16 %v895, %v881
  %v1232 = vpack.c.b16 %v896, %v882
  %v1233 = vpack.c.b16 %v897, %v883
  %v1234 = vpack.c.b16 %v898, %v884
  %v1235 = vpack.c.b16 %v899, %v885
  %v1236 = vpack.c.b16 %v900, %v886
  %v1237 = vpack.c.b16 %v901, %v887
  %v1238 = vpack.c.b16 %v902, %v888
  %v1239 = vpack.c.b16 %v903, %v889
  %v1240 = vpack.c.b16 %v904, %v890
  %v1241 = vpack.c.b16 %v905, %v891
  %v1242 = vpack.c.b16 %v906, %v892
  %v1243 = vpack.c.b16 %v907, %v893
  %v1244 = vpack.c.b16 %v908, %v894
  %v1245 = vpack.c.b16 %v923, %v909
  %v1246 = vpack.c.b16 %v924, %v910
  %v1247 = vpack.c.b16 %v925, %v911
  %v1248 = vpack.c.b16 %v926, %v912
  %v1249 = vpack.c.b16 %v927, %v913
  %v1250 = vpack.c.b16 %v928, %v914
  %v1251 = vpack.c.b16 %v929, %v915
  %v1252 = vpack.c.b16 %v930, %v916
  %v1253 = vpack.c.b16 %v931, %v917
  %v1254 = vpack.c.b16 %v932, %v918
  %v1255 = vpack.c.b16 %v933, %v919
  %v1256 = vpack.c.b16 %v934, %v920
  %v1257 = vpack.c.b16 %v935, %v921
  %v1258 = vpack.c.b16 %v936, %v922
  %v1259 = vpack.c.b16 %v951, %v937
  %v1260 = vpack.c.b16 %v952, %v938
  %v1261 = vpack.c.b16 %v953, %v939
  %v1262 = vpack.c.b16 %v954, %v940
  %v1263 = vpack.c.b16 %v955, %v941
  %v1264 = vpack.c.b16 %v956, %v942
  %v1265 = vpack.c.b16 %v957, %v943
  %v1266 = vpack.c.b16 %v958, %v944
  %v1267 = vpack.c.b16 %v959, %v945
  %v1268 = vpack.c.b16 %v960, %v946
  %v1269 = vpack.c.b16 %v961, %v947
  %v1270 = vpack.c.b16 %v962, %v948
  %v1271 = vpack.c.b16 %v963, %v949
  %v1272 = vpack.c.b16 %v964, %v950
  %v1273 = vpack.c.b16 %v979, %v965
  %v1274 = vpack.c.b16 %v980, %v966
  %v1275 = vpack.c.b16 %v981, %v967
  %v1276 = vpack.c.b16 %v982, %v968
  %v1277 = vpack.c.b16 %v983, %v969
  %v1278 = vpack.c.b16 %v984, %v970
  %v1279 = vpack.c.b16 %v985, %v971
  %v1280 = vpack.c.b16 %v986, %v972
  %v1281 = vpack.c.b16 %v987, %v973
  %v1282 = vpack.c.b16 %v988, %v974
  %v1283 = vpack.c.b16 %v989, %v975
  %v1284 = vpack.c.b16 %v990, %v976
  %v1285 = vpack.c.b16 %v991, %v977
  %v1286 = vpack.c.b16 %v992, %v978
  %v1287 = vpack.c.b16 %v1007, %v993
  %v1288 = vpack.c.b16 %v1008, %v994
  %v1289 = vpack.c.b16 %v1009, %v995
  %v1290 = vpack.c.b16 %v1010, %v996
  %v1291 = vpack.c.b16 %v1011, %v997
  %v1292 = vpack.c.b16 %v1012, %v998
  %v1293 = vpack.c.b16 %v1013, %v999
  %v1294 = vpack.c.b16 %v1014, %v1000
  %v1295 = vpack.c.b16 %v1015, %v1001
  %v1296 = vpack.c.b16 %v1016, %v1002
  %v1297 = vpack.c.b16 %v1017, %v1003
  %v1298 = vpack.c.b16 %v1018, %v1004
  %v1299 = vpack.c.b16 %v1019, %v1005
  %v1300 = vpack.c.b16 %v1020, %v1006
  %v1301 = vpack.c.b16 %v1035, %v1021
  %v1302 = vpack.c.b16 %v1036, %v1022
  %v1303 = vpack.c.b16 %v1037, %v1023
  %v1304 = vpack.c.b16 %v1038, %v1024
  %v1305 = vpack.c.b16 %v1039, %v1025
  %v1306 = vpack.c.b16 %v1040, %v1026
  %v1307 = vpack.c.b16 %v1041, %v1027
  %v1308 = vpack.c.b16 %v1042, %v1028
  %v1309 = vpack.c.b16 %v1043, %v1029
  %v1310 = vpack.c.b16 %v1044, %v1030
  %v1311 = vpack.c.b16 %v1045, %v1031
  %v1312 = vpack.c.b16 %v1046, %v1032
  %v1313 = vpack.c.b16 %v1047, %v1033
  %v1314 = vpack.c.b16 %v1048, %v1034
  %v1315 = vpack.c.b16 %v1063, %v1049
  %v1316 = vpack.c.b16 %v1064, %v1050
  %v1317 = vpack.c.b16 %v1065, %v1051
  %v1318 = vpack.c.b16 %v1066, %v1052
  %v1319 = vpack.c.b16 %v1067, %v1053
  %v1320 = vpack.c.b16 %v1068, %v1054
  %v1321 = vpack.c.b16 %v1069, %v1055
  %v1322 = vpack.c.b16 %v1070, %v1056
  %v1323 = vpack.c.b16 %v1071, %v1057
  %v1324 = vpack.c.b16 %v1072, %v1058
  %v1325 = vpack.c.b16 %v1073, %v1059
  %v1326 = vpack.c.b16 %v1074, %v1060
  %v1327 = vpack.c.b16 %v1075, %v1061
  %v1328 = vpack.c.b16 %v1076, %v1062
  %v1329 = vpack.c.b16 %v1091, %v1077
  %v1330 = vpack.c.b16 %v1092, %v1078
  %v1331 = vpack.c.b16 %v1093, %v1079
  %v1332 = vpack.c.b16 %v1094, %v1080
  %v1333 = vpack.c.b16 %v1095, %v1081
  %v1334 = vpack.c.b16 %v1096, %v1082
  %v1335 = vpack.c.b16 %v1097, %v1083
  %v1336 = vpack.c.b16 %v1098, %v1084
  %v1337 = vpack.c.b16 %v1099, %v1085
  %v1338 = vpack.c.b16 %v1100, %v1086
  %v1339 = vpack.c.b16 %v1101, %v1087
  %v1340 = vpack.c.b16 %v1102, %v1088
  %v1341 = vpack.c.b16 %v1103, %v1089
  %v1342 = vpack.c.b16 %v1104, %v1090
  %v1343 = vpack.c.b16 %v1119, %v1105
  %v1344 = vpack.c.b16 %v1120, %v1106
  %v1345 = vpack.c.b16 %v1121, %v1107
  %v1346 = vpack.c.b16 %v1122, %v1108
  %v1347 = vpack.c.b16 %v1123, %v1109
  %v1348 = vpack.c.b16 %v1124, %v1110
  %v1349 = vpack.c.b16 %v1125, %v1111
  %v1350 = vpack.c.b16 %v1126, %v1112
  %v1351 = vpack.c.b16 %v1127, %v1113
  %v1352 = vpack.c.b16 %v1128, %v1114
  %v1353 = vpack.c.b16 %v1129, %v1115
  %v1354 = vpack.c.b16 %v1130, %v1116
  %v1355 = vpack.c.b16 %v1131, %v1117
  %v1356 = vpack.c.b16 %v1132, %v1118
  %v1781 = vunpack.c.l.b16 %v245
  %v1782 = vunpack.c.l.b16 %v246
  %v1783 = vunpack.c.l.b16 %v247
  %v1784 = vunpack.c.l.b16 %v248
  %v1785 = vunpack.c.l.b16 %v249
  %v1786 = vunpack.c.l.b16 %v250
  %v1787 = vunpack.c.l.b16 %v251
  %v1788 = vunpack.c.l.b16 %v252
  %v1789 = vunpack.c.l.b16 %v253
  %v1790 = vunpack.c.l.b16 %v254
  %v1791 = vunpack.c.l.b16 %v255
  %v1792 = vunpack.c.l.b16 %v256
  %v1793 = vunpack.c.l.b16 %v257
  %v1794 = vunpack.c.l.b16 %v258
  %v1795 = vunpack.c.l.b16 %v259
  %v1796 = vunpack.c.l.b16 %v260
  %v1797 = vunpack.c.l.b16 %v261
  %v1798 = vunpack.c.l.b16 %v262
  %v1799 = vunpack.c.l.b16 %v263
  %v1800 = vunpack.c.l.b16 %v264
  %v1801 = vunpack.c.l.b16 %v265
  %v1802 = vunpack.c.l.b16 %v266
  %v1803 = vunpack.c.l.b16 %v267
  %v1804 = vunpack.c.l.b16 %v268
  %v1805 = vunpack.c.l.b16 %v269
  %v1806 = vunpack.c.l.b16 %v270
  %v1807 = vunpack.c.l.b16 %v271
  %v1808 = vunpack.c.l.b16 %v272
  %v1809 = vunpack.c.l.b16 %v273
  %v1810 = vunpack.c.l.b16 %v274
  %v1811 = vunpack.c.l.b16 %v275
  %v1812 = vunpack.c.l.b16 %v276
  %v1813 = vunpack.c.l.b16 %v277
  %v1814 = vunpack.c.l.b16 %v278
  %v1815 = vunpack.c.l.b16 %v279
  %v1816 = vunpack.c.l.b16 %v280
  %v1817 = vunpack.c.l.b16 %v281
  %v1818 = vunpack.c.l.b16 %v282
  %v1819 = vunpack.c.l.b16 %v283
  %v1820 = vunpack.c.l.b16 %v284
  %v1821 = vunpack.c.l.b16 %v285
  %v1822 = vunpack.c.l.b16 %v286
  %v1823 = vunpack.c.l.b16 %v287
  %v1824 = vunpack.c.l.b16 %v288
  %v1825 = vunpack.c.l.b16 %v289
  %v1826 = vunpack.c.l.b16 %v290
  %v1827 = vunpack.c.l.b16 %v291
  %v1828 = vunpack.c.l.b16 %v292
  %v1829 = vunpack.c.l.b16 %v293
  %v1830 = vunpack.c.l.b16 %v294
  %v1831 = vunpack.c.l.b16 %v295
  %v1832 = vunpack.c.l.b16 %v296
  %v1833 = vunpack.c.l.b16 %v297
  %v1834 = vunpack.c.l.b16 %v298
  %v1835 = vunpack.c.l.b16 %v299
  %v1836 = vunpack.c.l.b16 %v300
  %v1837 = vunpack.c.l.b16 %v301
  %v1838 = vunpack.c.l.b16 %v302
  %v1839 = vunpack.c.l.b16 %v303
  %v1840 = vunpack.c.l.b16 %v304
  %v1841 = vunpack.c.l.b16 %v305
  %v1842 = vunpack.c.l.b16 %v306
  %v1843 = vunpack.c.l.b16 %v307
  %v1844 = vunpack.c.l.b16 %v308
  %v1845 = vunpack.c.l.b16 %v309
  %v1846 = vunpack.c.l.b16 %v310
  %v1847 = vunpack.c.l.b16 %v311
  %v1848 = vunpack.c.l.b16 %v312
  %v1849 = vunpack.c.l.b16 %v313
  %v1850 = vunpack.c.l.b16 %v314
  %v1851 = vunpack.c.l.b16 %v315
  %v1852 = vunpack.c.l.b16 %v316
  %v1853 = vunpack.c.l.b16 %v317
  %v1854 = vunpack.c.l.b16 %v318
  %v1855 = vunpack.c.l.b16 %v319
  %v1856 = vunpack.c.l.b16 %v320
  %v1857 = vunpack.c.l.b16 %v321
  %v1858 = vunpack.c.l.b16 %v322
  %v1859 = vunpack.c.l.b16 %v323
  %v1860 = vunpack.c.l.b16 %v324
  %v1861 = vunpack.c.l.b16 %v325
  %v1862 = vunpack.c.l.b16 %v326
  %v1863 = vunpack.c.l.b16 %v327
  %v1864 = vunpack.c.l.b16 %v328
  %v1865 = vunpack.c.l.b16 %v329
  %v1866 = vunpack.c.l.b16 %v330
  %v1867 = vunpack.c.l.b16 %v331
  %v1868 = vunpack.c.l.b16 %v332
  %v1869 = vunpack.c.l.b16 %v333
  %v1870 = vunpack.c.l.b16 %v334
  %v1871 = vunpack.c.l.b16 %v335
  %v1872 = vunpack.c.l.b16 %v336
  %v1873 = vunpack.c.l.b16 %v337
  %v1874 = vunpack.c.l.b16 %v338
  %v1875 = vunpack.c.l.b16 %v339
  %v1876 = vunpack.c.l.b16 %v340
  %v1877 = vunpack.c.l.b16 %v341
  %v1878 = vunpack.c.l.b16 %v342
  %v1879 = vunpack.c.l.b16 %v343
  %v1880 = vunpack.c.l.b16 %v344
  %v1881 = vunpack.c.l.b16 %v345
  %v1882 = vunpack.c.l.b16 %v346
  %v1883 = vunpack.c.l.b16 %v347
  %v1884 = vunpack.c.l.b16 %v348
  %v1885 = vunpack.c.l.b16 %v349
  %v1886 = vunpack.c.l.b16 %v350
  %v1887 = vunpack.c.l.b16 %v351
  %v1888 = vunpack.c.l.b16 %v352
  %v1889 = vunpack.c.l.b16 %v353
  %v1890 = vunpack.c.l.b16 %v354
  %v1891 = vunpack.c.l.b16 %v355
  %v1892 = vunpack.c.l.b16 %v356
  %v1893 = vunpack.c.l.b16 %v357
  %v1894 = vunpack.c.l.b16 %v358
  %v1895 = vunpack.c.l.b16 %v359
  %v1896 = vunpack.c.l.b16 %v360
  %v1897 = vunpack.c.l.b16 %v361
  %v1898 = vunpack.c.l.b16 %v362
  %v1899 = vunpack.c.l.b16 %v363
  %v1900 = vunpack.c.l.b16 %v364
  %v1901 = vunpack.c.l.b16 %v365
  %v1902 = vunpack.c.l.b16 %v366
  %v1903 = vunpack.c.l.b16 %v367
  %v1904 = vunpack.c.l.b16 %v368
  %v1905 = vunpack.c.l.b16 %v369
  %v1906 = vunpack.c.l.b16 %v370
  %v1907 = vunpack.c.l.b16 %v371
  %v1908 = vunpack.c.l.b16 %v372
  %v1909 = vunpack.c.l.b16 %v373
  %v1910 = vunpack.c.l.b16 %v374
  %v1911 = vunpack.c.l.b16 %v375
  %v1912 = vunpack.c.l.b16 %v376
  %v1913 = vunpack.c.l.b16 %v377
  %v1914 = vunpack.c.l.b16 %v378
  %v1915 = vunpack.c.l.b16 %v379
  %v1916 = vunpack.c.l.b16 %v380
  %v1917 = vunpack.c.l.b16 %v381
  %v1918 = vunpack.c.l.b16 %v382
  %v1919 = vunpack.c.l.b16 %v383
  %v1920 = vunpack.c.l.b16 %v384
  %v1921 = vunpack.c.l.b16 %v385
  %v1922 = vunpack.c.l.b16 %v386
  %v1923 = vunpack.c.l.b16 %v387
  %v1924 = vunpack.c.l.b16 %v388
  %v1925 = vunpack.c.l.b16 %v389
  %v1926 = vunpack.c.l.b16 %v390
  %v1927 = vunpack.c.l.b16 %v391
  %v1928 = vunpack.c.l.b16 %v392
  %v1929 = vunpack.c.l.b16 %v393
  %v1930 = vunpack.c.l.b16 %v394
  %v1931 = vunpack.c.l.b16 %v395
  %v1932 = vunpack.c.l.b16 %v396
  %v1933 = vunpack.c.l.b16 %v397
  %v1934 = vunpack.c.l.b16 %v398
  %v1935 = vunpack.c.l.b16 %v399
  %v1936 = vunpack.c.l.b16 %v400
  %v1937 = vunpack.c.l.b16 %v401
  %v1938 = vunpack.c.l.b16 %v402
  %v1939 = vunpack.c.l.b16 %v403
  %v1940 = vunpack.c.l.b16 %v404
  %v1941 = vunpack.c.l.b16 %v405
  %v1942 = vunpack.c.l.b16 %v406
  %v1943 = vunpack.c.l.b16 %v407
  %v1944 = vunpack.c.l.b16 %v408
  %v1945 = vunpack.c.l.b16 %v409
  %v1946 = vunpack.c.l.b16 %v410
  %v1947 = vunpack.c.l.b16 %v411
  %v1948 = vunpack.c.l.b16 %v412
  %v1949 = vunpack.c.l.b16 %v413
  %v1950 = vunpack.c.l.b16 %v414
  %v1951 = vunpack.c.l.b16 %v415
  %v1952 = vunpack.c.l.b16 %v416
  %v1953 = vunpack.c.l.b16 %v417
  %v1954 = vunpack.c.l.b16 %v418
  %v1955 = vunpack.c.l.b16 %v419
  %v1956 = vunpack.c.l.b16 %v420
  %v1957 = vunpack.c.l.b16 %v421
  %v1958 = vunpack.c.l.b16 %v422
  %v1959 = vunpack.c.l.b16 %v423
  %v1960 = vunpack.c.l.b16 %v424
  %v1961 = vunpack.c.l.b16 %v425
  %v1962 = vunpack.c.l.b16 %v426
  %v1963 = vunpack.c.l.b16 %v427
  %v1964 = vunpack.c.l.b16 %v428
  %v1965 = vunpack.c.l.b16 %v429
  %v1966 = vunpack.c.l.b16 %v430
  %v1967 = vunpack.c.l.b16 %v431
  %v1968 = vunpack.c.l.b16 %v432
  %v1969 = vunpack.c.l.b16 %v433
  %v1970 = vunpack.c.l.b16 %v434
  %v1971 = vunpack.c.l.b16 %v435
  %v1972 = vunpack.c.l.b16 %v436
  %v1973 = vunpack.c.l.b16 %v437
  %v1974 = vunpack.c.l.b16 %v438
  %v1975 = vunpack.c.l.b16 %v439
  %v1976 = vunpack.c.l.b16 %v440
  %v1977 = vunpack.c.l.b16 %v441
  %v1978 = vunpack.c.l.b16 %v442
  %v1979 = vunpack.c.l.b16 %v443
  %v1980 = vunpack.c.l.b16 %v444
  %v1981 = vunpack.c.l.b16 %v445
  %v1982 = vunpack.c.l.b16 %v446
  %v1983 = vunpack.c.l.b16 %v447
  %v1984 = vunpack.c.l.b16 %v448
  %v1985 = vunpack.c.l.b16 %v449
  %v1986 = vunpack.c.l.b16 %v450
  %v1987 = vunpack.c.l.b16 %v451
  %v1988 = vunpack.c.l.b16 %v452
  %v1989 = vunpack.c.l.b16 %v453
  %v1990 = vunpack.c.l.b16 %v454
  %v1991 = vunpack.c.l.b16 %v455
  %v1992 = vunpack.c.l.b16 %v456
  %v1993 = vunpack.c.l.b16 %v457
  %v1994 = vunpack.c.l.b16 %v458
  %v1995 = vunpack.c.l.b16 %v459
  %v1996 = vunpack.c.l.b16 %v460
  %v1997 = vpack.c.b16 %v1782, %v1781
  %v1998 = vpack.c.b16 %v1784, %v1783
  %v1999 = vpack.c.b16 %v1786, %v1785
  %v2000 = vpack.c.b16 %v1788, %v1787
  %v2001 = vpack.c.b16 %v1790, %v1789
  %v2002 = vpack.c.b16 %v1792, %v1791
  %v2003 = vpack.c.b16 %v1794, %v1793
  %v2004 = vpack.c.b16 %v1796, %v1795
  %v2005 = vpack.c.b16 %v1798, %v1797
  %v2006 = vpack.c.b16 %v1800, %v1799
  %v2007 = vpack.c.b16 %v1802, %v1801
  %v2008 = vpack.c.b16 %v1804, %v1803
  %v2009 = vpack.c.b16 %v1806, %v1805
  %v2010 = vpack.c.b16 %v1808, %v1807
  %v2011 = vpack.c.b16 %v1810, %v1809
  %v2012 = vpack.c.b16 %v1812, %v1811
  %v2013 = vpack.c.b16 %v1814, %v1813
  %v2014 = vpack.c.b16 %v1816, %v1815
  %v2015 = vpack.c.b16 %v1818, %v1817
  %v2016 = vpack.c.b16 %v1820, %v1819
  %v2017 = vpack.c.b16 %v1822, %v1821
  %v2018 = vpack.c.b16 %v1824, %v1823
  %v2019 = vpack.c.b16 %v1826, %v1825
  %v2020 = vpack.c.b16 %v1828, %v1827
  %v2021 = vpack.c.b16 %v1830, %v1829
  %v2022 = vpack.c.b16 %v1832, %v1831
  %v2023 = vpack.c.b16 %v1834, %v1833
  %v2024 = vpack.c.b16 %v1836, %v1835
  %v2025 = vpack.c.b16 %v1838, %v1837
  %v2026 = vpack.c.b16 %v1840, %v1839
  %v2027 = vpack.c.b16 %v1842, %v1841
  %v2028 = vpack.c.b16 %v1844, %v1843
  %v2029 = vpack.c.b16 %v1846, %v1845
  %v2030 = vpack.c.b16 %v1848, %v1847
  %v2031 = vpack.c.b16 %v1850, %v1849
  %v2032 = vpack.c.b16 %v1852, %v1851
  %v2033 = vpack.c.b16 %v1854, %v1853
  %v2034 = vpack.c.b16 %v1856, %v1855
  %v2035 = vpack.c.b16 %v1858, %v1857
  %v2036 = vpack.c.b16 %v1860, %v1859
  %v2037 = vpack.c.b16 %v1862, %v1861
  %v2038 = vpack.c.b16 %v1864, %v1863
  %v2039 = vpack.c.b16 %v1866, %v1865
  %v2040 = vpack.c.b16 %v1868, %v1867
  %v2041 = vpack.c.b16 %v1870, %v1869
  %v2042 = vpack.c.b16 %v1872, %v1871
  %v2043 = vpack.c.b16 %v1874, %v1873
  %v2044 = vpack.c.b16 %v1876, %v1875
  %v2045 = vpack.c.b16 %v1878, %v1877
  %v2046 = vpack.c.b16 %v1880, %v1879
  %v2047 = vpack.c.b16 %v1882, %v1881
  %v2048 = vpack.c.b16 %v1884, %v1883
  %v2049 = vpack.c.b16 %v1886, %v1885
  %v2050 = vpack.c.b16 %v1888, %v1887
  %v2051 = vpack.c.b16 %v1890, %v1889
  %v2052 = vpack.c.b16 %v1892, %v1891
  %v2053 = vpack.c.b16 %v1894, %v1893
  %v2054 = vpack.c.b16 %v1896, %v1895
  %v2055 = vpack.c.b16 %v1898, %v1897
  %v2056 = vpack.c.b16 %v1900, %v1899
  %v2057 = vpack.c.b16 %v1902, %v1901
  %v2058 = vpack.c.b16 %v1904, %v1903
  %v2059 = vpack.c.b16 %v1906, %v1905
  %v2060 = vpack.c.b16 %v1908, %v1907
  %v2061 = vpack.c.b16 %v1910, %v1909
  %v2062 = vpack.c.b16 %v1912, %v1911
  %v2063 = vpack.c.b16 %v1914, %v1913
  %v2064 = vpack.c.b16 %v1916, %v1915
  %v2065 = vpack.c.b16 %v1918, %v1917
  %v2066 = vpack.c.b16 %v1920, %v1919
  %v2067 = vpack.c.b16 %v1922, %v1921
  %v2068 = vpack.c.b16 %v1924, %v1923
  %v2069 = vpack.c.b16 %v1926, %v1925
  %v2070 = vpack.c.b16 %v1928, %v1927
  %v2071 = vpack.c.b16 %v1930, %v1929
  %v2072 = vpack.c.b16 %v1932, %v1931
  %v2073 = vpack.c.b16 %v1934, %v1933
  %v2074 = vpack.c.b16 %v1936, %v1935
  %v2075 = vpack.c.b16 %v1938, %v1937
  %v2076 = vpack.c.b16 %v1940, %v1939
  %v2077 = vpack.c.b16 %v1942, %v1941
  %v2078 = vpack.c.b16 %v1944, %v1943
  %v2079 = vpack.c.b16 %v1946, %v1945
  %v2080 = vpack.c.b16 %v1948, %v1947
  %v2081 = vpack.c.b16 %v1950, %v1949
  %v2082 = vpack.c.b16 %v1952, %v1951
  %v2083 = vpack.c.b16 %v1954, %v1953
  %v2084 = vpack.c.b16 %v1956, %v1955
  %v2085 = vpack.c.b16 %v1958, %v1957
  %v2086 = vpack.c.b16 %v1960, %v1959
  %v2087 = vpack.c.b16 %v1962, %v1961
  %v2088 = vpack.c.b16 %v1964, %v1963
  %v2089 = vpack.c.b16 %v1966, %v1965
  %v2090 = vpack.c.b16 %v1968, %v1967
  %v2091 = vpack.c.b16 %v1970, %v1969
  %v2092 = vpack.c.b16 %v1972, %v1971
  %v2093 = vpack.c.b16 %v1974, %v1973
  %v2094 = vpack.c.b16 %v1976, %v1975
  %v2095 = vpack.c.b16 %v1978, %v1977
  %v2096 = vpack.c.b16 %v1980, %v1979
  %v2097 = vpack.c.b16 %v1982, %v1981
  %v2098 = vpack.c.b16 %v1984, %v1983
  %v2099 = vpack.c.b16 %v1986, %v1985
  %v2100 = vpack.c.b16 %v1988, %v1987
  %v2101 = vpack.c.b16 %v1990, %v1989
  %v2102 = vpack.c.b16 %v1992, %v1991
  %v2103 = vpack.c.b16 %v1994, %v1993
  %v2104 = vpack.c.b16 %v1996, %v1995
  %vm2213 = vcmask 523264
  %v2215 = vsel %vm2213, %v1146, 0
  %v2218 = vsel %vm2213, %v1160, 0
  %v2221 = vsel %vm2213, %v1174, 0
  %v2224 = vsel %vm2213, %v1188, 0
  %v2227 = vsel %vm2213, %v1202, 0
  %v2230 = vsel %vm2213, %v1216, 0
  %v2233 = vsel %vm2213, %v1230, 0
  %v2236 = vsel %vm2213, %v1244, 0
  %v2239 = vsel %vm2213, %v1258, 0
  %v2242 = vsel %vm2213, %v1272, 0
  %v2245 = vsel %vm2213, %v1286, 0
  %v2248 = vsel %vm2213, %v1300, 0
  %v2251 = vsel %vm2213, %v1314, 0
  %v2254 = vsel %vm2213, %v1328, 0
  %v2257 = vsel %vm2213, %v1342, 0
  %v2260 = vsel %vm2213, %v1356, 0
  %2262 = vmatpush.bf16.msra.mxu0 %v2004
  %2263 = vmatpush.bf16.msra.mxu0 %v2003
  %2264 = vmatpush.bf16.msra.mxu0 %v2002
  %2265 = vmatpush.bf16.msra.mxu0 %v2001
  %2266 = vmatpush.bf16.msra.mxu0 %v2000
  %2267 = vmatpush.bf16.msra.mxu0 %v1999
  %2268 = vmatpush.bf16.msra.mxu0 %v1998
  %2269 = vmatpush.bf16.msra.mxu0 %v1997
  %2270 = vmatmul.bf16.gmra.mxu0 %v1133
  %v2271 = vpop.f32.mrf.mxu0
  %v2272 = vadd.f32 0.0, %v2271
  %v2273 = vpop.f32.mrf.mxu0
  %v2274 = vadd.f32 0.0, %v2273
  %2275 = vmatmul.bf16.gmra.mxu0 %v1147
  %v2276 = vpop.f32.mrf.mxu0
  %v2277 = vadd.f32 0.0, %v2276
  %v2278 = vpop.f32.mrf.mxu0
  %v2279 = vadd.f32 0.0, %v2278
  %2280 = vmatmul.bf16.gmra.mxu0 %v1161
  %v2281 = vpop.f32.mrf.mxu0
  %v2282 = vadd.f32 0.0, %v2281
  %v2283 = vpop.f32.mrf.mxu0
  %v2284 = vadd.f32 0.0, %v2283
  %2285 = vmatmul.bf16.gmra.mxu0 %v1175
  %v2286 = vpop.f32.mrf.mxu0
  %v2287 = vadd.f32 0.0, %v2286
  %v2288 = vpop.f32.mrf.mxu0
  %v2289 = vadd.f32 0.0, %v2288
  %2290 = vmatmul.bf16.gmra.mxu0 %v1189
  %v2291 = vpop.f32.mrf.mxu0
  %v2292 = vadd.f32 0.0, %v2291
  %v2293 = vpop.f32.mrf.mxu0
  %v2294 = vadd.f32 0.0, %v2293
  %2295 = vmatmul.bf16.gmra.mxu0 %v1203
  %v2296 = vpop.f32.mrf.mxu0
  %v2297 = vadd.f32 0.0, %v2296
  %v2298 = vpop.f32.mrf.mxu0
  %v2299 = vadd.f32 0.0, %v2298
  %2300 = vmatmul.bf16.gmra.mxu0 %v1217
  %v2301 = vpop.f32.mrf.mxu0
  %v2302 = vadd.f32 0.0, %v2301
  %v2303 = vpop.f32.mrf.mxu0
  %v2304 = vadd.f32 0.0, %v2303
  %2305 = vmatmul.bf16.gmra.mxu0 %v1231
  %v2306 = vpop.f32.mrf.mxu0
  %v2307 = vadd.f32 0.0, %v2306
  %v2308 = vpop.f32.mrf.mxu0
  %v2309 = vadd.f32 0.0, %v2308
  %2310 = vmatmul.bf16.gmra.mxu0 %v1245
  %v2311 = vpop.f32.mrf.mxu0
  %v2312 = vadd.f32 0.0, %v2311
  %v2313 = vpop.f32.mrf.mxu0
  %v2314 = vadd.f32 0.0, %v2313
  %2315 = vmatmul.bf16.gmra.mxu0 %v1259
  %v2316 = vpop.f32.mrf.mxu0
  %v2317 = vadd.f32 0.0, %v2316
  %v2318 = vpop.f32.mrf.mxu0
  %v2319 = vadd.f32 0.0, %v2318
  %2320 = vmatmul.bf16.gmra.mxu0 %v1273
  %v2321 = vpop.f32.mrf.mxu0
  %v2322 = vadd.f32 0.0, %v2321
  %v2323 = vpop.f32.mrf.mxu0
  %v2324 = vadd.f32 0.0, %v2323
  %2325 = vmatmul.bf16.gmra.mxu0 %v1287
  %v2326 = vpop.f32.mrf.mxu0
  %v2327 = vadd.f32 0.0, %v2326
  %v2328 = vpop.f32.mrf.mxu0
  %v2329 = vadd.f32 0.0, %v2328
  %2330 = vmatmul.bf16.gmra.mxu0 %v1301
  %v2331 = vpop.f32.mrf.mxu0
  %v2332 = vadd.f32 0.0, %v2331
  %v2333 = vpop.f32.mrf.mxu0
  %v2334 = vadd.f32 0.0, %v2333
  %2335 = vmatmul.bf16.gmra.mxu0 %v1315
  %v2336 = vpop.f32.mrf.mxu0
  %v2337 = vadd.f32 0.0, %v2336
  %v2338 = vpop.f32.mrf.mxu0
  %v2339 = vadd.f32 0.0, %v2338
  %2340 = vmatmul.bf16.gmra.mxu0 %v1329
  %v2341 = vpop.f32.mrf.mxu0
  %v2342 = vadd.f32 0.0, %v2341
  %v2343 = vpop.f32.mrf.mxu0
  %v2344 = vadd.f32 0.0, %v2343
  %2345 = vmatmul.bf16.gmra.mxu0 %v1343
  %v2346 = vpop.f32.mrf.mxu0
  %v2347 = vadd.f32 0.0, %v2346
  %v2348 = vpop.f32.mrf.mxu0
  %v2349 = vadd.f32 0.0, %v2348
  %2350 = vdwg.mxu0
  %2351 = vmatpush.bf16.msra.mxu0 %v2012
  %2352 = vmatpush.bf16.msra.mxu0 %v2011
  %2353 = vmatpush.bf16.msra.mxu0 %v2010
  %2354 = vmatpush.bf16.msra.mxu0 %v2009
  %2355 = vmatpush.bf16.msra.mxu0 %v2008
  %2356 = vmatpush.bf16.msra.mxu0 %v2007
  %2357 = vmatpush.bf16.msra.mxu0 %v2006
  %2358 = vmatpush.bf16.msra.mxu0 %v2005
  %2359 = vmatmul.bf16.gmra.mxu0 %v1134
  %v2360 = vpop.f32.mrf.mxu0
  %v2361 = vadd.f32 %v2272, %v2360
  %v2362 = vpop.f32.mrf.mxu0
  %v2363 = vadd.f32 %v2274, %v2362
  %2364 = vmatmul.bf16.gmra.mxu0 %v1148
  %v2365 = vpop.f32.mrf.mxu0
  %v2366 = vadd.f32 %v2277, %v2365
  %v2367 = vpop.f32.mrf.mxu0
  %v2368 = vadd.f32 %v2279, %v2367
  %2369 = vmatmul.bf16.gmra.mxu0 %v1162
  %v2370 = vpop.f32.mrf.mxu0
  %v2371 = vadd.f32 %v2282, %v2370
  %v2372 = vpop.f32.mrf.mxu0
  %v2373 = vadd.f32 %v2284, %v2372
  %2374 = vmatmul.bf16.gmra.mxu0 %v1176
  %v2375 = vpop.f32.mrf.mxu0
  %v2376 = vadd.f32 %v2287, %v2375
  %v2377 = vpop.f32.mrf.mxu0
  %v2378 = vadd.f32 %v2289, %v2377
  %2379 = vmatmul.bf16.gmra.mxu0 %v1190
  %v2380 = vpop.f32.mrf.mxu0
  %v2381 = vadd.f32 %v2292, %v2380
  %v2382 = vpop.f32.mrf.mxu0
  %v2383 = vadd.f32 %v2294, %v2382
  %2384 = vmatmul.bf16.gmra.mxu0 %v1204
  %v2385 = vpop.f32.mrf.mxu0
  %v2386 = vadd.f32 %v2297, %v2385
  %v2387 = vpop.f32.mrf.mxu0
  %v2388 = vadd.f32 %v2299, %v2387
  %2389 = vmatmul.bf16.gmra.mxu0 %v1218
  %v2390 = vpop.f32.mrf.mxu0
  %v2391 = vadd.f32 %v2302, %v2390
  %v2392 = vpop.f32.mrf.mxu0
  %v2393 = vadd.f32 %v2304, %v2392
  %2394 = vmatmul.bf16.gmra.mxu0 %v1232
  %v2395 = vpop.f32.mrf.mxu0
  %v2396 = vadd.f32 %v2307, %v2395
  %v2397 = vpop.f32.mrf.mxu0
  %v2398 = vadd.f32 %v2309, %v2397
  %2399 = vmatmul.bf16.gmra.mxu0 %v1246
  %v2400 = vpop.f32.mrf.mxu0
  %v2401 = vadd.f32 %v2312, %v2400
  %v2402 = vpop.f32.mrf.mxu0
  %v2403 = vadd.f32 %v2314, %v2402
  %2404 = vmatmul.bf16.gmra.mxu0 %v1260
  %v2405 = vpop.f32.mrf.mxu0
  %v2406 = vadd.f32 %v2317, %v2405
  %v2407 = vpop.f32.mrf.mxu0
  %v2408 = vadd.f32 %v2319, %v2407
  %2409 = vmatmul.bf16.gmra.mxu0 %v1274
  %v2410 = vpop.f32.mrf.mxu0
  %v2411 = vadd.f32 %v2322, %v2410
  %v2412 = vpop.f32.mrf.mxu0
  %v2413 = vadd.f32 %v2324, %v2412
  %2414 = vmatmul.bf16.gmra.mxu0 %v1288
  %v2415 = vpop.f32.mrf.mxu0
  %v2416 = vadd.f32 %v2327, %v2415
  %v2417 = vpop.f32.mrf.mxu0
  %v2418 = vadd.f32 %v2329, %v2417
  %2419 = vmatmul.bf16.gmra.mxu0 %v1302
  %v2420 = vpop.f32.mrf.mxu0
  %v2421 = vadd.f32 %v2332, %v2420
  %v2422 = vpop.f32.mrf.mxu0
  %v2423 = vadd.f32 %v2334, %v2422
  %2424 = vmatmul.bf16.gmra.mxu0 %v1316
  %v2425 = vpop.f32.mrf.mxu0
  %v2426 = vadd.f32 %v2337, %v2425
  %v2427 = vpop.f32.mrf.mxu0
  %v2428 = vadd.f32 %v2339, %v2427
  %2429 = vmatmul.bf16.gmra.mxu0 %v1330
  %v2430 = vpop.f32.mrf.mxu0
  %v2431 = vadd.f32 %v2342, %v2430
  %v2432 = vpop.f32.mrf.mxu0
  %v2433 = vadd.f32 %v2344, %v2432
  %2434 = vmatmul.bf16.gmra.mxu0 %v1344
  %v2435 = vpop.f32.mrf.mxu0
  %v2436 = vadd.f32 %v2347, %v2435
  %v2437 = vpop.f32.mrf.mxu0
  %v2438 = vadd.f32 %v2349, %v2437
  %2439 = vdwg.mxu0
  %2440 = vmatpush.bf16.msra.mxu0 %v2020
  %2441 = vmatpush.bf16.msra.mxu0 %v2019
  %2442 = vmatpush.bf16.msra.mxu0 %v2018
  %2443 = vmatpush.bf16.msra.mxu0 %v2017
  %2444 = vmatpush.bf16.msra.mxu0 %v2016
  %2445 = vmatpush.bf16.msra.mxu0 %v2015
  %2446 = vmatpush.bf16.msra.mxu0 %v2014
  %2447 = vmatpush.bf16.msra.mxu0 %v2013
  %2448 = vmatmul.bf16.gmra.mxu0 %v1135
  %v2449 = vpop.f32.mrf.mxu0
  %v2450 = vadd.f32 %v2361, %v2449
  %v2451 = vpop.f32.mrf.mxu0
  %v2452 = vadd.f32 %v2363, %v2451
  %2453 = vmatmul.bf16.gmra.mxu0 %v1149
  %v2454 = vpop.f32.mrf.mxu0
  %v2455 = vadd.f32 %v2366, %v2454
  %v2456 = vpop.f32.mrf.mxu0
  %v2457 = vadd.f32 %v2368, %v2456
  %2458 = vmatmul.bf16.gmra.mxu0 %v1163
  %v2459 = vpop.f32.mrf.mxu0
  %v2460 = vadd.f32 %v2371, %v2459
  %v2461 = vpop.f32.mrf.mxu0
  %v2462 = vadd.f32 %v2373, %v2461
  %2463 = vmatmul.bf16.gmra.mxu0 %v1177
  %v2464 = vpop.f32.mrf.mxu0
  %v2465 = vadd.f32 %v2376, %v2464
  %v2466 = vpop.f32.mrf.mxu0
  %v2467 = vadd.f32 %v2378, %v2466
  %2468 = vmatmul.bf16.gmra.mxu0 %v1191
  %v2469 = vpop.f32.mrf.mxu0
  %v2470 = vadd.f32 %v2381, %v2469
  %v2471 = vpop.f32.mrf.mxu0
  %v2472 = vadd.f32 %v2383, %v2471
  %2473 = vmatmul.bf16.gmra.mxu0 %v1205
  %v2474 = vpop.f32.mrf.mxu0
  %v2475 = vadd.f32 %v2386, %v2474
  %v2476 = vpop.f32.mrf.mxu0
  %v2477 = vadd.f32 %v2388, %v2476
  %2478 = vmatmul.bf16.gmra.mxu0 %v1219
  %v2479 = vpop.f32.mrf.mxu0
  %v2480 = vadd.f32 %v2391, %v2479
  %v2481 = vpop.f32.mrf.mxu0
  %v2482 = vadd.f32 %v2393, %v2481
  %2483 = vmatmul.bf16.gmra.mxu0 %v1233
  %v2484 = vpop.f32.mrf.mxu0
  %v2485 = vadd.f32 %v2396, %v2484
  %v2486 = vpop.f32.mrf.mxu0
  %v2487 = vadd.f32 %v2398, %v2486
  %2488 = vmatmul.bf16.gmra.mxu0 %v1247
  %v2489 = vpop.f32.mrf.mxu0
  %v2490 = vadd.f32 %v2401, %v2489
  %v2491 = vpop.f32.mrf.mxu0
  %v2492 = vadd.f32 %v2403, %v2491
  %2493 = vmatmul.bf16.gmra.mxu0 %v1261
  %v2494 = vpop.f32.mrf.mxu0
  %v2495 = vadd.f32 %v2406, %v2494
  %v2496 = vpop.f32.mrf.mxu0
  %v2497 = vadd.f32 %v2408, %v2496
  %2498 = vmatmul.bf16.gmra.mxu0 %v1275
  %v2499 = vpop.f32.mrf.mxu0
  %v2500 = vadd.f32 %v2411, %v2499
  %v2501 = vpop.f32.mrf.mxu0
  %v2502 = vadd.f32 %v2413, %v2501
  %2503 = vmatmul.bf16.gmra.mxu0 %v1289
  %v2504 = vpop.f32.mrf.mxu0
  %v2505 = vadd.f32 %v2416, %v2504
  %v2506 = vpop.f32.mrf.mxu0
  %v2507 = vadd.f32 %v2418, %v2506
  %2508 = vmatmul.bf16.gmra.mxu0 %v1303
  %v2509 = vpop.f32.mrf.mxu0
  %v2510 = vadd.f32 %v2421, %v2509
  %v2511 = vpop.f32.mrf.mxu0
  %v2512 = vadd.f32 %v2423, %v2511
  %2513 = vmatmul.bf16.gmra.mxu0 %v1317
  %v2514 = vpop.f32.mrf.mxu0
  %v2515 = vadd.f32 %v2426, %v2514
  %v2516 = vpop.f32.mrf.mxu0
  %v2517 = vadd.f32 %v2428, %v2516
  %2518 = vmatmul.bf16.gmra.mxu0 %v1331
  %v2519 = vpop.f32.mrf.mxu0
  %v2520 = vadd.f32 %v2431, %v2519
  %v2521 = vpop.f32.mrf.mxu0
  %v2522 = vadd.f32 %v2433, %v2521
  %2523 = vmatmul.bf16.gmra.mxu0 %v1345
  %v2524 = vpop.f32.mrf.mxu0
  %v2525 = vadd.f32 %v2436, %v2524
  %v2526 = vpop.f32.mrf.mxu0
  %v2527 = vadd.f32 %v2438, %v2526
  %2528 = vdwg.mxu0
  %2529 = vmatpush.bf16.msra.mxu0 %v2028
  %2530 = vmatpush.bf16.msra.mxu0 %v2027
  %2531 = vmatpush.bf16.msra.mxu0 %v2026
  %2532 = vmatpush.bf16.msra.mxu0 %v2025
  %2533 = vmatpush.bf16.msra.mxu0 %v2024
  %2534 = vmatpush.bf16.msra.mxu0 %v2023
  %2535 = vmatpush.bf16.msra.mxu0 %v2022
  %2536 = vmatpush.bf16.msra.mxu0 %v2021
  %2537 = vmatmul.bf16.gmra.mxu0 %v1136
  %v2538 = vpop.f32.mrf.mxu0
  %v2539 = vadd.f32 %v2450, %v2538
  %v2540 = vpop.f32.mrf.mxu0
  %v2541 = vadd.f32 %v2452, %v2540
  %2542 = vmatmul.bf16.gmra.mxu0 %v1150
  %v2543 = vpop.f32.mrf.mxu0
  %v2544 = vadd.f32 %v2455, %v2543
  %v2545 = vpop.f32.mrf.mxu0
  %v2546 = vadd.f32 %v2457, %v2545
  %2547 = vmatmul.bf16.gmra.mxu0 %v1164
  %v2548 = vpop.f32.mrf.mxu0
  %v2549 = vadd.f32 %v2460, %v2548
  %v2550 = vpop.f32.mrf.mxu0
  %v2551 = vadd.f32 %v2462, %v2550
  %2552 = vmatmul.bf16.gmra.mxu0 %v1178
  %v2553 = vpop.f32.mrf.mxu0
  %v2554 = vadd.f32 %v2465, %v2553
  %v2555 = vpop.f32.mrf.mxu0
  %v2556 = vadd.f32 %v2467, %v2555
  %2557 = vmatmul.bf16.gmra.mxu0 %v1192
  %v2558 = vpop.f32.mrf.mxu0
  %v2559 = vadd.f32 %v2470, %v2558
  %v2560 = vpop.f32.mrf.mxu0
  %v2561 = vadd.f32 %v2472, %v2560
  %2562 = vmatmul.bf16.gmra.mxu0 %v1206
  %v2563 = vpop.f32.mrf.mxu0
  %v2564 = vadd.f32 %v2475, %v2563
  %v2565 = vpop.f32.mrf.mxu0
  %v2566 = vadd.f32 %v2477, %v2565
  %2567 = vmatmul.bf16.gmra.mxu0 %v1220
  %v2568 = vpop.f32.mrf.mxu0
  %v2569 = vadd.f32 %v2480, %v2568
  %v2570 = vpop.f32.mrf.mxu0
  %v2571 = vadd.f32 %v2482, %v2570
  %2572 = vmatmul.bf16.gmra.mxu0 %v1234
  %v2573 = vpop.f32.mrf.mxu0
  %v2574 = vadd.f32 %v2485, %v2573
  %v2575 = vpop.f32.mrf.mxu0
  %v2576 = vadd.f32 %v2487, %v2575
  %2577 = vmatmul.bf16.gmra.mxu0 %v1248
  %v2578 = vpop.f32.mrf.mxu0
  %v2579 = vadd.f32 %v2490, %v2578
  %v2580 = vpop.f32.mrf.mxu0
  %v2581 = vadd.f32 %v2492, %v2580
  %2582 = vmatmul.bf16.gmra.mxu0 %v1262
  %v2583 = vpop.f32.mrf.mxu0
  %v2584 = vadd.f32 %v2495, %v2583
  %v2585 = vpop.f32.mrf.mxu0
  %v2586 = vadd.f32 %v2497, %v2585
  %2587 = vmatmul.bf16.gmra.mxu0 %v1276
  %v2588 = vpop.f32.mrf.mxu0
  %v2589 = vadd.f32 %v2500, %v2588
  %v2590 = vpop.f32.mrf.mxu0
  %v2591 = vadd.f32 %v2502, %v2590
  %2592 = vmatmul.bf16.gmra.mxu0 %v1290
  %v2593 = vpop.f32.mrf.mxu0
  %v2594 = vadd.f32 %v2505, %v2593
  %v2595 = vpop.f32.mrf.mxu0
  %v2596 = vadd.f32 %v2507, %v2595
  %2597 = vmatmul.bf16.gmra.mxu0 %v1304
  %v2598 = vpop.f32.mrf.mxu0
  %v2599 = vadd.f32 %v2510, %v2598
  %v2600 = vpop.f32.mrf.mxu0
  %v2601 = vadd.f32 %v2512, %v2600
  %2602 = vmatmul.bf16.gmra.mxu0 %v1318
  %v2603 = vpop.f32.mrf.mxu0
  %v2604 = vadd.f32 %v2515, %v2603
  %v2605 = vpop.f32.mrf.mxu0
  %v2606 = vadd.f32 %v2517, %v2605
  %2607 = vmatmul.bf16.gmra.mxu0 %v1332
  %v2608 = vpop.f32.mrf.mxu0
  %v2609 = vadd.f32 %v2520, %v2608
  %v2610 = vpop.f32.mrf.mxu0
  %v2611 = vadd.f32 %v2522, %v2610
  %2612 = vmatmul.bf16.gmra.mxu0 %v1346
  %v2613 = vpop.f32.mrf.mxu0
  %v2614 = vadd.f32 %v2525, %v2613
  %v2615 = vpop.f32.mrf.mxu0
  %v2616 = vadd.f32 %v2527, %v2615
  %2617 = vdwg.mxu0
  %2618 = vmatpush.bf16.msra.mxu0 %v2036
  %2619 = vmatpush.bf16.msra.mxu0 %v2035
  %2620 = vmatpush.bf16.msra.mxu0 %v2034
  %2621 = vmatpush.bf16.msra.mxu0 %v2033
  %2622 = vmatpush.bf16.msra.mxu0 %v2032
  %2623 = vmatpush.bf16.msra.mxu0 %v2031
  %2624 = vmatpush.bf16.msra.mxu0 %v2030
  %2625 = vmatpush.bf16.msra.mxu0 %v2029
  %2626 = vmatmul.bf16.gmra.mxu0 %v1137
  %v2627 = vpop.f32.mrf.mxu0
  %v2628 = vadd.f32 %v2539, %v2627
  %v2629 = vpop.f32.mrf.mxu0
  %v2630 = vadd.f32 %v2541, %v2629
  %2631 = vmatmul.bf16.gmra.mxu0 %v1151
  %v2632 = vpop.f32.mrf.mxu0
  %v2633 = vadd.f32 %v2544, %v2632
  %v2634 = vpop.f32.mrf.mxu0
  %v2635 = vadd.f32 %v2546, %v2634
  %2636 = vmatmul.bf16.gmra.mxu0 %v1165
  %v2637 = vpop.f32.mrf.mxu0
  %v2638 = vadd.f32 %v2549, %v2637
  %v2639 = vpop.f32.mrf.mxu0
  %v2640 = vadd.f32 %v2551, %v2639
  %2641 = vmatmul.bf16.gmra.mxu0 %v1179
  %v2642 = vpop.f32.mrf.mxu0
  %v2643 = vadd.f32 %v2554, %v2642
  %v2644 = vpop.f32.mrf.mxu0
  %v2645 = vadd.f32 %v2556, %v2644
  %2646 = vmatmul.bf16.gmra.mxu0 %v1193
  %v2647 = vpop.f32.mrf.mxu0
  %v2648 = vadd.f32 %v2559, %v2647
  %v2649 = vpop.f32.mrf.mxu0
  %v2650 = vadd.f32 %v2561, %v2649
  %2651 = vmatmul.bf16.gmra.mxu0 %v1207
  %v2652 = vpop.f32.mrf.mxu0
  %v2653 = vadd.f32 %v2564, %v2652
  %v2654 = vpop.f32.mrf.mxu0
  %v2655 = vadd.f32 %v2566, %v2654
  %2656 = vmatmul.bf16.gmra.mxu0 %v1221
  %v2657 = vpop.f32.mrf.mxu0
  %v2658 = vadd.f32 %v2569, %v2657
  %v2659 = vpop.f32.mrf.mxu0
  %v2660 = vadd.f32 %v2571, %v2659
  %2661 = vmatmul.bf16.gmra.mxu0 %v1235
  %v2662 = vpop.f32.mrf.mxu0
  %v2663 = vadd.f32 %v2574, %v2662
  %v2664 = vpop.f32.mrf.mxu0
  %v2665 = vadd.f32 %v2576, %v2664
  %2666 = vmatmul.bf16.gmra.mxu0 %v1249
  %v2667 = vpop.f32.mrf.mxu0
  %v2668 = vadd.f32 %v2579, %v2667
  %v2669 = vpop.f32.mrf.mxu0
  %v2670 = vadd.f32 %v2581, %v2669
  %2671 = vmatmul.bf16.gmra.mxu0 %v1263
  %v2672 = vpop.f32.mrf.mxu0
  %v2673 = vadd.f32 %v2584, %v2672
  %v2674 = vpop.f32.mrf.mxu0
  %v2675 = vadd.f32 %v2586, %v2674
  %2676 = vmatmul.bf16.gmra.mxu0 %v1277
  %v2677 = vpop.f32.mrf.mxu0
  %v2678 = vadd.f32 %v2589, %v2677
  %v2679 = vpop.f32.mrf.mxu0
  %v2680 = vadd.f32 %v2591, %v2679
  %2681 = vmatmul.bf16.gmra.mxu0 %v1291
  %v2682 = vpop.f32.mrf.mxu0
  %v2683 = vadd.f32 %v2594, %v2682
  %v2684 = vpop.f32.mrf.mxu0
  %v2685 = vadd.f32 %v2596, %v2684
  %2686 = vmatmul.bf16.gmra.mxu0 %v1305
  %v2687 = vpop.f32.mrf.mxu0
  %v2688 = vadd.f32 %v2599, %v2687
  %v2689 = vpop.f32.mrf.mxu0
  %v2690 = vadd.f32 %v2601, %v2689
  %2691 = vmatmul.bf16.gmra.mxu0 %v1319
  %v2692 = vpop.f32.mrf.mxu0
  %v2693 = vadd.f32 %v2604, %v2692
  %v2694 = vpop.f32.mrf.mxu0
  %v2695 = vadd.f32 %v2606, %v2694
  %2696 = vmatmul.bf16.gmra.mxu0 %v1333
  %v2697 = vpop.f32.mrf.mxu0
  %v2698 = vadd.f32 %v2609, %v2697
  %v2699 = vpop.f32.mrf.mxu0
  %v2700 = vadd.f32 %v2611, %v2699
  %2701 = vmatmul.bf16.gmra.mxu0 %v1347
  %v2702 = vpop.f32.mrf.mxu0
  %v2703 = vadd.f32 %v2614, %v2702
  %v2704 = vpop.f32.mrf.mxu0
  %v2705 = vadd.f32 %v2616, %v2704
  %2706 = vdwg.mxu0
  %2707 = vmatpush.bf16.msra.mxu0 %v2044
  %2708 = vmatpush.bf16.msra.mxu0 %v2043
  %2709 = vmatpush.bf16.msra.mxu0 %v2042
  %2710 = vmatpush.bf16.msra.mxu0 %v2041
  %2711 = vmatpush.bf16.msra.mxu0 %v2040
  %2712 = vmatpush.bf16.msra.mxu0 %v2039
  %2713 = vmatpush.bf16.msra.mxu0 %v2038
  %2714 = vmatpush.bf16.msra.mxu0 %v2037
  %2715 = vmatmul.bf16.gmra.mxu0 %v1138
  %v2716 = vpop.f32.mrf.mxu0
  %v2717 = vadd.f32 %v2628, %v2716
  %v2718 = vpop.f32.mrf.mxu0
  %v2719 = vadd.f32 %v2630, %v2718
  %2720 = vmatmul.bf16.gmra.mxu0 %v1152
  %v2721 = vpop.f32.mrf.mxu0
  %v2722 = vadd.f32 %v2633, %v2721
  %v2723 = vpop.f32.mrf.mxu0
  %v2724 = vadd.f32 %v2635, %v2723
  %2725 = vmatmul.bf16.gmra.mxu0 %v1166
  %v2726 = vpop.f32.mrf.mxu0
  %v2727 = vadd.f32 %v2638, %v2726
  %v2728 = vpop.f32.mrf.mxu0
  %v2729 = vadd.f32 %v2640, %v2728
  %2730 = vmatmul.bf16.gmra.mxu0 %v1180
  %v2731 = vpop.f32.mrf.mxu0
  %v2732 = vadd.f32 %v2643, %v2731
  %v2733 = vpop.f32.mrf.mxu0
  %v2734 = vadd.f32 %v2645, %v2733
  %2735 = vmatmul.bf16.gmra.mxu0 %v1194
  %v2736 = vpop.f32.mrf.mxu0
  %v2737 = vadd.f32 %v2648, %v2736
  %v2738 = vpop.f32.mrf.mxu0
  %v2739 = vadd.f32 %v2650, %v2738
  %2740 = vmatmul.bf16.gmra.mxu0 %v1208
  %v2741 = vpop.f32.mrf.mxu0
  %v2742 = vadd.f32 %v2653, %v2741
  %v2743 = vpop.f32.mrf.mxu0
  %v2744 = vadd.f32 %v2655, %v2743
  %2745 = vmatmul.bf16.gmra.mxu0 %v1222
  %v2746 = vpop.f32.mrf.mxu0
  %v2747 = vadd.f32 %v2658, %v2746
  %v2748 = vpop.f32.mrf.mxu0
  %v2749 = vadd.f32 %v2660, %v2748
  %2750 = vmatmul.bf16.gmra.mxu0 %v1236
  %v2751 = vpop.f32.mrf.mxu0
  %v2752 = vadd.f32 %v2663, %v2751
  %v2753 = vpop.f32.mrf.mxu0
  %v2754 = vadd.f32 %v2665, %v2753
  %2755 = vmatmul.bf16.gmra.mxu0 %v1250
  %v2756 = vpop.f32.mrf.mxu0
  %v2757 = vadd.f32 %v2668, %v2756
  %v2758 = vpop.f32.mrf.mxu0
  %v2759 = vadd.f32 %v2670, %v2758
  %2760 = vmatmul.bf16.gmra.mxu0 %v1264
  %v2761 = vpop.f32.mrf.mxu0
  %v2762 = vadd.f32 %v2673, %v2761
  %v2763 = vpop.f32.mrf.mxu0
  %v2764 = vadd.f32 %v2675, %v2763
  %2765 = vmatmul.bf16.gmra.mxu0 %v1278
  %v2766 = vpop.f32.mrf.mxu0
  %v2767 = vadd.f32 %v2678, %v2766
  %v2768 = vpop.f32.mrf.mxu0
  %v2769 = vadd.f32 %v2680, %v2768
  %2770 = vmatmul.bf16.gmra.mxu0 %v1292
  %v2771 = vpop.f32.mrf.mxu0
  %v2772 = vadd.f32 %v2683, %v2771
  %v2773 = vpop.f32.mrf.mxu0
  %v2774 = vadd.f32 %v2685, %v2773
  %2775 = vmatmul.bf16.gmra.mxu0 %v1306
  %v2776 = vpop.f32.mrf.mxu0
  %v2777 = vadd.f32 %v2688, %v2776
  %v2778 = vpop.f32.mrf.mxu0
  %v2779 = vadd.f32 %v2690, %v2778
  %2780 = vmatmul.bf16.gmra.mxu0 %v1320
  %v2781 = vpop.f32.mrf.mxu0
  %v2782 = vadd.f32 %v2693, %v2781
  %v2783 = vpop.f32.mrf.mxu0
  %v2784 = vadd.f32 %v2695, %v2783
  %2785 = vmatmul.bf16.gmra.mxu0 %v1334
  %v2786 = vpop.f32.mrf.mxu0
  %v2787 = vadd.f32 %v2698, %v2786
  %v2788 = vpop.f32.mrf.mxu0
  %v2789 = vadd.f32 %v2700, %v2788
  %2790 = vmatmul.bf16.gmra.mxu0 %v1348
  %v2791 = vpop.f32.mrf.mxu0
  %v2792 = vadd.f32 %v2703, %v2791
  %v2793 = vpop.f32.mrf.mxu0
  %v2794 = vadd.f32 %v2705, %v2793
  %2795 = vdwg.mxu0
  %2796 = vmatpush.bf16.msra.mxu0 %v2052
  %2797 = vmatpush.bf16.msra.mxu0 %v2051
  %2798 = vmatpush.bf16.msra.mxu0 %v2050
  %2799 = vmatpush.bf16.msra.mxu0 %v2049
  %2800 = vmatpush.bf16.msra.mxu0 %v2048
  %2801 = vmatpush.bf16.msra.mxu0 %v2047
  %2802 = vmatpush.bf16.msra.mxu0 %v2046
  %2803 = vmatpush.bf16.msra.mxu0 %v2045
  %2804 = vmatmul.bf16.gmra.mxu0 %v1139
  %v2805 = vpop.f32.mrf.mxu0
  %v2806 = vadd.f32 %v2717, %v2805
  %v2807 = vpop.f32.mrf.mxu0
  %v2808 = vadd.f32 %v2719, %v2807
  %2809 = vmatmul.bf16.gmra.mxu0 %v1153
  %v2810 = vpop.f32.mrf.mxu0
  %v2811 = vadd.f32 %v2722, %v2810
  %v2812 = vpop.f32.mrf.mxu0
  %v2813 = vadd.f32 %v2724, %v2812
  %2814 = vmatmul.bf16.gmra.mxu0 %v1167
  %v2815 = vpop.f32.mrf.mxu0
  %v2816 = vadd.f32 %v2727, %v2815
  %v2817 = vpop.f32.mrf.mxu0
  %v2818 = vadd.f32 %v2729, %v2817
  %2819 = vmatmul.bf16.gmra.mxu0 %v1181
  %v2820 = vpop.f32.mrf.mxu0
  %v2821 = vadd.f32 %v2732, %v2820
  %v2822 = vpop.f32.mrf.mxu0
  %v2823 = vadd.f32 %v2734, %v2822
  %2824 = vmatmul.bf16.gmra.mxu0 %v1195
  %v2825 = vpop.f32.mrf.mxu0
  %v2826 = vadd.f32 %v2737, %v2825
  %v2827 = vpop.f32.mrf.mxu0
  %v2828 = vadd.f32 %v2739, %v2827
  %2829 = vmatmul.bf16.gmra.mxu0 %v1209
  %v2830 = vpop.f32.mrf.mxu0
  %v2831 = vadd.f32 %v2742, %v2830
  %v2832 = vpop.f32.mrf.mxu0
  %v2833 = vadd.f32 %v2744, %v2832
  %2834 = vmatmul.bf16.gmra.mxu0 %v1223
  %v2835 = vpop.f32.mrf.mxu0
  %v2836 = vadd.f32 %v2747, %v2835
  %v2837 = vpop.f32.mrf.mxu0
  %v2838 = vadd.f32 %v2749, %v2837
  %2839 = vmatmul.bf16.gmra.mxu0 %v1237
  %v2840 = vpop.f32.mrf.mxu0
  %v2841 = vadd.f32 %v2752, %v2840
  %v2842 = vpop.f32.mrf.mxu0
  %v2843 = vadd.f32 %v2754, %v2842
  %2844 = vmatmul.bf16.gmra.mxu0 %v1251
  %v2845 = vpop.f32.mrf.mxu0
  %v2846 = vadd.f32 %v2757, %v2845
  %v2847 = vpop.f32.mrf.mxu0
  %v2848 = vadd.f32 %v2759, %v2847
  %2849 = vmatmul.bf16.gmra.mxu0 %v1265
  %v2850 = vpop.f32.mrf.mxu0
  %v2851 = vadd.f32 %v2762, %v2850
  %v2852 = vpop.f32.mrf.mxu0
  %v2853 = vadd.f32 %v2764, %v2852
  %2854 = vmatmul.bf16.gmra.mxu0 %v1279
  %v2855 = vpop.f32.mrf.mxu0
  %v2856 = vadd.f32 %v2767, %v2855
  %v2857 = vpop.f32.mrf.mxu0
  %v2858 = vadd.f32 %v2769, %v2857
  %2859 = vmatmul.bf16.gmra.mxu0 %v1293
  %v2860 = vpop.f32.mrf.mxu0
  %v2861 = vadd.f32 %v2772, %v2860
  %v2862 = vpop.f32.mrf.mxu0
  %v2863 = vadd.f32 %v2774, %v2862
  %2864 = vmatmul.bf16.gmra.mxu0 %v1307
  %v2865 = vpop.f32.mrf.mxu0
  %v2866 = vadd.f32 %v2777, %v2865
  %v2867 = vpop.f32.mrf.mxu0
  %v2868 = vadd.f32 %v2779, %v2867
  %2869 = vmatmul.bf16.gmra.mxu0 %v1321
  %v2870 = vpop.f32.mrf.mxu0
  %v2871 = vadd.f32 %v2782, %v2870
  %v2872 = vpop.f32.mrf.mxu0
  %v2873 = vadd.f32 %v2784, %v2872
  %2874 = vmatmul.bf16.gmra.mxu0 %v1335
  %v2875 = vpop.f32.mrf.mxu0
  %v2876 = vadd.f32 %v2787, %v2875
  %v2877 = vpop.f32.mrf.mxu0
  %v2878 = vadd.f32 %v2789, %v2877
  %2879 = vmatmul.bf16.gmra.mxu0 %v1349
  %v2880 = vpop.f32.mrf.mxu0
  %v2881 = vadd.f32 %v2792, %v2880
  %v2882 = vpop.f32.mrf.mxu0
  %v2883 = vadd.f32 %v2794, %v2882
  %2884 = vdwg.mxu0
  %2885 = vmatpush.bf16.msra.mxu0 %v2060
  %2886 = vmatpush.bf16.msra.mxu0 %v2059
  %2887 = vmatpush.bf16.msra.mxu0 %v2058
  %2888 = vmatpush.bf16.msra.mxu0 %v2057
  %2889 = vmatpush.bf16.msra.mxu0 %v2056
  %2890 = vmatpush.bf16.msra.mxu0 %v2055
  %2891 = vmatpush.bf16.msra.mxu0 %v2054
  %2892 = vmatpush.bf16.msra.mxu0 %v2053
  %2893 = vmatmul.bf16.gmra.mxu0 %v1140
  %v2894 = vpop.f32.mrf.mxu0
  %v2895 = vadd.f32 %v2806, %v2894
  %v2896 = vpop.f32.mrf.mxu0
  %v2897 = vadd.f32 %v2808, %v2896
  %2898 = vmatmul.bf16.gmra.mxu0 %v1154
  %v2899 = vpop.f32.mrf.mxu0
  %v2900 = vadd.f32 %v2811, %v2899
  %v2901 = vpop.f32.mrf.mxu0
  %v2902 = vadd.f32 %v2813, %v2901
  %2903 = vmatmul.bf16.gmra.mxu0 %v1168
  %v2904 = vpop.f32.mrf.mxu0
  %v2905 = vadd.f32 %v2816, %v2904
  %v2906 = vpop.f32.mrf.mxu0
  %v2907 = vadd.f32 %v2818, %v2906
  %2908 = vmatmul.bf16.gmra.mxu0 %v1182
  %v2909 = vpop.f32.mrf.mxu0
  %v2910 = vadd.f32 %v2821, %v2909
  %v2911 = vpop.f32.mrf.mxu0
  %v2912 = vadd.f32 %v2823, %v2911
  %2913 = vmatmul.bf16.gmra.mxu0 %v1196
  %v2914 = vpop.f32.mrf.mxu0
  %v2915 = vadd.f32 %v2826, %v2914
  %v2916 = vpop.f32.mrf.mxu0
  %v2917 = vadd.f32 %v2828, %v2916
  %2918 = vmatmul.bf16.gmra.mxu0 %v1210
  %v2919 = vpop.f32.mrf.mxu0
  %v2920 = vadd.f32 %v2831, %v2919
  %v2921 = vpop.f32.mrf.mxu0
  %v2922 = vadd.f32 %v2833, %v2921
  %2923 = vmatmul.bf16.gmra.mxu0 %v1224
  %v2924 = vpop.f32.mrf.mxu0
  %v2925 = vadd.f32 %v2836, %v2924
  %v2926 = vpop.f32.mrf.mxu0
  %v2927 = vadd.f32 %v2838, %v2926
  %2928 = vmatmul.bf16.gmra.mxu0 %v1238
  %v2929 = vpop.f32.mrf.mxu0
  %v2930 = vadd.f32 %v2841, %v2929
  %v2931 = vpop.f32.mrf.mxu0
  %v2932 = vadd.f32 %v2843, %v2931
  %2933 = vmatmul.bf16.gmra.mxu0 %v1252
  %v2934 = vpop.f32.mrf.mxu0
  %v2935 = vadd.f32 %v2846, %v2934
  %v2936 = vpop.f32.mrf.mxu0
  %v2937 = vadd.f32 %v2848, %v2936
  %2938 = vmatmul.bf16.gmra.mxu0 %v1266
  %v2939 = vpop.f32.mrf.mxu0
  %v2940 = vadd.f32 %v2851, %v2939
  %v2941 = vpop.f32.mrf.mxu0
  %v2942 = vadd.f32 %v2853, %v2941
  %2943 = vmatmul.bf16.gmra.mxu0 %v1280
  %v2944 = vpop.f32.mrf.mxu0
  %v2945 = vadd.f32 %v2856, %v2944
  %v2946 = vpop.f32.mrf.mxu0
  %v2947 = vadd.f32 %v2858, %v2946
  %2948 = vmatmul.bf16.gmra.mxu0 %v1294
  %v2949 = vpop.f32.mrf.mxu0
  %v2950 = vadd.f32 %v2861, %v2949
  %v2951 = vpop.f32.mrf.mxu0
  %v2952 = vadd.f32 %v2863, %v2951
  %2953 = vmatmul.bf16.gmra.mxu0 %v1308
  %v2954 = vpop.f32.mrf.mxu0
  %v2955 = vadd.f32 %v2866, %v2954
  %v2956 = vpop.f32.mrf.mxu0
  %v2957 = vadd.f32 %v2868, %v2956
  %2958 = vmatmul.bf16.gmra.mxu0 %v1322
  %v2959 = vpop.f32.mrf.mxu0
  %v2960 = vadd.f32 %v2871, %v2959
  %v2961 = vpop.f32.mrf.mxu0
  %v2962 = vadd.f32 %v2873, %v2961
  %2963 = vmatmul.bf16.gmra.mxu0 %v1336
  %v2964 = vpop.f32.mrf.mxu0
  %v2965 = vadd.f32 %v2876, %v2964
  %v2966 = vpop.f32.mrf.mxu0
  %v2967 = vadd.f32 %v2878, %v2966
  %2968 = vmatmul.bf16.gmra.mxu0 %v1350
  %v2969 = vpop.f32.mrf.mxu0
  %v2970 = vadd.f32 %v2881, %v2969
  %v2971 = vpop.f32.mrf.mxu0
  %v2972 = vadd.f32 %v2883, %v2971
  %2973 = vdwg.mxu0
  %2974 = vmatpush.bf16.msra.mxu0 %v2068
  %2975 = vmatpush.bf16.msra.mxu0 %v2067
  %2976 = vmatpush.bf16.msra.mxu0 %v2066
  %2977 = vmatpush.bf16.msra.mxu0 %v2065
  %2978 = vmatpush.bf16.msra.mxu0 %v2064
  %2979 = vmatpush.bf16.msra.mxu0 %v2063
  %2980 = vmatpush.bf16.msra.mxu0 %v2062
  %2981 = vmatpush.bf16.msra.mxu0 %v2061
  %2982 = vmatmul.bf16.gmra.mxu0 %v1141
  %v2983 = vpop.f32.mrf.mxu0
  %v2984 = vadd.f32 %v2895, %v2983
  %v2985 = vpop.f32.mrf.mxu0
  %v2986 = vadd.f32 %v2897, %v2985
  %2987 = vmatmul.bf16.gmra.mxu0 %v1155
  %v2988 = vpop.f32.mrf.mxu0
  %v2989 = vadd.f32 %v2900, %v2988
  %v2990 = vpop.f32.mrf.mxu0
  %v2991 = vadd.f32 %v2902, %v2990
  %2992 = vmatmul.bf16.gmra.mxu0 %v1169
  %v2993 = vpop.f32.mrf.mxu0
  %v2994 = vadd.f32 %v2905, %v2993
  %v2995 = vpop.f32.mrf.mxu0
  %v2996 = vadd.f32 %v2907, %v2995
  %2997 = vmatmul.bf16.gmra.mxu0 %v1183
  %v2998 = vpop.f32.mrf.mxu0
  %v2999 = vadd.f32 %v2910, %v2998
  %v3000 = vpop.f32.mrf.mxu0
  %v3001 = vadd.f32 %v2912, %v3000
  %3002 = vmatmul.bf16.gmra.mxu0 %v1197
  %v3003 = vpop.f32.mrf.mxu0
  %v3004 = vadd.f32 %v2915, %v3003
  %v3005 = vpop.f32.mrf.mxu0
  %v3006 = vadd.f32 %v2917, %v3005
  %3007 = vmatmul.bf16.gmra.mxu0 %v1211
  %v3008 = vpop.f32.mrf.mxu0
  %v3009 = vadd.f32 %v2920, %v3008
  %v3010 = vpop.f32.mrf.mxu0
  %v3011 = vadd.f32 %v2922, %v3010
  %3012 = vmatmul.bf16.gmra.mxu0 %v1225
  %v3013 = vpop.f32.mrf.mxu0
  %v3014 = vadd.f32 %v2925, %v3013
  %v3015 = vpop.f32.mrf.mxu0
  %v3016 = vadd.f32 %v2927, %v3015
  %3017 = vmatmul.bf16.gmra.mxu0 %v1239
  %v3018 = vpop.f32.mrf.mxu0
  %v3019 = vadd.f32 %v2930, %v3018
  %v3020 = vpop.f32.mrf.mxu0
  %v3021 = vadd.f32 %v2932, %v3020
  %3022 = vmatmul.bf16.gmra.mxu0 %v1253
  %v3023 = vpop.f32.mrf.mxu0
  %v3024 = vadd.f32 %v2935, %v3023
  %v3025 = vpop.f32.mrf.mxu0
  %v3026 = vadd.f32 %v2937, %v3025
  %3027 = vmatmul.bf16.gmra.mxu0 %v1267
  %v3028 = vpop.f32.mrf.mxu0
  %v3029 = vadd.f32 %v2940, %v3028
  %v3030 = vpop.f32.mrf.mxu0
  %v3031 = vadd.f32 %v2942, %v3030
  %3032 = vmatmul.bf16.gmra.mxu0 %v1281
  %v3033 = vpop.f32.mrf.mxu0
  %v3034 = vadd.f32 %v2945, %v3033
  %v3035 = vpop.f32.mrf.mxu0
  %v3036 = vadd.f32 %v2947, %v3035
  %3037 = vmatmul.bf16.gmra.mxu0 %v1295
  %v3038 = vpop.f32.mrf.mxu0
  %v3039 = vadd.f32 %v2950, %v3038
  %v3040 = vpop.f32.mrf.mxu0
  %v3041 = vadd.f32 %v2952, %v3040
  %3042 = vmatmul.bf16.gmra.mxu0 %v1309
  %v3043 = vpop.f32.mrf.mxu0
  %v3044 = vadd.f32 %v2955, %v3043
  %v3045 = vpop.f32.mrf.mxu0
  %v3046 = vadd.f32 %v2957, %v3045
  %3047 = vmatmul.bf16.gmra.mxu0 %v1323
  %v3048 = vpop.f32.mrf.mxu0
  %v3049 = vadd.f32 %v2960, %v3048
  %v3050 = vpop.f32.mrf.mxu0
  %v3051 = vadd.f32 %v2962, %v3050
  %3052 = vmatmul.bf16.gmra.mxu0 %v1337
  %v3053 = vpop.f32.mrf.mxu0
  %v3054 = vadd.f32 %v2965, %v3053
  %v3055 = vpop.f32.mrf.mxu0
  %v3056 = vadd.f32 %v2967, %v3055
  %3057 = vmatmul.bf16.gmra.mxu0 %v1351
  %v3058 = vpop.f32.mrf.mxu0
  %v3059 = vadd.f32 %v2970, %v3058
  %v3060 = vpop.f32.mrf.mxu0
  %v3061 = vadd.f32 %v2972, %v3060
  %3062 = vdwg.mxu0
  %3063 = vmatpush.bf16.msra.mxu0 %v2076
  %3064 = vmatpush.bf16.msra.mxu0 %v2075
  %3065 = vmatpush.bf16.msra.mxu0 %v2074
  %3066 = vmatpush.bf16.msra.mxu0 %v2073
  %3067 = vmatpush.bf16.msra.mxu0 %v2072
  %3068 = vmatpush.bf16.msra.mxu0 %v2071
  %3069 = vmatpush.bf16.msra.mxu0 %v2070
  %3070 = vmatpush.bf16.msra.mxu0 %v2069
  %3071 = vmatmul.bf16.gmra.mxu0 %v1142
  %v3072 = vpop.f32.mrf.mxu0
  %v3073 = vadd.f32 %v2984, %v3072
  %v3074 = vpop.f32.mrf.mxu0
  %v3075 = vadd.f32 %v2986, %v3074
  %3076 = vmatmul.bf16.gmra.mxu0 %v1156
  %v3077 = vpop.f32.mrf.mxu0
  %v3078 = vadd.f32 %v2989, %v3077
  %v3079 = vpop.f32.mrf.mxu0
  %v3080 = vadd.f32 %v2991, %v3079
  %3081 = vmatmul.bf16.gmra.mxu0 %v1170
  %v3082 = vpop.f32.mrf.mxu0
  %v3083 = vadd.f32 %v2994, %v3082
  %v3084 = vpop.f32.mrf.mxu0
  %v3085 = vadd.f32 %v2996, %v3084
  %3086 = vmatmul.bf16.gmra.mxu0 %v1184
  %v3087 = vpop.f32.mrf.mxu0
  %v3088 = vadd.f32 %v2999, %v3087
  %v3089 = vpop.f32.mrf.mxu0
  %v3090 = vadd.f32 %v3001, %v3089
  %3091 = vmatmul.bf16.gmra.mxu0 %v1198
  %v3092 = vpop.f32.mrf.mxu0
  %v3093 = vadd.f32 %v3004, %v3092
  %v3094 = vpop.f32.mrf.mxu0
  %v3095 = vadd.f32 %v3006, %v3094
  %3096 = vmatmul.bf16.gmra.mxu0 %v1212
  %v3097 = vpop.f32.mrf.mxu0
  %v3098 = vadd.f32 %v3009, %v3097
  %v3099 = vpop.f32.mrf.mxu0
  %v3100 = vadd.f32 %v3011, %v3099
  %3101 = vmatmul.bf16.gmra.mxu0 %v1226
  %v3102 = vpop.f32.mrf.mxu0
  %v3103 = vadd.f32 %v3014, %v3102
  %v3104 = vpop.f32.mrf.mxu0
  %v3105 = vadd.f32 %v3016, %v3104
  %3106 = vmatmul.bf16.gmra.mxu0 %v1240
  %v3107 = vpop.f32.mrf.mxu0
  %v3108 = vadd.f32 %v3019, %v3107
  %v3109 = vpop.f32.mrf.mxu0
  %v3110 = vadd.f32 %v3021, %v3109
  %3111 = vmatmul.bf16.gmra.mxu0 %v1254
  %v3112 = vpop.f32.mrf.mxu0
  %v3113 = vadd.f32 %v3024, %v3112
  %v3114 = vpop.f32.mrf.mxu0
  %v3115 = vadd.f32 %v3026, %v3114
  %3116 = vmatmul.bf16.gmra.mxu0 %v1268
  %v3117 = vpop.f32.mrf.mxu0
  %v3118 = vadd.f32 %v3029, %v3117
  %v3119 = vpop.f32.mrf.mxu0
  %v3120 = vadd.f32 %v3031, %v3119
  %3121 = vmatmul.bf16.gmra.mxu0 %v1282
  %v3122 = vpop.f32.mrf.mxu0
  %v3123 = vadd.f32 %v3034, %v3122
  %v3124 = vpop.f32.mrf.mxu0
  %v3125 = vadd.f32 %v3036, %v3124
  %3126 = vmatmul.bf16.gmra.mxu0 %v1296
  %v3127 = vpop.f32.mrf.mxu0
  %v3128 = vadd.f32 %v3039, %v3127
  %v3129 = vpop.f32.mrf.mxu0
  %v3130 = vadd.f32 %v3041, %v3129
  %3131 = vmatmul.bf16.gmra.mxu0 %v1310
  %v3132 = vpop.f32.mrf.mxu0
  %v3133 = vadd.f32 %v3044, %v3132
  %v3134 = vpop.f32.mrf.mxu0
  %v3135 = vadd.f32 %v3046, %v3134
  %3136 = vmatmul.bf16.gmra.mxu0 %v1324
  %v3137 = vpop.f32.mrf.mxu0
  %v3138 = vadd.f32 %v3049, %v3137
  %v3139 = vpop.f32.mrf.mxu0
  %v3140 = vadd.f32 %v3051, %v3139
  %3141 = vmatmul.bf16.gmra.mxu0 %v1338
  %v3142 = vpop.f32.mrf.mxu0
  %v3143 = vadd.f32 %v3054, %v3142
  %v3144 = vpop.f32.mrf.mxu0
  %v3145 = vadd.f32 %v3056, %v3144
  %3146 = vmatmul.bf16.gmra.mxu0 %v1352
  %v3147 = vpop.f32.mrf.mxu0
  %v3148 = vadd.f32 %v3059, %v3147
  %v3149 = vpop.f32.mrf.mxu0
  %v3150 = vadd.f32 %v3061, %v3149
  %3151 = vdwg.mxu0
  %3152 = vmatpush.bf16.msra.mxu0 %v2084
  %3153 = vmatpush.bf16.msra.mxu0 %v2083
  %3154 = vmatpush.bf16.msra.mxu0 %v2082
  %3155 = vmatpush.bf16.msra.mxu0 %v2081
  %3156 = vmatpush.bf16.msra.mxu0 %v2080
  %3157 = vmatpush.bf16.msra.mxu0 %v2079
  %3158 = vmatpush.bf16.msra.mxu0 %v2078
  %3159 = vmatpush.bf16.msra.mxu0 %v2077
  %3160 = vmatmul.bf16.gmra.mxu0 %v1143
  %v3161 = vpop.f32.mrf.mxu0
  %v3162 = vadd.f32 %v3073, %v3161
  %v3163 = vpop.f32.mrf.mxu0
  %v3164 = vadd.f32 %v3075, %v3163
  %3165 = vmatmul.bf16.gmra.mxu0 %v1157
  %v3166 = vpop.f32.mrf.mxu0
  %v3167 = vadd.f32 %v3078, %v3166
  %v3168 = vpop.f32.mrf.mxu0
  %v3169 = vadd.f32 %v3080, %v3168
  %3170 = vmatmul.bf16.gmra.mxu0 %v1171
  %v3171 = vpop.f32.mrf.mxu0
  %v3172 = vadd.f32 %v3083, %v3171
  %v3173 = vpop.f32.mrf.mxu0
  %v3174 = vadd.f32 %v3085, %v3173
  %3175 = vmatmul.bf16.gmra.mxu0 %v1185
  %v3176 = vpop.f32.mrf.mxu0
  %v3177 = vadd.f32 %v3088, %v3176
  %v3178 = vpop.f32.mrf.mxu0
  %v3179 = vadd.f32 %v3090, %v3178
  %3180 = vmatmul.bf16.gmra.mxu0 %v1199
  %v3181 = vpop.f32.mrf.mxu0
  %v3182 = vadd.f32 %v3093, %v3181
  %v3183 = vpop.f32.mrf.mxu0
  %v3184 = vadd.f32 %v3095, %v3183
  %3185 = vmatmul.bf16.gmra.mxu0 %v1213
  %v3186 = vpop.f32.mrf.mxu0
  %v3187 = vadd.f32 %v3098, %v3186
  %v3188 = vpop.f32.mrf.mxu0
  %v3189 = vadd.f32 %v3100, %v3188
  %3190 = vmatmul.bf16.gmra.mxu0 %v1227
  %v3191 = vpop.f32.mrf.mxu0
  %v3192 = vadd.f32 %v3103, %v3191
  %v3193 = vpop.f32.mrf.mxu0
  %v3194 = vadd.f32 %v3105, %v3193
  %3195 = vmatmul.bf16.gmra.mxu0 %v1241
  %v3196 = vpop.f32.mrf.mxu0
  %v3197 = vadd.f32 %v3108, %v3196
  %v3198 = vpop.f32.mrf.mxu0
  %v3199 = vadd.f32 %v3110, %v3198
  %3200 = vmatmul.bf16.gmra.mxu0 %v1255
  %v3201 = vpop.f32.mrf.mxu0
  %v3202 = vadd.f32 %v3113, %v3201
  %v3203 = vpop.f32.mrf.mxu0
  %v3204 = vadd.f32 %v3115, %v3203
  %3205 = vmatmul.bf16.gmra.mxu0 %v1269
  %v3206 = vpop.f32.mrf.mxu0
  %v3207 = vadd.f32 %v3118, %v3206
  %v3208 = vpop.f32.mrf.mxu0
  %v3209 = vadd.f32 %v3120, %v3208
  %3210 = vmatmul.bf16.gmra.mxu0 %v1283
  %v3211 = vpop.f32.mrf.mxu0
  %v3212 = vadd.f32 %v3123, %v3211
  %v3213 = vpop.f32.mrf.mxu0
  %v3214 = vadd.f32 %v3125, %v3213
  %3215 = vmatmul.bf16.gmra.mxu0 %v1297
  %v3216 = vpop.f32.mrf.mxu0
  %v3217 = vadd.f32 %v3128, %v3216
  %v3218 = vpop.f32.mrf.mxu0
  %v3219 = vadd.f32 %v3130, %v3218
  %3220 = vmatmul.bf16.gmra.mxu0 %v1311
  %v3221 = vpop.f32.mrf.mxu0
  %v3222 = vadd.f32 %v3133, %v3221
  %v3223 = vpop.f32.mrf.mxu0
  %v3224 = vadd.f32 %v3135, %v3223
  %3225 = vmatmul.bf16.gmra.mxu0 %v1325
  %v3226 = vpop.f32.mrf.mxu0
  %v3227 = vadd.f32 %v3138, %v3226
  %v3228 = vpop.f32.mrf.mxu0
  %v3229 = vadd.f32 %v3140, %v3228
  %3230 = vmatmul.bf16.gmra.mxu0 %v1339
  %v3231 = vpop.f32.mrf.mxu0
  %v3232 = vadd.f32 %v3143, %v3231
  %v3233 = vpop.f32.mrf.mxu0
  %v3234 = vadd.f32 %v3145, %v3233
  %3235 = vmatmul.bf16.gmra.mxu0 %v1353
  %v3236 = vpop.f32.mrf.mxu0
  %v3237 = vadd.f32 %v3148, %v3236
  %v3238 = vpop.f32.mrf.mxu0
  %v3239 = vadd.f32 %v3150, %v3238
  %3240 = vdwg.mxu0
  %3241 = vmatpush.bf16.msra.mxu0 %v2092
  %3242 = vmatpush.bf16.msra.mxu0 %v2091
  %3243 = vmatpush.bf16.msra.mxu0 %v2090
  %3244 = vmatpush.bf16.msra.mxu0 %v2089
  %3245 = vmatpush.bf16.msra.mxu0 %v2088
  %3246 = vmatpush.bf16.msra.mxu0 %v2087
  %3247 = vmatpush.bf16.msra.mxu0 %v2086
  %3248 = vmatpush.bf16.msra.mxu0 %v2085
  %3249 = vmatmul.bf16.gmra.mxu0 %v1144
  %v3250 = vpop.f32.mrf.mxu0
  %v3251 = vadd.f32 %v3162, %v3250
  %v3252 = vpop.f32.mrf.mxu0
  %v3253 = vadd.f32 %v3164, %v3252
  %3254 = vmatmul.bf16.gmra.mxu0 %v1158
  %v3255 = vpop.f32.mrf.mxu0
  %v3256 = vadd.f32 %v3167, %v3255
  %v3257 = vpop.f32.mrf.mxu0
  %v3258 = vadd.f32 %v3169, %v3257
  %3259 = vmatmul.bf16.gmra.mxu0 %v1172
  %v3260 = vpop.f32.mrf.mxu0
  %v3261 = vadd.f32 %v3172, %v3260
  %v3262 = vpop.f32.mrf.mxu0
  %v3263 = vadd.f32 %v3174, %v3262
  %3264 = vmatmul.bf16.gmra.mxu0 %v1186
  %v3265 = vpop.f32.mrf.mxu0
  %v3266 = vadd.f32 %v3177, %v3265
  %v3267 = vpop.f32.mrf.mxu0
  %v3268 = vadd.f32 %v3179, %v3267
  %3269 = vmatmul.bf16.gmra.mxu0 %v1200
  %v3270 = vpop.f32.mrf.mxu0
  %v3271 = vadd.f32 %v3182, %v3270
  %v3272 = vpop.f32.mrf.mxu0
  %v3273 = vadd.f32 %v3184, %v3272
  %3274 = vmatmul.bf16.gmra.mxu0 %v1214
  %v3275 = vpop.f32.mrf.mxu0
  %v3276 = vadd.f32 %v3187, %v3275
  %v3277 = vpop.f32.mrf.mxu0
  %v3278 = vadd.f32 %v3189, %v3277
  %3279 = vmatmul.bf16.gmra.mxu0 %v1228
  %v3280 = vpop.f32.mrf.mxu0
  %v3281 = vadd.f32 %v3192, %v3280
  %v3282 = vpop.f32.mrf.mxu0
  %v3283 = vadd.f32 %v3194, %v3282
  %3284 = vmatmul.bf16.gmra.mxu0 %v1242
  %v3285 = vpop.f32.mrf.mxu0
  %v3286 = vadd.f32 %v3197, %v3285
  %v3287 = vpop.f32.mrf.mxu0
  %v3288 = vadd.f32 %v3199, %v3287
  %3289 = vmatmul.bf16.gmra.mxu0 %v1256
  %v3290 = vpop.f32.mrf.mxu0
  %v3291 = vadd.f32 %v3202, %v3290
  %v3292 = vpop.f32.mrf.mxu0
  %v3293 = vadd.f32 %v3204, %v3292
  %3294 = vmatmul.bf16.gmra.mxu0 %v1270
  %v3295 = vpop.f32.mrf.mxu0
  %v3296 = vadd.f32 %v3207, %v3295
  %v3297 = vpop.f32.mrf.mxu0
  %v3298 = vadd.f32 %v3209, %v3297
  %3299 = vmatmul.bf16.gmra.mxu0 %v1284
  %v3300 = vpop.f32.mrf.mxu0
  %v3301 = vadd.f32 %v3212, %v3300
  %v3302 = vpop.f32.mrf.mxu0
  %v3303 = vadd.f32 %v3214, %v3302
  %3304 = vmatmul.bf16.gmra.mxu0 %v1298
  %v3305 = vpop.f32.mrf.mxu0
  %v3306 = vadd.f32 %v3217, %v3305
  %v3307 = vpop.f32.mrf.mxu0
  %v3308 = vadd.f32 %v3219, %v3307
  %3309 = vmatmul.bf16.gmra.mxu0 %v1312
  %v3310 = vpop.f32.mrf.mxu0
  %v3311 = vadd.f32 %v3222, %v3310
  %v3312 = vpop.f32.mrf.mxu0
  %v3313 = vadd.f32 %v3224, %v3312
  %3314 = vmatmul.bf16.gmra.mxu0 %v1326
  %v3315 = vpop.f32.mrf.mxu0
  %v3316 = vadd.f32 %v3227, %v3315
  %v3317 = vpop.f32.mrf.mxu0
  %v3318 = vadd.f32 %v3229, %v3317
  %3319 = vmatmul.bf16.gmra.mxu0 %v1340
  %v3320 = vpop.f32.mrf.mxu0
  %v3321 = vadd.f32 %v3232, %v3320
  %v3322 = vpop.f32.mrf.mxu0
  %v3323 = vadd.f32 %v3234, %v3322
  %3324 = vmatmul.bf16.gmra.mxu0 %v1354
  %v3325 = vpop.f32.mrf.mxu0
  %v3326 = vadd.f32 %v3237, %v3325
  %v3327 = vpop.f32.mrf.mxu0
  %v3328 = vadd.f32 %v3239, %v3327
  %3329 = vdwg.mxu0
  %3330 = vmatpush.bf16.msra.mxu0 %v2100
  %3331 = vmatpush.bf16.msra.mxu0 %v2099
  %3332 = vmatpush.bf16.msra.mxu0 %v2098
  %3333 = vmatpush.bf16.msra.mxu0 %v2097
  %3334 = vmatpush.bf16.msra.mxu0 %v2096
  %3335 = vmatpush.bf16.msra.mxu0 %v2095
  %3336 = vmatpush.bf16.msra.mxu0 %v2094
  %3337 = vmatpush.bf16.msra.mxu0 %v2093
  %3338 = vmatmul.bf16.gmra.mxu0 %v1145
  %v3339 = vpop.f32.mrf.mxu0
  %v3340 = vadd.f32 %v3251, %v3339
  %v3341 = vpop.f32.mrf.mxu0
  %v3342 = vadd.f32 %v3253, %v3341
  %3343 = vmatmul.bf16.gmra.mxu0 %v1159
  %v3344 = vpop.f32.mrf.mxu0
  %v3345 = vadd.f32 %v3256, %v3344
  %v3346 = vpop.f32.mrf.mxu0
  %v3347 = vadd.f32 %v3258, %v3346
  %3348 = vmatmul.bf16.gmra.mxu0 %v1173
  %v3349 = vpop.f32.mrf.mxu0
  %v3350 = vadd.f32 %v3261, %v3349
  %v3351 = vpop.f32.mrf.mxu0
  %v3352 = vadd.f32 %v3263, %v3351
  %3353 = vmatmul.bf16.gmra.mxu0 %v1187
  %v3354 = vpop.f32.mrf.mxu0
  %v3355 = vadd.f32 %v3266, %v3354
  %v3356 = vpop.f32.mrf.mxu0
  %v3357 = vadd.f32 %v3268, %v3356
  %3358 = vmatmul.bf16.gmra.mxu0 %v1201
  %v3359 = vpop.f32.mrf.mxu0
  %v3360 = vadd.f32 %v3271, %v3359
  %v3361 = vpop.f32.mrf.mxu0
  %v3362 = vadd.f32 %v3273, %v3361
  %3363 = vmatmul.bf16.gmra.mxu0 %v1215
  %v3364 = vpop.f32.mrf.mxu0
  %v3365 = vadd.f32 %v3276, %v3364
  %v3366 = vpop.f32.mrf.mxu0
  %v3367 = vadd.f32 %v3278, %v3366
  %3368 = vmatmul.bf16.gmra.mxu0 %v1229
  %v3369 = vpop.f32.mrf.mxu0
  %v3370 = vadd.f32 %v3281, %v3369
  %v3371 = vpop.f32.mrf.mxu0
  %v3372 = vadd.f32 %v3283, %v3371
  %3373 = vmatmul.bf16.gmra.mxu0 %v1243
  %v3374 = vpop.f32.mrf.mxu0
  %v3375 = vadd.f32 %v3286, %v3374
  %v3376 = vpop.f32.mrf.mxu0
  %v3377 = vadd.f32 %v3288, %v3376
  %3378 = vmatmul.bf16.gmra.mxu0 %v1257
  %v3379 = vpop.f32.mrf.mxu0
  %v3380 = vadd.f32 %v3291, %v3379
  %v3381 = vpop.f32.mrf.mxu0
  %v3382 = vadd.f32 %v3293, %v3381
  %3383 = vmatmul.bf16.gmra.mxu0 %v1271
  %v3384 = vpop.f32.mrf.mxu0
  %v3385 = vadd.f32 %v3296, %v3384
  %v3386 = vpop.f32.mrf.mxu0
  %v3387 = vadd.f32 %v3298, %v3386
  %3388 = vmatmul.bf16.gmra.mxu0 %v1285
  %v3389 = vpop.f32.mrf.mxu0
  %v3390 = vadd.f32 %v3301, %v3389
  %v3391 = vpop.f32.mrf.mxu0
  %v3392 = vadd.f32 %v3303, %v3391
  %3393 = vmatmul.bf16.gmra.mxu0 %v1299
  %v3394 = vpop.f32.mrf.mxu0
  %v3395 = vadd.f32 %v3306, %v3394
  %v3396 = vpop.f32.mrf.mxu0
  %v3397 = vadd.f32 %v3308, %v3396
  %3398 = vmatmul.bf16.gmra.mxu0 %v1313
  %v3399 = vpop.f32.mrf.mxu0
  %v3400 = vadd.f32 %v3311, %v3399
  %v3401 = vpop.f32.mrf.mxu0
  %v3402 = vadd.f32 %v3313, %v3401
  %3403 = vmatmul.bf16.gmra.mxu0 %v1327
  %v3404 = vpop.f32.mrf.mxu0
  %v3405 = vadd.f32 %v3316, %v3404
  %v3406 = vpop.f32.mrf.mxu0
  %v3407 = vadd.f32 %v3318, %v3406
  %3408 = vmatmul.bf16.gmra.mxu0 %v1341
  %v3409 = vpop.f32.mrf.mxu0
  %v3410 = vadd.f32 %v3321, %v3409
  %v3411 = vpop.f32.mrf.mxu0
  %v3412 = vadd.f32 %v3323, %v3411
  %3413 = vmatmul.bf16.gmra.mxu0 %v1355
  %v3414 = vpop.f32.mrf.mxu0
  %v3415 = vadd.f32 %v3326, %v3414
  %v3416 = vpop.f32.mrf.mxu0
  %v3417 = vadd.f32 %v3328, %v3416
  %3418 = vdwg.mxu0
  %3419 = vmatpush.bf16.msra.mxu0 0
  %3420 = vmatpush.bf16.msra.mxu0 0
  %3421 = vmatpush.bf16.msra.mxu0 0
  %3422 = vmatpush.bf16.msra.mxu0 0
  %3423 = vmatpush.bf16.msra.mxu0 %v2104
  %3424 = vmatpush.bf16.msra.mxu0 %v2103
  %3425 = vmatpush.bf16.msra.mxu0 %v2102
  %3426 = vmatpush.bf16.msra.mxu0 %v2101
  %3427 = vmatmul.bf16.gmra.mxu0 %v2215
  %v3428 = vpop.f32.mrf.mxu0
  %v3429 = vadd.f32 %v3340, %v3428
  %v3430 = vpop.f32.mrf.mxu0
  %v3431 = vadd.f32 %v3342, %v3430
  %3432 = vmatmul.bf16.gmra.mxu0 %v2218
  %v3433 = vpop.f32.mrf.mxu0
  %v3434 = vadd.f32 %v3345, %v3433
  %v3435 = vpop.f32.mrf.mxu0
  %v3436 = vadd.f32 %v3347, %v3435
  %3437 = vmatmul.bf16.gmra.mxu0 %v2221
  %v3438 = vpop.f32.mrf.mxu0
  %v3439 = vadd.f32 %v3350, %v3438
  %v3440 = vpop.f32.mrf.mxu0
  %v3441 = vadd.f32 %v3352, %v3440
  %3442 = vmatmul.bf16.gmra.mxu0 %v2224
  %v3443 = vpop.f32.mrf.mxu0
  %v3444 = vadd.f32 %v3355, %v3443
  %v3445 = vpop.f32.mrf.mxu0
  %v3446 = vadd.f32 %v3357, %v3445
  %3447 = vmatmul.bf16.gmra.mxu0 %v2227
  %v3448 = vpop.f32.mrf.mxu0
  %v3449 = vadd.f32 %v3360, %v3448
  %v3450 = vpop.f32.mrf.mxu0
  %v3451 = vadd.f32 %v3362, %v3450
  %3452 = vmatmul.bf16.gmra.mxu0 %v2230
  %v3453 = vpop.f32.mrf.mxu0
  %v3454 = vadd.f32 %v3365, %v3453
  %v3455 = vpop.f32.mrf.mxu0
  %v3456 = vadd.f32 %v3367, %v3455
  %3457 = vmatmul.bf16.gmra.mxu0 %v2233
  %v3458 = vpop.f32.mrf.mxu0
  %v3459 = vadd.f32 %v3370, %v3458
  %v3460 = vpop.f32.mrf.mxu0
  %v3461 = vadd.f32 %v3372, %v3460
  %3462 = vmatmul.bf16.gmra.mxu0 %v2236
  %v3463 = vpop.f32.mrf.mxu0
  %v3464 = vadd.f32 %v3375, %v3463
  %v3465 = vpop.f32.mrf.mxu0
  %v3466 = vadd.f32 %v3377, %v3465
  %3467 = vmatmul.bf16.gmra.mxu0 %v2239
  %v3468 = vpop.f32.mrf.mxu0
  %v3469 = vadd.f32 %v3380, %v3468
  %v3470 = vpop.f32.mrf.mxu0
  %v3471 = vadd.f32 %v3382, %v3470
  %3472 = vmatmul.bf16.gmra.mxu0 %v2242
  %v3473 = vpop.f32.mrf.mxu0
  %v3474 = vadd.f32 %v3385, %v3473
  %v3475 = vpop.f32.mrf.mxu0
  %v3476 = vadd.f32 %v3387, %v3475
  %3477 = vmatmul.bf16.gmra.mxu0 %v2245
  %v3478 = vpop.f32.mrf.mxu0
  %v3479 = vadd.f32 %v3390, %v3478
  %v3480 = vpop.f32.mrf.mxu0
  %v3481 = vadd.f32 %v3392, %v3480
  %3482 = vmatmul.bf16.gmra.mxu0 %v2248
  %v3483 = vpop.f32.mrf.mxu0
  %v3484 = vadd.f32 %v3395, %v3483
  %v3485 = vpop.f32.mrf.mxu0
  %v3486 = vadd.f32 %v3397, %v3485
  %3487 = vmatmul.bf16.gmra.mxu0 %v2251
  %v3488 = vpop.f32.mrf.mxu0
  %v3489 = vadd.f32 %v3400, %v3488
  %v3490 = vpop.f32.mrf.mxu0
  %v3491 = vadd.f32 %v3402, %v3490
  %3492 = vmatmul.bf16.gmra.mxu0 %v2254
  %v3493 = vpop.f32.mrf.mxu0
  %v3494 = vadd.f32 %v3405, %v3493
  %v3495 = vpop.f32.mrf.mxu0
  %v3496 = vadd.f32 %v3407, %v3495
  %3497 = vmatmul.bf16.gmra.mxu0 %v2257
  %v3498 = vpop.f32.mrf.mxu0
  %v3499 = vadd.f32 %v3410, %v3498
  %v3500 = vpop.f32.mrf.mxu0
  %v3501 = vadd.f32 %v3412, %v3500
  %3502 = vmatmul.bf16.gmra.mxu0 %v2260
  %v3503 = vpop.f32.mrf.mxu0
  %v3504 = vadd.f32 %v3415, %v3503
  %v3505 = vpop.f32.mrf.mxu0
  %v3506 = vadd.f32 %v3417, %v3505
  %3507 = vdwg.mxu0
  %v3508 = vld [vmem:[%s2] sm:$0x1]
  %v3510 = vperm.slane %v3508, 0
  %v3512 = vmul.f32 %v3429, %v3510
  %v3513 = vmul.f32 %v3431, %v3510
  %v3514 = vmul.f32 %v3434, %v3510
  %v3515 = vmul.f32 %v3436, %v3510
  %v3516 = vmul.f32 %v3439, %v3510
  %v3517 = vmul.f32 %v3441, %v3510
  %v3518 = vmul.f32 %v3444, %v3510
  %v3519 = vmul.f32 %v3446, %v3510
  %v3520 = vmul.f32 %v3449, %v3510
  %v3521 = vmul.f32 %v3451, %v3510
  %v3522 = vmul.f32 %v3454, %v3510
  %v3523 = vmul.f32 %v3456, %v3510
  %v3524 = vmul.f32 %v3459, %v3510
  %v3525 = vmul.f32 %v3461, %v3510
  %v3526 = vmul.f32 %v3464, %v3510
  %v3527 = vmul.f32 %v3466, %v3510
  %v3528 = vmul.f32 %v3469, %v3510
  %v3529 = vmul.f32 %v3471, %v3510
  %v3530 = vmul.f32 %v3474, %v3510
  %v3531 = vmul.f32 %v3476, %v3510
  %v3532 = vmul.f32 %v3479, %v3510
  %v3533 = vmul.f32 %v3481, %v3510
  %v3534 = vmul.f32 %v3484, %v3510
  %v3535 = vmul.f32 %v3486, %v3510
  %v3536 = vmul.f32 %v3489, %v3510
  %v3537 = vmul.f32 %v3491, %v3510
  %v3538 = vmul.f32 %v3494, %v3510
  %v3539 = vmul.f32 %v3496, %v3510
  %v3540 = vmul.f32 %v3499, %v3510
  %v3541 = vmul.f32 %v3501, %v3510
  %v3542 = vmul.f32 %v3504, %v3510
  %v3543 = vmul.f32 %v3506, %v3510
  %v3544 = vld [vmem:[%s3] sm:$0x1]
  %v3546 = vperm.slane %v3544, 0
  %v3548 = vadd.f32 %v3512, %v3546
  %v3549 = vadd.f32 %v3513, %v3546
  %v3550 = vadd.f32 %v3514, %v3546
  %v3551 = vadd.f32 %v3515, %v3546
  %v3552 = vadd.f32 %v3516, %v3546
  %v3553 = vadd.f32 %v3517, %v3546
  %v3554 = vadd.f32 %v3518, %v3546
  %v3555 = vadd.f32 %v3519, %v3546
  %v3556 = vadd.f32 %v3520, %v3546
  %v3557 = vadd.f32 %v3521, %v3546
  %v3558 = vadd.f32 %v3522, %v3546
  %v3559 = vadd.f32 %v3523, %v3546
  %v3560 = vadd.f32 %v3524, %v3546
  %v3561 = vadd.f32 %v3525, %v3546
  %v3562 = vadd.f32 %v3526, %v3546
  %v3563 = vadd.f32 %v3527, %v3546
  %v3564 = vadd.f32 %v3528, %v3546
  %v3565 = vadd.f32 %v3529, %v3546
  %v3566 = vadd.f32 %v3530, %v3546
  %v3567 = vadd.f32 %v3531, %v3546
  %v3568 = vadd.f32 %v3532, %v3546
  %v3569 = vadd.f32 %v3533, %v3546
  %v3570 = vadd.f32 %v3534, %v3546
  %v3571 = vadd.f32 %v3535, %v3546
  %v3572 = vadd.f32 %v3536, %v3546
  %v3573 = vadd.f32 %v3537, %v3546
  %v3574 = vadd.f32 %v3538, %v3546
  %v3575 = vadd.f32 %v3539, %v3546
  %v3576 = vadd.f32 %v3540, %v3546
  %v3577 = vadd.f32 %v3541, %v3546
  %v3578 = vadd.f32 %v3542, %v3546
  %v3579 = vadd.f32 %v3543, %v3546
  %v3580 = vmax.f32 %v3548, 0.0
  %v3581 = vmax.f32 %v3549, 0.0
  %v3582 = vmax.f32 %v3550, 0.0
  %v3583 = vmax.f32 %v3551, 0.0
  %v3584 = vmax.f32 %v3552, 0.0
  %v3585 = vmax.f32 %v3553, 0.0
  %v3586 = vmax.f32 %v3554, 0.0
  %v3587 = vmax.f32 %v3555, 0.0
  %v3588 = vmax.f32 %v3556, 0.0
  %v3589 = vmax.f32 %v3557, 0.0
  %v3590 = vmax.f32 %v3558, 0.0
  %v3591 = vmax.f32 %v3559, 0.0
  %v3592 = vmax.f32 %v3560, 0.0
  %v3593 = vmax.f32 %v3561, 0.0
  %v3594 = vmax.f32 %v3562, 0.0
  %v3595 = vmax.f32 %v3563, 0.0
  %v3596 = vmax.f32 %v3564, 0.0
  %v3597 = vmax.f32 %v3565, 0.0
  %v3598 = vmax.f32 %v3566, 0.0
  %v3599 = vmax.f32 %v3567, 0.0
  %v3600 = vmax.f32 %v3568, 0.0
  %v3601 = vmax.f32 %v3569, 0.0
  %v3602 = vmax.f32 %v3570, 0.0
  %v3603 = vmax.f32 %v3571, 0.0
  %v3604 = vmax.f32 %v3572, 0.0
  %v3605 = vmax.f32 %v3573, 0.0
  %v3606 = vmax.f32 %v3574, 0.0
  %v3607 = vmax.f32 %v3575, 0.0
  %v3608 = vmax.f32 %v3576, 0.0
  %v3609 = vmax.f32 %v3577, 0.0
  %v3610 = vmax.f32 %v3578, 0.0
  %v3611 = vmax.f32 %v3579, 0.0
  %v3612 = vld [vmem:[%s4] sm:$0xf]
  %v3613 = vld [vmem:[%s4 + $0x4] sm:$0xf]
  %v3614 = vld [vmem:[%s4 + $0x8] sm:$0xf]
  %v3615 = vld [vmem:[%s4 + $0xc] sm:$0xf]
  %v3616 = vld [vmem:[%s4 + $0x10] sm:$0xf]
  %v3617 = vld [vmem:[%s4 + $0x14] sm:$0xf]
  %v3618 = vld [vmem:[%s4 + $0x18] sm:$0xf]
  %v3619 = vld [vmem:[%s4 + $0x1c] sm:$0xf]
  %v3620 = vld [vmem:[%s4 + $0x20] sm:$0xf]
  %v3621 = vld [vmem:[%s4 + $0x24] sm:$0xf]
  %v3622 = vld [vmem:[%s4 + $0x28] sm:$0xf]
  %v3623 = vld [vmem:[%s4 + $0x2c] sm:$0xf]
  %v3624 = vld [vmem:[%s4 + $0x30] sm:$0xf]
  %v3625 = vld [vmem:[%s4 + $0x34] sm:$0xf]
  %v3626 = vld [vmem:[%s4 + $0x38] sm:$0xf]
  %v3627 = vld [vmem:[%s4 + $0x3c] sm:$0xf]
  %v3628 = vld [vmem:[%s4 + $0x40] sm:$0xf]
  %v3629 = vld [vmem:[%s4 + $0x44] sm:$0xf]
  %v3630 = vld [vmem:[%s4 + $0x48] sm:$0xf]
  %v3631 = vld [vmem:[%s4 + $0x4c] sm:$0xf]
  %v3632 = vld [vmem:[%s4 + $0x50] sm:$0xf]
  %v3633 = vld [vmem:[%s4 + $0x54] sm:$0xf]
  %v3634 = vld [vmem:[%s4 + $0x58] sm:$0xf]
  %v3635 = vld [vmem:[%s4 + $0x5c] sm:$0xf]
  %v3636 = vld [vmem:[%s4 + $0x60] sm:$0xf]
  %v3637 = vld [vmem:[%s4 + $0x64] sm:$0xf]
  %v3638 = vld [vmem:[%s4 + $0x68] sm:$0xf]
  %v3639 = vld [vmem:[%s4 + $0x6c] sm:$0xf]
  %v3640 = vld [vmem:[%s4 + $0x70] sm:$0xf]
  %v3641 = vld [vmem:[%s4 + $0x74] sm:$0xf]
  %v3642 = vld [vmem:[%s4 + $0x78] sm:$0xf]
  %v3643 = vld [vmem:[%s4 + $0x7c] sm:$0xf]
  %v3644 = vunpack.c.l.bf16 %v3612
  %v3645 = vunpack.c.l.bf16 %v3613
  %v3646 = vunpack.c.l.bf16 %v3614
  %v3647 = vunpack.c.l.bf16 %v3615
  %v3648 = vunpack.c.l.bf16 %v3616
  %v3649 = vunpack.c.l.bf16 %v3617
  %v3650 = vunpack.c.l.bf16 %v3618
  %v3651 = vunpack.c.l.bf16 %v3619
  %v3652 = vunpack.c.l.bf16 %v3620
  %v3653 = vunpack.c.l.bf16 %v3621
  %v3654 = vunpack.c.l.bf16 %v3622
  %v3655 = vunpack.c.l.bf16 %v3623
  %v3656 = vunpack.c.l.bf16 %v3624
  %v3657 = vunpack.c.l.bf16 %v3625
  %v3658 = vunpack.c.l.bf16 %v3626
  %v3659 = vunpack.c.l.bf16 %v3627
  %v3660 = vunpack.c.l.bf16 %v3628
  %v3661 = vunpack.c.l.bf16 %v3629
  %v3662 = vunpack.c.l.bf16 %v3630
  %v3663 = vunpack.c.l.bf16 %v3631
  %v3664 = vunpack.c.l.bf16 %v3632
  %v3665 = vunpack.c.l.bf16 %v3633
  %v3666 = vunpack.c.l.bf16 %v3634
  %v3667 = vunpack.c.l.bf16 %v3635
  %v3668 = vunpack.c.l.bf16 %v3636
  %v3669 = vunpack.c.l.bf16 %v3637
  %v3670 = vunpack.c.l.bf16 %v3638
  %v3671 = vunpack.c.l.bf16 %v3639
  %v3672 = vunpack.c.l.bf16 %v3640
  %v3673 = vunpack.c.l.bf16 %v3641
  %v3674 = vunpack.c.l.bf16 %v3642
  %v3675 = vunpack.c.l.bf16 %v3643
  %v3676 = vadd.f32 %v3580, %v3644
  %v3677 = vadd.f32 %v3581, %v3645
  %v3678 = vadd.f32 %v3582, %v3646
  %v3679 = vadd.f32 %v3583, %v3647
  %v3680 = vadd.f32 %v3584, %v3648
  %v3681 = vadd.f32 %v3585, %v3649
  %v3682 = vadd.f32 %v3586, %v3650
  %v3683 = vadd.f32 %v3587, %v3651
  %v3684 = vadd.f32 %v3588, %v3652
  %v3685 = vadd.f32 %v3589, %v3653
  %v3686 = vadd.f32 %v3590, %v3654
  %v3687 = vadd.f32 %v3591, %v3655
  %v3688 = vadd.f32 %v3592, %v3656
  %v3689 = vadd.f32 %v3593, %v3657
  %v3690 = vadd.f32 %v3594, %v3658
  %v3691 = vadd.f32 %v3595, %v3659
  %v3692 = vadd.f32 %v3596, %v3660
  %v3693 = vadd.f32 %v3597, %v3661
  %v3694 = vadd.f32 %v3598, %v3662
  %v3695 = vadd.f32 %v3599, %v3663
  %v3696 = vadd.f32 %v3600, %v3664
  %v3697 = vadd.f32 %v3601, %v3665
  %v3698 = vadd.f32 %v3602, %v3666
  %v3699 = vadd.f32 %v3603, %v3667
  %v3700 = vadd.f32 %v3604, %v3668
  %v3701 = vadd.f32 %v3605, %v3669
  %v3702 = vadd.f32 %v3606, %v3670
  %v3703 = vadd.f32 %v3607, %v3671
  %v3704 = vadd.f32 %v3608, %v3672
  %v3705 = vadd.f32 %v3609, %v3673
  %v3706 = vadd.f32 %v3610, %v3674
  %v3707 = vadd.f32 %v3611, %v3675
  %v3708 = vpack.c.bf16 %v3676, %v3676
  %v3709 = vpack.c.bf16 %v3677, %v3677
  %v3710 = vpack.c.bf16 %v3678, %v3678
  %v3711 = vpack.c.bf16 %v3679, %v3679
  %v3712 = vpack.c.bf16 %v3680, %v3680
  %v3713 = vpack.c.bf16 %v3681, %v3681
  %v3714 = vpack.c.bf16 %v3682, %v3682
  %v3715 = vpack.c.bf16 %v3683, %v3683
  %v3716 = vpack.c.bf16 %v3684, %v3684
  %v3717 = vpack.c.bf16 %v3685, %v3685
  %v3718 = vpack.c.bf16 %v3686, %v3686
  %v3719 = vpack.c.bf16 %v3687, %v3687
  %v3720 = vpack.c.bf16 %v3688, %v3688
  %v3721 = vpack.c.bf16 %v3689, %v3689
  %v3722 = vpack.c.bf16 %v3690, %v3690
  %v3723 = vpack.c.bf16 %v3691, %v3691
  %v3724 = vpack.c.bf16 %v3692, %v3692
  %v3725 = vpack.c.bf16 %v3693, %v3693
  %v3726 = vpack.c.bf16 %v3694, %v3694
  %v3727 = vpack.c.bf16 %v3695, %v3695
  %v3728 = vpack.c.bf16 %v3696, %v3696
  %v3729 = vpack.c.bf16 %v3697, %v3697
  %v3730 = vpack.c.bf16 %v3698, %v3698
  %v3731 = vpack.c.bf16 %v3699, %v3699
  %v3732 = vpack.c.bf16 %v3700, %v3700
  %v3733 = vpack.c.bf16 %v3701, %v3701
  %v3734 = vpack.c.bf16 %v3702, %v3702
  %v3735 = vpack.c.bf16 %v3703, %v3703
  %v3736 = vpack.c.bf16 %v3704, %v3704
  %v3737 = vpack.c.bf16 %v3705, %v3705
  %v3738 = vpack.c.bf16 %v3706, %v3706
  %v3739 = vpack.c.bf16 %v3707, %v3707
  %vm3740 = vcmask 125952
  %3741 = vst.msk [vmem:[%s5] sm:$0xf] %vm3740, %v3708
  %3742 = vst.msk [vmem:[%s5 + $0x4] sm:$0xf] %vm3740, %v3709
  %3743 = vst.msk [vmem:[%s5 + $0x8] sm:$0xf] %vm3740, %v3710
  %3744 = vst.msk [vmem:[%s5 + $0xc] sm:$0xf] %vm3740, %v3711
  %3745 = vst.msk [vmem:[%s5 + $0x10] sm:$0xf] %vm3740, %v3712
  %3746 = vst.msk [vmem:[%s5 + $0x14] sm:$0xf] %vm3740, %v3713
  %3747 = vst.msk [vmem:[%s5 + $0x18] sm:$0xf] %vm3740, %v3714
  %3748 = vst.msk [vmem:[%s5 + $0x1c] sm:$0xf] %vm3740, %v3715
  %3749 = vst.msk [vmem:[%s5 + $0x20] sm:$0xf] %vm3740, %v3716
  %3750 = vst.msk [vmem:[%s5 + $0x24] sm:$0xf] %vm3740, %v3717
  %3751 = vst.msk [vmem:[%s5 + $0x28] sm:$0xf] %vm3740, %v3718
  %3752 = vst.msk [vmem:[%s5 + $0x2c] sm:$0xf] %vm3740, %v3719
  %3753 = vst.msk [vmem:[%s5 + $0x30] sm:$0xf] %vm3740, %v3720
  %3754 = vst.msk [vmem:[%s5 + $0x34] sm:$0xf] %vm3740, %v3721
  %3755 = vst.msk [vmem:[%s5 + $0x38] sm:$0xf] %vm3740, %v3722
  %3756 = vst.msk [vmem:[%s5 + $0x3c] sm:$0xf] %vm3740, %v3723
  %3757 = vst.msk [vmem:[%s5 + $0x40] sm:$0xf] %vm3740, %v3724
  %3758 = vst.msk [vmem:[%s5 + $0x44] sm:$0xf] %vm3740, %v3725
  %3759 = vst.msk [vmem:[%s5 + $0x48] sm:$0xf] %vm3740, %v3726
  %3760 = vst.msk [vmem:[%s5 + $0x4c] sm:$0xf] %vm3740, %v3727
  %3761 = vst.msk [vmem:[%s5 + $0x50] sm:$0xf] %vm3740, %v3728
  %3762 = vst.msk [vmem:[%s5 + $0x54] sm:$0xf] %vm3740, %v3729
  %3763 = vst.msk [vmem:[%s5 + $0x58] sm:$0xf] %vm3740, %v3730
  %3764 = vst.msk [vmem:[%s5 + $0x5c] sm:$0xf] %vm3740, %v3731
  %3765 = vst.msk [vmem:[%s5 + $0x60] sm:$0xf] %vm3740, %v3732
  %3766 = vst.msk [vmem:[%s5 + $0x64] sm:$0xf] %vm3740, %v3733
  %3767 = vst.msk [vmem:[%s5 + $0x68] sm:$0xf] %vm3740, %v3734
  %3768 = vst.msk [vmem:[%s5 + $0x6c] sm:$0xf] %vm3740, %v3735
  %3769 = vst.msk [vmem:[%s5 + $0x70] sm:$0xf] %vm3740, %v3736
  %3770 = vst.msk [vmem:[%s5 + $0x74] sm:$0xf] %vm3740, %v3737
  %3771 = vst.msk [vmem:[%s5 + $0x78] sm:$0xf] %vm3740, %v3738
  %3772 = vst.msk [vmem:[%s5 + $0x7c] sm:$0xf] %vm3740, %v3739
  // Predicated region
  $region22: #{network_forward.49} parent=0 // pred_check
    _
  $region23: #{network_forward.49} parent=0 // pred_check_branch
    %3774 = sbr.rel (0) target = $region25
  $region24: #{network_forward.49} parent=0 // pred_region
    _
  $region25: #{network_forward.49} parent=0 // pred_fallthru
    _
  // Predicated region
  $region26: #{network_forward.49} parent=0 // pred_check
    _
  $region27: #{network_forward.49} parent=0 // pred_check_branch
    %3776 = sbr.rel (0) target = $region29
  $region28: #{network_forward.49} parent=0 // pred_region
    _
  $region29: #{network_forward.49} parent=0 // pred_fallthru
    _

// kernel: network_forward.50
$region0: #{network_forward.50}
  #allocation0 [shape = 'u32[]', space=smem, size = 0x4, offset = 0x4, fixed_abs, tag = 'smem constant byte address 0x4 - core index']
  #allocation1 [shape = 'u32[72,128]{1,0:T(1,128)}', space=vmem, size = 0x9000, scoped, tag = 'internal scratch']
  %s0 = inlined_call_operand.vmem [shape: bf16[32,16], index: 0, kind: input, shape index: {}]
  %s1 = inlined_call_operand.vmem [shape: bf16[16,16], index: 1, kind: input, shape index: {}]
  %s2 = inlined_call_operand.vmem [shape: f32[1,16], index: 2, kind: input, shape index: {}]
  %s3 = inlined_call_operand.vmem [shape: f32[1,16], index: 3, kind: input, shape index: {}]
  %s4 = inlined_call_operand.vmem [shape: bf16[32,16], index: 4, kind: output, shape index: {}]
  %s5 = sld [smem:[#allocation0]]
  $region26: #{network_forward.50} parent=0
    _
  %s7 = ssub.s32 1, %s5
  %s8 = scalar_select 0, %s7, %s5
  // Predicated region
  $region2: #{network_forward.50} parent=0 // pred_check
    _
  $region3: #{network_forward.50} parent=0 // pred_check_branch
    %10 = sbr.rel (0) target = $region5
  $region4: #{network_forward.50} parent=0 // pred_region
    _
  $region5: #{network_forward.50} parent=0 // pred_fallthru
    _
  // Predicated region
  $region6: #{network_forward.50} parent=0 // pred_check
    _
  $region7: #{network_forward.50} parent=0 // pred_check_branch
    %12 = sbr.rel (0) target = $region9
  $region8: #{network_forward.50} parent=0 // pred_region
    _
  $region9: #{network_forward.50} parent=0 // pred_fallthru
    _
  // Predicated region
  $region10: #{network_forward.50} parent=0 // pred_check
    _
  $region11: #{network_forward.50} parent=0 // pred_check_branch
    %14 = sbr.rel (0) target = $region13
  $region12: #{network_forward.50} parent=0 // pred_region
    _
  $region13: #{network_forward.50} parent=0 // pred_fallthru
    _
  // Predicated region
  $region14: #{network_forward.50} parent=0 // pred_check
    _
  $region15: #{network_forward.50} parent=0 // pred_check_branch
    %16 = sbr.rel (0) target = $region17
  $region16: #{network_forward.50} parent=0 // pred_region
    _
  $region17: #{network_forward.50} parent=0 // pred_fallthru
    _
  %v18 = vld [vmem:[%s0] sm:$0xf]
  %v19 = vld [vmem:[%s0 + $0x4] sm:$0xf]
  %v20 = vld [vmem:[%s0 + $0x8] sm:$0xf]
  %v21 = vld [vmem:[%s0 + $0xc] sm:$0xf]
  %v22 = vld [vmem:[%s1] sm:$0xf]
  %v23 = vld [vmem:[%s1 + $0x4] sm:$0xf]
  %v28 = vunpack.c.l.b16 %v18
  %v29 = vunpack.c.l.b16 %v19
  %v30 = vunpack.c.l.b16 %v20
  %v31 = vunpack.c.l.b16 %v21
  %v32 = vpack.c.b16 %v29, %v28
  %v33 = vpack.c.b16 %v31, %v30
  %v36 = vunpack.c.l.b16 %v22
  %v37 = vunpack.c.l.b16 %v23
  %v38 = vpack.c.b16 %v37, %v36
  %vm40 = vcmask 130048
  %v42 = vsel %vm40, %v32, 0
  %v45 = vsel %vm40, %v33, 0
  %47 = vmatpush.bf16.msra.mxu0 0
  %48 = vmatpush.bf16.msra.mxu0 0
  %49 = vmatpush.bf16.msra.mxu0 0
  %50 = vmatpush.bf16.msra.mxu0 0
  %51 = vmatpush.bf16.msra.mxu0 0
  %52 = vmatpush.bf16.msra.mxu0 0
  %53 = vmatpush.bf16.msra.mxu0 0
  %54 = vmatpush.bf16.msra.mxu0 %v38
  %55 = vmatmul.bf16.gmra.mxu0 %v42
  %v56 = vpop.f32.mrf.mxu0
  %v57 = vadd.f32 0.0, %v56
  %v58 = vpop.f32.mrf.mxu0
  %v59 = vadd.f32 0.0, %v58
  %60 = vmatmul.bf16.gmra.mxu0 %v45
  %v61 = vpop.f32.mrf.mxu0
  %v62 = vadd.f32 0.0, %v61
  %v63 = vpop.f32.mrf.mxu0
  %v64 = vadd.f32 0.0, %v63
  %65 = vdwg.mxu0
  %v66 = vld [vmem:[%s2] sm:$0x1]
  %v68 = vperm.slane %v66, 0
  %v70 = vmul.f32 %v57, %v68
  %v71 = vmul.f32 %v59, %v68
  %v72 = vmul.f32 %v62, %v68
  %v73 = vmul.f32 %v64, %v68
  %v74 = vld [vmem:[%s3] sm:$0x1]
  %v76 = vperm.slane %v74, 0
  %v78 = vadd.f32 %v70, %v76
  %v79 = vadd.f32 %v71, %v76
  %v80 = vadd.f32 %v72, %v76
  %v81 = vadd.f32 %v73, %v76
  %v82 = vpack.c.bf16 %v78, %v78
  %v83 = vpack.c.bf16 %v79, %v79
  %v84 = vpack.c.bf16 %v80, %v80
  %v85 = vpack.c.bf16 %v81, %v81
  %vm86 = vcmask 125952
  %87 = vst.msk [vmem:[%s4] sm:$0xf] %vm86, %v82
  %88 = vst.msk [vmem:[%s4 + $0x4] sm:$0xf] %vm86, %v83
  %89 = vst.msk [vmem:[%s4 + $0x8] sm:$0xf] %vm86, %v84
  %90 = vst.msk [vmem:[%s4 + $0xc] sm:$0xf] %vm86, %v85
  // Predicated region
  $region18: #{network_forward.50} parent=0 // pred_check
    _
  $region19: #{network_forward.50} parent=0 // pred_check_branch
    %92 = sbr.rel (0) target = $region21
  $region20: #{network_forward.50} parent=0 // pred_region
    _
  $region21: #{network_forward.50} parent=0 // pred_fallthru
    _
  // Predicated region
  $region22: #{network_forward.50} parent=0 // pred_check
    _
  $region23: #{network_forward.50} parent=0 // pred_check_branch
    %94 = sbr.rel (0) target = $region25
  $region24: #{network_forward.50} parent=0 // pred_region
    _
  $region25: #{network_forward.50} parent=0 // pred_fallthru
    _

// kernel: network_forward.51
$region0: #{network_forward.51}
  #allocation0 [shape = 'u32[]', space=smem, size = 0x4, offset = 0x4, fixed_abs, tag = 'smem constant byte address 0x4 - core index']
  #allocation1 [shape = 'u32[72,128]{1,0:T(1,128)}', space=vmem, size = 0x9000, scoped, tag = 'internal scratch']
  %s0 = inlined_call_operand.vmem [shape: bf16[32,4], index: 0, kind: input, shape index: {}]
  %s1 = inlined_call_operand.vmem [shape: bf16[4,16], index: 1, kind: input, shape index: {}]
  %s2 = inlined_call_operand.vmem [shape: f32[1,16], index: 2, kind: input, shape index: {}]
  %s3 = inlined_call_operand.vmem [shape: f32[1,16], index: 3, kind: input, shape index: {}]
  %s4 = inlined_call_operand.vmem [shape: bf16[32,16], index: 4, kind: input, shape index: {}]
  %s5 = inlined_call_operand.vmem [shape: bf16[32,16], index: 5, kind: output, shape index: {}]
  %s6 = sld [smem:[#allocation0]]
  $region30: #{network_forward.51} parent=0
    _
  %s8 = ssub.s32 1, %s6
  %s9 = scalar_select 0, %s8, %s6
  // Predicated region
  $region2: #{network_forward.51} parent=0 // pred_check
    _
  $region3: #{network_forward.51} parent=0 // pred_check_branch
    %11 = sbr.rel (0) target = $region5
  $region4: #{network_forward.51} parent=0 // pred_region
    _
  $region5: #{network_forward.51} parent=0 // pred_fallthru
    _
  // Predicated region
  $region6: #{network_forward.51} parent=0 // pred_check
    _
  $region7: #{network_forward.51} parent=0 // pred_check_branch
    %13 = sbr.rel (0) target = $region9
  $region8: #{network_forward.51} parent=0 // pred_region
    _
  $region9: #{network_forward.51} parent=0 // pred_fallthru
    _
  // Predicated region
  $region10: #{network_forward.51} parent=0 // pred_check
    _
  $region11: #{network_forward.51} parent=0 // pred_check_branch
    %15 = sbr.rel (0) target = $region13
  $region12: #{network_forward.51} parent=0 // pred_region
    _
  $region13: #{network_forward.51} parent=0 // pred_fallthru
    _
  // Predicated region
  $region14: #{network_forward.51} parent=0 // pred_check
    _
  $region15: #{network_forward.51} parent=0 // pred_check_branch
    %17 = sbr.rel (0) target = $region17
  $region16: #{network_forward.51} parent=0 // pred_region
    _
  $region17: #{network_forward.51} parent=0 // pred_fallthru
    _
  // Predicated region
  $region18: #{network_forward.51} parent=0 // pred_check
    _
  $region19: #{network_forward.51} parent=0 // pred_check_branch
    %19 = sbr.rel (0) target = $region21
  $region20: #{network_forward.51} parent=0 // pred_region
    _
  $region21: #{network_forward.51} parent=0 // pred_fallthru
    _
  %v21 = vld [vmem:[%s0] sm:$0xf]
  %v22 = vld [vmem:[%s0 + $0x4] sm:$0xf]
  %v23 = vld [vmem:[%s0 + $0x8] sm:$0xf]
  %v24 = vld [vmem:[%s0 + $0xc] sm:$0xf]
  %v25 = vld [vmem:[%s1] sm:$0x3]
  %v30 = vunpack.c.l.b16 %v21
  %v31 = vunpack.c.l.b16 %v22
  %v32 = vunpack.c.l.b16 %v23
  %v33 = vunpack.c.l.b16 %v24
  %v34 = vpack.c.b16 %v31, %v30
  %v35 = vpack.c.b16 %v33, %v32
  %vm36 = vcmask 31744
  %v38 = vsel %vm36, %v34, 0
  %v41 = vsel %vm36, %v35, 0
  %vm43 = vcmask 1041408
  %v45 = vsel %vm43, %v25, 0
  %47 = vmatpush.bf16.msra.mxu0 0
  %48 = vmatpush.bf16.msra.mxu0 0
  %49 = vmatpush.bf16.msra.mxu0 0
  %50 = vmatpush.bf16.msra.mxu0 0
  %51 = vmatpush.bf16.msra.mxu0 0
  %52 = vmatpush.bf16.msra.mxu0 0
  %53 = vmatpush.bf16.msra.mxu0 0
  %54 = vmatpush.bf16.msra.mxu0 %v45
  %55 = vmatmul.bf16.gmra.mxu0 %v38
  %v56 = vpop.f32.mrf.mxu0
  %v57 = vadd.f32 0.0, %v56
  %v58 = vpop.f32.mrf.mxu0
  %v59 = vadd.f32 0.0, %v58
  %60 = vmatmul.bf16.gmra.mxu0 %v41
  %v61 = vpop.f32.mrf.mxu0
  %v62 = vadd.f32 0.0, %v61
  %v63 = vpop.f32.mrf.mxu0
  %v64 = vadd.f32 0.0, %v63
  %65 = vdwg.mxu0
  %v66 = vld [vmem:[%s2] sm:$0x1]
  %v68 = vperm.slane %v66, 0
  %v70 = vmul.f32 %v57, %v68
  %v71 = vmul.f32 %v59, %v68
  %v72 = vmul.f32 %v62, %v68
  %v73 = vmul.f32 %v64, %v68
  %v74 = vld [vmem:[%s3] sm:$0x1]
  %v76 = vperm.slane %v74, 0
  %v78 = vadd.f32 %v70, %v76
  %v79 = vadd.f32 %v71, %v76
  %v80 = vadd.f32 %v72, %v76
  %v81 = vadd.f32 %v73, %v76
  %v82 = vld [vmem:[%s4] sm:$0xf]
  %v83 = vld [vmem:[%s4 + $0x4] sm:$0xf]
  %v84 = vld [vmem:[%s4 + $0x8] sm:$0xf]
  %v85 = vld [vmem:[%s4 + $0xc] sm:$0xf]
  %v86 = vunpack.c.l.bf16 %v82
  %v87 = vunpack.c.l.bf16 %v83
  %v88 = vunpack.c.l.bf16 %v84
  %v89 = vunpack.c.l.bf16 %v85
  %v90 = vadd.f32 %v78, %v86
  %v91 = vadd.f32 %v79, %v87
  %v92 = vadd.f32 %v80, %v88
  %v93 = vadd.f32 %v81, %v89
  %v94 = vmax.f32 %v90, 0.0
  %v95 = vmax.f32 %v91, 0.0
  %v96 = vmax.f32 %v92, 0.0
  %v97 = vmax.f32 %v93, 0.0
  %v98 = vpack.c.bf16 %v94, %v94
  %v99 = vpack.c.bf16 %v95, %v95
  %v100 = vpack.c.bf16 %v96, %v96
  %v101 = vpack.c.bf16 %v97, %v97
  %vm102 = vcmask 125952
  %103 = vst.msk [vmem:[%s5] sm:$0xf] %vm102, %v98
  %104 = vst.msk [vmem:[%s5 + $0x4] sm:$0xf] %vm102, %v99
  %105 = vst.msk [vmem:[%s5 + $0x8] sm:$0xf] %vm102, %v100
  %106 = vst.msk [vmem:[%s5 + $0xc] sm:$0xf] %vm102, %v101
  // Predicated region
  $region22: #{network_forward.51} parent=0 // pred_check
    _
  $region23: #{network_forward.51} parent=0 // pred_check_branch
    %108 = sbr.rel (0) target = $region25
  $region24: #{network_forward.51} parent=0 // pred_region
    _
  $region25: #{network_forward.51} parent=0 // pred_fallthru
    _
  // Predicated region
  $region26: #{network_forward.51} parent=0 // pred_check
    _
  $region27: #{network_forward.51} parent=0 // pred_check_branch
    %110 = sbr.rel (0) target = $region29
  $region28: #{network_forward.51} parent=0 // pred_region
    _
  $region29: #{network_forward.51} parent=0 // pred_fallthru
    _

// kernel: network_forward.55
$region0: #{network_forward.55}
  #allocation0 [shape = 'u32[]', space=smem, size = 0x4, offset = 0x4, fixed_abs, tag = 'smem constant byte address 0x4 - core index']
  #allocation1 [shape = 'u32[72,128]{1,0:T(1,128)}', space=vmem, size = 0x9000, scoped, tag = 'internal scratch']
  %s0 = inlined_call_operand.vmem [shape: bf16[4,16], index: 0, kind: input, shape index: {}]
  %s1 = inlined_call_operand.vmem [shape: bf16[16,32], index: 1, kind: input, shape index: {}]
  %s2 = inlined_call_operand.hbm [shape: f32[1,32], index: 2, kind: input, shape index: {}]
  %s3 = inlined_call_operand.hbm [shape: f32[1,32], index: 3, kind: input, shape index: {}]
  %s4 = inlined_call_operand.vmem [shape: bf16[4,32], index: 4, kind: output, shape index: {}]
  %s5 = sld [smem:[#allocation0]]
  $region34: #{network_forward.55} parent=0
    _
  %s7 = ssub.s32 1, %s5
  %s8 = scalar_select 0, %s7, %s5
  $region1: #{network_forward.55} parent=0
    #allocation2 [shape = 'u8[512]{0}', space=vmem, size = 0x400, scoped, tag = 'input window, operand 2, single buffered']
    #allocation3 [shape = 's32[1]{0}', space=sflag, size = 0x4, scoped, tag = 'scoped memory for network_forward.55']
    #allocation4 [shape = 'u8[512]{0}', space=vmem, size = 0x400, scoped, tag = 'input window, operand 3, single buffered']
    #allocation5 [shape = 's32[1]{0}', space=sflag, size = 0x4, scoped, tag = 'scoped memory for network_forward.55']
    %9 = vsyncpa [#allocation3], 0
    %10 = vsyncpa [#allocation5], 0
    // Predicated region
    $region2: #{network_forward.55} parent=1 // pred_check
      _
    $region3: #{network_forward.55} parent=1 // pred_check_branch
      %12 = sbr.rel (0) target = $region5
    $region4: #{network_forward.55} parent=1 // pred_region
      _
    $region5: #{network_forward.55} parent=1 // pred_fallthru
      _
    // Predicated region
    $region6: #{network_forward.55} parent=1 // pred_check
      _
    $region7: #{network_forward.55} parent=1 // pred_check_branch
      %14 = sbr.rel (0) target = $region9
    $region8: #{network_forward.55} parent=1 // pred_region
      _
    $region9: #{network_forward.55} parent=1 // pred_fallthru
      _
    // Predicated region
    $region10: #{network_forward.55} parent=1 // pred_check
      _
    $region11: #{network_forward.55} parent=1 // pred_check_branch
      %16 = sbr.rel (0) target = $region13
    $region12: #{network_forward.55} parent=1 // pred_region
      %18 = vsyncadd [#allocation3], 0
      %s20 = sshll.u32 %s2, 4
      %s21 = int_to_ptr.hbm [resolvable:$true] %s20
      %s22 = sshll.u32 [#allocation2], 4
      %s23 = int_to_ptr.vmem [resolvable:$true] %s22
      %25 = dma.hbm_to_vmem [thread:$0]  %s21, 16, %s23, [#allocation3]
    $region13: #{network_forward.55} parent=1 // pred_fallthru
      _
    // Predicated region
    $region14: #{network_forward.55} parent=1 // pred_check
      _
    $region15: #{network_forward.55} parent=1 // pred_check_branch
      %27 = sbr.rel (0) target = $region17
    $region16: #{network_forward.55} parent=1 // pred_region
      %29 = vsyncadd [#allocation5], 0
      %s31 = sshll.u32 %s3, 4
      %s32 = int_to_ptr.hbm [resolvable:$true] %s31
      %s33 = sshll.u32 [#allocation4], 4
      %s34 = int_to_ptr.vmem [resolvable:$true] %s33
      %36 = dma.hbm_to_vmem [thread:$0]  %s32, 16, %s34, [#allocation5]
    $region17: #{network_forward.55} parent=1 // pred_fallthru
      _
    // Predicated region
    $region18: #{network_forward.55} parent=1 // pred_check
      _
    $region19: #{network_forward.55} parent=1 // pred_check_branch
      %38 = sbr.rel (0) target = $region21
    $region20: #{network_forward.55} parent=1 // pred_region
      %40 = dma.done [#allocation3], 16
    $region21: #{network_forward.55} parent=1 // pred_fallthru
      _
    // Predicated region
    $region22: #{network_forward.55} parent=1 // pred_check
      _
    $region23: #{network_forward.55} parent=1 // pred_check_branch
      %42 = sbr.rel (0) target = $region25
    $region24: #{network_forward.55} parent=1 // pred_region
      %44 = dma.done [#allocation5], 16
    $region25: #{network_forward.55} parent=1 // pred_fallthru
      _
    %v46 = vld [vmem:[%s0] sm:$0x3]
    %v47 = vld [vmem:[%s1] sm:$0xf]
    %v48 = vld [vmem:[%s1 + $0x4] sm:$0xf]
    %v51 = vunpack.c.l.b16 %v47
    %v52 = vunpack.c.l.b16 %v48
    %v53 = vpack.c.b16 %v52, %v51
    %vm55 = vcmask 130048
    %v57 = vsel %vm55, %v46, 0
    %59 = vmatpush.bf16.msra.mxu0 0
    %60 = vmatpush.bf16.msra.mxu0 0
    %61 = vmatpush.bf16.msra.mxu0 0
    %62 = vmatpush.bf16.msra.mxu0 0
    %63 = vmatpush.bf16.msra.mxu0 0
    %64 = vmatpush.bf16.msra.mxu0 0
    %65 = vmatpush.bf16.msra.mxu0 0
    %66 = vmatpush.bf16.msra.mxu0 %v53
    %67 = vmatmul.bf16.gmra.mxu0 %v57
    %v68 = vpop.f32.mrf.mxu0
    %v69 = vadd.f32 0.0, %v68
    %v70 = vpop.f32.mrf.mxu0
    %71 = vdwg.mxu0
    %v72 = vld [vmem:[#allocation2] sm:$0x1]
    %v74 = vperm.slane %v72, 0
    %v76 = vmul.f32 %v69, %v74
    %v77 = vld [vmem:[#allocation4] sm:$0x1]
    %v79 = vperm.slane %v77, 0
    %v81 = vadd.f32 %v76, %v79
    %v82 = vpack.c.bf16 %v81, %v81
    %vm83 = vcmask 254976
    %84 = vst.msk [vmem:[%s4] sm:$0x3] %vm83, %v82
    // Predicated region
    $region26: #{network_forward.55} parent=1 // pred_check
      _
    $region27: #{network_forward.55} parent=1 // pred_check_branch
      %86 = sbr.rel (0) target = $region29
    $region28: #{network_forward.55} parent=1 // pred_region
      _
    $region29: #{network_forward.55} parent=1 // pred_fallthru
      _
    // Predicated region
    $region30: #{network_forward.55} parent=1 // pred_check
      _
    $region31: #{network_forward.55} parent=1 // pred_check_branch
      %88 = sbr.rel (0) target = $region33
    $region32: #{network_forward.55} parent=1 // pred_region
      _
    $region33: #{network_forward.55} parent=1 // pred_fallthru
      _
    %89 = vsyncpa [#allocation3], 1
    %90 = vsyncpa [#allocation5], 1

// kernel: network_forward.56
$region0: #{network_forward.56}
  #allocation0 [shape = 'u32[]', space=smem, size = 0x4, offset = 0x4, fixed_abs, tag = 'smem constant byte address 0x4 - core index']
  #allocation1 [shape = 'u32[72,128]{1,0:T(1,128)}', space=vmem, size = 0x9000, scoped, tag = 'internal scratch']
  %s0 = inlined_call_operand.vmem [shape: bf16[4,4], index: 0, kind: input, shape index: {}]
  %s1 = inlined_call_operand.vmem [shape: bf16[4,32], index: 1, kind: input, shape index: {}]
  %s2 = inlined_call_operand.hbm [shape: f32[1,32], index: 2, kind: input, shape index: {}]
  %s3 = inlined_call_operand.hbm [shape: f32[1,32], index: 3, kind: input, shape index: {}]
  %s4 = inlined_call_operand.vmem [shape: bf16[4,32], index: 4, kind: input, shape index: {}]
  %s5 = inlined_call_operand.vmem [shape: bf16[4,32], index: 5, kind: output, shape index: {}]
  %s6 = sld [smem:[#allocation0]]
  $region38: #{network_forward.56} parent=0
    _
  %s8 = ssub.s32 1, %s6
  %s9 = scalar_select 0, %s8, %s6
  $region1: #{network_forward.56} parent=0
    #allocation2 [shape = 'u8[512]{0}', space=vmem, size = 0x400, scoped, tag = 'input window, operand 2, single buffered']
    #allocation3 [shape = 's32[1]{0}', space=sflag, size = 0x4, scoped, tag = 'scoped memory for network_forward.56']
    #allocation4 [shape = 'u8[512]{0}', space=vmem, size = 0x400, scoped, tag = 'input window, operand 3, single buffered']
    #allocation5 [shape = 's32[1]{0}', space=sflag, size = 0x4, scoped, tag = 'scoped memory for network_forward.56']
    %10 = vsyncpa [#allocation3], 0
    %11 = vsyncpa [#allocation5], 0
    // Predicated region
    $region2: #{network_forward.56} parent=1 // pred_check
      _
    $region3: #{network_forward.56} parent=1 // pred_check_branch
      %13 = sbr.rel (0) target = $region5
    $region4: #{network_forward.56} parent=1 // pred_region
      _
    $region5: #{network_forward.56} parent=1 // pred_fallthru
      _
    // Predicated region
    $region6: #{network_forward.56} parent=1 // pred_check
      _
    $region7: #{network_forward.56} parent=1 // pred_check_branch
      %15 = sbr.rel (0) target = $region9
    $region8: #{network_forward.56} parent=1 // pred_region
      _
    $region9: #{network_forward.56} parent=1 // pred_fallthru
      _
    // Predicated region
    $region10: #{network_forward.56} parent=1 // pred_check
      _
    $region11: #{network_forward.56} parent=1 // pred_check_branch
      %17 = sbr.rel (0) target = $region13
    $region12: #{network_forward.56} parent=1 // pred_region
      %19 = vsyncadd [#allocation3], 0
      %s21 = sshll.u32 %s2, 4
      %s22 = int_to_ptr.hbm [resolvable:$true] %s21
      %s23 = sshll.u32 [#allocation2], 4
      %s24 = int_to_ptr.vmem [resolvable:$true] %s23
      %26 = dma.hbm_to_vmem [thread:$0]  %s22, 16, %s24, [#allocation3]
    $region13: #{network_forward.56} parent=1 // pred_fallthru
      _
    // Predicated region
    $region14: #{network_forward.56} parent=1 // pred_check
      _
    $region15: #{network_forward.56} parent=1 // pred_check_branch
      %28 = sbr.rel (0) target = $region17
    $region16: #{network_forward.56} parent=1 // pred_region
      %30 = vsyncadd [#allocation5], 0
      %s32 = sshll.u32 %s3, 4
      %s33 = int_to_ptr.hbm [resolvable:$true] %s32
      %s34 = sshll.u32 [#allocation4], 4
      %s35 = int_to_ptr.vmem [resolvable:$true] %s34
      %37 = dma.hbm_to_vmem [thread:$0]  %s33, 16, %s35, [#allocation5]
    $region17: #{network_forward.56} parent=1 // pred_fallthru
      _
    // Predicated region
    $region18: #{network_forward.56} parent=1 // pred_check
      _
    $region19: #{network_forward.56} parent=1 // pred_check_branch
      %39 = sbr.rel (0) target = $region21
    $region20: #{network_forward.56} parent=1 // pred_region
      _
    $region21: #{network_forward.56} parent=1 // pred_fallthru
      _
    // Predicated region
    $region22: #{network_forward.56} parent=1 // pred_check
      _
    $region23: #{network_forward.56} parent=1 // pred_check_branch
      %41 = sbr.rel (0) target = $region25
    $region24: #{network_forward.56} parent=1 // pred_region
      %43 = dma.done [#allocation3], 16
    $region25: #{network_forward.56} parent=1 // pred_fallthru
      _
    // Predicated region
    $region26: #{network_forward.56} parent=1 // pred_check
      _
    $region27: #{network_forward.56} parent=1 // pred_check_branch
      %45 = sbr.rel (0) target = $region29
    $region28: #{network_forward.56} parent=1 // pred_region
      %47 = dma.done [#allocation5], 16
    $region29: #{network_forward.56} parent=1 // pred_fallthru
      _
    %v49 = vld [vmem:[%s0] sm:$0x3]
    %v50 = vld [vmem:[%s1] sm:$0x3]
    %vm51 = vcmask 31744
    %v53 = vsel %vm51, %v49, 0
    %vm55 = vcmask 1041408
    %v57 = vsel %vm55, %v50, 0
    %59 = vmatpush.bf16.msra.mxu0 0
    %60 = vmatpush.bf16.msra.mxu0 0
    %61 = vmatpush.bf16.msra.mxu0 0
    %62 = vmatpush.bf16.msra.mxu0 0
    %63 = vmatpush.bf16.msra.mxu0 0
    %64 = vmatpush.bf16.msra.mxu0 0
    %65 = vmatpush.bf16.msra.mxu0 0
    %66 = vmatpush.bf16.msra.mxu0 %v57
    %67 = vmatmul.bf16.gmra.mxu0 %v53
    %v68 = vpop.f32.mrf.mxu0
    %v69 = vadd.f32 0.0, %v68
    %v70 = vpop.f32.mrf.mxu0
    %71 = vdwg.mxu0
    %v72 = vld [vmem:[#allocation2] sm:$0x1]
    %v74 = vperm.slane %v72, 0
    %v76 = vmul.f32 %v69, %v74
    %v77 = vld [vmem:[#allocation4] sm:$0x1]
    %v79 = vperm.slane %v77, 0
    %v81 = vadd.f32 %v76, %v79
    %v82 = vld [vmem:[%s4] sm:$0x3]
    %v83 = vunpack.c.l.bf16 %v82
    %v84 = vadd.f32 %v81, %v83
    %v85 = vmax.f32 %v84, 0.0
    %v86 = vpack.c.bf16 %v85, %v85
    %vm87 = vcmask 254976
    %88 = vst.msk [vmem:[%s5] sm:$0x3] %vm87, %v86
    // Predicated region
    $region30: #{network_forward.56} parent=1 // pred_check
      _
    $region31: #{network_forward.56} parent=1 // pred_check_branch
      %90 = sbr.rel (0) target = $region33
    $region32: #{network_forward.56} parent=1 // pred_region
      _
    $region33: #{network_forward.56} parent=1 // pred_fallthru
      _
    // Predicated region
    $region34: #{network_forward.56} parent=1 // pred_check
      _
    $region35: #{network_forward.56} parent=1 // pred_check_branch
      %92 = sbr.rel (0) target = $region37
    $region36: #{network_forward.56} parent=1 // pred_region
      _
    $region37: #{network_forward.56} parent=1 // pred_fallthru
      _
    %93 = vsyncpa [#allocation3], 1
    %94 = vsyncpa [#allocation5], 1

// kernel: network_forward.59
$region0: #{network_forward.59}
  #allocation0 [shape = 'u32[]', space=smem, size = 0x4, offset = 0x4, fixed_abs, tag = 'smem constant byte address 0x4 - core index']
  #allocation1 [shape = 'u32[72,128]{1,0:T(1,128)}', space=vmem, size = 0x9000, scoped, tag = 'internal scratch']
  %s0 = inlined_call_operand.vmem [shape: bf16[4,8], index: 0, kind: input, shape index: {}]
  %s1 = inlined_call_operand.vmem [shape: bf16[8,32], index: 1, kind: input, shape index: {}]
  %s2 = inlined_call_operand.vmem [shape: f32[1,32], index: 2, kind: input, shape index: {}]
  %s3 = inlined_call_operand.hbm [shape: f32[1,32], index: 3, kind: input, shape index: {}]
  %s4 = inlined_call_operand.vmem [shape: bf16[4,32], index: 4, kind: input, shape index: {}]
  %s5 = inlined_call_operand.vmem [shape: bf16[4,32], index: 5, kind: output, shape index: {}]
  %s6 = sld [smem:[#allocation0]]
  $region34: #{network_forward.59} parent=0
    _
  %s8 = ssub.s32 1, %s6
  %s9 = scalar_select 0, %s8, %s6
  $region1: #{network_forward.59} parent=0
    #allocation2 [shape = 'u8[512]{0}', space=vmem, size = 0x400, scoped, tag = 'input window, operand 3, single buffered']
    #allocation3 [shape = 's32[1]{0}', space=sflag, size = 0x4, scoped, tag = 'scoped memory for network_forward.59']
    %10 = vsyncpa [#allocation3], 0
    // Predicated region
    $region2: #{network_forward.59} parent=1 // pred_check
      _
    $region3: #{network_forward.59} parent=1 // pred_check_branch
      %12 = sbr.rel (0) target = $region5
    $region4: #{network_forward.59} parent=1 // pred_region
      _
    $region5: #{network_forward.59} parent=1 // pred_fallthru
      _
    // Predicated region
    $region6: #{network_forward.59} parent=1 // pred_check
      _
    $region7: #{network_forward.59} parent=1 // pred_check_branch
      %14 = sbr.rel (0) target = $region9
    $region8: #{network_forward.59} parent=1 // pred_region
      _
    $region9: #{network_forward.59} parent=1 // pred_fallthru
      _
    // Predicated region
    $region10: #{network_forward.59} parent=1 // pred_check
      _
    $region11: #{network_forward.59} parent=1 // pred_check_branch
      %16 = sbr.rel (0) target = $region13
    $region12: #{network_forward.59} parent=1 // pred_region
      _
    $region13: #{network_forward.59} parent=1 // pred_fallthru
      _
    // Predicated region
    $region14: #{network_forward.59} parent=1 // pred_check
      _
    $region15: #{network_forward.59} parent=1 // pred_check_branch
      %18 = sbr.rel (0) target = $region17
    $region16: #{network_forward.59} parent=1 // pred_region
      %20 = vsyncadd [#allocation3], 0
      %s22 = sshll.u32 %s3, 4
      %s23 = int_to_ptr.hbm [resolvable:$true] %s22
      %s24 = sshll.u32 [#allocation2], 4
      %s25 = int_to_ptr.vmem [resolvable:$true] %s24
      %27 = dma.hbm_to_vmem [thread:$0]  %s23, 16, %s25, [#allocation3]
    $region17: #{network_forward.59} parent=1 // pred_fallthru
      _
    // Predicated region
    $region18: #{network_forward.59} parent=1 // pred_check
      _
    $region19: #{network_forward.59} parent=1 // pred_check_branch
      %29 = sbr.rel (0) target = $region21
    $region20: #{network_forward.59} parent=1 // pred_region
      _
    $region21: #{network_forward.59} parent=1 // pred_fallthru
      _
    // Predicated region
    $region22: #{network_forward.59} parent=1 // pred_check
      _
    $region23: #{network_forward.59} parent=1 // pred_check_branch
      %31 = sbr.rel (0) target = $region25
    $region24: #{network_forward.59} parent=1 // pred_region
      %33 = dma.done [#allocation3], 16
    $region25: #{network_forward.59} parent=1 // pred_fallthru
      _
    %v35 = vld [vmem:[%s0] sm:$0x3]
    %v36 = vld [vmem:[%s1] sm:$0xf]
    %vm37 = vcmask 64512
    %v39 = vsel %vm37, %v35, 0
    %vm41 = vcmask 1043456
    %v43 = vsel %vm41, %v36, 0
    %45 = vmatpush.bf16.msra.mxu0 0
    %46 = vmatpush.bf16.msra.mxu0 0
    %47 = vmatpush.bf16.msra.mxu0 0
    %48 = vmatpush.bf16.msra.mxu0 0
    %49 = vmatpush.bf16.msra.mxu0 0
    %50 = vmatpush.bf16.msra.mxu0 0
    %51 = vmatpush.bf16.msra.mxu0 0
    %52 = vmatpush.bf16.msra.mxu0 %v43
    %53 = vmatmul.bf16.gmra.mxu0 %v39
    %v54 = vpop.f32.mrf.mxu0
    %v55 = vadd.f32 0.0, %v54
    %v56 = vpop.f32.mrf.mxu0
    %57 = vdwg.mxu0
    %v58 = vld [vmem:[%s2] sm:$0x1]
    %v60 = vperm.slane %v58, 0
    %v62 = vmul.f32 %v55, %v60
    %v63 = vld [vmem:[#allocation2] sm:$0x1]
    %v65 = vperm.slane %v63, 0
    %v67 = vadd.f32 %v62, %v65
    %v68 = vld [vmem:[%s4] sm:$0x3]
    %v69 = vunpack.c.l.bf16 %v68
    %v70 = vadd.f32 %v67, %v69
    %v71 = vmax.f32 %v70, 0.0
    %v72 = vpack.c.bf16 %v71, %v71
    %vm73 = vcmask 254976
    %74 = vst.msk [vmem:[%s5] sm:$0x3] %vm73, %v72
    // Predicated region
    $region26: #{network_forward.59} parent=1 // pred_check
      _
    $region27: #{network_forward.59} parent=1 // pred_check_branch
      %76 = sbr.rel (0) target = $region29
    $region28: #{network_forward.59} parent=1 // pred_region
      _
    $region29: #{network_forward.59} parent=1 // pred_fallthru
      _
    // Predicated region
    $region30: #{network_forward.59} parent=1 // pred_check
      _
    $region31: #{network_forward.59} parent=1 // pred_check_branch
      %78 = sbr.rel (0) target = $region33
    $region32: #{network_forward.59} parent=1 // pred_region
      _
    $region33: #{network_forward.59} parent=1 // pred_fallthru
      _
    %79 = vsyncpa [#allocation3], 1

// kernel: network_forward.57
$region0: #{network_forward.57}
  #allocation0 [shape = 'u32[]', space=smem, size = 0x4, offset = 0x4, fixed_abs, tag = 'smem constant byte address 0x4 - core index']
  #allocation1 [shape = 'u32[72,128]{1,0:T(1,128)}', space=vmem, size = 0x9000, scoped, tag = 'internal scratch']
  %s0 = inlined_call_operand.vmem [shape: bf16[4,8], index: 0, kind: input, shape index: {}]
  %s1 = inlined_call_operand.hbm [shape: bf16[8,32], index: 1, kind: input, shape index: {}]
  %s2 = inlined_call_operand.hbm [shape: f32[1,32], index: 2, kind: input, shape index: {}]
  %s3 = inlined_call_operand.hbm [shape: f32[1,32], index: 3, kind: input, shape index: {}]
  %s4 = inlined_call_operand.vmem [shape: bf16[4,32], index: 4, kind: input, shape index: {}]
  %s5 = inlined_call_operand.vmem [shape: bf16[4,32], index: 5, kind: output, shape index: {}]
  %s6 = sld [smem:[#allocation0]]
  $region42: #{network_forward.57} parent=0
    _
  %s8 = ssub.s32 1, %s6
  %s9 = scalar_select 0, %s8, %s6
  $region1: #{network_forward.57} parent=0
    #allocation2 [shape = 'u8[2048]{0}', space=vmem, size = 0x800, scoped, tag = 'input window, operand 1, single buffered']
    #allocation3 [shape = 's32[1]{0}', space=sflag, size = 0x4, scoped, tag = 'scoped memory for network_forward.57']
    #allocation4 [shape = 'u8[512]{0}', space=vmem, size = 0x400, scoped, tag = 'input window, operand 2, single buffered']
    #allocation5 [shape = 's32[1]{0}', space=sflag, size = 0x4, scoped, tag = 'scoped memory for network_forward.57']
    #allocation6 [shape = 'u8[512]{0}', space=vmem, size = 0x400, scoped, tag = 'input window, operand 3, single buffered']
    %10 = vsyncpa [#allocation3], 0
    %11 = vsyncpa [#allocation5], 0
    // Predicated region
    $region2: #{network_forward.57} parent=1 // pred_check
      _
    $region3: #{network_forward.57} parent=1 // pred_check_branch
      %13 = sbr.rel (0) target = $region5
    $region4: #{network_forward.57} parent=1 // pred_region
      _
    $region5: #{network_forward.57} parent=1 // pred_fallthru
      _
    // Predicated region
    $region6: #{network_forward.57} parent=1 // pred_check
      _
    $region7: #{network_forward.57} parent=1 // pred_check_branch
      %15 = sbr.rel (0) target = $region9
    $region8: #{network_forward.57} parent=1 // pred_region
      %17 = vsyncadd [#allocation3], 0
      %s19 = sshll.u32 %s1, 4
      %s20 = int_to_ptr.hbm [resolvable:$true] %s19
      %s21 = sshll.u32 [#allocation2], 4
      %s22 = int_to_ptr.vmem [resolvable:$true] %s21
      %24 = dma.hbm_to_vmem [thread:$0]  %s20, 64, %s22, [#allocation3]
    $region9: #{network_forward.57} parent=1 // pred_fallthru
      _
    // Predicated region
    $region10: #{network_forward.57} parent=1 // pred_check
      _
    $region11: #{network_forward.57} parent=1 // pred_check_branch
      %26 = sbr.rel (0) target = $region13
    $region12: #{network_forward.57} parent=1 // pred_region
      %28 = vsyncadd [#allocation5], 0
      %s30 = sshll.u32 %s2, 4
      %s31 = int_to_ptr.hbm [resolvable:$true] %s30
      %s32 = sshll.u32 [#allocation4], 4
      %s33 = int_to_ptr.vmem [resolvable:$true] %s32
      %35 = dma.hbm_to_vmem [thread:$0]  %s31, 16, %s33, [#allocation5]
    $region13: #{network_forward.57} parent=1 // pred_fallthru
      _
    // Predicated region
    $region14: #{network_forward.57} parent=1 // pred_check
      _
    $region15: #{network_forward.57} parent=1 // pred_check_branch
      %37 = sbr.rel (0) target = $region17
    $region16: #{network_forward.57} parent=1 // pred_region
      %39 = vsyncadd [#allocation5], 0
      %s41 = sshll.u32 %s3, 4
      %s42 = int_to_ptr.hbm [resolvable:$true] %s41
      %s43 = sshll.u32 [#allocation6], 4
      %s44 = int_to_ptr.vmem [resolvable:$true] %s43
      %46 = dma.hbm_to_vmem [thread:$0]  %s42, 16, %s44, [#allocation5]
    $region17: #{network_forward.57} parent=1 // pred_fallthru
      _
    // Predicated region
    $region18: #{network_forward.57} parent=1 // pred_check
      _
    $region19: #{network_forward.57} parent=1 // pred_check_branch
      %48 = sbr.rel (0) target = $region21
    $region20: #{network_forward.57} parent=1 // pred_region
      _
    $region21: #{network_forward.57} parent=1 // pred_fallthru
      _
    // Predicated region
    $region22: #{network_forward.57} parent=1 // pred_check
      _
    $region23: #{network_forward.57} parent=1 // pred_check_branch
      %50 = sbr.rel (0) target = $region25
    $region24: #{network_forward.57} parent=1 // pred_region
      %52 = dma.done [#allocation3], 64
    $region25: #{network_forward.57} parent=1 // pred_fallthru
      _
    // Predicated region
    $region26: #{network_forward.57} parent=1 // pred_check
      _
    $region27: #{network_forward.57} parent=1 // pred_check_branch
      %54 = sbr.rel (0) target = $region29
    $region28: #{network_forward.57} parent=1 // pred_region
      %56 = dma.done [#allocation5], 16
    $region29: #{network_forward.57} parent=1 // pred_fallthru
      _
    // Predicated region
    $region30: #{network_forward.57} parent=1 // pred_check
      _
    $region31: #{network_forward.57} parent=1 // pred_check_branch
      %58 = sbr.rel (0) target = $region33
    $region32: #{network_forward.57} parent=1 // pred_region
      %60 = dma.done [#allocation5], 16
    $region33: #{network_forward.57} parent=1 // pred_fallthru
      _
    %v62 = vld [vmem:[%s0] sm:$0x3]
    %v63 = vld [vmem:[#allocation2] sm:$0xf]
    %vm64 = vcmask 64512
    %v66 = vsel %vm64, %v62, 0
    %vm68 = vcmask 1043456
    %v70 = vsel %vm68, %v63, 0
    %72 = vmatpush.bf16.msra.mxu0 0
    %73 = vmatpush.bf16.msra.mxu0 0
    %74 = vmatpush.bf16.msra.mxu0 0
    %75 = vmatpush.bf16.msra.mxu0 0
    %76 = vmatpush.bf16.msra.mxu0 0
    %77 = vmatpush.bf16.msra.mxu0 0
    %78 = vmatpush.bf16.msra.mxu0 0
    %79 = vmatpush.bf16.msra.mxu0 %v70
    %80 = vmatmul.bf16.gmra.mxu0 %v66
    %v81 = vpop.f32.mrf.mxu0
    %v82 = vadd.f32 0.0, %v81
    %v83 = vpop.f32.mrf.mxu0
    %84 = vdwg.mxu0
    %v85 = vld [vmem:[#allocation4] sm:$0x1]
    %v87 = vperm.slane %v85, 0
    %v89 = vmul.f32 %v82, %v87
    %v90 = vld [vmem:[#allocation6] sm:$0x1]
    %v92 = vperm.slane %v90, 0
    %v94 = vadd.f32 %v89, %v92
    %v95 = vld [vmem:[%s4] sm:$0x3]
    %v96 = vunpack.c.l.bf16 %v95
    %v97 = vadd.f32 %v94, %v96
    %v98 = vmax.f32 %v97, 0.0
    %v99 = vpack.c.bf16 %v98, %v98
    %vm100 = vcmask 254976
    %101 = vst.msk [vmem:[%s5] sm:$0x3] %vm100, %v99
    // Predicated region
    $region34: #{network_forward.57} parent=1 // pred_check
      _
    $region35: #{network_forward.57} parent=1 // pred_check_branch
      %103 = sbr.rel (0) target = $region37
    $region36: #{network_forward.57} parent=1 // pred_region
      _
    $region37: #{network_forward.57} parent=1 // pred_fallthru
      _
    // Predicated region
    $region38: #{network_forward.57} parent=1 // pred_check
      _
    $region39: #{network_forward.57} parent=1 // pred_check_branch
      %105 = sbr.rel (0) target = $region41
    $region40: #{network_forward.57} parent=1 // pred_region
      _
    $region41: #{network_forward.57} parent=1 // pred_fallthru
      _
    %106 = vsyncpa [#allocation3], 1
    %107 = vsyncpa [#allocation5], 1

// kernel: network_forward.60
$region0: #{network_forward.60}
  #allocation0 [shape = 'u32[]', space=smem, size = 0x4, offset = 0x4, fixed_abs, tag = 'smem constant byte address 0x4 - core index']
  #allocation1 [shape = 'u32[72,128]{1,0:T(1,128)}', space=vmem, size = 0x9000, scoped, tag = 'internal scratch']
  %s0 = inlined_call_operand.vmem [shape: bf16[4,256], index: 0, kind: input, shape index: {}]
  %s1 = inlined_call_operand.hbm [shape: bf16[256,128], index: 1, kind: input, shape index: {}]
  %s2 = inlined_call_operand.vmem [shape: f32[1,128], index: 2, kind: input, shape index: {}]
  %s3 = inlined_call_operand.vmem [shape: f32[1,128], index: 3, kind: input, shape index: {}]
  %s4 = inlined_call_operand.vmem [shape: bf16[4,128], index: 4, kind: output, shape index: {}]
  %s5 = sld [smem:[#allocation0]]
  $region30: #{network_forward.60} parent=0
    _
  %s7 = ssub.s32 1, %s5
  %s8 = scalar_select 0, %s7, %s5
  $region1: #{network_forward.60} parent=0
    #allocation2 [shape = 'u8[65536]{0}', space=vmem, size = 0x10000, scoped, tag = 'input window, operand 1, single buffered']
    #allocation3 [shape = 's32[1]{0}', space=sflag, size = 0x4, scoped, tag = 'scoped memory for network_forward.60']
    %9 = vsyncpa [#allocation3], 0
    // Predicated region
    $region2: #{network_forward.60} parent=1 // pred_check
      _
    $region3: #{network_forward.60} parent=1 // pred_check_branch
      %11 = sbr.rel (0) target = $region5
    $region4: #{network_forward.60} parent=1 // pred_region
      _
    $region5: #{network_forward.60} parent=1 // pred_fallthru
      _
    // Predicated region
    $region6: #{network_forward.60} parent=1 // pred_check
      _
    $region7: #{network_forward.60} parent=1 // pred_check_branch
      %13 = sbr.rel (0) target = $region9
    $region8: #{network_forward.60} parent=1 // pred_region
      %15 = vsyncadd [#allocation3], 0
      %s16 = sshll.u32 %s1, 4
      %s17 = int_to_ptr.hbm [resolvable:$true] %s16
      %s18 = sshll.u32 [#allocation2], 4
      %s19 = int_to_ptr.vmem [resolvable:$true] %s18
      %24 = dma.hbm_to_vmem [thread:$0]  %s17, 2048, %s19, [#allocation3], 64, 64, 4
    $region9: #{network_forward.60} parent=1 // pred_fallthru
      _
    // Predicated region
    $region10: #{network_forward.60} parent=1 // pred_check
      _
    $region11: #{network_forward.60} parent=1 // pred_check_branch
      %26 = sbr.rel (0) target = $region13
    $region12: #{network_forward.60} parent=1 // pred_region
      _
    $region13: #{network_forward.60} parent=1 // pred_fallthru
      _
    // Predicated region
    $region14: #{network_forward.60} parent=1 // pred_check
      _
    $region15: #{network_forward.60} parent=1 // pred_check_branch
      %28 = sbr.rel (0) target = $region17
    $region16: #{network_forward.60} parent=1 // pred_region
      _
    $region17: #{network_forward.60} parent=1 // pred_fallthru
      _
    // Predicated region
    $region18: #{network_forward.60} parent=1 // pred_check
      _
    $region19: #{network_forward.60} parent=1 // pred_check_branch
      %30 = sbr.rel (0) target = $region21
    $region20: #{network_forward.60} parent=1 // pred_region
      %32 = dma.done [#allocation3], 2048
    $region21: #{network_forward.60} parent=1 // pred_fallthru
      _
    %v33 = vld [vmem:[%s0] sm:$0xf]
    %v34 = vld [vmem:[#allocation2] sm:$0xf]
    %v35 = vld [vmem:[#allocation2 + $0x4] sm:$0xf]
    %v36 = vld [vmem:[#allocation2 + $0x8] sm:$0xf]
    %v37 = vld [vmem:[#allocation2 + $0xc] sm:$0xf]
    %v38 = vld [vmem:[#allocation2 + $0x10] sm:$0xf]
    %v39 = vld [vmem:[#allocation2 + $0x14] sm:$0xf]
    %v40 = vld [vmem:[#allocation2 + $0x18] sm:$0xf]
    %v41 = vld [vmem:[#allocation2 + $0x1c] sm:$0xf]
    %v42 = vld [vmem:[#allocation2 + $0x20] sm:$0xf]
    %v43 = vld [vmem:[#allocation2 + $0x24] sm:$0xf]
    %v44 = vld [vmem:[#allocation2 + $0x28] sm:$0xf]
    %v45 = vld [vmem:[#allocation2 + $0x2c] sm:$0xf]
    %v46 = vld [vmem:[#allocation2 + $0x30] sm:$0xf]
    %v47 = vld [vmem:[#allocation2 + $0x34] sm:$0xf]
    %v48 = vld [vmem:[#allocation2 + $0x38] sm:$0xf]
    %v49 = vld [vmem:[#allocation2 + $0x3c] sm:$0xf]
    %v50 = vld [vmem:[#allocation2 + $0x40] sm:$0xf]
    %v51 = vld [vmem:[#allocation2 + $0x44] sm:$0xf]
    %v52 = vld [vmem:[#allocation2 + $0x48] sm:$0xf]
    %v53 = vld [vmem:[#allocation2 + $0x4c] sm:$0xf]
    %v54 = vld [vmem:[#allocation2 + $0x50] sm:$0xf]
    %v55 = vld [vmem:[#allocation2 + $0x54] sm:$0xf]
    %v56 = vld [vmem:[#allocation2 + $0x58] sm:$0xf]
    %v57 = vld [vmem:[#allocation2 + $0x5c] sm:$0xf]
    %v58 = vld [vmem:[#allocation2 + $0x60] sm:$0xf]
    %v59 = vld [vmem:[#allocation2 + $0x64] sm:$0xf]
    %v60 = vld [vmem:[#allocation2 + $0x68] sm:$0xf]
    %v61 = vld [vmem:[#allocation2 + $0x6c] sm:$0xf]
    %v62 = vld [vmem:[#allocation2 + $0x70] sm:$0xf]
    %v63 = vld [vmem:[#allocation2 + $0x74] sm:$0xf]
    %v64 = vld [vmem:[#allocation2 + $0x78] sm:$0xf]
    %v65 = vld [vmem:[#allocation2 + $0x7c] sm:$0xf]
    %67 = vst [vmem:[#allocation1] ss:$4 sm:$0xff] %v33
    %v68 = vld.sshfl [vmem:[#allocation1] sm:$0xff pattern:$0x73625140]
    %v69 = vld.sshfl [vmem:[#allocation1 + $0x8] sm:$0xff pattern:$0x73625140]
    %v104 = vunpack.c.l.b16 %v34
    %v105 = vunpack.c.l.b16 %v35
    %v106 = vunpack.c.l.b16 %v36
    %v107 = vunpack.c.l.b16 %v37
    %v108 = vunpack.c.l.b16 %v38
    %v109 = vunpack.c.l.b16 %v39
    %v110 = vunpack.c.l.b16 %v40
    %v111 = vunpack.c.l.b16 %v41
    %v112 = vunpack.c.l.b16 %v42
    %v113 = vunpack.c.l.b16 %v43
    %v114 = vunpack.c.l.b16 %v44
    %v115 = vunpack.c.l.b16 %v45
    %v116 = vunpack.c.l.b16 %v46
    %v117 = vunpack.c.l.b16 %v47
    %v118 = vunpack.c.l.b16 %v48
    %v119 = vunpack.c.l.b16 %v49
    %v120 = vunpack.c.l.b16 %v50
    %v121 = vunpack.c.l.b16 %v51
    %v122 = vunpack.c.l.b16 %v52
    %v123 = vunpack.c.l.b16 %v53
    %v124 = vunpack.c.l.b16 %v54
    %v125 = vunpack.c.l.b16 %v55
    %v126 = vunpack.c.l.b16 %v56
    %v127 = vunpack.c.l.b16 %v57
    %v128 = vunpack.c.l.b16 %v58
    %v129 = vunpack.c.l.b16 %v59
    %v130 = vunpack.c.l.b16 %v60
    %v131 = vunpack.c.l.b16 %v61
    %v132 = vunpack.c.l.b16 %v62
    %v133 = vunpack.c.l.b16 %v63
    %v134 = vunpack.c.l.b16 %v64
    %v135 = vunpack.c.l.b16 %v65
    %v136 = vpack.c.b16 %v105, %v104
    %v137 = vpack.c.b16 %v107, %v106
    %v138 = vpack.c.b16 %v109, %v108
    %v139 = vpack.c.b16 %v111, %v110
    %v140 = vpack.c.b16 %v113, %v112
    %v141 = vpack.c.b16 %v115, %v114
    %v142 = vpack.c.b16 %v117, %v116
    %v143 = vpack.c.b16 %v119, %v118
    %v144 = vpack.c.b16 %v121, %v120
    %v145 = vpack.c.b16 %v123, %v122
    %v146 = vpack.c.b16 %v125, %v124
    %v147 = vpack.c.b16 %v127, %v126
    %v148 = vpack.c.b16 %v129, %v128
    %v149 = vpack.c.b16 %v131, %v130
    %v150 = vpack.c.b16 %v133, %v132
    %v151 = vpack.c.b16 %v135, %v134
    %168 = vmatpush.bf16.msra.mxu0 %v143
    %169 = vmatpush.bf16.msra.mxu0 %v142
    %170 = vmatpush.bf16.msra.mxu0 %v141
    %171 = vmatpush.bf16.msra.mxu0 %v140
    %172 = vmatpush.bf16.msra.mxu0 %v139
    %173 = vmatpush.bf16.msra.mxu0 %v138
    %174 = vmatpush.bf16.msra.mxu0 %v137
    %175 = vmatpush.bf16.msra.mxu0 %v136
    %176 = vmatmul.bf16.gmra.mxu0 %v68
    %v177 = vpop.f32.mrf.mxu0
    %v178 = vadd.f32 0.0, %v177
    %v179 = vpop.f32.mrf.mxu0
    %180 = vdwg.mxu0
    %181 = vmatpush.bf16.msra.mxu0 %v151
    %182 = vmatpush.bf16.msra.mxu0 %v150
    %183 = vmatpush.bf16.msra.mxu0 %v149
    %184 = vmatpush.bf16.msra.mxu0 %v148
    %185 = vmatpush.bf16.msra.mxu0 %v147
    %186 = vmatpush.bf16.msra.mxu0 %v146
    %187 = vmatpush.bf16.msra.mxu0 %v145
    %188 = vmatpush.bf16.msra.mxu0 %v144
    %189 = vmatmul.bf16.gmra.mxu0 %v69
    %v190 = vpop.f32.mrf.mxu0
    %v191 = vadd.f32 %v178, %v190
    %v192 = vpop.f32.mrf.mxu0
    %193 = vdwg.mxu0
    %v194 = vld [vmem:[%s2] sm:$0x1]
    %v196 = vperm.slane %v194, 0
    %v198 = vmul.f32 %v191, %v196
    %v199 = vld [vmem:[%s3] sm:$0x1]
    %v201 = vperm.slane %v199, 0
    %v203 = vadd.f32 %v198, %v201
    %v204 = vmax.f32 %v203, 0.0
    %v205 = vpack.c.bf16 %v204, %v204
    %206 = vst [vmem:[%s4] sm:$0x3] %v205
    // Predicated region
    $region22: #{network_forward.60} parent=1 // pred_check
      _
    $region23: #{network_forward.60} parent=1 // pred_check_branch
      %208 = sbr.rel (0) target = $region25
    $region24: #{network_forward.60} parent=1 // pred_region
      _
    $region25: #{network_forward.60} parent=1 // pred_fallthru
      _
    // Predicated region
    $region26: #{network_forward.60} parent=1 // pred_check
      _
    $region27: #{network_forward.60} parent=1 // pred_check_branch
      %210 = sbr.rel (0) target = $region29
    $region28: #{network_forward.60} parent=1 // pred_region
      _
    $region29: #{network_forward.60} parent=1 // pred_fallthru
      _
    %211 = vsyncpa [#allocation3], 1

// kernel: network_forward.61
$region0: #{network_forward.61}
  #allocation0 [shape = 'u32[]', space=smem, size = 0x4, offset = 0x4, fixed_abs, tag = 'smem constant byte address 0x4 - core index']
  #allocation1 [shape = 'u32[72,128]{1,0:T(1,128)}', space=vmem, size = 0x9000, scoped, tag = 'internal scratch']
  %s0 = inlined_call_operand.vmem [shape: bf16[32,128], index: 0, kind: input, shape index: {}]
  %s1 = inlined_call_operand.vmem [shape: bf16[128,128], index: 1, kind: input, shape index: {}]
  %s2 = inlined_call_operand.vmem [shape: f32[1,128], index: 2, kind: input, shape index: {}]
  %s3 = inlined_call_operand.vmem [shape: f32[1,128], index: 3, kind: input, shape index: {}]
  %s4 = inlined_call_operand.vmem [shape: bf16[32,128], index: 4, kind: output, shape index: {}]
  %s5 = sld [smem:[#allocation0]]
  $region26: #{network_forward.61} parent=0
    _
  %s7 = ssub.s32 1, %s5
  %s8 = scalar_select 0, %s7, %s5
  // Predicated region
  $region2: #{network_forward.61} parent=0 // pred_check
    _
  $region3: #{network_forward.61} parent=0 // pred_check_branch
    %10 = sbr.rel (0) target = $region5
  $region4: #{network_forward.61} parent=0 // pred_region
    _
  $region5: #{network_forward.61} parent=0 // pred_fallthru
    _
  // Predicated region
  $region6: #{network_forward.61} parent=0 // pred_check
    _
  $region7: #{network_forward.61} parent=0 // pred_check_branch
    %12 = sbr.rel (0) target = $region9
  $region8: #{network_forward.61} parent=0 // pred_region
    _
  $region9: #{network_forward.61} parent=0 // pred_fallthru
    _
  // Predicated region
  $region10: #{network_forward.61} parent=0 // pred_check
    _
  $region11: #{network_forward.61} parent=0 // pred_check_branch
    %14 = sbr.rel (0) target = $region13
  $region12: #{network_forward.61} parent=0 // pred_region
    _
  $region13: #{network_forward.61} parent=0 // pred_fallthru
    _
  // Predicated region
  $region14: #{network_forward.61} parent=0 // pred_check
    _
  $region15: #{network_forward.61} parent=0 // pred_check_branch
    %16 = sbr.rel (0) target = $region17
  $region16: #{network_forward.61} parent=0 // pred_region
    _
  $region17: #{network_forward.61} parent=0 // pred_fallthru
    _
  %v17 = vld [vmem:[%s0] sm:$0xf]
  %v18 = vld [vmem:[%s0 + $0x4] sm:$0xf]
  %v19 = vld [vmem:[%s0 + $0x8] sm:$0xf]
  %v20 = vld [vmem:[%s0 + $0xc] sm:$0xf]
  %v21 = vld [vmem:[%s1] sm:$0xf]
  %v22 = vld [vmem:[%s1 + $0x4] sm:$0xf]
  %v23 = vld [vmem:[%s1 + $0x8] sm:$0xf]
  %v24 = vld [vmem:[%s1 + $0xc] sm:$0xf]
  %v25 = vld [vmem:[%s1 + $0x10] sm:$0xf]
  %v26 = vld [vmem:[%s1 + $0x14] sm:$0xf]
  %v27 = vld [vmem:[%s1 + $0x18] sm:$0xf]
  %v28 = vld [vmem:[%s1 + $0x1c] sm:$0xf]
  %v29 = vld [vmem:[%s1 + $0x20] sm:$0xf]
  %v30 = vld [vmem:[%s1 + $0x24] sm:$0xf]
  %v31 = vld [vmem:[%s1 + $0x28] sm:$0xf]
  %v32 = vld [vmem:[%s1 + $0x2c] sm:$0xf]
  %v33 = vld [vmem:[%s1 + $0x30] sm:$0xf]
  %v34 = vld [vmem:[%s1 + $0x34] sm:$0xf]
  %v35 = vld [vmem:[%s1 + $0x38] sm:$0xf]
  %v36 = vld [vmem:[%s1 + $0x3c] sm:$0xf]
  %v41 = vunpack.c.l.b16 %v17
  %v42 = vunpack.c.l.b16 %v18
  %v43 = vunpack.c.l.b16 %v19
  %v44 = vunpack.c.l.b16 %v20
  %v45 = vpack.c.b16 %v42, %v41
  %v46 = vpack.c.b16 %v44, %v43
  %v65 = vunpack.c.l.b16 %v21
  %v66 = vunpack.c.l.b16 %v22
  %v67 = vunpack.c.l.b16 %v23
  %v68 = vunpack.c.l.b16 %v24
  %v69 = vunpack.c.l.b16 %v25
  %v70 = vunpack.c.l.b16 %v26
  %v71 = vunpack.c.l.b16 %v27
  %v72 = vunpack.c.l.b16 %v28
  %v73 = vunpack.c.l.b16 %v29
  %v74 = vunpack.c.l.b16 %v30
  %v75 = vunpack.c.l.b16 %v31
  %v76 = vunpack.c.l.b16 %v32
  %v77 = vunpack.c.l.b16 %v33
  %v78 = vunpack.c.l.b16 %v34
  %v79 = vunpack.c.l.b16 %v35
  %v80 = vunpack.c.l.b16 %v36
  %v81 = vpack.c.b16 %v66, %v65
  %v82 = vpack.c.b16 %v68, %v67
  %v83 = vpack.c.b16 %v70, %v69
  %v84 = vpack.c.b16 %v72, %v71
  %v85 = vpack.c.b16 %v74, %v73
  %v86 = vpack.c.b16 %v76, %v75
  %v87 = vpack.c.b16 %v78, %v77
  %v88 = vpack.c.b16 %v80, %v79
  %97 = vmatpush.bf16.msra.mxu0 %v88
  %98 = vmatpush.bf16.msra.mxu0 %v87
  %99 = vmatpush.bf16.msra.mxu0 %v86
  %100 = vmatpush.bf16.msra.mxu0 %v85
  %101 = vmatpush.bf16.msra.mxu0 %v84
  %102 = vmatpush.bf16.msra.mxu0 %v83
  %103 = vmatpush.bf16.msra.mxu0 %v82
  %104 = vmatpush.bf16.msra.mxu0 %v81
  %105 = vmatmul.bf16.gmra.mxu0 %v45
  %v106 = vpop.f32.mrf.mxu0
  %v107 = vadd.f32 0.0, %v106
  %v108 = vpop.f32.mrf.mxu0
  %v109 = vadd.f32 0.0, %v108
  %110 = vmatmul.bf16.gmra.mxu0 %v46
  %v111 = vpop.f32.mrf.mxu0
  %v112 = vadd.f32 0.0, %v111
  %v113 = vpop.f32.mrf.mxu0
  %v114 = vadd.f32 0.0, %v113
  %115 = vdwg.mxu0
  %v116 = vld [vmem:[%s2] sm:$0x1]
  %v118 = vperm.slane %v116, 0
  %v120 = vmul.f32 %v107, %v118
  %v121 = vmul.f32 %v109, %v118
  %v122 = vmul.f32 %v112, %v118
  %v123 = vmul.f32 %v114, %v118
  %v124 = vld [vmem:[%s3] sm:$0x1]
  %v126 = vperm.slane %v124, 0
  %v128 = vadd.f32 %v120, %v126
  %v129 = vadd.f32 %v121, %v126
  %v130 = vadd.f32 %v122, %v126
  %v131 = vadd.f32 %v123, %v126
  %v132 = vmax.f32 %v128, 0.0
  %v133 = vmax.f32 %v129, 0.0
  %v134 = vmax.f32 %v130, 0.0
  %v135 = vmax.f32 %v131, 0.0
  %v136 = vpack.c.bf16 %v132, %v132
  %v137 = vpack.c.bf16 %v133, %v133
  %v138 = vpack.c.bf16 %v134, %v134
  %v139 = vpack.c.bf16 %v135, %v135
  %140 = vst [vmem:[%s4] sm:$0xf] %v136
  %141 = vst [vmem:[%s4 + $0x4] sm:$0xf] %v137
  %142 = vst [vmem:[%s4 + $0x8] sm:$0xf] %v138
  %143 = vst [vmem:[%s4 + $0xc] sm:$0xf] %v139
  // Predicated region
  $region18: #{network_forward.61} parent=0 // pred_check
    _
  $region19: #{network_forward.61} parent=0 // pred_check_branch
    %145 = sbr.rel (0) target = $region21
  $region20: #{network_forward.61} parent=0 // pred_region
    _
  $region21: #{network_forward.61} parent=0 // pred_fallthru
    _
  // Predicated region
  $region22: #{network_forward.61} parent=0 // pred_check
    _
  $region23: #{network_forward.61} parent=0 // pred_check_branch
    %147 = sbr.rel (0) target = $region25
  $region24: #{network_forward.61} parent=0 // pred_region
    _
  $region25: #{network_forward.61} parent=0 // pred_fallthru
    _

// kernel: network_forward.68
$region0: #{network_forward.68}
  #allocation0 [shape = 'u32[]', space=smem, size = 0x4, offset = 0x4, fixed_abs, tag = 'smem constant byte address 0x4 - core index']
  #allocation1 [shape = 'u32[72,128]{1,0:T(1,128)}', space=vmem, size = 0x9000, scoped, tag = 'internal scratch']
  %s0 = inlined_call_operand.vmem [shape: bf16[4,4], index: 0, kind: input, shape index: {}]
  %s1 = inlined_call_operand.hbm [shape: bf16[4,32], index: 1, kind: input, shape index: {}]
  %s2 = inlined_call_operand.hbm [shape: f32[1,32], index: 2, kind: input, shape index: {}]
  %s3 = inlined_call_operand.hbm [shape: f32[1,32], index: 3, kind: input, shape index: {}]
  %s4 = inlined_call_operand.vmem [shape: bf16[4,32], index: 4, kind: input, shape index: {}]
  %s5 = inlined_call_operand.vmem [shape: bf16[4,32], index: 5, kind: output, shape index: {}]
  %s6 = sld [smem:[#allocation0]]
  $region42: #{network_forward.68} parent=0
    _
  %s8 = ssub.s32 1, %s6
  %s9 = scalar_select 0, %s8, %s6
  $region1: #{network_forward.68} parent=0
    #allocation2 [shape = 'u8[1024]{0}', space=vmem, size = 0x400, scoped, tag = 'input window, operand 1, single buffered']
    #allocation3 [shape = 's32[1]{0}', space=sflag, size = 0x4, scoped, tag = 'scoped memory for network_forward.68']
    #allocation4 [shape = 'u8[512]{0}', space=vmem, size = 0x400, scoped, tag = 'input window, operand 2, single buffered']
    #allocation5 [shape = 's32[1]{0}', space=sflag, size = 0x4, scoped, tag = 'scoped memory for network_forward.68']
    #allocation6 [shape = 'u8[512]{0}', space=vmem, size = 0x400, scoped, tag = 'input window, operand 3, single buffered']
    %10 = vsyncpa [#allocation3], 0
    %11 = vsyncpa [#allocation5], 0
    // Predicated region
    $region2: #{network_forward.68} parent=1 // pred_check
      _
    $region3: #{network_forward.68} parent=1 // pred_check_branch
      %13 = sbr.rel (0) target = $region5
    $region4: #{network_forward.68} parent=1 // pred_region
      _
    $region5: #{network_forward.68} parent=1 // pred_fallthru
      _
    // Predicated region
    $region6: #{network_forward.68} parent=1 // pred_check
      _
    $region7: #{network_forward.68} parent=1 // pred_check_branch
      %15 = sbr.rel (0) target = $region9
    $region8: #{network_forward.68} parent=1 // pred_region
      %17 = vsyncadd [#allocation3], 0
      %s19 = sshll.u32 %s1, 4
      %s20 = int_to_ptr.hbm [resolvable:$true] %s19
      %s21 = sshll.u32 [#allocation2], 4
      %s22 = int_to_ptr.vmem [resolvable:$true] %s21
      %24 = dma.hbm_to_vmem [thread:$0]  %s20, 32, %s22, [#allocation3]
    $region9: #{network_forward.68} parent=1 // pred_fallthru
      _
    // Predicated region
    $region10: #{network_forward.68} parent=1 // pred_check
      _
    $region11: #{network_forward.68} parent=1 // pred_check_branch
      %26 = sbr.rel (0) target = $region13
    $region12: #{network_forward.68} parent=1 // pred_region
      %28 = vsyncadd [#allocation5], 0
      %s30 = sshll.u32 %s2, 4
      %s31 = int_to_ptr.hbm [resolvable:$true] %s30
      %s32 = sshll.u32 [#allocation4], 4
      %s33 = int_to_ptr.vmem [resolvable:$true] %s32
      %35 = dma.hbm_to_vmem [thread:$0]  %s31, 16, %s33, [#allocation5]
    $region13: #{network_forward.68} parent=1 // pred_fallthru
      _
    // Predicated region
    $region14: #{network_forward.68} parent=1 // pred_check
      _
    $region15: #{network_forward.68} parent=1 // pred_check_branch
      %37 = sbr.rel (0) target = $region17
    $region16: #{network_forward.68} parent=1 // pred_region
      %39 = vsyncadd [#allocation5], 0
      %s41 = sshll.u32 %s3, 4
      %s42 = int_to_ptr.hbm [resolvable:$true] %s41
      %s43 = sshll.u32 [#allocation6], 4
      %s44 = int_to_ptr.vmem [resolvable:$true] %s43
      %46 = dma.hbm_to_vmem [thread:$0]  %s42, 16, %s44, [#allocation5]
    $region17: #{network_forward.68} parent=1 // pred_fallthru
      _
    // Predicated region
    $region18: #{network_forward.68} parent=1 // pred_check
      _
    $region19: #{network_forward.68} parent=1 // pred_check_branch
      %48 = sbr.rel (0) target = $region21
    $region20: #{network_forward.68} parent=1 // pred_region
      _
    $region21: #{network_forward.68} parent=1 // pred_fallthru
      _
    // Predicated region
    $region22: #{network_forward.68} parent=1 // pred_check
      _
    $region23: #{network_forward.68} parent=1 // pred_check_branch
      %50 = sbr.rel (0) target = $region25
    $region24: #{network_forward.68} parent=1 // pred_region
      %52 = dma.done [#allocation3], 32
    $region25: #{network_forward.68} parent=1 // pred_fallthru
      _
    // Predicated region
    $region26: #{network_forward.68} parent=1 // pred_check
      _
    $region27: #{network_forward.68} parent=1 // pred_check_branch
      %54 = sbr.rel (0) target = $region29
    $region28: #{network_forward.68} parent=1 // pred_region
      %56 = dma.done [#allocation5], 16
    $region29: #{network_forward.68} parent=1 // pred_fallthru
      _
    // Predicated region
    $region30: #{network_forward.68} parent=1 // pred_check
      _
    $region31: #{network_forward.68} parent=1 // pred_check_branch
      %58 = sbr.rel (0) target = $region33
    $region32: #{network_forward.68} parent=1 // pred_region
      %60 = dma.done [#allocation5], 16
    $region33: #{network_forward.68} parent=1 // pred_fallthru
      _
    %v62 = vld [vmem:[%s0] sm:$0x3]
    %v63 = vld [vmem:[#allocation2] sm:$0x3]
    %vm64 = vcmask 31744
    %v66 = vsel %vm64, %v62, 0
    %vm68 = vcmask 1041408
    %v70 = vsel %vm68, %v63, 0
    %72 = vmatpush.bf16.msra.mxu0 0
    %73 = vmatpush.bf16.msra.mxu0 0
    %74 = vmatpush.bf16.msra.mxu0 0
    %75 = vmatpush.bf16.msra.mxu0 0
    %76 = vmatpush.bf16.msra.mxu0 0
    %77 = vmatpush.bf16.msra.mxu0 0
    %78 = vmatpush.bf16.msra.mxu0 0
    %79 = vmatpush.bf16.msra.mxu0 %v70
    %80 = vmatmul.bf16.gmra.mxu0 %v66
    %v81 = vpop.f32.mrf.mxu0
    %v82 = vadd.f32 0.0, %v81
    %v83 = vpop.f32.mrf.mxu0
    %84 = vdwg.mxu0
    %v85 = vld [vmem:[#allocation4] sm:$0x1]
    %v87 = vperm.slane %v85, 0
    %v89 = vmul.f32 %v82, %v87
    %v90 = vld [vmem:[#allocation6] sm:$0x1]
    %v92 = vperm.slane %v90, 0
    %v94 = vadd.f32 %v89, %v92
    %v95 = vld [vmem:[%s4] sm:$0x3]
    %v96 = vunpack.c.l.bf16 %v95
    %v97 = vadd.f32 %v94, %v96
    %v98 = vmax.f32 %v97, 0.0
    %v99 = vpack.c.bf16 %v98, %v98
    %vm100 = vcmask 254976
    %101 = vst.msk [vmem:[%s5] sm:$0x3] %vm100, %v99
    // Predicated region
    $region34: #{network_forward.68} parent=1 // pred_check
      _
    $region35: #{network_forward.68} parent=1 // pred_check_branch
      %103 = sbr.rel (0) target = $region37
    $region36: #{network_forward.68} parent=1 // pred_region
      _
    $region37: #{network_forward.68} parent=1 // pred_fallthru
      _
    // Predicated region
    $region38: #{network_forward.68} parent=1 // pred_check
      _
    $region39: #{network_forward.68} parent=1 // pred_check_branch
      %105 = sbr.rel (0) target = $region41
    $region40: #{network_forward.68} parent=1 // pred_region
      _
    $region41: #{network_forward.68} parent=1 // pred_fallthru
      _
    %106 = vsyncpa [#allocation3], 1
    %107 = vsyncpa [#allocation5], 1

// kernel: network_forward.81
$region0: #{network_forward.81}
  #allocation0 [shape = 'u32[]', space=smem, size = 0x4, offset = 0x4, fixed_abs, tag = 'smem constant byte address 0x4 - core index']
  #allocation1 [shape = 'u32[72,128]{1,0:T(1,128)}', space=vmem, size = 0x9000, scoped, tag = 'internal scratch']
  %s0 = inlined_call_operand.vmem [shape: bf16[4,16], index: 0, kind: input, shape index: {}]
  %s1 = inlined_call_operand.hbm [shape: bf16[16,32], index: 1, kind: input, shape index: {}]
  %s2 = inlined_call_operand.hbm [shape: f32[1,32], index: 2, kind: input, shape index: {}]
  %s3 = inlined_call_operand.hbm [shape: f32[1,32], index: 3, kind: input, shape index: {}]
  %s4 = inlined_call_operand.vmem [shape: bf16[4,32], index: 4, kind: output, shape index: {}]
  %s5 = sld [smem:[#allocation0]]
  $region38: #{network_forward.81} parent=0
    _
  %s7 = ssub.s32 1, %s5
  %s8 = scalar_select 0, %s7, %s5
  $region1: #{network_forward.81} parent=0
    #allocation2 [shape = 'u8[4096]{0}', space=vmem, size = 0x1000, scoped, tag = 'input window, operand 1, single buffered']
    #allocation3 [shape = 's32[1]{0}', space=sflag, size = 0x4, scoped, tag = 'scoped memory for network_forward.81']
    #allocation4 [shape = 'u8[512]{0}', space=vmem, size = 0x400, scoped, tag = 'input window, operand 2, single buffered']
    #allocation5 [shape = 's32[1]{0}', space=sflag, size = 0x4, scoped, tag = 'scoped memory for network_forward.81']
    #allocation6 [shape = 'u8[512]{0}', space=vmem, size = 0x400, scoped, tag = 'input window, operand 3, single buffered']
    %9 = vsyncpa [#allocation3], 0
    %10 = vsyncpa [#allocation5], 0
    // Predicated region
    $region2: #{network_forward.81} parent=1 // pred_check
      _
    $region3: #{network_forward.81} parent=1 // pred_check_branch
      %12 = sbr.rel (0) target = $region5
    $region4: #{network_forward.81} parent=1 // pred_region
      _
    $region5: #{network_forward.81} parent=1 // pred_fallthru
      _
    // Predicated region
    $region6: #{network_forward.81} parent=1 // pred_check
      _
    $region7: #{network_forward.81} parent=1 // pred_check_branch
      %14 = sbr.rel (0) target = $region9
    $region8: #{network_forward.81} parent=1 // pred_region
      %16 = vsyncadd [#allocation3], 0
      %s17 = sshll.u32 %s1, 4
      %s18 = int_to_ptr.hbm [resolvable:$true] %s17
      %s19 = sshll.u32 [#allocation2], 4
      %s20 = int_to_ptr.vmem [resolvable:$true] %s19
      %25 = dma.hbm_to_vmem [thread:$0]  %s18, 128, %s20, [#allocation3], 64, 64, 4
    $region9: #{network_forward.81} parent=1 // pred_fallthru
      _
    // Predicated region
    $region10: #{network_forward.81} parent=1 // pred_check
      _
    $region11: #{network_forward.81} parent=1 // pred_check_branch
      %27 = sbr.rel (0) target = $region13
    $region12: #{network_forward.81} parent=1 // pred_region
      %29 = vsyncadd [#allocation5], 0
      %s31 = sshll.u32 %s2, 4
      %s32 = int_to_ptr.hbm [resolvable:$true] %s31
      %s33 = sshll.u32 [#allocation4], 4
      %s34 = int_to_ptr.vmem [resolvable:$true] %s33
      %36 = dma.hbm_to_vmem [thread:$0]  %s32, 16, %s34, [#allocation5]
    $region13: #{network_forward.81} parent=1 // pred_fallthru
      _
    // Predicated region
    $region14: #{network_forward.81} parent=1 // pred_check
      _
    $region15: #{network_forward.81} parent=1 // pred_check_branch
      %38 = sbr.rel (0) target = $region17
    $region16: #{network_forward.81} parent=1 // pred_region
      %40 = vsyncadd [#allocation5], 0
      %s42 = sshll.u32 %s3, 4
      %s43 = int_to_ptr.hbm [resolvable:$true] %s42
      %s44 = sshll.u32 [#allocation6], 4
      %s45 = int_to_ptr.vmem [resolvable:$true] %s44
      %47 = dma.hbm_to_vmem [thread:$0]  %s43, 16, %s45, [#allocation5]
    $region17: #{network_forward.81} parent=1 // pred_fallthru
      _
    // Predicated region
    $region18: #{network_forward.81} parent=1 // pred_check
      _
    $region19: #{network_forward.81} parent=1 // pred_check_branch
      %49 = sbr.rel (0) target = $region21
    $region20: #{network_forward.81} parent=1 // pred_region
      %51 = dma.done [#allocation3], 128
    $region21: #{network_forward.81} parent=1 // pred_fallthru
      _
    // Predicated region
    $region22: #{network_forward.81} parent=1 // pred_check
      _
    $region23: #{network_forward.81} parent=1 // pred_check_branch
      %53 = sbr.rel (0) target = $region25
    $region24: #{network_forward.81} parent=1 // pred_region
      %55 = dma.done [#allocation5], 16
    $region25: #{network_forward.81} parent=1 // pred_fallthru
      _
    // Predicated region
    $region26: #{network_forward.81} parent=1 // pred_check
      _
    $region27: #{network_forward.81} parent=1 // pred_check_branch
      %57 = sbr.rel (0) target = $region29
    $region28: #{network_forward.81} parent=1 // pred_region
      %59 = dma.done [#allocation5], 16
    $region29: #{network_forward.81} parent=1 // pred_fallthru
      _
    %v61 = vld [vmem:[%s0] sm:$0x3]
    %v62 = vld [vmem:[#allocation2] sm:$0xf]
    %v63 = vld [vmem:[#allocation2 + $0x4] sm:$0xf]
    %v66 = vunpack.c.l.b16 %v62
    %v67 = vunpack.c.l.b16 %v63
    %v68 = vpack.c.b16 %v67, %v66
    %vm70 = vcmask 130048
    %v72 = vsel %vm70, %v61, 0
    %74 = vmatpush.bf16.msra.mxu0 0
    %75 = vmatpush.bf16.msra.mxu0 0
    %76 = vmatpush.bf16.msra.mxu0 0
    %77 = vmatpush.bf16.msra.mxu0 0
    %78 = vmatpush.bf16.msra.mxu0 0
    %79 = vmatpush.bf16.msra.mxu0 0
    %80 = vmatpush.bf16.msra.mxu0 0
    %81 = vmatpush.bf16.msra.mxu0 %v68
    %82 = vmatmul.bf16.gmra.mxu0 %v72
    %v83 = vpop.f32.mrf.mxu0
    %v84 = vadd.f32 0.0, %v83
    %v85 = vpop.f32.mrf.mxu0
    %86 = vdwg.mxu0
    %v87 = vld [vmem:[#allocation4] sm:$0x1]
    %v89 = vperm.slane %v87, 0
    %v91 = vmul.f32 %v84, %v89
    %v92 = vld [vmem:[#allocation6] sm:$0x1]
    %v94 = vperm.slane %v92, 0
    %v96 = vadd.f32 %v91, %v94
    %v97 = vpack.c.bf16 %v96, %v96
    %vm98 = vcmask 254976
    %99 = vst.msk [vmem:[%s4] sm:$0x3] %vm98, %v97
    // Predicated region
    $region30: #{network_forward.81} parent=1 // pred_check
      _
    $region31: #{network_forward.81} parent=1 // pred_check_branch
      %101 = sbr.rel (0) target = $region33
    $region32: #{network_forward.81} parent=1 // pred_region
      _
    $region33: #{network_forward.81} parent=1 // pred_fallthru
      _
    // Predicated region
    $region34: #{network_forward.81} parent=1 // pred_check
      _
    $region35: #{network_forward.81} parent=1 // pred_check_branch
      %103 = sbr.rel (0) target = $region37
    $region36: #{network_forward.81} parent=1 // pred_region
      _
    $region37: #{network_forward.81} parent=1 // pred_fallthru
      _
    %104 = vsyncpa [#allocation3], 1
    %105 = vsyncpa [#allocation5], 1

</llo_original>
